<compile_context>
chip_gen: v6e
topology: v6e:2x2x1
jax: 0.10.0
libtpu: 0.0.40
codegen_flags: <defaults>
</compile_context>

<pallas_src>
import functools

import jax
import jax.numpy as jnp
from jax.experimental import pallas as pl
from jax.experimental.pallas import tpu as pltpu


def _tree_sum(vals):
    """Pairwise (tree) sum of a list of arrays — exposes ILP to the 4 VALU slots."""
    vals = list(vals)
    while len(vals) > 1:
        nxt = [vals[i] + vals[i + 1] for i in range(0, len(vals) - 1, 2)]
        if len(vals) % 2:
            nxt.append(vals[-1])
        vals = nxt
    return vals[0]


def _ema_block_kernel(x_ref, w1_ref, b1_ref, w3_ref, b3_ref, gnw_ref, gnb_ref,
                      o_ref, x1_scr, x2_scr, *, H, W, eps):
    # x_ref  : [Gb, Cg, H*W]  activations, spatial axis flattened (lane-dense)  VMEM
    # w1_ref : [Cg*Cg]        conv1x1 weight, (o, i) row-major                  SMEM
    # b1_ref : [Cg]           conv1x1 bias                                      SMEM
    # w3_ref : [Cg*Cg*9]      conv3x3 weight, (o, i, kh, kw) row-major          SMEM
    # b3_ref : [Cg]           conv3x3 bias                                      SMEM
    # gnw_ref/gnb_ref : [Cg]  GroupNorm affine weight / bias                    SMEM
    # o_ref  : [Gb, Cg, H*W]
    # x1_scr / x2_scr : [Cg, Gb, H*W] f32 VMEM scratch (bounds live ranges)
    Gb, Cg, HW = x_ref.shape
    inv_h = 1.0 / float(H)
    inv_w = 1.0 / float(W)
    inv_hw = 1.0 / float(H * W)

    # ---- lane-index helpers (computed once per block) --------------------------
    pidx = jax.lax.broadcasted_iota(jnp.int32, (1, HW), 1)           # flat p = h*W + w
    p_f = pidx.astype(jnp.float32)
    # w = p mod W via float floor (avoids vector integer div/mod on the VPU).
    w_f = p_f - float(W) * jnp.floor((p_f + 0.5) * (1.0 / float(W)))

    def lane_roll(v, off):
        # v[..., p] <- v[..., (p + off) mod HW]   (XLU rotate; jnp.roll semantics)
        return pltpu.roll(v, shift=(-off) % HW, axis=v.ndim - 1)

    def seg_roll(v, s):
        # Cyclic shift by +s *within* each length-W row segment (0 < s < W):
        # built from two global rotates + a lane-mask select.
        a = lane_roll(v, s)          # source p + s      (same row, no wrap)
        b = lane_roll(v, s - W)      # source p + s - W  (same row, wrapped)
        return jnp.where(w_f < float(W - s), a, b)

    # Edge-validity masks for the 3x3 halo taps.
    row_ok = {-1: pidx >= W, 0: None, 1: pidx < (H - 1) * W}
    col_ok = {-1: w_f >= 0.5, 0: None, 1: w_f < float(W) - 1.5}

    # ---- per-input-channel slabs: activations, pooled maps, hoisted 3x3 taps ---
    xc, xh_b, xw_b, taps = [], [], [], []
    for ci in range(Cg):
        v = x_ref[:, ci, :].astype(jnp.float32)                      # [Gb, HW]
        xc.append(v)

        # mean over H (stride-W strata), broadcast back over H: cyclic butterfly.
        t = v
        if H & (H - 1) == 0:
            s = W
            while s < H * W:
                t = t + lane_roll(t, s)
                s *= 2
        else:
            t = _tree_sum([v] + [lane_roll(v, k * W) for k in range(1, H)])
        xw_b.append(t * inv_h)

        # mean over W (within-row segments), broadcast back over W.
        t = v
        if W & (W - 1) == 0:
            s = 1
            while s < W:
                t = t + seg_roll(t, s)
                s *= 2
        else:
            t = _tree_sum([v] + [seg_roll(v, k) for k in range(1, W)])
        xh_b.append(t * inv_w)

        # 9 shifted + edge-masked taps for the 3x3 conv (hoisted out of the co loop).
        tci = []
        for dh in (-1, 0, 1):
            for dw in (-1, 0, 1):
                off = dh * W + dw
                tap = v if off == 0 else lane_roll(v, off)
                m = row_ok[dh]
                if col_ok[dw] is not None:
                    m = col_ok[dw] if m is None else jnp.logical_and(m, col_ok[dw])
                if m is not None:
                    tap = jnp.where(m, tap, 0.0)
                tci.append(tap)
        taps.append(tci)

    # ---- per-output-channel: 1x1-conv gates, GroupNorm, 3x3 conv ----------------
    m1, m2 = [], []
    for co in range(Cg):
        # Shared 1x1 conv on the pooled descriptors, evaluated on the broadcast
        # maps (identical values per pixel; scalar-weight VPU MACs, tree-summed).
        th = _tree_sum([w1_ref[co * Cg + ci] * xh_b[ci] for ci in range(Cg)])
        tw = _tree_sum([w1_ref[co * Cg + ci] * xw_b[ci] for ci in range(Cg)])
        gate = jax.nn.sigmoid(th + b1_ref[co]) * jax.nn.sigmoid(tw + b1_ref[co])

        # Per-channel GroupNorm (num_groups == num_channels): one-pass statistics.
        g_in = xc[co] * gate                                         # [Gb, HW]
        mu = jnp.sum(g_in, axis=-1, keepdims=True) * inv_hw          # [Gb, 1]
        ex2 = jnp.sum(g_in * g_in, axis=-1, keepdims=True) * inv_hw
        var = jnp.maximum(ex2 - mu * mu, 0.0)
        x1_c = (g_in - mu) * jax.lax.rsqrt(var + eps) * gnw_ref[co] + gnb_ref[co]
        x1_scr[co] = x1_c
        m1.append(jnp.sum(x1_c, axis=-1, keepdims=True) * inv_hw)

        # 3x3 conv: scalar-weight MACs over the hoisted taps, tree-summed per ci.
        parts = []
        for ci in range(Cg):
            base = (co * Cg + ci) * 9
            parts.append(_tree_sum([w3_ref[base + k] * taps[ci][k] for k in range(9)]))
        x2_c = _tree_sum(parts) + b3_ref[co]
        x2_scr[co] = x2_c
        m2.append(jnp.sum(x2_c, axis=-1, keepdims=True) * inv_hw)

    # ---- channel softmaxes of the pooled descriptors ([Gb,1] per channel) -------
    def _softmax(vals):
        mx = vals[0]
        for v in vals[1:]:
            mx = jnp.maximum(mx, v)
        es = [jnp.exp(v - mx) for v in vals]
        inv = 1.0 / _tree_sum(es)
        return [e * inv for e in es]

    a1 = _softmax(m1)    # applied to x2
    a2 = _softmax(m2)    # applied to x1

    wmap = _tree_sum([a1[c] * x2_scr[c] + a2[c] * x1_scr[c] for c in range(Cg)])
    sig = jax.nn.sigmoid(wmap)                                       # [Gb, HW]

    # Lane-dense, unmasked full-block store.
    o_ref[...] = (x_ref[...].astype(jnp.float32) * sig[:, None, :]).astype(o_ref.dtype)


def ema_forward(x, params, *, factor, eps=1e-5, target_block_bytes=512 * 1024):
    """EMA forward pass. x: [B, C, H, W] (NCHW, like the PyTorch module)."""
    w1, b1, w3, b3, gn_w, gn_b = params
    B, C, H, W = x.shape
    G = factor
    assert C % G == 0 and C // G > 0
    Cg = C // G
    BG = B * G
    HW = H * W

    # [B,C,H,W] -> [B*G, Cg, H*W]: free reshape (contiguous dims merge), no pad,
    # no transpose — HBM traffic is exactly one read + one write of x.
    xg = x.reshape(BG, Cg, HW)

    # Batch Gb group instances per grid step: large enough to amortize the ~0.35us
    # per-step overhead, small enough to leave scoped-VMEM headroom, and keep the
    # grid >= 2 when possible so both v7x TensorCores get a "parallel" shard.
    bytes_per_group = Cg * HW * x.dtype.itemsize
    gb_cap = max(1, target_block_bytes // max(1, bytes_per_group))
    divisors = [d for d in range(1, BG + 1) if BG % d == 0 and d <= gb_cap]
    pref = [d for d in divisors if BG // d >= 2]
    Gb = max(pref) if pref else max(divisors)

    w1_flat = w1.reshape(Cg * Cg).astype(jnp.float32)       # OIHW [o,i,1,1] -> (o,i)
    w3_flat = w3.reshape(Cg * Cg * 9).astype(jnp.float32)   # OIHW [o,i,3,3] row-major
    b1f = b1.astype(jnp.float32)
    b3f = b3.astype(jnp.float32)
    gnw = gn_w.astype(jnp.float32)
    gnb = gn_b.astype(jnp.float32)

    smem = pl.BlockSpec(memory_space=pltpu.MemorySpace.SMEM)
    out = pl.pallas_call(
        functools.partial(_ema_block_kernel, H=H, W=W, eps=eps),
        out_shape=jax.ShapeDtypeStruct((BG, Cg, HW), x.dtype),
        grid=(BG // Gb,),
        in_specs=[
            pl.BlockSpec((Gb, Cg, HW), lambda g: (g, 0, 0)),
            smem, smem, smem, smem, smem, smem,
        ],
        out_specs=pl.BlockSpec((Gb, Cg, HW), lambda g: (g, 0, 0)),
        scratch_shapes=[
            pltpu.VMEM((Cg, Gb, HW), jnp.float32),   # x1: GroupNorm'd gated features
            pltpu.VMEM((Cg, Gb, HW), jnp.float32),   # x2: 3x3-conv features
        ],
        compiler_params=pltpu.CompilerParams(
            dimension_semantics=("parallel",),
        ),
    )(xg, w1_flat, b1f, w3_flat, b3f, gnw, gnb)

    return out.reshape(B, C, H, W)


def _ema_reference(x, params, *, factor, eps=1e-5):
    """Pure-JAX reference mirroring the PyTorch EMA.forward."""
    w1, b1, w3, b3, gn_w, gn_b = params
    B, C, H, W = x.shape
    G = factor
    Cg = C // G
    gx = x.reshape(B * G, Cg, H, W)

    x_h = jnp.mean(gx, axis=3, keepdims=True)                        # [BG,Cg,H,1]
    x_w = jnp.mean(gx, axis=2, keepdims=True)                        # [BG,Cg,1,W]
    cat = jnp.concatenate([x_h, jnp.transpose(x_w, (0, 1, 3, 2))], axis=2)
    hw = jnp.einsum('oc,bcsk->bosk', w1.reshape(Cg, Cg), cat,
                    precision=jax.lax.Precision.HIGHEST) + b1[None, :, None, None]
    h_part = hw[:, :, :H, :]                                         # [BG,Cg,H,1]
    w_part = jnp.transpose(hw[:, :, H:, :], (0, 1, 3, 2))            # [BG,Cg,1,W]

    gated = gx * jax.nn.sigmoid(h_part) * jax.nn.sigmoid(w_part)
    mu = jnp.mean(gated, axis=(2, 3), keepdims=True)
    var = jnp.mean((gated - mu) ** 2, axis=(2, 3), keepdims=True)
    x1 = (gated - mu) / jnp.sqrt(var + eps) * gn_w[None, :, None, None] \
         + gn_b[None, :, None, None]

    x2 = jax.lax.conv_general_dilated(
        gx, w3, window_strides=(1, 1), padding=((1, 1), (1, 1)),
        dimension_numbers=("NCHW", "OIHW", "NCHW"),
        precision=jax.lax.Precision.HIGHEST,
    ) + b3[None, :, None, None]

    a1 = jax.nn.softmax(jnp.mean(x1, axis=(2, 3)), axis=-1)          # [BG,Cg]
    a2 = jax.nn.softmax(jnp.mean(x2, axis=(2, 3)), axis=-1)          # [BG,Cg]
    wmap = (jnp.einsum('bc,bchw->bhw', a1, x2, precision=jax.lax.Precision.HIGHEST)
            + jnp.einsum('bc,bchw->bhw', a2, x1, precision=jax.lax.Precision.HIGHEST))
    out = gx * jax.nn.sigmoid(wmap)[:, None, :, :]
    return out.reshape(B, C, H, W)


if __name__ == "__main__":
    # Small deterministic config: B=2, C=16, H=W=16, factor=4 -> Cg=4, B*G=8, HW=256.
    B, C, H, W = 2, 16, 16, 16
    factor = 4
    Cg = C // factor

    key = jax.random.PRNGKey(0)
    kx, k1, k2, k3, k4, k5, k6 = jax.random.split(key, 7)

    x = jax.random.normal(kx, (B, C, H, W), dtype=jnp.float32)
    w1 = jax.random.normal(k1, (Cg, Cg, 1, 1), dtype=jnp.float32) * 0.3
    b1 = jax.random.normal(k2, (Cg,), dtype=jnp.float32) * 0.1
    w3 = jax.random.normal(k3, (Cg, Cg, 3, 3), dtype=jnp.float32) * 0.1
    b3 = jax.random.normal(k4, (Cg,), dtype=jnp.float32) * 0.1
    gn_w = 0.5 + jax.random.uniform(k5, (Cg,), dtype=jnp.float32)
    gn_b = jax.random.normal(k6, (Cg,), dtype=jnp.float32) * 0.1

    params = (w1, b1, w3, b3, gn_w, gn_b)

    out = ema_forward(x, params, factor=factor)
    out = jax.block_until_ready(out)

    ref = _ema_reference(x, params, factor=factor)
    assert out.shape == (B, C, H, W), out.shape
    max_err = float(jnp.max(jnp.abs(out - ref)))
    assert jnp.allclose(out, ref, atol=1e-3, rtol=1e-3), f"mismatch, max err {max_err}"

    print("KERNEL_OK")
</pallas_src>

<mosaic_0001>
module attributes {stable_mosaic.version = 11 : i64} {
  func.func @_ema_block_kernel(%arg0: i32, %arg1: memref<4x4x256xf32, #tpu.memory_space<vmem>>, %arg2: memref<16xf32, #tpu.memory_space<smem>>, %arg3: memref<4xf32, #tpu.memory_space<smem>>, %arg4: memref<144xf32, #tpu.memory_space<smem>>, %arg5: memref<4xf32, #tpu.memory_space<smem>>, %arg6: memref<4xf32, #tpu.memory_space<smem>>, %arg7: memref<4xf32, #tpu.memory_space<smem>>, %arg8: memref<4x4x256xf32, #tpu.memory_space<vmem>>, %arg9: memref<4x4x256xf32, #tpu.memory_space<vmem>>, %arg10: memref<4x4x256xf32, #tpu.memory_space<vmem>>) attributes {dimension_semantics = [#tpu.dimension_semantics<parallel>], iteration_bounds = array<i64: 2>, scalar_prefetch = 0 : i64, scratch_operands = 2 : i64, tpu.core_type = #tpu.core_type<tc>, window_params = [{transform_indices = @transform_0, window_bounds = array<i64: 4, 4, 256>}, {transform_indices = @transform_1, window_bounds = array<i64: 16>}, {transform_indices = @transform_2, window_bounds = array<i64: 4>}, {transform_indices = @transform_3, window_bounds = array<i64: 144>}, {transform_indices = @transform_4, window_bounds = array<i64: 4>}, {transform_indices = @transform_5, window_bounds = array<i64: 4>}, {transform_indices = @transform_6, window_bounds = array<i64: 4>}, {transform_indices = @transform_7, window_bounds = array<i64: 4, 4, 256>}]} {
    %0 = tpu.iota {dimensions = array<i32: 1>} : vector<1x256xi32>
    %1 = arith.sitofp %0 : vector<1x256xi32> to vector<1x256xf32>
    %cst = arith.constant 5.000000e-01 : f32
    %2 = vector.broadcast %cst : f32 to vector<1x256xf32>
    %3 = arith.addf %1, %2 : vector<1x256xf32>
    %cst_0 = arith.constant 6.250000e-02 : f32
    %4 = vector.broadcast %cst_0 : f32 to vector<1x256xf32>
    %5 = arith.mulf %3, %4 : vector<1x256xf32>
    %6 = math.floor %5 : vector<1x256xf32>
    %cst_1 = arith.constant 1.600000e+01 : f32
    %7 = vector.broadcast %cst_1 : f32 to vector<1x256xf32>
    %8 = arith.mulf %7, %6 : vector<1x256xf32>
    %9 = arith.subf %1, %8 : vector<1x256xf32>
    %c16_i32 = arith.constant 16 : i32
    %10 = vector.broadcast %c16_i32 : i32 to vector<1x256xi32>
    %11 = arith.cmpi sge, %0, %10 : vector<1x256xi32>
    %c240_i32 = arith.constant 240 : i32
    %12 = vector.broadcast %c240_i32 : i32 to vector<1x256xi32>
    %13 = arith.cmpi slt, %0, %12 : vector<1x256xi32>
    %cst_2 = arith.constant 5.000000e-01 : f32
    %14 = vector.broadcast %cst_2 : f32 to vector<1x256xf32>
    %15 = arith.cmpf oge, %9, %14 : vector<1x256xf32>
    %cst_3 = arith.constant 1.450000e+01 : f32
    %16 = vector.broadcast %cst_3 : f32 to vector<1x256xf32>
    %17 = arith.cmpf olt, %9, %16 : vector<1x256xf32>
    %c0 = arith.constant 0 : index
    %c0_4 = arith.constant 0 : index
    %c0_5 = arith.constant 0 : index
    %18 = vector.load %arg1[%c0, %c0_4, %c0_5] : memref<4x4x256xf32, #tpu.memory_space<vmem>>, vector<4x1x256xf32>
    %19 = vector.shape_cast %18 : vector<4x1x256xf32> to vector<4x256xf32>
    %c240_i32_6 = arith.constant 240 : i32
    %20 = tpu.dynamic_rotate %19 by %c240_i32_6 dim 1 : vector<4x256xf32>, i32 -> vector<4x256xf32>
    %21 = arith.addf %19, %20 : vector<4x256xf32>
    %c224_i32 = arith.constant 224 : i32
    %22 = tpu.dynamic_rotate %21 by %c224_i32 dim 1 : vector<4x256xf32>, i32 -> vector<4x256xf32>
    %23 = arith.addf %21, %22 : vector<4x256xf32>
    %c192_i32 = arith.constant 192 : i32
    %24 = tpu.dynamic_rotate %23 by %c192_i32 dim 1 : vector<4x256xf32>, i32 -> vector<4x256xf32>
    %25 = arith.addf %23, %24 : vector<4x256xf32>
    %c128_i32 = arith.constant 128 : i32
    %26 = tpu.dynamic_rotate %25 by %c128_i32 dim 1 : vector<4x256xf32>, i32 -> vector<4x256xf32>
    %27 = arith.addf %25, %26 : vector<4x256xf32>
    %cst_7 = arith.constant 6.250000e-02 : f32
    %28 = vector.broadcast %cst_7 : f32 to vector<4x256xf32>
    %29 = arith.mulf %27, %28 : vector<4x256xf32>
    %c255_i32 = arith.constant 255 : i32
    %30 = tpu.dynamic_rotate %19 by %c255_i32 dim 1 : vector<4x256xf32>, i32 -> vector<4x256xf32>
    %c15_i32 = arith.constant 15 : i32
    %31 = tpu.dynamic_rotate %19 by %c15_i32 dim 1 : vector<4x256xf32>, i32 -> vector<4x256xf32>
    %cst_8 = arith.constant 1.500000e+01 : f32
    %32 = vector.broadcast %cst_8 : f32 to vector<1x256xf32>
    %33 = arith.cmpf olt, %9, %32 : vector<1x256xf32>
    %34 = vector.shape_cast %33 : vector<1x256xi1> to vector<1x256xi1>
    %35 = vector.broadcast %34 : vector<1x256xi1> to vector<4x256xi1>
    %36 = arith.select %35, %30, %31 : vector<4x256xi1>, vector<4x256xf32>
    %37 = arith.addf %19, %36 : vector<4x256xf32>
    %c254_i32 = arith.constant 254 : i32
    %38 = tpu.dynamic_rotate %37 by %c254_i32 dim 1 : vector<4x256xf32>, i32 -> vector<4x256xf32>
    %c14_i32 = arith.constant 14 : i32
    %39 = tpu.dynamic_rotate %37 by %c14_i32 dim 1 : vector<4x256xf32>, i32 -> vector<4x256xf32>
    %cst_9 = arith.constant 1.400000e+01 : f32
    %40 = vector.broadcast %cst_9 : f32 to vector<1x256xf32>
    %41 = arith.cmpf olt, %9, %40 : vector<1x256xf32>
    %42 = vector.shape_cast %41 : vector<1x256xi1> to vector<1x256xi1>
    %43 = vector.broadcast %42 : vector<1x256xi1> to vector<4x256xi1>
    %44 = arith.select %43, %38, %39 : vector<4x256xi1>, vector<4x256xf32>
    %45 = arith.addf %37, %44 : vector<4x256xf32>
    %c252_i32 = arith.constant 252 : i32
    %46 = tpu.dynamic_rotate %45 by %c252_i32 dim 1 : vector<4x256xf32>, i32 -> vector<4x256xf32>
    %c12_i32 = arith.constant 12 : i32
    %47 = tpu.dynamic_rotate %45 by %c12_i32 dim 1 : vector<4x256xf32>, i32 -> vector<4x256xf32>
    %cst_10 = arith.constant 1.200000e+01 : f32
    %48 = vector.broadcast %cst_10 : f32 to vector<1x256xf32>
    %49 = arith.cmpf olt, %9, %48 : vector<1x256xf32>
    %50 = vector.shape_cast %49 : vector<1x256xi1> to vector<1x256xi1>
    %51 = vector.broadcast %50 : vector<1x256xi1> to vector<4x256xi1>
    %52 = arith.select %51, %46, %47 : vector<4x256xi1>, vector<4x256xf32>
    %53 = arith.addf %45, %52 : vector<4x256xf32>
    %c248_i32 = arith.constant 248 : i32
    %54 = tpu.dynamic_rotate %53 by %c248_i32 dim 1 : vector<4x256xf32>, i32 -> vector<4x256xf32>
    %c8_i32 = arith.constant 8 : i32
    %55 = tpu.dynamic_rotate %53 by %c8_i32 dim 1 : vector<4x256xf32>, i32 -> vector<4x256xf32>
    %cst_11 = arith.constant 8.000000e+00 : f32
    %56 = vector.broadcast %cst_11 : f32 to vector<1x256xf32>
    %57 = arith.cmpf olt, %9, %56 : vector<1x256xf32>
    %58 = vector.shape_cast %57 : vector<1x256xi1> to vector<1x256xi1>
    %59 = vector.broadcast %58 : vector<1x256xi1> to vector<4x256xi1>
    %60 = arith.select %59, %54, %55 : vector<4x256xi1>, vector<4x256xf32>
    %61 = arith.addf %53, %60 : vector<4x256xf32>
    %cst_12 = arith.constant 6.250000e-02 : f32
    %62 = vector.broadcast %cst_12 : f32 to vector<4x256xf32>
    %63 = arith.mulf %61, %62 : vector<4x256xf32>
    %c17_i32 = arith.constant 17 : i32
    %64 = tpu.dynamic_rotate %19 by %c17_i32 dim 1 : vector<4x256xf32>, i32 -> vector<4x256xf32>
    %65 = arith.andi %11, %15 : vector<1x256xi1>
    %cst_13 = arith.constant 0.000000e+00 : f32
    %66 = vector.shape_cast %65 : vector<1x256xi1> to vector<1x256xi1>
    %67 = vector.broadcast %66 : vector<1x256xi1> to vector<4x256xi1>
    %68 = vector.broadcast %cst_13 : f32 to vector<4x256xf32>
    %69 = arith.select %67, %64, %68 : vector<4x256xi1>, vector<4x256xf32>
    %c16_i32_14 = arith.constant 16 : i32
    %70 = tpu.dynamic_rotate %19 by %c16_i32_14 dim 1 : vector<4x256xf32>, i32 -> vector<4x256xf32>
    %cst_15 = arith.constant 0.000000e+00 : f32
    %71 = vector.shape_cast %11 : vector<1x256xi1> to vector<1x256xi1>
    %72 = vector.broadcast %71 : vector<1x256xi1> to vector<4x256xi1>
    %73 = vector.broadcast %cst_15 : f32 to vector<4x256xf32>
    %74 = arith.select %72, %70, %73 : vector<4x256xi1>, vector<4x256xf32>
    %c15_i32_16 = arith.constant 15 : i32
    %75 = tpu.dynamic_rotate %19 by %c15_i32_16 dim 1 : vector<4x256xf32>, i32 -> vector<4x256xf32>
    %76 = arith.andi %11, %17 : vector<1x256xi1>
    %cst_17 = arith.constant 0.000000e+00 : f32
    %77 = vector.shape_cast %76 : vector<1x256xi1> to vector<1x256xi1>
    %78 = vector.broadcast %77 : vector<1x256xi1> to vector<4x256xi1>
    %79 = vector.broadcast %cst_17 : f32 to vector<4x256xf32>
    %80 = arith.select %78, %75, %79 : vector<4x256xi1>, vector<4x256xf32>
    %c1_i32 = arith.constant 1 : i32
    %81 = tpu.dynamic_rotate %19 by %c1_i32 dim 1 : vector<4x256xf32>, i32 -> vector<4x256xf32>
    %cst_18 = arith.constant 0.000000e+00 : f32
    %82 = vector.shape_cast %15 : vector<1x256xi1> to vector<1x256xi1>
    %83 = vector.broadcast %82 : vector<1x256xi1> to vector<4x256xi1>
    %84 = vector.broadcast %cst_18 : f32 to vector<4x256xf32>
    %85 = arith.select %83, %81, %84 : vector<4x256xi1>, vector<4x256xf32>
    %c255_i32_19 = arith.constant 255 : i32
    %86 = tpu.dynamic_rotate %19 by %c255_i32_19 dim 1 : vector<4x256xf32>, i32 -> vector<4x256xf32>
    %cst_20 = arith.constant 0.000000e+00 : f32
    %87 = vector.shape_cast %17 : vector<1x256xi1> to vector<1x256xi1>
    %88 = vector.broadcast %87 : vector<1x256xi1> to vector<4x256xi1>
    %89 = vector.broadcast %cst_20 : f32 to vector<4x256xf32>
    %90 = arith.select %88, %86, %89 : vector<4x256xi1>, vector<4x256xf32>
    %c241_i32 = arith.constant 241 : i32
    %91 = tpu.dynamic_rotate %19 by %c241_i32 dim 1 : vector<4x256xf32>, i32 -> vector<4x256xf32>
    %92 = arith.andi %13, %15 : vector<1x256xi1>
    %cst_21 = arith.constant 0.000000e+00 : f32
    %93 = vector.shape_cast %92 : vector<1x256xi1> to vector<1x256xi1>
    %94 = vector.broadcast %93 : vector<1x256xi1> to vector<4x256xi1>
    %95 = vector.broadcast %cst_21 : f32 to vector<4x256xf32>
    %96 = arith.select %94, %91, %95 : vector<4x256xi1>, vector<4x256xf32>
    %c240_i32_22 = arith.constant 240 : i32
    %97 = tpu.dynamic_rotate %19 by %c240_i32_22 dim 1 : vector<4x256xf32>, i32 -> vector<4x256xf32>
    %cst_23 = arith.constant 0.000000e+00 : f32
    %98 = vector.shape_cast %13 : vector<1x256xi1> to vector<1x256xi1>
    %99 = vector.broadcast %98 : vector<1x256xi1> to vector<4x256xi1>
    %100 = vector.broadcast %cst_23 : f32 to vector<4x256xf32>
    %101 = arith.select %99, %97, %100 : vector<4x256xi1>, vector<4x256xf32>
    %c239_i32 = arith.constant 239 : i32
    %102 = tpu.dynamic_rotate %19 by %c239_i32 dim 1 : vector<4x256xf32>, i32 -> vector<4x256xf32>
    %103 = arith.andi %13, %17 : vector<1x256xi1>
    %cst_24 = arith.constant 0.000000e+00 : f32
    %104 = vector.shape_cast %103 : vector<1x256xi1> to vector<1x256xi1>
    %105 = vector.broadcast %104 : vector<1x256xi1> to vector<4x256xi1>
    %106 = vector.broadcast %cst_24 : f32 to vector<4x256xf32>
    %107 = arith.select %105, %102, %106 : vector<4x256xi1>, vector<4x256xf32>
    %c0_25 = arith.constant 0 : index
    %c1 = arith.constant 1 : index
    %c0_26 = arith.constant 0 : index
    %108 = vector.load %arg1[%c0_25, %c1, %c0_26] : memref<4x4x256xf32, #tpu.memory_space<vmem>>, vector<4x1x256xf32>
    %109 = vector.shape_cast %108 : vector<4x1x256xf32> to vector<4x256xf32>
    %c240_i32_27 = arith.constant 240 : i32
    %110 = tpu.dynamic_rotate %109 by %c240_i32_27 dim 1 : vector<4x256xf32>, i32 -> vector<4x256xf32>
    %111 = arith.addf %109, %110 : vector<4x256xf32>
    %c224_i32_28 = arith.constant 224 : i32
    %112 = tpu.dynamic_rotate %111 by %c224_i32_28 dim 1 : vector<4x256xf32>, i32 -> vector<4x256xf32>
    %113 = arith.addf %111, %112 : vector<4x256xf32>
    %c192_i32_29 = arith.constant 192 : i32
    %114 = tpu.dynamic_rotate %113 by %c192_i32_29 dim 1 : vector<4x256xf32>, i32 -> vector<4x256xf32>
    %115 = arith.addf %113, %114 : vector<4x256xf32>
    %c128_i32_30 = arith.constant 128 : i32
    %116 = tpu.dynamic_rotate %115 by %c128_i32_30 dim 1 : vector<4x256xf32>, i32 -> vector<4x256xf32>
    %117 = arith.addf %115, %116 : vector<4x256xf32>
    %cst_31 = arith.constant 6.250000e-02 : f32
    %118 = vector.broadcast %cst_31 : f32 to vector<4x256xf32>
    %119 = arith.mulf %117, %118 : vector<4x256xf32>
    %c255_i32_32 = arith.constant 255 : i32
    %120 = tpu.dynamic_rotate %109 by %c255_i32_32 dim 1 : vector<4x256xf32>, i32 -> vector<4x256xf32>
    %c15_i32_33 = arith.constant 15 : i32
    %121 = tpu.dynamic_rotate %109 by %c15_i32_33 dim 1 : vector<4x256xf32>, i32 -> vector<4x256xf32>
    %cst_34 = arith.constant 1.500000e+01 : f32
    %122 = vector.broadcast %cst_34 : f32 to vector<1x256xf32>
    %123 = arith.cmpf olt, %9, %122 : vector<1x256xf32>
    %124 = vector.shape_cast %123 : vector<1x256xi1> to vector<1x256xi1>
    %125 = vector.broadcast %124 : vector<1x256xi1> to vector<4x256xi1>
    %126 = arith.select %125, %120, %121 : vector<4x256xi1>, vector<4x256xf32>
    %127 = arith.addf %109, %126 : vector<4x256xf32>
    %c254_i32_35 = arith.constant 254 : i32
    %128 = tpu.dynamic_rotate %127 by %c254_i32_35 dim 1 : vector<4x256xf32>, i32 -> vector<4x256xf32>
    %c14_i32_36 = arith.constant 14 : i32
    %129 = tpu.dynamic_rotate %127 by %c14_i32_36 dim 1 : vector<4x256xf32>, i32 -> vector<4x256xf32>
    %cst_37 = arith.constant 1.400000e+01 : f32
    %130 = vector.broadcast %cst_37 : f32 to vector<1x256xf32>
    %131 = arith.cmpf olt, %9, %130 : vector<1x256xf32>
    %132 = vector.shape_cast %131 : vector<1x256xi1> to vector<1x256xi1>
    %133 = vector.broadcast %132 : vector<1x256xi1> to vector<4x256xi1>
    %134 = arith.select %133, %128, %129 : vector<4x256xi1>, vector<4x256xf32>
    %135 = arith.addf %127, %134 : vector<4x256xf32>
    %c252_i32_38 = arith.constant 252 : i32
    %136 = tpu.dynamic_rotate %135 by %c252_i32_38 dim 1 : vector<4x256xf32>, i32 -> vector<4x256xf32>
    %c12_i32_39 = arith.constant 12 : i32
    %137 = tpu.dynamic_rotate %135 by %c12_i32_39 dim 1 : vector<4x256xf32>, i32 -> vector<4x256xf32>
    %cst_40 = arith.constant 1.200000e+01 : f32
    %138 = vector.broadcast %cst_40 : f32 to vector<1x256xf32>
    %139 = arith.cmpf olt, %9, %138 : vector<1x256xf32>
    %140 = vector.shape_cast %139 : vector<1x256xi1> to vector<1x256xi1>
    %141 = vector.broadcast %140 : vector<1x256xi1> to vector<4x256xi1>
    %142 = arith.select %141, %136, %137 : vector<4x256xi1>, vector<4x256xf32>
    %143 = arith.addf %135, %142 : vector<4x256xf32>
    %c248_i32_41 = arith.constant 248 : i32
    %144 = tpu.dynamic_rotate %143 by %c248_i32_41 dim 1 : vector<4x256xf32>, i32 -> vector<4x256xf32>
    %c8_i32_42 = arith.constant 8 : i32
    %145 = tpu.dynamic_rotate %143 by %c8_i32_42 dim 1 : vector<4x256xf32>, i32 -> vector<4x256xf32>
    %cst_43 = arith.constant 8.000000e+00 : f32
    %146 = vector.broadcast %cst_43 : f32 to vector<1x256xf32>
    %147 = arith.cmpf olt, %9, %146 : vector<1x256xf32>
    %148 = vector.shape_cast %147 : vector<1x256xi1> to vector<1x256xi1>
    %149 = vector.broadcast %148 : vector<1x256xi1> to vector<4x256xi1>
    %150 = arith.select %149, %144, %145 : vector<4x256xi1>, vector<4x256xf32>
    %151 = arith.addf %143, %150 : vector<4x256xf32>
    %cst_44 = arith.constant 6.250000e-02 : f32
    %152 = vector.broadcast %cst_44 : f32 to vector<4x256xf32>
    %153 = arith.mulf %151, %152 : vector<4x256xf32>
    %c17_i32_45 = arith.constant 17 : i32
    %154 = tpu.dynamic_rotate %109 by %c17_i32_45 dim 1 : vector<4x256xf32>, i32 -> vector<4x256xf32>
    %155 = arith.andi %11, %15 : vector<1x256xi1>
    %cst_46 = arith.constant 0.000000e+00 : f32
    %156 = vector.shape_cast %155 : vector<1x256xi1> to vector<1x256xi1>
    %157 = vector.broadcast %156 : vector<1x256xi1> to vector<4x256xi1>
    %158 = vector.broadcast %cst_46 : f32 to vector<4x256xf32>
    %159 = arith.select %157, %154, %158 : vector<4x256xi1>, vector<4x256xf32>
    %c16_i32_47 = arith.constant 16 : i32
    %160 = tpu.dynamic_rotate %109 by %c16_i32_47 dim 1 : vector<4x256xf32>, i32 -> vector<4x256xf32>
    %cst_48 = arith.constant 0.000000e+00 : f32
    %161 = vector.shape_cast %11 : vector<1x256xi1> to vector<1x256xi1>
    %162 = vector.broadcast %161 : vector<1x256xi1> to vector<4x256xi1>
    %163 = vector.broadcast %cst_48 : f32 to vector<4x256xf32>
    %164 = arith.select %162, %160, %163 : vector<4x256xi1>, vector<4x256xf32>
    %c15_i32_49 = arith.constant 15 : i32
    %165 = tpu.dynamic_rotate %109 by %c15_i32_49 dim 1 : vector<4x256xf32>, i32 -> vector<4x256xf32>
    %166 = arith.andi %11, %17 : vector<1x256xi1>
    %cst_50 = arith.constant 0.000000e+00 : f32
    %167 = vector.shape_cast %166 : vector<1x256xi1> to vector<1x256xi1>
    %168 = vector.broadcast %167 : vector<1x256xi1> to vector<4x256xi1>
    %169 = vector.broadcast %cst_50 : f32 to vector<4x256xf32>
    %170 = arith.select %168, %165, %169 : vector<4x256xi1>, vector<4x256xf32>
    %c1_i32_51 = arith.constant 1 : i32
    %171 = tpu.dynamic_rotate %109 by %c1_i32_51 dim 1 : vector<4x256xf32>, i32 -> vector<4x256xf32>
    %cst_52 = arith.constant 0.000000e+00 : f32
    %172 = vector.shape_cast %15 : vector<1x256xi1> to vector<1x256xi1>
    %173 = vector.broadcast %172 : vector<1x256xi1> to vector<4x256xi1>
    %174 = vector.broadcast %cst_52 : f32 to vector<4x256xf32>
    %175 = arith.select %173, %171, %174 : vector<4x256xi1>, vector<4x256xf32>
    %c255_i32_53 = arith.constant 255 : i32
    %176 = tpu.dynamic_rotate %109 by %c255_i32_53 dim 1 : vector<4x256xf32>, i32 -> vector<4x256xf32>
    %cst_54 = arith.constant 0.000000e+00 : f32
    %177 = vector.shape_cast %17 : vector<1x256xi1> to vector<1x256xi1>
    %178 = vector.broadcast %177 : vector<1x256xi1> to vector<4x256xi1>
    %179 = vector.broadcast %cst_54 : f32 to vector<4x256xf32>
    %180 = arith.select %178, %176, %179 : vector<4x256xi1>, vector<4x256xf32>
    %c241_i32_55 = arith.constant 241 : i32
    %181 = tpu.dynamic_rotate %109 by %c241_i32_55 dim 1 : vector<4x256xf32>, i32 -> vector<4x256xf32>
    %182 = arith.andi %13, %15 : vector<1x256xi1>
    %cst_56 = arith.constant 0.000000e+00 : f32
    %183 = vector.shape_cast %182 : vector<1x256xi1> to vector<1x256xi1>
    %184 = vector.broadcast %183 : vector<1x256xi1> to vector<4x256xi1>
    %185 = vector.broadcast %cst_56 : f32 to vector<4x256xf32>
    %186 = arith.select %184, %181, %185 : vector<4x256xi1>, vector<4x256xf32>
    %c240_i32_57 = arith.constant 240 : i32
    %187 = tpu.dynamic_rotate %109 by %c240_i32_57 dim 1 : vector<4x256xf32>, i32 -> vector<4x256xf32>
    %cst_58 = arith.constant 0.000000e+00 : f32
    %188 = vector.shape_cast %13 : vector<1x256xi1> to vector<1x256xi1>
    %189 = vector.broadcast %188 : vector<1x256xi1> to vector<4x256xi1>
    %190 = vector.broadcast %cst_58 : f32 to vector<4x256xf32>
    %191 = arith.select %189, %187, %190 : vector<4x256xi1>, vector<4x256xf32>
    %c239_i32_59 = arith.constant 239 : i32
    %192 = tpu.dynamic_rotate %109 by %c239_i32_59 dim 1 : vector<4x256xf32>, i32 -> vector<4x256xf32>
    %193 = arith.andi %13, %17 : vector<1x256xi1>
    %cst_60 = arith.constant 0.000000e+00 : f32
    %194 = vector.shape_cast %193 : vector<1x256xi1> to vector<1x256xi1>
    %195 = vector.broadcast %194 : vector<1x256xi1> to vector<4x256xi1>
    %196 = vector.broadcast %cst_60 : f32 to vector<4x256xf32>
    %197 = arith.select %195, %192, %196 : vector<4x256xi1>, vector<4x256xf32>
    %c0_61 = arith.constant 0 : index
    %c2 = arith.constant 2 : index
    %c0_62 = arith.constant 0 : index
    %198 = vector.load %arg1[%c0_61, %c2, %c0_62] : memref<4x4x256xf32, #tpu.memory_space<vmem>>, vector<4x1x256xf32>
    %199 = vector.shape_cast %198 : vector<4x1x256xf32> to vector<4x256xf32>
    %c240_i32_63 = arith.constant 240 : i32
    %200 = tpu.dynamic_rotate %199 by %c240_i32_63 dim 1 : vector<4x256xf32>, i32 -> vector<4x256xf32>
    %201 = arith.addf %199, %200 : vector<4x256xf32>
    %c224_i32_64 = arith.constant 224 : i32
    %202 = tpu.dynamic_rotate %201 by %c224_i32_64 dim 1 : vector<4x256xf32>, i32 -> vector<4x256xf32>
    %203 = arith.addf %201, %202 : vector<4x256xf32>
    %c192_i32_65 = arith.constant 192 : i32
    %204 = tpu.dynamic_rotate %203 by %c192_i32_65 dim 1 : vector<4x256xf32>, i32 -> vector<4x256xf32>
    %205 = arith.addf %203, %204 : vector<4x256xf32>
    %c128_i32_66 = arith.constant 128 : i32
    %206 = tpu.dynamic_rotate %205 by %c128_i32_66 dim 1 : vector<4x256xf32>, i32 -> vector<4x256xf32>
    %207 = arith.addf %205, %206 : vector<4x256xf32>
    %cst_67 = arith.constant 6.250000e-02 : f32
    %208 = vector.broadcast %cst_67 : f32 to vector<4x256xf32>
    %209 = arith.mulf %207, %208 : vector<4x256xf32>
    %c255_i32_68 = arith.constant 255 : i32
    %210 = tpu.dynamic_rotate %199 by %c255_i32_68 dim 1 : vector<4x256xf32>, i32 -> vector<4x256xf32>
    %c15_i32_69 = arith.constant 15 : i32
    %211 = tpu.dynamic_rotate %199 by %c15_i32_69 dim 1 : vector<4x256xf32>, i32 -> vector<4x256xf32>
    %cst_70 = arith.constant 1.500000e+01 : f32
    %212 = vector.broadcast %cst_70 : f32 to vector<1x256xf32>
    %213 = arith.cmpf olt, %9, %212 : vector<1x256xf32>
    %214 = vector.shape_cast %213 : vector<1x256xi1> to vector<1x256xi1>
    %215 = vector.broadcast %214 : vector<1x256xi1> to vector<4x256xi1>
    %216 = arith.select %215, %210, %211 : vector<4x256xi1>, vector<4x256xf32>
    %217 = arith.addf %199, %216 : vector<4x256xf32>
    %c254_i32_71 = arith.constant 254 : i32
    %218 = tpu.dynamic_rotate %217 by %c254_i32_71 dim 1 : vector<4x256xf32>, i32 -> vector<4x256xf32>
    %c14_i32_72 = arith.constant 14 : i32
    %219 = tpu.dynamic_rotate %217 by %c14_i32_72 dim 1 : vector<4x256xf32>, i32 -> vector<4x256xf32>
    %cst_73 = arith.constant 1.400000e+01 : f32
    %220 = vector.broadcast %cst_73 : f32 to vector<1x256xf32>
    %221 = arith.cmpf olt, %9, %220 : vector<1x256xf32>
    %222 = vector.shape_cast %221 : vector<1x256xi1> to vector<1x256xi1>
    %223 = vector.broadcast %222 : vector<1x256xi1> to vector<4x256xi1>
    %224 = arith.select %223, %218, %219 : vector<4x256xi1>, vector<4x256xf32>
    %225 = arith.addf %217, %224 : vector<4x256xf32>
    %c252_i32_74 = arith.constant 252 : i32
    %226 = tpu.dynamic_rotate %225 by %c252_i32_74 dim 1 : vector<4x256xf32>, i32 -> vector<4x256xf32>
    %c12_i32_75 = arith.constant 12 : i32
    %227 = tpu.dynamic_rotate %225 by %c12_i32_75 dim 1 : vector<4x256xf32>, i32 -> vector<4x256xf32>
    %cst_76 = arith.constant 1.200000e+01 : f32
    %228 = vector.broadcast %cst_76 : f32 to vector<1x256xf32>
    %229 = arith.cmpf olt, %9, %228 : vector<1x256xf32>
    %230 = vector.shape_cast %229 : vector<1x256xi1> to vector<1x256xi1>
    %231 = vector.broadcast %230 : vector<1x256xi1> to vector<4x256xi1>
    %232 = arith.select %231, %226, %227 : vector<4x256xi1>, vector<4x256xf32>
    %233 = arith.addf %225, %232 : vector<4x256xf32>
    %c248_i32_77 = arith.constant 248 : i32
    %234 = tpu.dynamic_rotate %233 by %c248_i32_77 dim 1 : vector<4x256xf32>, i32 -> vector<4x256xf32>
    %c8_i32_78 = arith.constant 8 : i32
    %235 = tpu.dynamic_rotate %233 by %c8_i32_78 dim 1 : vector<4x256xf32>, i32 -> vector<4x256xf32>
    %cst_79 = arith.constant 8.000000e+00 : f32
    %236 = vector.broadcast %cst_79 : f32 to vector<1x256xf32>
    %237 = arith.cmpf olt, %9, %236 : vector<1x256xf32>
    %238 = vector.shape_cast %237 : vector<1x256xi1> to vector<1x256xi1>
    %239 = vector.broadcast %238 : vector<1x256xi1> to vector<4x256xi1>
    %240 = arith.select %239, %234, %235 : vector<4x256xi1>, vector<4x256xf32>
    %241 = arith.addf %233, %240 : vector<4x256xf32>
    %cst_80 = arith.constant 6.250000e-02 : f32
    %242 = vector.broadcast %cst_80 : f32 to vector<4x256xf32>
    %243 = arith.mulf %241, %242 : vector<4x256xf32>
    %c17_i32_81 = arith.constant 17 : i32
    %244 = tpu.dynamic_rotate %199 by %c17_i32_81 dim 1 : vector<4x256xf32>, i32 -> vector<4x256xf32>
    %245 = arith.andi %11, %15 : vector<1x256xi1>
    %cst_82 = arith.constant 0.000000e+00 : f32
    %246 = vector.shape_cast %245 : vector<1x256xi1> to vector<1x256xi1>
    %247 = vector.broadcast %246 : vector<1x256xi1> to vector<4x256xi1>
    %248 = vector.broadcast %cst_82 : f32 to vector<4x256xf32>
    %249 = arith.select %247, %244, %248 : vector<4x256xi1>, vector<4x256xf32>
    %c16_i32_83 = arith.constant 16 : i32
    %250 = tpu.dynamic_rotate %199 by %c16_i32_83 dim 1 : vector<4x256xf32>, i32 -> vector<4x256xf32>
    %cst_84 = arith.constant 0.000000e+00 : f32
    %251 = vector.shape_cast %11 : vector<1x256xi1> to vector<1x256xi1>
    %252 = vector.broadcast %251 : vector<1x256xi1> to vector<4x256xi1>
    %253 = vector.broadcast %cst_84 : f32 to vector<4x256xf32>
    %254 = arith.select %252, %250, %253 : vector<4x256xi1>, vector<4x256xf32>
    %c15_i32_85 = arith.constant 15 : i32
    %255 = tpu.dynamic_rotate %199 by %c15_i32_85 dim 1 : vector<4x256xf32>, i32 -> vector<4x256xf32>
    %256 = arith.andi %11, %17 : vector<1x256xi1>
    %cst_86 = arith.constant 0.000000e+00 : f32
    %257 = vector.shape_cast %256 : vector<1x256xi1> to vector<1x256xi1>
    %258 = vector.broadcast %257 : vector<1x256xi1> to vector<4x256xi1>
    %259 = vector.broadcast %cst_86 : f32 to vector<4x256xf32>
    %260 = arith.select %258, %255, %259 : vector<4x256xi1>, vector<4x256xf32>
    %c1_i32_87 = arith.constant 1 : i32
    %261 = tpu.dynamic_rotate %199 by %c1_i32_87 dim 1 : vector<4x256xf32>, i32 -> vector<4x256xf32>
    %cst_88 = arith.constant 0.000000e+00 : f32
    %262 = vector.shape_cast %15 : vector<1x256xi1> to vector<1x256xi1>
    %263 = vector.broadcast %262 : vector<1x256xi1> to vector<4x256xi1>
    %264 = vector.broadcast %cst_88 : f32 to vector<4x256xf32>
    %265 = arith.select %263, %261, %264 : vector<4x256xi1>, vector<4x256xf32>
    %c255_i32_89 = arith.constant 255 : i32
    %266 = tpu.dynamic_rotate %199 by %c255_i32_89 dim 1 : vector<4x256xf32>, i32 -> vector<4x256xf32>
    %cst_90 = arith.constant 0.000000e+00 : f32
    %267 = vector.shape_cast %17 : vector<1x256xi1> to vector<1x256xi1>
    %268 = vector.broadcast %267 : vector<1x256xi1> to vector<4x256xi1>
    %269 = vector.broadcast %cst_90 : f32 to vector<4x256xf32>
    %270 = arith.select %268, %266, %269 : vector<4x256xi1>, vector<4x256xf32>
    %c241_i32_91 = arith.constant 241 : i32
    %271 = tpu.dynamic_rotate %199 by %c241_i32_91 dim 1 : vector<4x256xf32>, i32 -> vector<4x256xf32>
    %272 = arith.andi %13, %15 : vector<1x256xi1>
    %cst_92 = arith.constant 0.000000e+00 : f32
    %273 = vector.shape_cast %272 : vector<1x256xi1> to vector<1x256xi1>
    %274 = vector.broadcast %273 : vector<1x256xi1> to vector<4x256xi1>
    %275 = vector.broadcast %cst_92 : f32 to vector<4x256xf32>
    %276 = arith.select %274, %271, %275 : vector<4x256xi1>, vector<4x256xf32>
    %c240_i32_93 = arith.constant 240 : i32
    %277 = tpu.dynamic_rotate %199 by %c240_i32_93 dim 1 : vector<4x256xf32>, i32 -> vector<4x256xf32>
    %cst_94 = arith.constant 0.000000e+00 : f32
    %278 = vector.shape_cast %13 : vector<1x256xi1> to vector<1x256xi1>
    %279 = vector.broadcast %278 : vector<1x256xi1> to vector<4x256xi1>
    %280 = vector.broadcast %cst_94 : f32 to vector<4x256xf32>
    %281 = arith.select %279, %277, %280 : vector<4x256xi1>, vector<4x256xf32>
    %c239_i32_95 = arith.constant 239 : i32
    %282 = tpu.dynamic_rotate %199 by %c239_i32_95 dim 1 : vector<4x256xf32>, i32 -> vector<4x256xf32>
    %283 = arith.andi %13, %17 : vector<1x256xi1>
    %cst_96 = arith.constant 0.000000e+00 : f32
    %284 = vector.shape_cast %283 : vector<1x256xi1> to vector<1x256xi1>
    %285 = vector.broadcast %284 : vector<1x256xi1> to vector<4x256xi1>
    %286 = vector.broadcast %cst_96 : f32 to vector<4x256xf32>
    %287 = arith.select %285, %282, %286 : vector<4x256xi1>, vector<4x256xf32>
    %c0_97 = arith.constant 0 : index
    %c3 = arith.constant 3 : index
    %c0_98 = arith.constant 0 : index
    %288 = vector.load %arg1[%c0_97, %c3, %c0_98] : memref<4x4x256xf32, #tpu.memory_space<vmem>>, vector<4x1x256xf32>
    %289 = vector.shape_cast %288 : vector<4x1x256xf32> to vector<4x256xf32>
    %c240_i32_99 = arith.constant 240 : i32
    %290 = tpu.dynamic_rotate %289 by %c240_i32_99 dim 1 : vector<4x256xf32>, i32 -> vector<4x256xf32>
    %291 = arith.addf %289, %290 : vector<4x256xf32>
    %c224_i32_100 = arith.constant 224 : i32
    %292 = tpu.dynamic_rotate %291 by %c224_i32_100 dim 1 : vector<4x256xf32>, i32 -> vector<4x256xf32>
    %293 = arith.addf %291, %292 : vector<4x256xf32>
    %c192_i32_101 = arith.constant 192 : i32
    %294 = tpu.dynamic_rotate %293 by %c192_i32_101 dim 1 : vector<4x256xf32>, i32 -> vector<4x256xf32>
    %295 = arith.addf %293, %294 : vector<4x256xf32>
    %c128_i32_102 = arith.constant 128 : i32
    %296 = tpu.dynamic_rotate %295 by %c128_i32_102 dim 1 : vector<4x256xf32>, i32 -> vector<4x256xf32>
    %297 = arith.addf %295, %296 : vector<4x256xf32>
    %cst_103 = arith.constant 6.250000e-02 : f32
    %298 = vector.broadcast %cst_103 : f32 to vector<4x256xf32>
    %299 = arith.mulf %297, %298 : vector<4x256xf32>
    %c255_i32_104 = arith.constant 255 : i32
    %300 = tpu.dynamic_rotate %289 by %c255_i32_104 dim 1 : vector<4x256xf32>, i32 -> vector<4x256xf32>
    %c15_i32_105 = arith.constant 15 : i32
    %301 = tpu.dynamic_rotate %289 by %c15_i32_105 dim 1 : vector<4x256xf32>, i32 -> vector<4x256xf32>
    %cst_106 = arith.constant 1.500000e+01 : f32
    %302 = vector.broadcast %cst_106 : f32 to vector<1x256xf32>
    %303 = arith.cmpf olt, %9, %302 : vector<1x256xf32>
    %304 = vector.shape_cast %303 : vector<1x256xi1> to vector<1x256xi1>
    %305 = vector.broadcast %304 : vector<1x256xi1> to vector<4x256xi1>
    %306 = arith.select %305, %300, %301 : vector<4x256xi1>, vector<4x256xf32>
    %307 = arith.addf %289, %306 : vector<4x256xf32>
    %c254_i32_107 = arith.constant 254 : i32
    %308 = tpu.dynamic_rotate %307 by %c254_i32_107 dim 1 : vector<4x256xf32>, i32 -> vector<4x256xf32>
    %c14_i32_108 = arith.constant 14 : i32
    %309 = tpu.dynamic_rotate %307 by %c14_i32_108 dim 1 : vector<4x256xf32>, i32 -> vector<4x256xf32>
    %cst_109 = arith.constant 1.400000e+01 : f32
    %310 = vector.broadcast %cst_109 : f32 to vector<1x256xf32>
    %311 = arith.cmpf olt, %9, %310 : vector<1x256xf32>
    %312 = vector.shape_cast %311 : vector<1x256xi1> to vector<1x256xi1>
    %313 = vector.broadcast %312 : vector<1x256xi1> to vector<4x256xi1>
    %314 = arith.select %313, %308, %309 : vector<4x256xi1>, vector<4x256xf32>
    %315 = arith.addf %307, %314 : vector<4x256xf32>
    %c252_i32_110 = arith.constant 252 : i32
    %316 = tpu.dynamic_rotate %315 by %c252_i32_110 dim 1 : vector<4x256xf32>, i32 -> vector<4x256xf32>
    %c12_i32_111 = arith.constant 12 : i32
    %317 = tpu.dynamic_rotate %315 by %c12_i32_111 dim 1 : vector<4x256xf32>, i32 -> vector<4x256xf32>
    %cst_112 = arith.constant 1.200000e+01 : f32
    %318 = vector.broadcast %cst_112 : f32 to vector<1x256xf32>
    %319 = arith.cmpf olt, %9, %318 : vector<1x256xf32>
    %320 = vector.shape_cast %319 : vector<1x256xi1> to vector<1x256xi1>
    %321 = vector.broadcast %320 : vector<1x256xi1> to vector<4x256xi1>
    %322 = arith.select %321, %316, %317 : vector<4x256xi1>, vector<4x256xf32>
    %323 = arith.addf %315, %322 : vector<4x256xf32>
    %c248_i32_113 = arith.constant 248 : i32
    %324 = tpu.dynamic_rotate %323 by %c248_i32_113 dim 1 : vector<4x256xf32>, i32 -> vector<4x256xf32>
    %c8_i32_114 = arith.constant 8 : i32
    %325 = tpu.dynamic_rotate %323 by %c8_i32_114 dim 1 : vector<4x256xf32>, i32 -> vector<4x256xf32>
    %cst_115 = arith.constant 8.000000e+00 : f32
    %326 = vector.broadcast %cst_115 : f32 to vector<1x256xf32>
    %327 = arith.cmpf olt, %9, %326 : vector<1x256xf32>
    %328 = vector.shape_cast %327 : vector<1x256xi1> to vector<1x256xi1>
    %329 = vector.broadcast %328 : vector<1x256xi1> to vector<4x256xi1>
    %330 = arith.select %329, %324, %325 : vector<4x256xi1>, vector<4x256xf32>
    %331 = arith.addf %323, %330 : vector<4x256xf32>
    %cst_116 = arith.constant 6.250000e-02 : f32
    %332 = vector.broadcast %cst_116 : f32 to vector<4x256xf32>
    %333 = arith.mulf %331, %332 : vector<4x256xf32>
    %c17_i32_117 = arith.constant 17 : i32
    %334 = tpu.dynamic_rotate %289 by %c17_i32_117 dim 1 : vector<4x256xf32>, i32 -> vector<4x256xf32>
    %335 = arith.andi %11, %15 : vector<1x256xi1>
    %cst_118 = arith.constant 0.000000e+00 : f32
    %336 = vector.shape_cast %335 : vector<1x256xi1> to vector<1x256xi1>
    %337 = vector.broadcast %336 : vector<1x256xi1> to vector<4x256xi1>
    %338 = vector.broadcast %cst_118 : f32 to vector<4x256xf32>
    %339 = arith.select %337, %334, %338 : vector<4x256xi1>, vector<4x256xf32>
    %c16_i32_119 = arith.constant 16 : i32
    %340 = tpu.dynamic_rotate %289 by %c16_i32_119 dim 1 : vector<4x256xf32>, i32 -> vector<4x256xf32>
    %cst_120 = arith.constant 0.000000e+00 : f32
    %341 = vector.shape_cast %11 : vector<1x256xi1> to vector<1x256xi1>
    %342 = vector.broadcast %341 : vector<1x256xi1> to vector<4x256xi1>
    %343 = vector.broadcast %cst_120 : f32 to vector<4x256xf32>
    %344 = arith.select %342, %340, %343 : vector<4x256xi1>, vector<4x256xf32>
    %c15_i32_121 = arith.constant 15 : i32
    %345 = tpu.dynamic_rotate %289 by %c15_i32_121 dim 1 : vector<4x256xf32>, i32 -> vector<4x256xf32>
    %346 = arith.andi %11, %17 : vector<1x256xi1>
    %cst_122 = arith.constant 0.000000e+00 : f32
    %347 = vector.shape_cast %346 : vector<1x256xi1> to vector<1x256xi1>
    %348 = vector.broadcast %347 : vector<1x256xi1> to vector<4x256xi1>
    %349 = vector.broadcast %cst_122 : f32 to vector<4x256xf32>
    %350 = arith.select %348, %345, %349 : vector<4x256xi1>, vector<4x256xf32>
    %c1_i32_123 = arith.constant 1 : i32
    %351 = tpu.dynamic_rotate %289 by %c1_i32_123 dim 1 : vector<4x256xf32>, i32 -> vector<4x256xf32>
    %cst_124 = arith.constant 0.000000e+00 : f32
    %352 = vector.shape_cast %15 : vector<1x256xi1> to vector<1x256xi1>
    %353 = vector.broadcast %352 : vector<1x256xi1> to vector<4x256xi1>
    %354 = vector.broadcast %cst_124 : f32 to vector<4x256xf32>
    %355 = arith.select %353, %351, %354 : vector<4x256xi1>, vector<4x256xf32>
    %c255_i32_125 = arith.constant 255 : i32
    %356 = tpu.dynamic_rotate %289 by %c255_i32_125 dim 1 : vector<4x256xf32>, i32 -> vector<4x256xf32>
    %cst_126 = arith.constant 0.000000e+00 : f32
    %357 = vector.shape_cast %17 : vector<1x256xi1> to vector<1x256xi1>
    %358 = vector.broadcast %357 : vector<1x256xi1> to vector<4x256xi1>
    %359 = vector.broadcast %cst_126 : f32 to vector<4x256xf32>
    %360 = arith.select %358, %356, %359 : vector<4x256xi1>, vector<4x256xf32>
    %c241_i32_127 = arith.constant 241 : i32
    %361 = tpu.dynamic_rotate %289 by %c241_i32_127 dim 1 : vector<4x256xf32>, i32 -> vector<4x256xf32>
    %362 = arith.andi %13, %15 : vector<1x256xi1>
    %cst_128 = arith.constant 0.000000e+00 : f32
    %363 = vector.shape_cast %362 : vector<1x256xi1> to vector<1x256xi1>
    %364 = vector.broadcast %363 : vector<1x256xi1> to vector<4x256xi1>
    %365 = vector.broadcast %cst_128 : f32 to vector<4x256xf32>
    %366 = arith.select %364, %361, %365 : vector<4x256xi1>, vector<4x256xf32>
    %c240_i32_129 = arith.constant 240 : i32
    %367 = tpu.dynamic_rotate %289 by %c240_i32_129 dim 1 : vector<4x256xf32>, i32 -> vector<4x256xf32>
    %cst_130 = arith.constant 0.000000e+00 : f32
    %368 = vector.shape_cast %13 : vector<1x256xi1> to vector<1x256xi1>
    %369 = vector.broadcast %368 : vector<1x256xi1> to vector<4x256xi1>
    %370 = vector.broadcast %cst_130 : f32 to vector<4x256xf32>
    %371 = arith.select %369, %367, %370 : vector<4x256xi1>, vector<4x256xf32>
    %c239_i32_131 = arith.constant 239 : i32
    %372 = tpu.dynamic_rotate %289 by %c239_i32_131 dim 1 : vector<4x256xf32>, i32 -> vector<4x256xf32>
    %373 = arith.andi %13, %17 : vector<1x256xi1>
    %cst_132 = arith.constant 0.000000e+00 : f32
    %374 = vector.shape_cast %373 : vector<1x256xi1> to vector<1x256xi1>
    %375 = vector.broadcast %374 : vector<1x256xi1> to vector<4x256xi1>
    %376 = vector.broadcast %cst_132 : f32 to vector<4x256xf32>
    %377 = arith.select %375, %372, %376 : vector<4x256xi1>, vector<4x256xf32>
    %c0_133 = arith.constant 0 : index
    %378 = memref.load %arg2[%c0_133] : memref<16xf32, #tpu.memory_space<smem>>
    %379 = vector.broadcast %378 : f32 to vector<4x256xf32>
    %380 = arith.mulf %379, %63 : vector<4x256xf32>
    %c1_134 = arith.constant 1 : index
    %381 = memref.load %arg2[%c1_134] : memref<16xf32, #tpu.memory_space<smem>>
    %382 = vector.broadcast %381 : f32 to vector<4x256xf32>
    %383 = arith.mulf %382, %153 : vector<4x256xf32>
    %c2_135 = arith.constant 2 : index
    %384 = memref.load %arg2[%c2_135] : memref<16xf32, #tpu.memory_space<smem>>
    %385 = vector.broadcast %384 : f32 to vector<4x256xf32>
    %386 = arith.mulf %385, %243 : vector<4x256xf32>
    %c3_136 = arith.constant 3 : index
    %387 = memref.load %arg2[%c3_136] : memref<16xf32, #tpu.memory_space<smem>>
    %388 = vector.broadcast %387 : f32 to vector<4x256xf32>
    %389 = arith.mulf %388, %333 : vector<4x256xf32>
    %390 = arith.addf %380, %383 : vector<4x256xf32>
    %391 = arith.addf %386, %389 : vector<4x256xf32>
    %392 = arith.addf %390, %391 : vector<4x256xf32>
    %c0_137 = arith.constant 0 : index
    %393 = memref.load %arg2[%c0_137] : memref<16xf32, #tpu.memory_space<smem>>
    %394 = vector.broadcast %393 : f32 to vector<4x256xf32>
    %395 = arith.mulf %394, %29 : vector<4x256xf32>
    %c1_138 = arith.constant 1 : index
    %396 = memref.load %arg2[%c1_138] : memref<16xf32, #tpu.memory_space<smem>>
    %397 = vector.broadcast %396 : f32 to vector<4x256xf32>
    %398 = arith.mulf %397, %119 : vector<4x256xf32>
    %c2_139 = arith.constant 2 : index
    %399 = memref.load %arg2[%c2_139] : memref<16xf32, #tpu.memory_space<smem>>
    %400 = vector.broadcast %399 : f32 to vector<4x256xf32>
    %401 = arith.mulf %400, %209 : vector<4x256xf32>
    %c3_140 = arith.constant 3 : index
    %402 = memref.load %arg2[%c3_140] : memref<16xf32, #tpu.memory_space<smem>>
    %403 = vector.broadcast %402 : f32 to vector<4x256xf32>
    %404 = arith.mulf %403, %299 : vector<4x256xf32>
    %405 = arith.addf %395, %398 : vector<4x256xf32>
    %406 = arith.addf %401, %404 : vector<4x256xf32>
    %407 = arith.addf %405, %406 : vector<4x256xf32>
    %c0_141 = arith.constant 0 : index
    %408 = memref.load %arg3[%c0_141] : memref<4xf32, #tpu.memory_space<smem>>
    %409 = vector.broadcast %408 : f32 to vector<4x256xf32>
    %410 = arith.addf %392, %409 : vector<4x256xf32>
    %411 = arith.negf %410 : vector<4x256xf32>
    %412 = math.exp %411 : vector<4x256xf32>
    %cst_142 = arith.constant 1.000000e+00 : f32
    %413 = vector.broadcast %cst_142 : f32 to vector<4x256xf32>
    %414 = arith.addf %413, %412 : vector<4x256xf32>
    %415 = arith.divf %413, %414 : vector<4x256xf32>
    %c0_143 = arith.constant 0 : index
    %416 = memref.load %arg3[%c0_143] : memref<4xf32, #tpu.memory_space<smem>>
    %417 = vector.broadcast %416 : f32 to vector<4x256xf32>
    %418 = arith.addf %407, %417 : vector<4x256xf32>
    %419 = arith.negf %418 : vector<4x256xf32>
    %420 = math.exp %419 : vector<4x256xf32>
    %cst_144 = arith.constant 1.000000e+00 : f32
    %421 = vector.broadcast %cst_144 : f32 to vector<4x256xf32>
    %422 = arith.addf %421, %420 : vector<4x256xf32>
    %423 = arith.divf %421, %422 : vector<4x256xf32>
    %424 = arith.mulf %415, %423 : vector<4x256xf32>
    %425 = arith.mulf %19, %424 : vector<4x256xf32>
    %cst_145 = arith.constant dense<0.000000e+00> : vector<4xf32>
    %426 = vector.multi_reduction <add>, %425, %cst_145 [1] : vector<4x256xf32> to vector<4xf32>
    %427 = vector.shape_cast %426 : vector<4xf32> to vector<4x1xf32>
    %cst_146 = arith.constant 3.906250e-03 : f32
    %428 = vector.broadcast %cst_146 : f32 to vector<4x1xf32>
    %429 = arith.mulf %427, %428 : vector<4x1xf32>
    %430 = arith.mulf %425, %425 : vector<4x256xf32>
    %cst_147 = arith.constant dense<0.000000e+00> : vector<4xf32>
    %431 = vector.multi_reduction <add>, %430, %cst_147 [1] : vector<4x256xf32> to vector<4xf32>
    %432 = vector.shape_cast %431 : vector<4xf32> to vector<4x1xf32>
    %cst_148 = arith.constant 3.906250e-03 : f32
    %433 = vector.broadcast %cst_148 : f32 to vector<4x1xf32>
    %434 = arith.mulf %432, %433 : vector<4x1xf32>
    %435 = arith.mulf %429, %429 : vector<4x1xf32>
    %436 = arith.subf %434, %435 : vector<4x1xf32>
    %cst_149 = arith.constant 0.000000e+00 : f32
    %437 = vector.broadcast %cst_149 : f32 to vector<4x1xf32>
    %438 = arith.maximumf %436, %437 : vector<4x1xf32>
    %439 = vector.broadcast %429 : vector<4x1xf32> to vector<4x256xf32>
    %440 = arith.subf %425, %439 : vector<4x256xf32>
    %cst_150 = arith.constant 9.99999974E-6 : f32
    %441 = vector.broadcast %cst_150 : f32 to vector<4x1xf32>
    %442 = arith.addf %438, %441 : vector<4x1xf32>
    %443 = math.rsqrt %442 : vector<4x1xf32>
    %444 = vector.broadcast %443 : vector<4x1xf32> to vector<4x256xf32>
    %445 = arith.mulf %440, %444 : vector<4x256xf32>
    %c0_151 = arith.constant 0 : index
    %446 = memref.load %arg6[%c0_151] : memref<4xf32, #tpu.memory_space<smem>>
    %447 = vector.broadcast %446 : f32 to vector<4x256xf32>
    %448 = arith.mulf %445, %447 : vector<4x256xf32>
    %c0_152 = arith.constant 0 : index
    %449 = memref.load %arg7[%c0_152] : memref<4xf32, #tpu.memory_space<smem>>
    %450 = vector.broadcast %449 : f32 to vector<4x256xf32>
    %451 = arith.addf %448, %450 : vector<4x256xf32>
    %c0_153 = arith.constant 0 : index
    %c0_154 = arith.constant 0 : index
    %c0_155 = arith.constant 0 : index
    %452 = vector.load %arg9[%c0_153, %c0_154, %c0_155] : memref<4x4x256xf32, #tpu.memory_space<vmem>>, vector<1x4x256xf32>
    %453 = vector.shape_cast %452 : vector<1x4x256xf32> to vector<4x256xf32>
    %454 = vector.shape_cast %451 : vector<4x256xf32> to vector<1x4x256xf32>
    tpu.vector_store %arg9[%c0_153, %c0_154, %c0_155], %454 {strides = array<i32>} : memref<4x4x256xf32, #tpu.memory_space<vmem>>, vector<1x4x256xf32>,
    %cst_156 = arith.constant dense<0.000000e+00> : vector<4xf32>
    %455 = vector.multi_reduction <add>, %451, %cst_156 [1] : vector<4x256xf32> to vector<4xf32>
    %456 = vector.shape_cast %455 : vector<4xf32> to vector<4x1xf32>
    %cst_157 = arith.constant 3.906250e-03 : f32
    %457 = vector.broadcast %cst_157 : f32 to vector<4x1xf32>
    %458 = arith.mulf %456, %457 : vector<4x1xf32>
    %c0_158 = arith.constant 0 : index
    %459 = memref.load %arg4[%c0_158] : memref<144xf32, #tpu.memory_space<smem>>
    %460 = vector.broadcast %459 : f32 to vector<4x256xf32>
    %461 = arith.mulf %460, %69 : vector<4x256xf32>
    %c1_159 = arith.constant 1 : index
    %462 = memref.load %arg4[%c1_159] : memref<144xf32, #tpu.memory_space<smem>>
    %463 = vector.broadcast %462 : f32 to vector<4x256xf32>
    %464 = arith.mulf %463, %74 : vector<4x256xf32>
    %c2_160 = arith.constant 2 : index
    %465 = memref.load %arg4[%c2_160] : memref<144xf32, #tpu.memory_space<smem>>
    %466 = vector.broadcast %465 : f32 to vector<4x256xf32>
    %467 = arith.mulf %466, %80 : vector<4x256xf32>
    %c3_161 = arith.constant 3 : index
    %468 = memref.load %arg4[%c3_161] : memref<144xf32, #tpu.memory_space<smem>>
    %469 = vector.broadcast %468 : f32 to vector<4x256xf32>
    %470 = arith.mulf %469, %85 : vector<4x256xf32>
    %c4 = arith.constant 4 : index
    %471 = memref.load %arg4[%c4] : memref<144xf32, #tpu.memory_space<smem>>
    %472 = vector.broadcast %471 : f32 to vector<4x256xf32>
    %473 = arith.mulf %472, %19 : vector<4x256xf32>
    %c5 = arith.constant 5 : index
    %474 = memref.load %arg4[%c5] : memref<144xf32, #tpu.memory_space<smem>>
    %475 = vector.broadcast %474 : f32 to vector<4x256xf32>
    %476 = arith.mulf %475, %90 : vector<4x256xf32>
    %c6 = arith.constant 6 : index
    %477 = memref.load %arg4[%c6] : memref<144xf32, #tpu.memory_space<smem>>
    %478 = vector.broadcast %477 : f32 to vector<4x256xf32>
    %479 = arith.mulf %478, %96 : vector<4x256xf32>
    %c7 = arith.constant 7 : index
    %480 = memref.load %arg4[%c7] : memref<144xf32, #tpu.memory_space<smem>>
    %481 = vector.broadcast %480 : f32 to vector<4x256xf32>
    %482 = arith.mulf %481, %101 : vector<4x256xf32>
    %c8 = arith.constant 8 : index
    %483 = memref.load %arg4[%c8] : memref<144xf32, #tpu.memory_space<smem>>
    %484 = vector.broadcast %483 : f32 to vector<4x256xf32>
    %485 = arith.mulf %484, %107 : vector<4x256xf32>
    %486 = arith.addf %461, %464 : vector<4x256xf32>
    %487 = arith.addf %467, %470 : vector<4x256xf32>
    %488 = arith.addf %473, %476 : vector<4x256xf32>
    %489 = arith.addf %479, %482 : vector<4x256xf32>
    %490 = arith.addf %486, %487 : vector<4x256xf32>
    %491 = arith.addf %488, %489 : vector<4x256xf32>
    %492 = arith.addf %490, %491 : vector<4x256xf32>
    %493 = arith.addf %492, %485 : vector<4x256xf32>
    %c9 = arith.constant 9 : index
    %494 = memref.load %arg4[%c9] : memref<144xf32, #tpu.memory_space<smem>>
    %495 = vector.broadcast %494 : f32 to vector<4x256xf32>
    %496 = arith.mulf %495, %159 : vector<4x256xf32>
    %c10 = arith.constant 10 : index
    %497 = memref.load %arg4[%c10] : memref<144xf32, #tpu.memory_space<smem>>
    %498 = vector.broadcast %497 : f32 to vector<4x256xf32>
    %499 = arith.mulf %498, %164 : vector<4x256xf32>
    %c11 = arith.constant 11 : index
    %500 = memref.load %arg4[%c11] : memref<144xf32, #tpu.memory_space<smem>>
    %501 = vector.broadcast %500 : f32 to vector<4x256xf32>
    %502 = arith.mulf %501, %170 : vector<4x256xf32>
    %c12 = arith.constant 12 : index
    %503 = memref.load %arg4[%c12] : memref<144xf32, #tpu.memory_space<smem>>
    %504 = vector.broadcast %503 : f32 to vector<4x256xf32>
    %505 = arith.mulf %504, %175 : vector<4x256xf32>
    %c13 = arith.constant 13 : index
    %506 = memref.load %arg4[%c13] : memref<144xf32, #tpu.memory_space<smem>>
    %507 = vector.broadcast %506 : f32 to vector<4x256xf32>
    %508 = arith.mulf %507, %109 : vector<4x256xf32>
    %c14 = arith.constant 14 : index
    %509 = memref.load %arg4[%c14] : memref<144xf32, #tpu.memory_space<smem>>
    %510 = vector.broadcast %509 : f32 to vector<4x256xf32>
    %511 = arith.mulf %510, %180 : vector<4x256xf32>
    %c15 = arith.constant 15 : index
    %512 = memref.load %arg4[%c15] : memref<144xf32, #tpu.memory_space<smem>>
    %513 = vector.broadcast %512 : f32 to vector<4x256xf32>
    %514 = arith.mulf %513, %186 : vector<4x256xf32>
    %c16 = arith.constant 16 : index
    %515 = memref.load %arg4[%c16] : memref<144xf32, #tpu.memory_space<smem>>
    %516 = vector.broadcast %515 : f32 to vector<4x256xf32>
    %517 = arith.mulf %516, %191 : vector<4x256xf32>
    %c17 = arith.constant 17 : index
    %518 = memref.load %arg4[%c17] : memref<144xf32, #tpu.memory_space<smem>>
    %519 = vector.broadcast %518 : f32 to vector<4x256xf32>
    %520 = arith.mulf %519, %197 : vector<4x256xf32>
    %521 = arith.addf %496, %499 : vector<4x256xf32>
    %522 = arith.addf %502, %505 : vector<4x256xf32>
    %523 = arith.addf %508, %511 : vector<4x256xf32>
    %524 = arith.addf %514, %517 : vector<4x256xf32>
    %525 = arith.addf %521, %522 : vector<4x256xf32>
    %526 = arith.addf %523, %524 : vector<4x256xf32>
    %527 = arith.addf %525, %526 : vector<4x256xf32>
    %528 = arith.addf %527, %520 : vector<4x256xf32>
    %c18 = arith.constant 18 : index
    %529 = memref.load %arg4[%c18] : memref<144xf32, #tpu.memory_space<smem>>
    %530 = vector.broadcast %529 : f32 to vector<4x256xf32>
    %531 = arith.mulf %530, %249 : vector<4x256xf32>
    %c19 = arith.constant 19 : index
    %532 = memref.load %arg4[%c19] : memref<144xf32, #tpu.memory_space<smem>>
    %533 = vector.broadcast %532 : f32 to vector<4x256xf32>
    %534 = arith.mulf %533, %254 : vector<4x256xf32>
    %c20 = arith.constant 20 : index
    %535 = memref.load %arg4[%c20] : memref<144xf32, #tpu.memory_space<smem>>
    %536 = vector.broadcast %535 : f32 to vector<4x256xf32>
    %537 = arith.mulf %536, %260 : vector<4x256xf32>
    %c21 = arith.constant 21 : index
    %538 = memref.load %arg4[%c21] : memref<144xf32, #tpu.memory_space<smem>>
    %539 = vector.broadcast %538 : f32 to vector<4x256xf32>
    %540 = arith.mulf %539, %265 : vector<4x256xf32>
    %c22 = arith.constant 22 : index
    %541 = memref.load %arg4[%c22] : memref<144xf32, #tpu.memory_space<smem>>
    %542 = vector.broadcast %541 : f32 to vector<4x256xf32>
    %543 = arith.mulf %542, %199 : vector<4x256xf32>
    %c23 = arith.constant 23 : index
    %544 = memref.load %arg4[%c23] : memref<144xf32, #tpu.memory_space<smem>>
    %545 = vector.broadcast %544 : f32 to vector<4x256xf32>
    %546 = arith.mulf %545, %270 : vector<4x256xf32>
    %c24 = arith.constant 24 : index
    %547 = memref.load %arg4[%c24] : memref<144xf32, #tpu.memory_space<smem>>
    %548 = vector.broadcast %547 : f32 to vector<4x256xf32>
    %549 = arith.mulf %548, %276 : vector<4x256xf32>
    %c25 = arith.constant 25 : index
    %550 = memref.load %arg4[%c25] : memref<144xf32, #tpu.memory_space<smem>>
    %551 = vector.broadcast %550 : f32 to vector<4x256xf32>
    %552 = arith.mulf %551, %281 : vector<4x256xf32>
    %c26 = arith.constant 26 : index
    %553 = memref.load %arg4[%c26] : memref<144xf32, #tpu.memory_space<smem>>
    %554 = vector.broadcast %553 : f32 to vector<4x256xf32>
    %555 = arith.mulf %554, %287 : vector<4x256xf32>
    %556 = arith.addf %531, %534 : vector<4x256xf32>
    %557 = arith.addf %537, %540 : vector<4x256xf32>
    %558 = arith.addf %543, %546 : vector<4x256xf32>
    %559 = arith.addf %549, %552 : vector<4x256xf32>
    %560 = arith.addf %556, %557 : vector<4x256xf32>
    %561 = arith.addf %558, %559 : vector<4x256xf32>
    %562 = arith.addf %560, %561 : vector<4x256xf32>
    %563 = arith.addf %562, %555 : vector<4x256xf32>
    %c27 = arith.constant 27 : index
    %564 = memref.load %arg4[%c27] : memref<144xf32, #tpu.memory_space<smem>>
    %565 = vector.broadcast %564 : f32 to vector<4x256xf32>
    %566 = arith.mulf %565, %339 : vector<4x256xf32>
    %c28 = arith.constant 28 : index
    %567 = memref.load %arg4[%c28] : memref<144xf32, #tpu.memory_space<smem>>
    %568 = vector.broadcast %567 : f32 to vector<4x256xf32>
    %569 = arith.mulf %568, %344 : vector<4x256xf32>
    %c29 = arith.constant 29 : index
    %570 = memref.load %arg4[%c29] : memref<144xf32, #tpu.memory_space<smem>>
    %571 = vector.broadcast %570 : f32 to vector<4x256xf32>
    %572 = arith.mulf %571, %350 : vector<4x256xf32>
    %c30 = arith.constant 30 : index
    %573 = memref.load %arg4[%c30] : memref<144xf32, #tpu.memory_space<smem>>
    %574 = vector.broadcast %573 : f32 to vector<4x256xf32>
    %575 = arith.mulf %574, %355 : vector<4x256xf32>
    %c31 = arith.constant 31 : index
    %576 = memref.load %arg4[%c31] : memref<144xf32, #tpu.memory_space<smem>>
    %577 = vector.broadcast %576 : f32 to vector<4x256xf32>
    %578 = arith.mulf %577, %289 : vector<4x256xf32>
    %c32 = arith.constant 32 : index
    %579 = memref.load %arg4[%c32] : memref<144xf32, #tpu.memory_space<smem>>
    %580 = vector.broadcast %579 : f32 to vector<4x256xf32>
    %581 = arith.mulf %580, %360 : vector<4x256xf32>
    %c33 = arith.constant 33 : index
    %582 = memref.load %arg4[%c33] : memref<144xf32, #tpu.memory_space<smem>>
    %583 = vector.broadcast %582 : f32 to vector<4x256xf32>
    %584 = arith.mulf %583, %366 : vector<4x256xf32>
    %c34 = arith.constant 34 : index
    %585 = memref.load %arg4[%c34] : memref<144xf32, #tpu.memory_space<smem>>
    %586 = vector.broadcast %585 : f32 to vector<4x256xf32>
    %587 = arith.mulf %586, %371 : vector<4x256xf32>
    %c35 = arith.constant 35 : index
    %588 = memref.load %arg4[%c35] : memref<144xf32, #tpu.memory_space<smem>>
    %589 = vector.broadcast %588 : f32 to vector<4x256xf32>
    %590 = arith.mulf %589, %377 : vector<4x256xf32>
    %591 = arith.addf %566, %569 : vector<4x256xf32>
    %592 = arith.addf %572, %575 : vector<4x256xf32>
    %593 = arith.addf %578, %581 : vector<4x256xf32>
    %594 = arith.addf %584, %587 : vector<4x256xf32>
    %595 = arith.addf %591, %592 : vector<4x256xf32>
    %596 = arith.addf %593, %594 : vector<4x256xf32>
    %597 = arith.addf %595, %596 : vector<4x256xf32>
    %598 = arith.addf %597, %590 : vector<4x256xf32>
    %599 = arith.addf %493, %528 : vector<4x256xf32>
    %600 = arith.addf %563, %598 : vector<4x256xf32>
    %601 = arith.addf %599, %600 : vector<4x256xf32>
    %c0_162 = arith.constant 0 : index
    %602 = memref.load %arg5[%c0_162] : memref<4xf32, #tpu.memory_space<smem>>
    %603 = vector.broadcast %602 : f32 to vector<4x256xf32>
    %604 = arith.addf %601, %603 : vector<4x256xf32>
    %c0_163 = arith.constant 0 : index
    %c0_164 = arith.constant 0 : index
    %c0_165 = arith.constant 0 : index
    %605 = vector.load %arg10[%c0_163, %c0_164, %c0_165] : memref<4x4x256xf32, #tpu.memory_space<vmem>>, vector<1x4x256xf32>
    %606 = vector.shape_cast %605 : vector<1x4x256xf32> to vector<4x256xf32>
    %607 = vector.shape_cast %604 : vector<4x256xf32> to vector<1x4x256xf32>
    tpu.vector_store %arg10[%c0_163, %c0_164, %c0_165], %607 {strides = array<i32>} : memref<4x4x256xf32, #tpu.memory_space<vmem>>, vector<1x4x256xf32>,
    %cst_166 = arith.constant dense<0.000000e+00> : vector<4xf32>
    %608 = vector.multi_reduction <add>, %604, %cst_166 [1] : vector<4x256xf32> to vector<4xf32>
    %609 = vector.shape_cast %608 : vector<4xf32> to vector<4x1xf32>
    %cst_167 = arith.constant 3.906250e-03 : f32
    %610 = vector.broadcast %cst_167 : f32 to vector<4x1xf32>
    %611 = arith.mulf %609, %610 : vector<4x1xf32>
    %c4_168 = arith.constant 4 : index
    %612 = memref.load %arg2[%c4_168] : memref<16xf32, #tpu.memory_space<smem>>
    %613 = vector.broadcast %612 : f32 to vector<4x256xf32>
    %614 = arith.mulf %613, %63 : vector<4x256xf32>
    %c5_169 = arith.constant 5 : index
    %615 = memref.load %arg2[%c5_169] : memref<16xf32, #tpu.memory_space<smem>>
    %616 = vector.broadcast %615 : f32 to vector<4x256xf32>
    %617 = arith.mulf %616, %153 : vector<4x256xf32>
    %c6_170 = arith.constant 6 : index
    %618 = memref.load %arg2[%c6_170] : memref<16xf32, #tpu.memory_space<smem>>
    %619 = vector.broadcast %618 : f32 to vector<4x256xf32>
    %620 = arith.mulf %619, %243 : vector<4x256xf32>
    %c7_171 = arith.constant 7 : index
    %621 = memref.load %arg2[%c7_171] : memref<16xf32, #tpu.memory_space<smem>>
    %622 = vector.broadcast %621 : f32 to vector<4x256xf32>
    %623 = arith.mulf %622, %333 : vector<4x256xf32>
    %624 = arith.addf %614, %617 : vector<4x256xf32>
    %625 = arith.addf %620, %623 : vector<4x256xf32>
    %626 = arith.addf %624, %625 : vector<4x256xf32>
    %c4_172 = arith.constant 4 : index
    %627 = memref.load %arg2[%c4_172] : memref<16xf32, #tpu.memory_space<smem>>
    %628 = vector.broadcast %627 : f32 to vector<4x256xf32>
    %629 = arith.mulf %628, %29 : vector<4x256xf32>
    %c5_173 = arith.constant 5 : index
    %630 = memref.load %arg2[%c5_173] : memref<16xf32, #tpu.memory_space<smem>>
    %631 = vector.broadcast %630 : f32 to vector<4x256xf32>
    %632 = arith.mulf %631, %119 : vector<4x256xf32>
    %c6_174 = arith.constant 6 : index
    %633 = memref.load %arg2[%c6_174] : memref<16xf32, #tpu.memory_space<smem>>
    %634 = vector.broadcast %633 : f32 to vector<4x256xf32>
    %635 = arith.mulf %634, %209 : vector<4x256xf32>
    %c7_175 = arith.constant 7 : index
    %636 = memref.load %arg2[%c7_175] : memref<16xf32, #tpu.memory_space<smem>>
    %637 = vector.broadcast %636 : f32 to vector<4x256xf32>
    %638 = arith.mulf %637, %299 : vector<4x256xf32>
    %639 = arith.addf %629, %632 : vector<4x256xf32>
    %640 = arith.addf %635, %638 : vector<4x256xf32>
    %641 = arith.addf %639, %640 : vector<4x256xf32>
    %c1_176 = arith.constant 1 : index
    %642 = memref.load %arg3[%c1_176] : memref<4xf32, #tpu.memory_space<smem>>
    %643 = vector.broadcast %642 : f32 to vector<4x256xf32>
    %644 = arith.addf %626, %643 : vector<4x256xf32>
    %645 = arith.negf %644 : vector<4x256xf32>
    %646 = math.exp %645 : vector<4x256xf32>
    %cst_177 = arith.constant 1.000000e+00 : f32
    %647 = vector.broadcast %cst_177 : f32 to vector<4x256xf32>
    %648 = arith.addf %647, %646 : vector<4x256xf32>
    %649 = arith.divf %647, %648 : vector<4x256xf32>
    %c1_178 = arith.constant 1 : index
    %650 = memref.load %arg3[%c1_178] : memref<4xf32, #tpu.memory_space<smem>>
    %651 = vector.broadcast %650 : f32 to vector<4x256xf32>
    %652 = arith.addf %641, %651 : vector<4x256xf32>
    %653 = arith.negf %652 : vector<4x256xf32>
    %654 = math.exp %653 : vector<4x256xf32>
    %cst_179 = arith.constant 1.000000e+00 : f32
    %655 = vector.broadcast %cst_179 : f32 to vector<4x256xf32>
    %656 = arith.addf %655, %654 : vector<4x256xf32>
    %657 = arith.divf %655, %656 : vector<4x256xf32>
    %658 = arith.mulf %649, %657 : vector<4x256xf32>
    %659 = arith.mulf %109, %658 : vector<4x256xf32>
    %cst_180 = arith.constant dense<0.000000e+00> : vector<4xf32>
    %660 = vector.multi_reduction <add>, %659, %cst_180 [1] : vector<4x256xf32> to vector<4xf32>
    %661 = vector.shape_cast %660 : vector<4xf32> to vector<4x1xf32>
    %cst_181 = arith.constant 3.906250e-03 : f32
    %662 = vector.broadcast %cst_181 : f32 to vector<4x1xf32>
    %663 = arith.mulf %661, %662 : vector<4x1xf32>
    %664 = arith.mulf %659, %659 : vector<4x256xf32>
    %cst_182 = arith.constant dense<0.000000e+00> : vector<4xf32>
    %665 = vector.multi_reduction <add>, %664, %cst_182 [1] : vector<4x256xf32> to vector<4xf32>
    %666 = vector.shape_cast %665 : vector<4xf32> to vector<4x1xf32>
    %cst_183 = arith.constant 3.906250e-03 : f32
    %667 = vector.broadcast %cst_183 : f32 to vector<4x1xf32>
    %668 = arith.mulf %666, %667 : vector<4x1xf32>
    %669 = arith.mulf %663, %663 : vector<4x1xf32>
    %670 = arith.subf %668, %669 : vector<4x1xf32>
    %cst_184 = arith.constant 0.000000e+00 : f32
    %671 = vector.broadcast %cst_184 : f32 to vector<4x1xf32>
    %672 = arith.maximumf %670, %671 : vector<4x1xf32>
    %673 = vector.broadcast %663 : vector<4x1xf32> to vector<4x256xf32>
    %674 = arith.subf %659, %673 : vector<4x256xf32>
    %cst_185 = arith.constant 9.99999974E-6 : f32
    %675 = vector.broadcast %cst_185 : f32 to vector<4x1xf32>
    %676 = arith.addf %672, %675 : vector<4x1xf32>
    %677 = math.rsqrt %676 : vector<4x1xf32>
    %678 = vector.broadcast %677 : vector<4x1xf32> to vector<4x256xf32>
    %679 = arith.mulf %674, %678 : vector<4x256xf32>
    %c1_186 = arith.constant 1 : index
    %680 = memref.load %arg6[%c1_186] : memref<4xf32, #tpu.memory_space<smem>>
    %681 = vector.broadcast %680 : f32 to vector<4x256xf32>
    %682 = arith.mulf %679, %681 : vector<4x256xf32>
    %c1_187 = arith.constant 1 : index
    %683 = memref.load %arg7[%c1_187] : memref<4xf32, #tpu.memory_space<smem>>
    %684 = vector.broadcast %683 : f32 to vector<4x256xf32>
    %685 = arith.addf %682, %684 : vector<4x256xf32>
    %c1_188 = arith.constant 1 : index
    %c0_189 = arith.constant 0 : index
    %c0_190 = arith.constant 0 : index
    %686 = vector.load %arg9[%c1_188, %c0_189, %c0_190] : memref<4x4x256xf32, #tpu.memory_space<vmem>>, vector<1x4x256xf32>
    %687 = vector.shape_cast %686 : vector<1x4x256xf32> to vector<4x256xf32>
    %688 = vector.shape_cast %685 : vector<4x256xf32> to vector<1x4x256xf32>
    tpu.vector_store %arg9[%c1_188, %c0_189, %c0_190], %688 {strides = array<i32>} : memref<4x4x256xf32, #tpu.memory_space<vmem>>, vector<1x4x256xf32>,
    %cst_191 = arith.constant dense<0.000000e+00> : vector<4xf32>
    %689 = vector.multi_reduction <add>, %685, %cst_191 [1] : vector<4x256xf32> to vector<4xf32>
    %690 = vector.shape_cast %689 : vector<4xf32> to vector<4x1xf32>
    %cst_192 = arith.constant 3.906250e-03 : f32
    %691 = vector.broadcast %cst_192 : f32 to vector<4x1xf32>
    %692 = arith.mulf %690, %691 : vector<4x1xf32>
    %c36 = arith.constant 36 : index
    %693 = memref.load %arg4[%c36] : memref<144xf32, #tpu.memory_space<smem>>
    %694 = vector.broadcast %693 : f32 to vector<4x256xf32>
    %695 = arith.mulf %694, %69 : vector<4x256xf32>
    %c37 = arith.constant 37 : index
    %696 = memref.load %arg4[%c37] : memref<144xf32, #tpu.memory_space<smem>>
    %697 = vector.broadcast %696 : f32 to vector<4x256xf32>
    %698 = arith.mulf %697, %74 : vector<4x256xf32>
    %c38 = arith.constant 38 : index
    %699 = memref.load %arg4[%c38] : memref<144xf32, #tpu.memory_space<smem>>
    %700 = vector.broadcast %699 : f32 to vector<4x256xf32>
    %701 = arith.mulf %700, %80 : vector<4x256xf32>
    %c39 = arith.constant 39 : index
    %702 = memref.load %arg4[%c39] : memref<144xf32, #tpu.memory_space<smem>>
    %703 = vector.broadcast %702 : f32 to vector<4x256xf32>
    %704 = arith.mulf %703, %85 : vector<4x256xf32>
    %c40 = arith.constant 40 : index
    %705 = memref.load %arg4[%c40] : memref<144xf32, #tpu.memory_space<smem>>
    %706 = vector.broadcast %705 : f32 to vector<4x256xf32>
    %707 = arith.mulf %706, %19 : vector<4x256xf32>
    %c41 = arith.constant 41 : index
    %708 = memref.load %arg4[%c41] : memref<144xf32, #tpu.memory_space<smem>>
    %709 = vector.broadcast %708 : f32 to vector<4x256xf32>
    %710 = arith.mulf %709, %90 : vector<4x256xf32>
    %c42 = arith.constant 42 : index
    %711 = memref.load %arg4[%c42] : memref<144xf32, #tpu.memory_space<smem>>
    %712 = vector.broadcast %711 : f32 to vector<4x256xf32>
    %713 = arith.mulf %712, %96 : vector<4x256xf32>
    %c43 = arith.constant 43 : index
    %714 = memref.load %arg4[%c43] : memref<144xf32, #tpu.memory_space<smem>>
    %715 = vector.broadcast %714 : f32 to vector<4x256xf32>
    %716 = arith.mulf %715, %101 : vector<4x256xf32>
    %c44 = arith.constant 44 : index
    %717 = memref.load %arg4[%c44] : memref<144xf32, #tpu.memory_space<smem>>
    %718 = vector.broadcast %717 : f32 to vector<4x256xf32>
    %719 = arith.mulf %718, %107 : vector<4x256xf32>
    %720 = arith.addf %695, %698 : vector<4x256xf32>
    %721 = arith.addf %701, %704 : vector<4x256xf32>
    %722 = arith.addf %707, %710 : vector<4x256xf32>
    %723 = arith.addf %713, %716 : vector<4x256xf32>
    %724 = arith.addf %720, %721 : vector<4x256xf32>
    %725 = arith.addf %722, %723 : vector<4x256xf32>
    %726 = arith.addf %724, %725 : vector<4x256xf32>
    %727 = arith.addf %726, %719 : vector<4x256xf32>
    %c45 = arith.constant 45 : index
    %728 = memref.load %arg4[%c45] : memref<144xf32, #tpu.memory_space<smem>>
    %729 = vector.broadcast %728 : f32 to vector<4x256xf32>
    %730 = arith.mulf %729, %159 : vector<4x256xf32>
    %c46 = arith.constant 46 : index
    %731 = memref.load %arg4[%c46] : memref<144xf32, #tpu.memory_space<smem>>
    %732 = vector.broadcast %731 : f32 to vector<4x256xf32>
    %733 = arith.mulf %732, %164 : vector<4x256xf32>
    %c47 = arith.constant 47 : index
    %734 = memref.load %arg4[%c47] : memref<144xf32, #tpu.memory_space<smem>>
    %735 = vector.broadcast %734 : f32 to vector<4x256xf32>
    %736 = arith.mulf %735, %170 : vector<4x256xf32>
    %c48 = arith.constant 48 : index
    %737 = memref.load %arg4[%c48] : memref<144xf32, #tpu.memory_space<smem>>
    %738 = vector.broadcast %737 : f32 to vector<4x256xf32>
    %739 = arith.mulf %738, %175 : vector<4x256xf32>
    %c49 = arith.constant 49 : index
    %740 = memref.load %arg4[%c49] : memref<144xf32, #tpu.memory_space<smem>>
    %741 = vector.broadcast %740 : f32 to vector<4x256xf32>
    %742 = arith.mulf %741, %109 : vector<4x256xf32>
    %c50 = arith.constant 50 : index
    %743 = memref.load %arg4[%c50] : memref<144xf32, #tpu.memory_space<smem>>
    %744 = vector.broadcast %743 : f32 to vector<4x256xf32>
    %745 = arith.mulf %744, %180 : vector<4x256xf32>
    %c51 = arith.constant 51 : index
    %746 = memref.load %arg4[%c51] : memref<144xf32, #tpu.memory_space<smem>>
    %747 = vector.broadcast %746 : f32 to vector<4x256xf32>
    %748 = arith.mulf %747, %186 : vector<4x256xf32>
    %c52 = arith.constant 52 : index
    %749 = memref.load %arg4[%c52] : memref<144xf32, #tpu.memory_space<smem>>
    %750 = vector.broadcast %749 : f32 to vector<4x256xf32>
    %751 = arith.mulf %750, %191 : vector<4x256xf32>
    %c53 = arith.constant 53 : index
    %752 = memref.load %arg4[%c53] : memref<144xf32, #tpu.memory_space<smem>>
    %753 = vector.broadcast %752 : f32 to vector<4x256xf32>
    %754 = arith.mulf %753, %197 : vector<4x256xf32>
    %755 = arith.addf %730, %733 : vector<4x256xf32>
    %756 = arith.addf %736, %739 : vector<4x256xf32>
    %757 = arith.addf %742, %745 : vector<4x256xf32>
    %758 = arith.addf %748, %751 : vector<4x256xf32>
    %759 = arith.addf %755, %756 : vector<4x256xf32>
    %760 = arith.addf %757, %758 : vector<4x256xf32>
    %761 = arith.addf %759, %760 : vector<4x256xf32>
    %762 = arith.addf %761, %754 : vector<4x256xf32>
    %c54 = arith.constant 54 : index
    %763 = memref.load %arg4[%c54] : memref<144xf32, #tpu.memory_space<smem>>
    %764 = vector.broadcast %763 : f32 to vector<4x256xf32>
    %765 = arith.mulf %764, %249 : vector<4x256xf32>
    %c55 = arith.constant 55 : index
    %766 = memref.load %arg4[%c55] : memref<144xf32, #tpu.memory_space<smem>>
    %767 = vector.broadcast %766 : f32 to vector<4x256xf32>
    %768 = arith.mulf %767, %254 : vector<4x256xf32>
    %c56 = arith.constant 56 : index
    %769 = memref.load %arg4[%c56] : memref<144xf32, #tpu.memory_space<smem>>
    %770 = vector.broadcast %769 : f32 to vector<4x256xf32>
    %771 = arith.mulf %770, %260 : vector<4x256xf32>
    %c57 = arith.constant 57 : index
    %772 = memref.load %arg4[%c57] : memref<144xf32, #tpu.memory_space<smem>>
    %773 = vector.broadcast %772 : f32 to vector<4x256xf32>
    %774 = arith.mulf %773, %265 : vector<4x256xf32>
    %c58 = arith.constant 58 : index
    %775 = memref.load %arg4[%c58] : memref<144xf32, #tpu.memory_space<smem>>
    %776 = vector.broadcast %775 : f32 to vector<4x256xf32>
    %777 = arith.mulf %776, %199 : vector<4x256xf32>
    %c59 = arith.constant 59 : index
    %778 = memref.load %arg4[%c59] : memref<144xf32, #tpu.memory_space<smem>>
    %779 = vector.broadcast %778 : f32 to vector<4x256xf32>
    %780 = arith.mulf %779, %270 : vector<4x256xf32>
    %c60 = arith.constant 60 : index
    %781 = memref.load %arg4[%c60] : memref<144xf32, #tpu.memory_space<smem>>
    %782 = vector.broadcast %781 : f32 to vector<4x256xf32>
    %783 = arith.mulf %782, %276 : vector<4x256xf32>
    %c61 = arith.constant 61 : index
    %784 = memref.load %arg4[%c61] : memref<144xf32, #tpu.memory_space<smem>>
    %785 = vector.broadcast %784 : f32 to vector<4x256xf32>
    %786 = arith.mulf %785, %281 : vector<4x256xf32>
    %c62 = arith.constant 62 : index
    %787 = memref.load %arg4[%c62] : memref<144xf32, #tpu.memory_space<smem>>
    %788 = vector.broadcast %787 : f32 to vector<4x256xf32>
    %789 = arith.mulf %788, %287 : vector<4x256xf32>
    %790 = arith.addf %765, %768 : vector<4x256xf32>
    %791 = arith.addf %771, %774 : vector<4x256xf32>
    %792 = arith.addf %777, %780 : vector<4x256xf32>
    %793 = arith.addf %783, %786 : vector<4x256xf32>
    %794 = arith.addf %790, %791 : vector<4x256xf32>
    %795 = arith.addf %792, %793 : vector<4x256xf32>
    %796 = arith.addf %794, %795 : vector<4x256xf32>
    %797 = arith.addf %796, %789 : vector<4x256xf32>
    %c63 = arith.constant 63 : index
    %798 = memref.load %arg4[%c63] : memref<144xf32, #tpu.memory_space<smem>>
    %799 = vector.broadcast %798 : f32 to vector<4x256xf32>
    %800 = arith.mulf %799, %339 : vector<4x256xf32>
    %c64 = arith.constant 64 : index
    %801 = memref.load %arg4[%c64] : memref<144xf32, #tpu.memory_space<smem>>
    %802 = vector.broadcast %801 : f32 to vector<4x256xf32>
    %803 = arith.mulf %802, %344 : vector<4x256xf32>
    %c65 = arith.constant 65 : index
    %804 = memref.load %arg4[%c65] : memref<144xf32, #tpu.memory_space<smem>>
    %805 = vector.broadcast %804 : f32 to vector<4x256xf32>
    %806 = arith.mulf %805, %350 : vector<4x256xf32>
    %c66 = arith.constant 66 : index
    %807 = memref.load %arg4[%c66] : memref<144xf32, #tpu.memory_space<smem>>
    %808 = vector.broadcast %807 : f32 to vector<4x256xf32>
    %809 = arith.mulf %808, %355 : vector<4x256xf32>
    %c67 = arith.constant 67 : index
    %810 = memref.load %arg4[%c67] : memref<144xf32, #tpu.memory_space<smem>>
    %811 = vector.broadcast %810 : f32 to vector<4x256xf32>
    %812 = arith.mulf %811, %289 : vector<4x256xf32>
    %c68 = arith.constant 68 : index
    %813 = memref.load %arg4[%c68] : memref<144xf32, #tpu.memory_space<smem>>
    %814 = vector.broadcast %813 : f32 to vector<4x256xf32>
    %815 = arith.mulf %814, %360 : vector<4x256xf32>
    %c69 = arith.constant 69 : index
    %816 = memref.load %arg4[%c69] : memref<144xf32, #tpu.memory_space<smem>>
    %817 = vector.broadcast %816 : f32 to vector<4x256xf32>
    %818 = arith.mulf %817, %366 : vector<4x256xf32>
    %c70 = arith.constant 70 : index
    %819 = memref.load %arg4[%c70] : memref<144xf32, #tpu.memory_space<smem>>
    %820 = vector.broadcast %819 : f32 to vector<4x256xf32>
    %821 = arith.mulf %820, %371 : vector<4x256xf32>
    %c71 = arith.constant 71 : index
    %822 = memref.load %arg4[%c71] : memref<144xf32, #tpu.memory_space<smem>>
    %823 = vector.broadcast %822 : f32 to vector<4x256xf32>
    %824 = arith.mulf %823, %377 : vector<4x256xf32>
    %825 = arith.addf %800, %803 : vector<4x256xf32>
    %826 = arith.addf %806, %809 : vector<4x256xf32>
    %827 = arith.addf %812, %815 : vector<4x256xf32>
    %828 = arith.addf %818, %821 : vector<4x256xf32>
    %829 = arith.addf %825, %826 : vector<4x256xf32>
    %830 = arith.addf %827, %828 : vector<4x256xf32>
    %831 = arith.addf %829, %830 : vector<4x256xf32>
    %832 = arith.addf %831, %824 : vector<4x256xf32>
    %833 = arith.addf %727, %762 : vector<4x256xf32>
    %834 = arith.addf %797, %832 : vector<4x256xf32>
    %835 = arith.addf %833, %834 : vector<4x256xf32>
    %c1_193 = arith.constant 1 : index
    %836 = memref.load %arg5[%c1_193] : memref<4xf32, #tpu.memory_space<smem>>
    %837 = vector.broadcast %836 : f32 to vector<4x256xf32>
    %838 = arith.addf %835, %837 : vector<4x256xf32>
    %c1_194 = arith.constant 1 : index
    %c0_195 = arith.constant 0 : index
    %c0_196 = arith.constant 0 : index
    %839 = vector.load %arg10[%c1_194, %c0_195, %c0_196] : memref<4x4x256xf32, #tpu.memory_space<vmem>>, vector<1x4x256xf32>
    %840 = vector.shape_cast %839 : vector<1x4x256xf32> to vector<4x256xf32>
    %841 = vector.shape_cast %838 : vector<4x256xf32> to vector<1x4x256xf32>
    tpu.vector_store %arg10[%c1_194, %c0_195, %c0_196], %841 {strides = array<i32>} : memref<4x4x256xf32, #tpu.memory_space<vmem>>, vector<1x4x256xf32>,
    %cst_197 = arith.constant dense<0.000000e+00> : vector<4xf32>
    %842 = vector.multi_reduction <add>, %838, %cst_197 [1] : vector<4x256xf32> to vector<4xf32>
    %843 = vector.shape_cast %842 : vector<4xf32> to vector<4x1xf32>
    %cst_198 = arith.constant 3.906250e-03 : f32
    %844 = vector.broadcast %cst_198 : f32 to vector<4x1xf32>
    %845 = arith.mulf %843, %844 : vector<4x1xf32>
    %c8_199 = arith.constant 8 : index
    %846 = memref.load %arg2[%c8_199] : memref<16xf32, #tpu.memory_space<smem>>
    %847 = vector.broadcast %846 : f32 to vector<4x256xf32>
    %848 = arith.mulf %847, %63 : vector<4x256xf32>
    %c9_200 = arith.constant 9 : index
    %849 = memref.load %arg2[%c9_200] : memref<16xf32, #tpu.memory_space<smem>>
    %850 = vector.broadcast %849 : f32 to vector<4x256xf32>
    %851 = arith.mulf %850, %153 : vector<4x256xf32>
    %c10_201 = arith.constant 10 : index
    %852 = memref.load %arg2[%c10_201] : memref<16xf32, #tpu.memory_space<smem>>
    %853 = vector.broadcast %852 : f32 to vector<4x256xf32>
    %854 = arith.mulf %853, %243 : vector<4x256xf32>
    %c11_202 = arith.constant 11 : index
    %855 = memref.load %arg2[%c11_202] : memref<16xf32, #tpu.memory_space<smem>>
    %856 = vector.broadcast %855 : f32 to vector<4x256xf32>
    %857 = arith.mulf %856, %333 : vector<4x256xf32>
    %858 = arith.addf %848, %851 : vector<4x256xf32>
    %859 = arith.addf %854, %857 : vector<4x256xf32>
    %860 = arith.addf %858, %859 : vector<4x256xf32>
    %c8_203 = arith.constant 8 : index
    %861 = memref.load %arg2[%c8_203] : memref<16xf32, #tpu.memory_space<smem>>
    %862 = vector.broadcast %861 : f32 to vector<4x256xf32>
    %863 = arith.mulf %862, %29 : vector<4x256xf32>
    %c9_204 = arith.constant 9 : index
    %864 = memref.load %arg2[%c9_204] : memref<16xf32, #tpu.memory_space<smem>>
    %865 = vector.broadcast %864 : f32 to vector<4x256xf32>
    %866 = arith.mulf %865, %119 : vector<4x256xf32>
    %c10_205 = arith.constant 10 : index
    %867 = memref.load %arg2[%c10_205] : memref<16xf32, #tpu.memory_space<smem>>
    %868 = vector.broadcast %867 : f32 to vector<4x256xf32>
    %869 = arith.mulf %868, %209 : vector<4x256xf32>
    %c11_206 = arith.constant 11 : index
    %870 = memref.load %arg2[%c11_206] : memref<16xf32, #tpu.memory_space<smem>>
    %871 = vector.broadcast %870 : f32 to vector<4x256xf32>
    %872 = arith.mulf %871, %299 : vector<4x256xf32>
    %873 = arith.addf %863, %866 : vector<4x256xf32>
    %874 = arith.addf %869, %872 : vector<4x256xf32>
    %875 = arith.addf %873, %874 : vector<4x256xf32>
    %c2_207 = arith.constant 2 : index
    %876 = memref.load %arg3[%c2_207] : memref<4xf32, #tpu.memory_space<smem>>
    %877 = vector.broadcast %876 : f32 to vector<4x256xf32>
    %878 = arith.addf %860, %877 : vector<4x256xf32>
    %879 = arith.negf %878 : vector<4x256xf32>
    %880 = math.exp %879 : vector<4x256xf32>
    %cst_208 = arith.constant 1.000000e+00 : f32
    %881 = vector.broadcast %cst_208 : f32 to vector<4x256xf32>
    %882 = arith.addf %881, %880 : vector<4x256xf32>
    %883 = arith.divf %881, %882 : vector<4x256xf32>
    %c2_209 = arith.constant 2 : index
    %884 = memref.load %arg3[%c2_209] : memref<4xf32, #tpu.memory_space<smem>>
    %885 = vector.broadcast %884 : f32 to vector<4x256xf32>
    %886 = arith.addf %875, %885 : vector<4x256xf32>
    %887 = arith.negf %886 : vector<4x256xf32>
    %888 = math.exp %887 : vector<4x256xf32>
    %cst_210 = arith.constant 1.000000e+00 : f32
    %889 = vector.broadcast %cst_210 : f32 to vector<4x256xf32>
    %890 = arith.addf %889, %888 : vector<4x256xf32>
    %891 = arith.divf %889, %890 : vector<4x256xf32>
    %892 = arith.mulf %883, %891 : vector<4x256xf32>
    %893 = arith.mulf %199, %892 : vector<4x256xf32>
    %cst_211 = arith.constant dense<0.000000e+00> : vector<4xf32>
    %894 = vector.multi_reduction <add>, %893, %cst_211 [1] : vector<4x256xf32> to vector<4xf32>
    %895 = vector.shape_cast %894 : vector<4xf32> to vector<4x1xf32>
    %cst_212 = arith.constant 3.906250e-03 : f32
    %896 = vector.broadcast %cst_212 : f32 to vector<4x1xf32>
    %897 = arith.mulf %895, %896 : vector<4x1xf32>
    %898 = arith.mulf %893, %893 : vector<4x256xf32>
    %cst_213 = arith.constant dense<0.000000e+00> : vector<4xf32>
    %899 = vector.multi_reduction <add>, %898, %cst_213 [1] : vector<4x256xf32> to vector<4xf32>
    %900 = vector.shape_cast %899 : vector<4xf32> to vector<4x1xf32>
    %cst_214 = arith.constant 3.906250e-03 : f32
    %901 = vector.broadcast %cst_214 : f32 to vector<4x1xf32>
    %902 = arith.mulf %900, %901 : vector<4x1xf32>
    %903 = arith.mulf %897, %897 : vector<4x1xf32>
    %904 = arith.subf %902, %903 : vector<4x1xf32>
    %cst_215 = arith.constant 0.000000e+00 : f32
    %905 = vector.broadcast %cst_215 : f32 to vector<4x1xf32>
    %906 = arith.maximumf %904, %905 : vector<4x1xf32>
    %907 = vector.broadcast %897 : vector<4x1xf32> to vector<4x256xf32>
    %908 = arith.subf %893, %907 : vector<4x256xf32>
    %cst_216 = arith.constant 9.99999974E-6 : f32
    %909 = vector.broadcast %cst_216 : f32 to vector<4x1xf32>
    %910 = arith.addf %906, %909 : vector<4x1xf32>
    %911 = math.rsqrt %910 : vector<4x1xf32>
    %912 = vector.broadcast %911 : vector<4x1xf32> to vector<4x256xf32>
    %913 = arith.mulf %908, %912 : vector<4x256xf32>
    %c2_217 = arith.constant 2 : index
    %914 = memref.load %arg6[%c2_217] : memref<4xf32, #tpu.memory_space<smem>>
    %915 = vector.broadcast %914 : f32 to vector<4x256xf32>
    %916 = arith.mulf %913, %915 : vector<4x256xf32>
    %c2_218 = arith.constant 2 : index
    %917 = memref.load %arg7[%c2_218] : memref<4xf32, #tpu.memory_space<smem>>
    %918 = vector.broadcast %917 : f32 to vector<4x256xf32>
    %919 = arith.addf %916, %918 : vector<4x256xf32>
    %c2_219 = arith.constant 2 : index
    %c0_220 = arith.constant 0 : index
    %c0_221 = arith.constant 0 : index
    %920 = vector.load %arg9[%c2_219, %c0_220, %c0_221] : memref<4x4x256xf32, #tpu.memory_space<vmem>>, vector<1x4x256xf32>
    %921 = vector.shape_cast %920 : vector<1x4x256xf32> to vector<4x256xf32>
    %922 = vector.shape_cast %919 : vector<4x256xf32> to vector<1x4x256xf32>
    tpu.vector_store %arg9[%c2_219, %c0_220, %c0_221], %922 {strides = array<i32>} : memref<4x4x256xf32, #tpu.memory_space<vmem>>, vector<1x4x256xf32>,
    %cst_222 = arith.constant dense<0.000000e+00> : vector<4xf32>
    %923 = vector.multi_reduction <add>, %919, %cst_222 [1] : vector<4x256xf32> to vector<4xf32>
    %924 = vector.shape_cast %923 : vector<4xf32> to vector<4x1xf32>
    %cst_223 = arith.constant 3.906250e-03 : f32
    %925 = vector.broadcast %cst_223 : f32 to vector<4x1xf32>
    %926 = arith.mulf %924, %925 : vector<4x1xf32>
    %c72 = arith.constant 72 : index
    %927 = memref.load %arg4[%c72] : memref<144xf32, #tpu.memory_space<smem>>
    %928 = vector.broadcast %927 : f32 to vector<4x256xf32>
    %929 = arith.mulf %928, %69 : vector<4x256xf32>
    %c73 = arith.constant 73 : index
    %930 = memref.load %arg4[%c73] : memref<144xf32, #tpu.memory_space<smem>>
    %931 = vector.broadcast %930 : f32 to vector<4x256xf32>
    %932 = arith.mulf %931, %74 : vector<4x256xf32>
    %c74 = arith.constant 74 : index
    %933 = memref.load %arg4[%c74] : memref<144xf32, #tpu.memory_space<smem>>
    %934 = vector.broadcast %933 : f32 to vector<4x256xf32>
    %935 = arith.mulf %934, %80 : vector<4x256xf32>
    %c75 = arith.constant 75 : index
    %936 = memref.load %arg4[%c75] : memref<144xf32, #tpu.memory_space<smem>>
    %937 = vector.broadcast %936 : f32 to vector<4x256xf32>
    %938 = arith.mulf %937, %85 : vector<4x256xf32>
    %c76 = arith.constant 76 : index
    %939 = memref.load %arg4[%c76] : memref<144xf32, #tpu.memory_space<smem>>
    %940 = vector.broadcast %939 : f32 to vector<4x256xf32>
    %941 = arith.mulf %940, %19 : vector<4x256xf32>
    %c77 = arith.constant 77 : index
    %942 = memref.load %arg4[%c77] : memref<144xf32, #tpu.memory_space<smem>>
    %943 = vector.broadcast %942 : f32 to vector<4x256xf32>
    %944 = arith.mulf %943, %90 : vector<4x256xf32>
    %c78 = arith.constant 78 : index
    %945 = memref.load %arg4[%c78] : memref<144xf32, #tpu.memory_space<smem>>
    %946 = vector.broadcast %945 : f32 to vector<4x256xf32>
    %947 = arith.mulf %946, %96 : vector<4x256xf32>
    %c79 = arith.constant 79 : index
    %948 = memref.load %arg4[%c79] : memref<144xf32, #tpu.memory_space<smem>>
    %949 = vector.broadcast %948 : f32 to vector<4x256xf32>
    %950 = arith.mulf %949, %101 : vector<4x256xf32>
    %c80 = arith.constant 80 : index
    %951 = memref.load %arg4[%c80] : memref<144xf32, #tpu.memory_space<smem>>
    %952 = vector.broadcast %951 : f32 to vector<4x256xf32>
    %953 = arith.mulf %952, %107 : vector<4x256xf32>
    %954 = arith.addf %929, %932 : vector<4x256xf32>
    %955 = arith.addf %935, %938 : vector<4x256xf32>
    %956 = arith.addf %941, %944 : vector<4x256xf32>
    %957 = arith.addf %947, %950 : vector<4x256xf32>
    %958 = arith.addf %954, %955 : vector<4x256xf32>
    %959 = arith.addf %956, %957 : vector<4x256xf32>
    %960 = arith.addf %958, %959 : vector<4x256xf32>
    %961 = arith.addf %960, %953 : vector<4x256xf32>
    %c81 = arith.constant 81 : index
    %962 = memref.load %arg4[%c81] : memref<144xf32, #tpu.memory_space<smem>>
    %963 = vector.broadcast %962 : f32 to vector<4x256xf32>
    %964 = arith.mulf %963, %159 : vector<4x256xf32>
    %c82 = arith.constant 82 : index
    %965 = memref.load %arg4[%c82] : memref<144xf32, #tpu.memory_space<smem>>
    %966 = vector.broadcast %965 : f32 to vector<4x256xf32>
    %967 = arith.mulf %966, %164 : vector<4x256xf32>
    %c83 = arith.constant 83 : index
    %968 = memref.load %arg4[%c83] : memref<144xf32, #tpu.memory_space<smem>>
    %969 = vector.broadcast %968 : f32 to vector<4x256xf32>
    %970 = arith.mulf %969, %170 : vector<4x256xf32>
    %c84 = arith.constant 84 : index
    %971 = memref.load %arg4[%c84] : memref<144xf32, #tpu.memory_space<smem>>
    %972 = vector.broadcast %971 : f32 to vector<4x256xf32>
    %973 = arith.mulf %972, %175 : vector<4x256xf32>
    %c85 = arith.constant 85 : index
    %974 = memref.load %arg4[%c85] : memref<144xf32, #tpu.memory_space<smem>>
    %975 = vector.broadcast %974 : f32 to vector<4x256xf32>
    %976 = arith.mulf %975, %109 : vector<4x256xf32>
    %c86 = arith.constant 86 : index
    %977 = memref.load %arg4[%c86] : memref<144xf32, #tpu.memory_space<smem>>
    %978 = vector.broadcast %977 : f32 to vector<4x256xf32>
    %979 = arith.mulf %978, %180 : vector<4x256xf32>
    %c87 = arith.constant 87 : index
    %980 = memref.load %arg4[%c87] : memref<144xf32, #tpu.memory_space<smem>>
    %981 = vector.broadcast %980 : f32 to vector<4x256xf32>
    %982 = arith.mulf %981, %186 : vector<4x256xf32>
    %c88 = arith.constant 88 : index
    %983 = memref.load %arg4[%c88] : memref<144xf32, #tpu.memory_space<smem>>
    %984 = vector.broadcast %983 : f32 to vector<4x256xf32>
    %985 = arith.mulf %984, %191 : vector<4x256xf32>
    %c89 = arith.constant 89 : index
    %986 = memref.load %arg4[%c89] : memref<144xf32, #tpu.memory_space<smem>>
    %987 = vector.broadcast %986 : f32 to vector<4x256xf32>
    %988 = arith.mulf %987, %197 : vector<4x256xf32>
    %989 = arith.addf %964, %967 : vector<4x256xf32>
    %990 = arith.addf %970, %973 : vector<4x256xf32>
    %991 = arith.addf %976, %979 : vector<4x256xf32>
    %992 = arith.addf %982, %985 : vector<4x256xf32>
    %993 = arith.addf %989, %990 : vector<4x256xf32>
    %994 = arith.addf %991, %992 : vector<4x256xf32>
    %995 = arith.addf %993, %994 : vector<4x256xf32>
    %996 = arith.addf %995, %988 : vector<4x256xf32>
    %c90 = arith.constant 90 : index
    %997 = memref.load %arg4[%c90] : memref<144xf32, #tpu.memory_space<smem>>
    %998 = vector.broadcast %997 : f32 to vector<4x256xf32>
    %999 = arith.mulf %998, %249 : vector<4x256xf32>
    %c91 = arith.constant 91 : index
    %1000 = memref.load %arg4[%c91] : memref<144xf32, #tpu.memory_space<smem>>
    %1001 = vector.broadcast %1000 : f32 to vector<4x256xf32>
    %1002 = arith.mulf %1001, %254 : vector<4x256xf32>
    %c92 = arith.constant 92 : index
    %1003 = memref.load %arg4[%c92] : memref<144xf32, #tpu.memory_space<smem>>
    %1004 = vector.broadcast %1003 : f32 to vector<4x256xf32>
    %1005 = arith.mulf %1004, %260 : vector<4x256xf32>
    %c93 = arith.constant 93 : index
    %1006 = memref.load %arg4[%c93] : memref<144xf32, #tpu.memory_space<smem>>
    %1007 = vector.broadcast %1006 : f32 to vector<4x256xf32>
    %1008 = arith.mulf %1007, %265 : vector<4x256xf32>
    %c94 = arith.constant 94 : index
    %1009 = memref.load %arg4[%c94] : memref<144xf32, #tpu.memory_space<smem>>
    %1010 = vector.broadcast %1009 : f32 to vector<4x256xf32>
    %1011 = arith.mulf %1010, %199 : vector<4x256xf32>
    %c95 = arith.constant 95 : index
    %1012 = memref.load %arg4[%c95] : memref<144xf32, #tpu.memory_space<smem>>
    %1013 = vector.broadcast %1012 : f32 to vector<4x256xf32>
    %1014 = arith.mulf %1013, %270 : vector<4x256xf32>
    %c96 = arith.constant 96 : index
    %1015 = memref.load %arg4[%c96] : memref<144xf32, #tpu.memory_space<smem>>
    %1016 = vector.broadcast %1015 : f32 to vector<4x256xf32>
    %1017 = arith.mulf %1016, %276 : vector<4x256xf32>
    %c97 = arith.constant 97 : index
    %1018 = memref.load %arg4[%c97] : memref<144xf32, #tpu.memory_space<smem>>
    %1019 = vector.broadcast %1018 : f32 to vector<4x256xf32>
    %1020 = arith.mulf %1019, %281 : vector<4x256xf32>
    %c98 = arith.constant 98 : index
    %1021 = memref.load %arg4[%c98] : memref<144xf32, #tpu.memory_space<smem>>
    %1022 = vector.broadcast %1021 : f32 to vector<4x256xf32>
    %1023 = arith.mulf %1022, %287 : vector<4x256xf32>
    %1024 = arith.addf %999, %1002 : vector<4x256xf32>
    %1025 = arith.addf %1005, %1008 : vector<4x256xf32>
    %1026 = arith.addf %1011, %1014 : vector<4x256xf32>
    %1027 = arith.addf %1017, %1020 : vector<4x256xf32>
    %1028 = arith.addf %1024, %1025 : vector<4x256xf32>
    %1029 = arith.addf %1026, %1027 : vector<4x256xf32>
    %1030 = arith.addf %1028, %1029 : vector<4x256xf32>
    %1031 = arith.addf %1030, %1023 : vector<4x256xf32>
    %c99 = arith.constant 99 : index
    %1032 = memref.load %arg4[%c99] : memref<144xf32, #tpu.memory_space<smem>>
    %1033 = vector.broadcast %1032 : f32 to vector<4x256xf32>
    %1034 = arith.mulf %1033, %339 : vector<4x256xf32>
    %c100 = arith.constant 100 : index
    %1035 = memref.load %arg4[%c100] : memref<144xf32, #tpu.memory_space<smem>>
    %1036 = vector.broadcast %1035 : f32 to vector<4x256xf32>
    %1037 = arith.mulf %1036, %344 : vector<4x256xf32>
    %c101 = arith.constant 101 : index
    %1038 = memref.load %arg4[%c101] : memref<144xf32, #tpu.memory_space<smem>>
    %1039 = vector.broadcast %1038 : f32 to vector<4x256xf32>
    %1040 = arith.mulf %1039, %350 : vector<4x256xf32>
    %c102 = arith.constant 102 : index
    %1041 = memref.load %arg4[%c102] : memref<144xf32, #tpu.memory_space<smem>>
    %1042 = vector.broadcast %1041 : f32 to vector<4x256xf32>
    %1043 = arith.mulf %1042, %355 : vector<4x256xf32>
    %c103 = arith.constant 103 : index
    %1044 = memref.load %arg4[%c103] : memref<144xf32, #tpu.memory_space<smem>>
    %1045 = vector.broadcast %1044 : f32 to vector<4x256xf32>
    %1046 = arith.mulf %1045, %289 : vector<4x256xf32>
    %c104 = arith.constant 104 : index
    %1047 = memref.load %arg4[%c104] : memref<144xf32, #tpu.memory_space<smem>>
    %1048 = vector.broadcast %1047 : f32 to vector<4x256xf32>
    %1049 = arith.mulf %1048, %360 : vector<4x256xf32>
    %c105 = arith.constant 105 : index
    %1050 = memref.load %arg4[%c105] : memref<144xf32, #tpu.memory_space<smem>>
    %1051 = vector.broadcast %1050 : f32 to vector<4x256xf32>
    %1052 = arith.mulf %1051, %366 : vector<4x256xf32>
    %c106 = arith.constant 106 : index
    %1053 = memref.load %arg4[%c106] : memref<144xf32, #tpu.memory_space<smem>>
    %1054 = vector.broadcast %1053 : f32 to vector<4x256xf32>
    %1055 = arith.mulf %1054, %371 : vector<4x256xf32>
    %c107 = arith.constant 107 : index
    %1056 = memref.load %arg4[%c107] : memref<144xf32, #tpu.memory_space<smem>>
    %1057 = vector.broadcast %1056 : f32 to vector<4x256xf32>
    %1058 = arith.mulf %1057, %377 : vector<4x256xf32>
    %1059 = arith.addf %1034, %1037 : vector<4x256xf32>
    %1060 = arith.addf %1040, %1043 : vector<4x256xf32>
    %1061 = arith.addf %1046, %1049 : vector<4x256xf32>
    %1062 = arith.addf %1052, %1055 : vector<4x256xf32>
    %1063 = arith.addf %1059, %1060 : vector<4x256xf32>
    %1064 = arith.addf %1061, %1062 : vector<4x256xf32>
    %1065 = arith.addf %1063, %1064 : vector<4x256xf32>
    %1066 = arith.addf %1065, %1058 : vector<4x256xf32>
    %1067 = arith.addf %961, %996 : vector<4x256xf32>
    %1068 = arith.addf %1031, %1066 : vector<4x256xf32>
    %1069 = arith.addf %1067, %1068 : vector<4x256xf32>
    %c2_224 = arith.constant 2 : index
    %1070 = memref.load %arg5[%c2_224] : memref<4xf32, #tpu.memory_space<smem>>
    %1071 = vector.broadcast %1070 : f32 to vector<4x256xf32>
    %1072 = arith.addf %1069, %1071 : vector<4x256xf32>
    %c2_225 = arith.constant 2 : index
    %c0_226 = arith.constant 0 : index
    %c0_227 = arith.constant 0 : index
    %1073 = vector.load %arg10[%c2_225, %c0_226, %c0_227] : memref<4x4x256xf32, #tpu.memory_space<vmem>>, vector<1x4x256xf32>
    %1074 = vector.shape_cast %1073 : vector<1x4x256xf32> to vector<4x256xf32>
    %1075 = vector.shape_cast %1072 : vector<4x256xf32> to vector<1x4x256xf32>
    tpu.vector_store %arg10[%c2_225, %c0_226, %c0_227], %1075 {strides = array<i32>} : memref<4x4x256xf32, #tpu.memory_space<vmem>>, vector<1x4x256xf32>,
    %cst_228 = arith.constant dense<0.000000e+00> : vector<4xf32>
    %1076 = vector.multi_reduction <add>, %1072, %cst_228 [1] : vector<4x256xf32> to vector<4xf32>
    %1077 = vector.shape_cast %1076 : vector<4xf32> to vector<4x1xf32>
    %cst_229 = arith.constant 3.906250e-03 : f32
    %1078 = vector.broadcast %cst_229 : f32 to vector<4x1xf32>
    %1079 = arith.mulf %1077, %1078 : vector<4x1xf32>
    %c12_230 = arith.constant 12 : index
    %1080 = memref.load %arg2[%c12_230] : memref<16xf32, #tpu.memory_space<smem>>
    %1081 = vector.broadcast %1080 : f32 to vector<4x256xf32>
    %1082 = arith.mulf %1081, %63 : vector<4x256xf32>
    %c13_231 = arith.constant 13 : index
    %1083 = memref.load %arg2[%c13_231] : memref<16xf32, #tpu.memory_space<smem>>
    %1084 = vector.broadcast %1083 : f32 to vector<4x256xf32>
    %1085 = arith.mulf %1084, %153 : vector<4x256xf32>
    %c14_232 = arith.constant 14 : index
    %1086 = memref.load %arg2[%c14_232] : memref<16xf32, #tpu.memory_space<smem>>
    %1087 = vector.broadcast %1086 : f32 to vector<4x256xf32>
    %1088 = arith.mulf %1087, %243 : vector<4x256xf32>
    %c15_233 = arith.constant 15 : index
    %1089 = memref.load %arg2[%c15_233] : memref<16xf32, #tpu.memory_space<smem>>
    %1090 = vector.broadcast %1089 : f32 to vector<4x256xf32>
    %1091 = arith.mulf %1090, %333 : vector<4x256xf32>
    %1092 = arith.addf %1082, %1085 : vector<4x256xf32>
    %1093 = arith.addf %1088, %1091 : vector<4x256xf32>
    %1094 = arith.addf %1092, %1093 : vector<4x256xf32>
    %c12_234 = arith.constant 12 : index
    %1095 = memref.load %arg2[%c12_234] : memref<16xf32, #tpu.memory_space<smem>>
    %1096 = vector.broadcast %1095 : f32 to vector<4x256xf32>
    %1097 = arith.mulf %1096, %29 : vector<4x256xf32>
    %c13_235 = arith.constant 13 : index
    %1098 = memref.load %arg2[%c13_235] : memref<16xf32, #tpu.memory_space<smem>>
    %1099 = vector.broadcast %1098 : f32 to vector<4x256xf32>
    %1100 = arith.mulf %1099, %119 : vector<4x256xf32>
    %c14_236 = arith.constant 14 : index
    %1101 = memref.load %arg2[%c14_236] : memref<16xf32, #tpu.memory_space<smem>>
    %1102 = vector.broadcast %1101 : f32 to vector<4x256xf32>
    %1103 = arith.mulf %1102, %209 : vector<4x256xf32>
    %c15_237 = arith.constant 15 : index
    %1104 = memref.load %arg2[%c15_237] : memref<16xf32, #tpu.memory_space<smem>>
    %1105 = vector.broadcast %1104 : f32 to vector<4x256xf32>
    %1106 = arith.mulf %1105, %299 : vector<4x256xf32>
    %1107 = arith.addf %1097, %1100 : vector<4x256xf32>
    %1108 = arith.addf %1103, %1106 : vector<4x256xf32>
    %1109 = arith.addf %1107, %1108 : vector<4x256xf32>
    %c3_238 = arith.constant 3 : index
    %1110 = memref.load %arg3[%c3_238] : memref<4xf32, #tpu.memory_space<smem>>
    %1111 = vector.broadcast %1110 : f32 to vector<4x256xf32>
    %1112 = arith.addf %1094, %1111 : vector<4x256xf32>
    %1113 = arith.negf %1112 : vector<4x256xf32>
    %1114 = math.exp %1113 : vector<4x256xf32>
    %cst_239 = arith.constant 1.000000e+00 : f32
    %1115 = vector.broadcast %cst_239 : f32 to vector<4x256xf32>
    %1116 = arith.addf %1115, %1114 : vector<4x256xf32>
    %1117 = arith.divf %1115, %1116 : vector<4x256xf32>
    %c3_240 = arith.constant 3 : index
    %1118 = memref.load %arg3[%c3_240] : memref<4xf32, #tpu.memory_space<smem>>
    %1119 = vector.broadcast %1118 : f32 to vector<4x256xf32>
    %1120 = arith.addf %1109, %1119 : vector<4x256xf32>
    %1121 = arith.negf %1120 : vector<4x256xf32>
    %1122 = math.exp %1121 : vector<4x256xf32>
    %cst_241 = arith.constant 1.000000e+00 : f32
    %1123 = vector.broadcast %cst_241 : f32 to vector<4x256xf32>
    %1124 = arith.addf %1123, %1122 : vector<4x256xf32>
    %1125 = arith.divf %1123, %1124 : vector<4x256xf32>
    %1126 = arith.mulf %1117, %1125 : vector<4x256xf32>
    %1127 = arith.mulf %289, %1126 : vector<4x256xf32>
    %cst_242 = arith.constant dense<0.000000e+00> : vector<4xf32>
    %1128 = vector.multi_reduction <add>, %1127, %cst_242 [1] : vector<4x256xf32> to vector<4xf32>
    %1129 = vector.shape_cast %1128 : vector<4xf32> to vector<4x1xf32>
    %cst_243 = arith.constant 3.906250e-03 : f32
    %1130 = vector.broadcast %cst_243 : f32 to vector<4x1xf32>
    %1131 = arith.mulf %1129, %1130 : vector<4x1xf32>
    %1132 = arith.mulf %1127, %1127 : vector<4x256xf32>
    %cst_244 = arith.constant dense<0.000000e+00> : vector<4xf32>
    %1133 = vector.multi_reduction <add>, %1132, %cst_244 [1] : vector<4x256xf32> to vector<4xf32>
    %1134 = vector.shape_cast %1133 : vector<4xf32> to vector<4x1xf32>
    %cst_245 = arith.constant 3.906250e-03 : f32
    %1135 = vector.broadcast %cst_245 : f32 to vector<4x1xf32>
    %1136 = arith.mulf %1134, %1135 : vector<4x1xf32>
    %1137 = arith.mulf %1131, %1131 : vector<4x1xf32>
    %1138 = arith.subf %1136, %1137 : vector<4x1xf32>
    %cst_246 = arith.constant 0.000000e+00 : f32
    %1139 = vector.broadcast %cst_246 : f32 to vector<4x1xf32>
    %1140 = arith.maximumf %1138, %1139 : vector<4x1xf32>
    %1141 = vector.broadcast %1131 : vector<4x1xf32> to vector<4x256xf32>
    %1142 = arith.subf %1127, %1141 : vector<4x256xf32>
    %cst_247 = arith.constant 9.99999974E-6 : f32
    %1143 = vector.broadcast %cst_247 : f32 to vector<4x1xf32>
    %1144 = arith.addf %1140, %1143 : vector<4x1xf32>
    %1145 = math.rsqrt %1144 : vector<4x1xf32>
    %1146 = vector.broadcast %1145 : vector<4x1xf32> to vector<4x256xf32>
    %1147 = arith.mulf %1142, %1146 : vector<4x256xf32>
    %c3_248 = arith.constant 3 : index
    %1148 = memref.load %arg6[%c3_248] : memref<4xf32, #tpu.memory_space<smem>>
    %1149 = vector.broadcast %1148 : f32 to vector<4x256xf32>
    %1150 = arith.mulf %1147, %1149 : vector<4x256xf32>
    %c3_249 = arith.constant 3 : index
    %1151 = memref.load %arg7[%c3_249] : memref<4xf32, #tpu.memory_space<smem>>
    %1152 = vector.broadcast %1151 : f32 to vector<4x256xf32>
    %1153 = arith.addf %1150, %1152 : vector<4x256xf32>
    %c3_250 = arith.constant 3 : index
    %c0_251 = arith.constant 0 : index
    %c0_252 = arith.constant 0 : index
    %1154 = vector.load %arg9[%c3_250, %c0_251, %c0_252] : memref<4x4x256xf32, #tpu.memory_space<vmem>>, vector<1x4x256xf32>
    %1155 = vector.shape_cast %1154 : vector<1x4x256xf32> to vector<4x256xf32>
    %1156 = vector.shape_cast %1153 : vector<4x256xf32> to vector<1x4x256xf32>
    tpu.vector_store %arg9[%c3_250, %c0_251, %c0_252], %1156 {strides = array<i32>} : memref<4x4x256xf32, #tpu.memory_space<vmem>>, vector<1x4x256xf32>,
    %cst_253 = arith.constant dense<0.000000e+00> : vector<4xf32>
    %1157 = vector.multi_reduction <add>, %1153, %cst_253 [1] : vector<4x256xf32> to vector<4xf32>
    %1158 = vector.shape_cast %1157 : vector<4xf32> to vector<4x1xf32>
    %cst_254 = arith.constant 3.906250e-03 : f32
    %1159 = vector.broadcast %cst_254 : f32 to vector<4x1xf32>
    %1160 = arith.mulf %1158, %1159 : vector<4x1xf32>
    %c108 = arith.constant 108 : index
    %1161 = memref.load %arg4[%c108] : memref<144xf32, #tpu.memory_space<smem>>
    %1162 = vector.broadcast %1161 : f32 to vector<4x256xf32>
    %1163 = arith.mulf %1162, %69 : vector<4x256xf32>
    %c109 = arith.constant 109 : index
    %1164 = memref.load %arg4[%c109] : memref<144xf32, #tpu.memory_space<smem>>
    %1165 = vector.broadcast %1164 : f32 to vector<4x256xf32>
    %1166 = arith.mulf %1165, %74 : vector<4x256xf32>
    %c110 = arith.constant 110 : index
    %1167 = memref.load %arg4[%c110] : memref<144xf32, #tpu.memory_space<smem>>
    %1168 = vector.broadcast %1167 : f32 to vector<4x256xf32>
    %1169 = arith.mulf %1168, %80 : vector<4x256xf32>
    %c111 = arith.constant 111 : index
    %1170 = memref.load %arg4[%c111] : memref<144xf32, #tpu.memory_space<smem>>
    %1171 = vector.broadcast %1170 : f32 to vector<4x256xf32>
    %1172 = arith.mulf %1171, %85 : vector<4x256xf32>
    %c112 = arith.constant 112 : index
    %1173 = memref.load %arg4[%c112] : memref<144xf32, #tpu.memory_space<smem>>
    %1174 = vector.broadcast %1173 : f32 to vector<4x256xf32>
    %1175 = arith.mulf %1174, %19 : vector<4x256xf32>
    %c113 = arith.constant 113 : index
    %1176 = memref.load %arg4[%c113] : memref<144xf32, #tpu.memory_space<smem>>
    %1177 = vector.broadcast %1176 : f32 to vector<4x256xf32>
    %1178 = arith.mulf %1177, %90 : vector<4x256xf32>
    %c114 = arith.constant 114 : index
    %1179 = memref.load %arg4[%c114] : memref<144xf32, #tpu.memory_space<smem>>
    %1180 = vector.broadcast %1179 : f32 to vector<4x256xf32>
    %1181 = arith.mulf %1180, %96 : vector<4x256xf32>
    %c115 = arith.constant 115 : index
    %1182 = memref.load %arg4[%c115] : memref<144xf32, #tpu.memory_space<smem>>
    %1183 = vector.broadcast %1182 : f32 to vector<4x256xf32>
    %1184 = arith.mulf %1183, %101 : vector<4x256xf32>
    %c116 = arith.constant 116 : index
    %1185 = memref.load %arg4[%c116] : memref<144xf32, #tpu.memory_space<smem>>
    %1186 = vector.broadcast %1185 : f32 to vector<4x256xf32>
    %1187 = arith.mulf %1186, %107 : vector<4x256xf32>
    %1188 = arith.addf %1163, %1166 : vector<4x256xf32>
    %1189 = arith.addf %1169, %1172 : vector<4x256xf32>
    %1190 = arith.addf %1175, %1178 : vector<4x256xf32>
    %1191 = arith.addf %1181, %1184 : vector<4x256xf32>
    %1192 = arith.addf %1188, %1189 : vector<4x256xf32>
    %1193 = arith.addf %1190, %1191 : vector<4x256xf32>
    %1194 = arith.addf %1192, %1193 : vector<4x256xf32>
    %1195 = arith.addf %1194, %1187 : vector<4x256xf32>
    %c117 = arith.constant 117 : index
    %1196 = memref.load %arg4[%c117] : memref<144xf32, #tpu.memory_space<smem>>
    %1197 = vector.broadcast %1196 : f32 to vector<4x256xf32>
    %1198 = arith.mulf %1197, %159 : vector<4x256xf32>
    %c118 = arith.constant 118 : index
    %1199 = memref.load %arg4[%c118] : memref<144xf32, #tpu.memory_space<smem>>
    %1200 = vector.broadcast %1199 : f32 to vector<4x256xf32>
    %1201 = arith.mulf %1200, %164 : vector<4x256xf32>
    %c119 = arith.constant 119 : index
    %1202 = memref.load %arg4[%c119] : memref<144xf32, #tpu.memory_space<smem>>
    %1203 = vector.broadcast %1202 : f32 to vector<4x256xf32>
    %1204 = arith.mulf %1203, %170 : vector<4x256xf32>
    %c120 = arith.constant 120 : index
    %1205 = memref.load %arg4[%c120] : memref<144xf32, #tpu.memory_space<smem>>
    %1206 = vector.broadcast %1205 : f32 to vector<4x256xf32>
    %1207 = arith.mulf %1206, %175 : vector<4x256xf32>
    %c121 = arith.constant 121 : index
    %1208 = memref.load %arg4[%c121] : memref<144xf32, #tpu.memory_space<smem>>
    %1209 = vector.broadcast %1208 : f32 to vector<4x256xf32>
    %1210 = arith.mulf %1209, %109 : vector<4x256xf32>
    %c122 = arith.constant 122 : index
    %1211 = memref.load %arg4[%c122] : memref<144xf32, #tpu.memory_space<smem>>
    %1212 = vector.broadcast %1211 : f32 to vector<4x256xf32>
    %1213 = arith.mulf %1212, %180 : vector<4x256xf32>
    %c123 = arith.constant 123 : index
    %1214 = memref.load %arg4[%c123] : memref<144xf32, #tpu.memory_space<smem>>
    %1215 = vector.broadcast %1214 : f32 to vector<4x256xf32>
    %1216 = arith.mulf %1215, %186 : vector<4x256xf32>
    %c124 = arith.constant 124 : index
    %1217 = memref.load %arg4[%c124] : memref<144xf32, #tpu.memory_space<smem>>
    %1218 = vector.broadcast %1217 : f32 to vector<4x256xf32>
    %1219 = arith.mulf %1218, %191 : vector<4x256xf32>
    %c125 = arith.constant 125 : index
    %1220 = memref.load %arg4[%c125] : memref<144xf32, #tpu.memory_space<smem>>
    %1221 = vector.broadcast %1220 : f32 to vector<4x256xf32>
    %1222 = arith.mulf %1221, %197 : vector<4x256xf32>
    %1223 = arith.addf %1198, %1201 : vector<4x256xf32>
    %1224 = arith.addf %1204, %1207 : vector<4x256xf32>
    %1225 = arith.addf %1210, %1213 : vector<4x256xf32>
    %1226 = arith.addf %1216, %1219 : vector<4x256xf32>
    %1227 = arith.addf %1223, %1224 : vector<4x256xf32>
    %1228 = arith.addf %1225, %1226 : vector<4x256xf32>
    %1229 = arith.addf %1227, %1228 : vector<4x256xf32>
    %1230 = arith.addf %1229, %1222 : vector<4x256xf32>
    %c126 = arith.constant 126 : index
    %1231 = memref.load %arg4[%c126] : memref<144xf32, #tpu.memory_space<smem>>
    %1232 = vector.broadcast %1231 : f32 to vector<4x256xf32>
    %1233 = arith.mulf %1232, %249 : vector<4x256xf32>
    %c127 = arith.constant 127 : index
    %1234 = memref.load %arg4[%c127] : memref<144xf32, #tpu.memory_space<smem>>
    %1235 = vector.broadcast %1234 : f32 to vector<4x256xf32>
    %1236 = arith.mulf %1235, %254 : vector<4x256xf32>
    %c128 = arith.constant 128 : index
    %1237 = memref.load %arg4[%c128] : memref<144xf32, #tpu.memory_space<smem>>
    %1238 = vector.broadcast %1237 : f32 to vector<4x256xf32>
    %1239 = arith.mulf %1238, %260 : vector<4x256xf32>
    %c129 = arith.constant 129 : index
    %1240 = memref.load %arg4[%c129] : memref<144xf32, #tpu.memory_space<smem>>
    %1241 = vector.broadcast %1240 : f32 to vector<4x256xf32>
    %1242 = arith.mulf %1241, %265 : vector<4x256xf32>
    %c130 = arith.constant 130 : index
    %1243 = memref.load %arg4[%c130] : memref<144xf32, #tpu.memory_space<smem>>
    %1244 = vector.broadcast %1243 : f32 to vector<4x256xf32>
    %1245 = arith.mulf %1244, %199 : vector<4x256xf32>
    %c131 = arith.constant 131 : index
    %1246 = memref.load %arg4[%c131] : memref<144xf32, #tpu.memory_space<smem>>
    %1247 = vector.broadcast %1246 : f32 to vector<4x256xf32>
    %1248 = arith.mulf %1247, %270 : vector<4x256xf32>
    %c132 = arith.constant 132 : index
    %1249 = memref.load %arg4[%c132] : memref<144xf32, #tpu.memory_space<smem>>
    %1250 = vector.broadcast %1249 : f32 to vector<4x256xf32>
    %1251 = arith.mulf %1250, %276 : vector<4x256xf32>
    %c133 = arith.constant 133 : index
    %1252 = memref.load %arg4[%c133] : memref<144xf32, #tpu.memory_space<smem>>
    %1253 = vector.broadcast %1252 : f32 to vector<4x256xf32>
    %1254 = arith.mulf %1253, %281 : vector<4x256xf32>
    %c134 = arith.constant 134 : index
    %1255 = memref.load %arg4[%c134] : memref<144xf32, #tpu.memory_space<smem>>
    %1256 = vector.broadcast %1255 : f32 to vector<4x256xf32>
    %1257 = arith.mulf %1256, %287 : vector<4x256xf32>
    %1258 = arith.addf %1233, %1236 : vector<4x256xf32>
    %1259 = arith.addf %1239, %1242 : vector<4x256xf32>
    %1260 = arith.addf %1245, %1248 : vector<4x256xf32>
    %1261 = arith.addf %1251, %1254 : vector<4x256xf32>
    %1262 = arith.addf %1258, %1259 : vector<4x256xf32>
    %1263 = arith.addf %1260, %1261 : vector<4x256xf32>
    %1264 = arith.addf %1262, %1263 : vector<4x256xf32>
    %1265 = arith.addf %1264, %1257 : vector<4x256xf32>
    %c135 = arith.constant 135 : index
    %1266 = memref.load %arg4[%c135] : memref<144xf32, #tpu.memory_space<smem>>
    %1267 = vector.broadcast %1266 : f32 to vector<4x256xf32>
    %1268 = arith.mulf %1267, %339 : vector<4x256xf32>
    %c136 = arith.constant 136 : index
    %1269 = memref.load %arg4[%c136] : memref<144xf32, #tpu.memory_space<smem>>
    %1270 = vector.broadcast %1269 : f32 to vector<4x256xf32>
    %1271 = arith.mulf %1270, %344 : vector<4x256xf32>
    %c137 = arith.constant 137 : index
    %1272 = memref.load %arg4[%c137] : memref<144xf32, #tpu.memory_space<smem>>
    %1273 = vector.broadcast %1272 : f32 to vector<4x256xf32>
    %1274 = arith.mulf %1273, %350 : vector<4x256xf32>
    %c138 = arith.constant 138 : index
    %1275 = memref.load %arg4[%c138] : memref<144xf32, #tpu.memory_space<smem>>
    %1276 = vector.broadcast %1275 : f32 to vector<4x256xf32>
    %1277 = arith.mulf %1276, %355 : vector<4x256xf32>
    %c139 = arith.constant 139 : index
    %1278 = memref.load %arg4[%c139] : memref<144xf32, #tpu.memory_space<smem>>
    %1279 = vector.broadcast %1278 : f32 to vector<4x256xf32>
    %1280 = arith.mulf %1279, %289 : vector<4x256xf32>
    %c140 = arith.constant 140 : index
    %1281 = memref.load %arg4[%c140] : memref<144xf32, #tpu.memory_space<smem>>
    %1282 = vector.broadcast %1281 : f32 to vector<4x256xf32>
    %1283 = arith.mulf %1282, %360 : vector<4x256xf32>
    %c141 = arith.constant 141 : index
    %1284 = memref.load %arg4[%c141] : memref<144xf32, #tpu.memory_space<smem>>
    %1285 = vector.broadcast %1284 : f32 to vector<4x256xf32>
    %1286 = arith.mulf %1285, %366 : vector<4x256xf32>
    %c142 = arith.constant 142 : index
    %1287 = memref.load %arg4[%c142] : memref<144xf32, #tpu.memory_space<smem>>
    %1288 = vector.broadcast %1287 : f32 to vector<4x256xf32>
    %1289 = arith.mulf %1288, %371 : vector<4x256xf32>
    %c143 = arith.constant 143 : index
    %1290 = memref.load %arg4[%c143] : memref<144xf32, #tpu.memory_space<smem>>
    %1291 = vector.broadcast %1290 : f32 to vector<4x256xf32>
    %1292 = arith.mulf %1291, %377 : vector<4x256xf32>
    %1293 = arith.addf %1268, %1271 : vector<4x256xf32>
    %1294 = arith.addf %1274, %1277 : vector<4x256xf32>
    %1295 = arith.addf %1280, %1283 : vector<4x256xf32>
    %1296 = arith.addf %1286, %1289 : vector<4x256xf32>
    %1297 = arith.addf %1293, %1294 : vector<4x256xf32>
    %1298 = arith.addf %1295, %1296 : vector<4x256xf32>
    %1299 = arith.addf %1297, %1298 : vector<4x256xf32>
    %1300 = arith.addf %1299, %1292 : vector<4x256xf32>
    %1301 = arith.addf %1195, %1230 : vector<4x256xf32>
    %1302 = arith.addf %1265, %1300 : vector<4x256xf32>
    %1303 = arith.addf %1301, %1302 : vector<4x256xf32>
    %c3_255 = arith.constant 3 : index
    %1304 = memref.load %arg5[%c3_255] : memref<4xf32, #tpu.memory_space<smem>>
    %1305 = vector.broadcast %1304 : f32 to vector<4x256xf32>
    %1306 = arith.addf %1303, %1305 : vector<4x256xf32>
    %c3_256 = arith.constant 3 : index
    %c0_257 = arith.constant 0 : index
    %c0_258 = arith.constant 0 : index
    %1307 = vector.load %arg10[%c3_256, %c0_257, %c0_258] : memref<4x4x256xf32, #tpu.memory_space<vmem>>, vector<1x4x256xf32>
    %1308 = vector.shape_cast %1307 : vector<1x4x256xf32> to vector<4x256xf32>
    %1309 = vector.shape_cast %1306 : vector<4x256xf32> to vector<1x4x256xf32>
    tpu.vector_store %arg10[%c3_256, %c0_257, %c0_258], %1309 {strides = array<i32>} : memref<4x4x256xf32, #tpu.memory_space<vmem>>, vector<1x4x256xf32>,
    %cst_259 = arith.constant dense<0.000000e+00> : vector<4xf32>
    %1310 = vector.multi_reduction <add>, %1306, %cst_259 [1] : vector<4x256xf32> to vector<4xf32>
    %1311 = vector.shape_cast %1310 : vector<4xf32> to vector<4x1xf32>
    %cst_260 = arith.constant 3.906250e-03 : f32
    %1312 = vector.broadcast %cst_260 : f32 to vector<4x1xf32>
    %1313 = arith.mulf %1311, %1312 : vector<4x1xf32>
    %1314 = arith.maximumf %458, %692 : vector<4x1xf32>
    %1315 = arith.maximumf %1314, %926 : vector<4x1xf32>
    %1316 = arith.maximumf %1315, %1160 : vector<4x1xf32>
    %1317 = arith.subf %458, %1316 : vector<4x1xf32>
    %1318 = math.exp %1317 : vector<4x1xf32>
    %1319 = arith.subf %692, %1316 : vector<4x1xf32>
    %1320 = math.exp %1319 : vector<4x1xf32>
    %1321 = arith.subf %926, %1316 : vector<4x1xf32>
    %1322 = math.exp %1321 : vector<4x1xf32>
    %1323 = arith.subf %1160, %1316 : vector<4x1xf32>
    %1324 = math.exp %1323 : vector<4x1xf32>
    %1325 = arith.addf %1318, %1320 : vector<4x1xf32>
    %1326 = arith.addf %1322, %1324 : vector<4x1xf32>
    %1327 = arith.addf %1325, %1326 : vector<4x1xf32>
    %cst_261 = arith.constant 1.000000e+00 : f32
    %1328 = vector.broadcast %cst_261 : f32 to vector<4x1xf32>
    %1329 = arith.divf %1328, %1327 : vector<4x1xf32>
    %1330 = arith.mulf %1318, %1329 : vector<4x1xf32>
    %1331 = arith.mulf %1320, %1329 : vector<4x1xf32>
    %1332 = arith.mulf %1322, %1329 : vector<4x1xf32>
    %1333 = arith.mulf %1324, %1329 : vector<4x1xf32>
    %1334 = arith.maximumf %611, %845 : vector<4x1xf32>
    %1335 = arith.maximumf %1334, %1079 : vector<4x1xf32>
    %1336 = arith.maximumf %1335, %1313 : vector<4x1xf32>
    %1337 = arith.subf %611, %1336 : vector<4x1xf32>
    %1338 = math.exp %1337 : vector<4x1xf32>
    %1339 = arith.subf %845, %1336 : vector<4x1xf32>
    %1340 = math.exp %1339 : vector<4x1xf32>
    %1341 = arith.subf %1079, %1336 : vector<4x1xf32>
    %1342 = math.exp %1341 : vector<4x1xf32>
    %1343 = arith.subf %1313, %1336 : vector<4x1xf32>
    %1344 = math.exp %1343 : vector<4x1xf32>
    %1345 = arith.addf %1338, %1340 : vector<4x1xf32>
    %1346 = arith.addf %1342, %1344 : vector<4x1xf32>
    %1347 = arith.addf %1345, %1346 : vector<4x1xf32>
    %cst_262 = arith.constant 1.000000e+00 : f32
    %1348 = vector.broadcast %cst_262 : f32 to vector<4x1xf32>
    %1349 = arith.divf %1348, %1347 : vector<4x1xf32>
    %1350 = arith.mulf %1338, %1349 : vector<4x1xf32>
    %1351 = arith.mulf %1340, %1349 : vector<4x1xf32>
    %1352 = arith.mulf %1342, %1349 : vector<4x1xf32>
    %1353 = arith.mulf %1344, %1349 : vector<4x1xf32>
    %c0_263 = arith.constant 0 : index
    %c0_264 = arith.constant 0 : index
    %c0_265 = arith.constant 0 : index
    %1354 = vector.load %arg10[%c0_263, %c0_264, %c0_265] : memref<4x4x256xf32, #tpu.memory_space<vmem>>, vector<1x4x256xf32>
    %1355 = vector.shape_cast %1354 : vector<1x4x256xf32> to vector<4x256xf32>
    %1356 = vector.broadcast %1330 : vector<4x1xf32> to vector<4x256xf32>
    %1357 = arith.mulf %1356, %1355 : vector<4x256xf32>
    %c0_266 = arith.constant 0 : index
    %c0_267 = arith.constant 0 : index
    %c0_268 = arith.constant 0 : index
    %1358 = vector.load %arg9[%c0_266, %c0_267, %c0_268] : memref<4x4x256xf32, #tpu.memory_space<vmem>>, vector<1x4x256xf32>
    %1359 = vector.shape_cast %1358 : vector<1x4x256xf32> to vector<4x256xf32>
    %1360 = vector.broadcast %1350 : vector<4x1xf32> to vector<4x256xf32>
    %1361 = arith.mulf %1360, %1359 : vector<4x256xf32>
    %1362 = arith.addf %1357, %1361 : vector<4x256xf32>
    %c1_269 = arith.constant 1 : index
    %c0_270 = arith.constant 0 : index
    %c0_271 = arith.constant 0 : index
    %1363 = vector.load %arg10[%c1_269, %c0_270, %c0_271] : memref<4x4x256xf32, #tpu.memory_space<vmem>>, vector<1x4x256xf32>
    %1364 = vector.shape_cast %1363 : vector<1x4x256xf32> to vector<4x256xf32>
    %1365 = vector.broadcast %1331 : vector<4x1xf32> to vector<4x256xf32>
    %1366 = arith.mulf %1365, %1364 : vector<4x256xf32>
    %c1_272 = arith.constant 1 : index
    %c0_273 = arith.constant 0 : index
    %c0_274 = arith.constant 0 : index
    %1367 = vector.load %arg9[%c1_272, %c0_273, %c0_274] : memref<4x4x256xf32, #tpu.memory_space<vmem>>, vector<1x4x256xf32>
    %1368 = vector.shape_cast %1367 : vector<1x4x256xf32> to vector<4x256xf32>
    %1369 = vector.broadcast %1351 : vector<4x1xf32> to vector<4x256xf32>
    %1370 = arith.mulf %1369, %1368 : vector<4x256xf32>
    %1371 = arith.addf %1366, %1370 : vector<4x256xf32>
    %c2_275 = arith.constant 2 : index
    %c0_276 = arith.constant 0 : index
    %c0_277 = arith.constant 0 : index
    %1372 = vector.load %arg10[%c2_275, %c0_276, %c0_277] : memref<4x4x256xf32, #tpu.memory_space<vmem>>, vector<1x4x256xf32>
    %1373 = vector.shape_cast %1372 : vector<1x4x256xf32> to vector<4x256xf32>
    %1374 = vector.broadcast %1332 : vector<4x1xf32> to vector<4x256xf32>
    %1375 = arith.mulf %1374, %1373 : vector<4x256xf32>
    %c2_278 = arith.constant 2 : index
    %c0_279 = arith.constant 0 : index
    %c0_280 = arith.constant 0 : index
    %1376 = vector.load %arg9[%c2_278, %c0_279, %c0_280] : memref<4x4x256xf32, #tpu.memory_space<vmem>>, vector<1x4x256xf32>
    %1377 = vector.shape_cast %1376 : vector<1x4x256xf32> to vector<4x256xf32>
    %1378 = vector.broadcast %1352 : vector<4x1xf32> to vector<4x256xf32>
    %1379 = arith.mulf %1378, %1377 : vector<4x256xf32>
    %1380 = arith.addf %1375, %1379 : vector<4x256xf32>
    %c3_281 = arith.constant 3 : index
    %c0_282 = arith.constant 0 : index
    %c0_283 = arith.constant 0 : index
    %1381 = vector.load %arg10[%c3_281, %c0_282, %c0_283] : memref<4x4x256xf32, #tpu.memory_space<vmem>>, vector<1x4x256xf32>
    %1382 = vector.shape_cast %1381 : vector<1x4x256xf32> to vector<4x256xf32>
    %1383 = vector.broadcast %1333 : vector<4x1xf32> to vector<4x256xf32>
    %1384 = arith.mulf %1383, %1382 : vector<4x256xf32>
    %c3_284 = arith.constant 3 : index
    %c0_285 = arith.constant 0 : index
    %c0_286 = arith.constant 0 : index
    %1385 = vector.load %arg9[%c3_284, %c0_285, %c0_286] : memref<4x4x256xf32, #tpu.memory_space<vmem>>, vector<1x4x256xf32>
    %1386 = vector.shape_cast %1385 : vector<1x4x256xf32> to vector<4x256xf32>
    %1387 = vector.broadcast %1353 : vector<4x1xf32> to vector<4x256xf32>
    %1388 = arith.mulf %1387, %1386 : vector<4x256xf32>
    %1389 = arith.addf %1384, %1388 : vector<4x256xf32>
    %1390 = arith.addf %1362, %1371 : vector<4x256xf32>
    %1391 = arith.addf %1380, %1389 : vector<4x256xf32>
    %1392 = arith.addf %1390, %1391 : vector<4x256xf32>
    %1393 = arith.negf %1392 : vector<4x256xf32>
    %1394 = math.exp %1393 : vector<4x256xf32>
    %cst_287 = arith.constant 1.000000e+00 : f32
    %1395 = vector.broadcast %cst_287 : f32 to vector<4x256xf32>
    %1396 = arith.addf %1395, %1394 : vector<4x256xf32>
    %1397 = arith.divf %1395, %1396 : vector<4x256xf32>
    %c0_288 = arith.constant 0 : index
    %c0_289 = arith.constant 0 : index
    %c0_290 = arith.constant 0 : index
    %1398 = vector.load %arg1[%c0_288, %c0_289, %c0_290] : memref<4x4x256xf32, #tpu.memory_space<vmem>>, vector<4x4x256xf32>
    %1399 = vector.shape_cast %1397 : vector<4x256xf32> to vector<4x1x256xf32>
    %1400 = vector.broadcast %1399 : vector<4x1x256xf32> to vector<4x4x256xf32>
    %1401 = arith.mulf %1398, %1400 : vector<4x4x256xf32>
    %c0_291 = arith.constant 0 : index
    %c0_292 = arith.constant 0 : index
    %c0_293 = arith.constant 0 : index
    %1402 = vector.load %arg8[%c0_291, %c0_292, %c0_293] : memref<4x4x256xf32, #tpu.memory_space<vmem>>, vector<4x4x256xf32>
    tpu.vector_store %arg8[%c0_291, %c0_292, %c0_293], %1401 {strides = array<i32>} : memref<4x4x256xf32, #tpu.memory_space<vmem>>, vector<4x4x256xf32>,
    return
  }
  func.func @transform_0(%arg0: i32) -> (i32, i32, i32) {
    %c0_i32 = arith.constant 0 : i32
    %c0_i32_0 = arith.constant 0 : i32
    %c0_i32_1 = arith.constant 0 : i32
    return %arg0, %c0_i32, %c0_i32_0 : i32, i32, i32
  }
  func.func @transform_1(%arg0: i32) -> i32 {
    %c0_i32 = arith.constant 0 : i32
    %c0_i32_0 = arith.constant 0 : i32
    return %c0_i32 : i32
  }
  func.func @transform_2(%arg0: i32) -> i32 {
    %c0_i32 = arith.constant 0 : i32
    %c0_i32_0 = arith.constant 0 : i32
    return %c0_i32 : i32
  }
  func.func @transform_3(%arg0: i32) -> i32 {
    %c0_i32 = arith.constant 0 : i32
    %c0_i32_0 = arith.constant 0 : i32
    return %c0_i32 : i32
  }
  func.func @transform_4(%arg0: i32) -> i32 {
    %c0_i32 = arith.constant 0 : i32
    %c0_i32_0 = arith.constant 0 : i32
    return %c0_i32 : i32
  }
  func.func @transform_5(%arg0: i32) -> i32 {
    %c0_i32 = arith.constant 0 : i32
    %c0_i32_0 = arith.constant 0 : i32
    return %c0_i32 : i32
  }
  func.func @transform_6(%arg0: i32) -> i32 {
    %c0_i32 = arith.constant 0 : i32
    %c0_i32_0 = arith.constant 0 : i32
    return %c0_i32 : i32
  }
  func.func @transform_7(%arg0: i32) -> (i32, i32, i32) {
    %c0_i32 = arith.constant 0 : i32
    %c0_i32_0 = arith.constant 0 : i32
    %c0_i32_1 = arith.constant 0 : i32
    return %arg0, %c0_i32, %c0_i32_0 : i32, i32, i32
  }
}

</mosaic_0001>

<llo_original>
// kernel: tpu_custom_call.1
$region0: #{tpu_custom_call.1}
  #allocation0 [shape = 'u32[]', space=smem, size = 0x4, offset = 0x4, fixed_abs, tag = 'smem constant byte address 0x4 - core index']
  #allocation1 [shape = 'u32[144,128]{1,0:T(1,128)}', space=vmem, size = 0x12000, scoped, tag = 'internal scratch']
  #allocation2 [shape = 'f32[4,4,256]{2,1,0:T(4,128)}', space=vmem, size = 0x4000, scoped, tag = 'scratch operand']
  #allocation3 [shape = 'f32[4,4,256]{2,1,0:T(4,128)}', space=vmem, size = 0x4000, scoped, tag = 'scratch operand']
  %s0 = inlined_call_operand.hbm [shape: f32[8,4,256], index: 0, kind: input, shape index: {}]
  %s1 = inlined_call_operand.vmem [shape: f32[16], index: 1, kind: input, shape index: {}]
  %s2 = inlined_call_operand.hbm [shape: f32[4], index: 2, kind: input, shape index: {}]
  %s3 = inlined_call_operand.vmem [shape: f32[144], index: 3, kind: input, shape index: {}]
  %s4 = inlined_call_operand.vmem [shape: f32[4], index: 4, kind: input, shape index: {}]
  %s5 = inlined_call_operand.vmem [shape: f32[4], index: 5, kind: input, shape index: {}]
  %s6 = inlined_call_operand.vmem [shape: f32[4], index: 6, kind: input, shape index: {}]
  %s7 = inlined_call_operand.hbm [shape: f32[8,4,256], index: 7, kind: output, shape index: {}]
  %s8 = sld [smem:[#allocation0]]
  $region89: #{tpu_custom_call.1} parent=0
    _
  %s10 = ssub.s32 1, %s8
  %s11 = scalar_select 0, %s10, %s8
  $region1: #{tpu_custom_call.1} parent=0
    #allocation4 [shape = 'u8[32768]{0}', space=vmem, size = 0x8000, scoped, tag = 'input window, operand 0']
    #allocation5 [shape = 's32[2]{0}', space=sflag, size = 0x8, scoped, tag = 'scoped memory for tpu_custom_call.1']
    #allocation6 [shape = 's32[2]{0}', space=sflag, size = 0x8, scoped, tag = 'scoped memory for tpu_custom_call.1']
    #allocation7 [shape = 's32[2]{0}', space=sflag, size = 0x8, scoped, tag = 'scoped memory for tpu_custom_call.1']
    #allocation8 [shape = 's32[2]{0}', space=sflag, size = 0x8, scoped, tag = 'scoped memory for tpu_custom_call.1']
    #allocation9 [shape = 'u8[512]{0}', space=smem, size = 0x200, scoped, tag = 'input window, operand 1, single buffered']
    #allocation10 [shape = 'u8[512]{0}', space=smem, size = 0x200, scoped, tag = 'input window, operand 2, single buffered']
    #allocation11 [shape = 'u8[1024]{0}', space=smem, size = 0x400, scoped, tag = 'input window, operand 3, single buffered']
    #allocation12 [shape = 's32[1]{0}', space=sflag, size = 0x4, scoped, tag = 'scoped memory for tpu_custom_call.1']
    #allocation13 [shape = 'u8[512]{0}', space=smem, size = 0x200, scoped, tag = 'input window, operand 4, single buffered']
    #allocation14 [shape = 'u8[512]{0}', space=smem, size = 0x200, scoped, tag = 'input window, operand 5, single buffered']
    #allocation15 [shape = 's32[1]{0}', space=sflag, size = 0x4, scoped, tag = 'scoped memory for tpu_custom_call.1']
    #allocation16 [shape = 'u8[512]{0}', space=smem, size = 0x200, scoped, tag = 'input window, operand 6, single buffered']
    #allocation17 [shape = 'u8[32768]{0}', space=vmem, size = 0x8000, scoped, tag = 'output window, operand 0']
    %12 = vsyncpa [#allocation5], 0
    %s13 = scalar_lea.sflag [#allocation5], 1
    %14 = vsyncpa %s13, 0
    %15 = vsyncpa [#allocation8], 0
    %16 = vsyncpa [#allocation7], 0
    %17 = vsyncpa [#allocation12], 0
    %18 = vsyncpa [#allocation15], 0
    %19 = vsyncpa [#allocation6], 0
    %s20 = scalar_lea.sflag [#allocation6], 1
    %21 = vsyncpa %s20, 0
    loop: start=0, step=1, limit=4
    $region2: #{tpu_custom_call.1} parent=1 // loop_pre_header
      _
    $region3: #{tpu_custom_call.1} parent=1 // loop_header
      %s23 = sphi 0, %s27
      %p24 = scmp.ge.s32.totalorder %s23, 4
      %s33 = sphi 0, %s35
      %s36 = sphi 0, %s33
      %s37 = sphi 0, %s36
      %s53 = sphi 0, %s37
      %s57 = sphi 0, %s57
      %s59 = sphi 0, %s57
      %s60 = sphi 0, %s59
      %s74 = sphi 0, %s60
      %s78 = sphi 0, %s78
      %s80 = sphi 0, %s78
      %s81 = sphi 0, %s80
      %s95 = sphi 0, %s81
      %s99 = sphi 0, %s99
      %s101 = sphi 0, %s99
      %s102 = sphi 0, %s101
      %s116 = sphi 0, %s102
      %s120 = sphi 0, %s120
      %s122 = sphi 0, %s120
      %s123 = sphi 0, %s122
      %s137 = sphi 0, %s123
      %s141 = sphi 0, %s141
      %s143 = sphi 0, %s141
      %s144 = sphi 0, %s143
      %s158 = sphi 0, %s144
      %s162 = sphi 0, %s162
      %s164 = sphi 0, %s162
      %s165 = sphi 0, %s164
      %s179 = sphi 0, %s165
      %s185 = sphi 0, %s187
      %s188 = sphi 0, %s185
      %s189 = sphi 0, %s188
      %s205 = sphi 0, %s189
    $region4: #{tpu_custom_call.1} parent=1 // loop_header_branch
      %26 = sbr.rel (%p24) target = $region8
    $region5: #{tpu_custom_call.1} parent=1 // loop_body
      %s28 = ssub.s32 %s23, 1
      %s29 = ssub.s32 %s23, 2
      %s30 = sadd.s32 %s23, 1
      %s31 = ssub.s32 %s23, %s30
      %p32 = scmp.eq.s32.totalorder %s31, 0
      %s34 = sadd.s32 %s33, 1
      %s35 = scalar_select %p32, %s33, %s34
      %p38 = pneg %p32
      %p39 = scmp.eq.s32.totalorder %s23, 1
      %p40 = por %p38, %p39
      %p41 = scmp.ne.s32.totalorder %s33, %s36
      %p42 = scmp.eq.s32.totalorder %s23, 0
      %p43 = por %p41, %p42
      %p44 = scmp.ne.s32.totalorder %s33, %s36
      %p45 = scmp.eq.s32.totalorder %s28, 1
      %p46 = por %p44, %p45
      %p47 = scmp.ne.s32.totalorder %s36, %s37
      %p48 = scmp.eq.s32.totalorder %s28, 0
      %p49 = por %p47, %p48
      %p50 = scmp.ne.s32.totalorder %s36, %s37
      %p51 = scmp.eq.s32.totalorder %s29, 1
      %p52 = por %p50, %p51
      %p54 = scmp.ne.s32.totalorder %s37, %s53
      %p55 = scmp.eq.s32.totalorder %s29, 0
      %p56 = por %p54, %p55
      %s58 = sadd.s32 %s57, 1
      %p61 = scmp.eq.s32.totalorder %s23, 1
      %p62 = scmp.ne.s32.totalorder %s57, %s59
      %p63 = scmp.eq.s32.totalorder %s23, 0
      %p64 = por %p62, %p63
      %p65 = scmp.ne.s32.totalorder %s57, %s59
      %p66 = scmp.eq.s32.totalorder %s28, 1
      %p67 = por %p65, %p66
      %p68 = scmp.ne.s32.totalorder %s59, %s60
      %p69 = scmp.eq.s32.totalorder %s28, 0
      %p70 = por %p68, %p69
      %p71 = scmp.ne.s32.totalorder %s59, %s60
      %p72 = scmp.eq.s32.totalorder %s29, 1
      %p73 = por %p71, %p72
      %p75 = scmp.ne.s32.totalorder %s60, %s74
      %p76 = scmp.eq.s32.totalorder %s29, 0
      %p77 = por %p75, %p76
      %s79 = sadd.s32 %s78, 1
      %p82 = scmp.eq.s32.totalorder %s23, 1
      %p83 = scmp.ne.s32.totalorder %s78, %s80
      %p84 = scmp.eq.s32.totalorder %s23, 0
      %p85 = por %p83, %p84
      %p86 = scmp.ne.s32.totalorder %s78, %s80
      %p87 = scmp.eq.s32.totalorder %s28, 1
      %p88 = por %p86, %p87
      %p89 = scmp.ne.s32.totalorder %s80, %s81
      %p90 = scmp.eq.s32.totalorder %s28, 0
      %p91 = por %p89, %p90
      %p92 = scmp.ne.s32.totalorder %s80, %s81
      %p93 = scmp.eq.s32.totalorder %s29, 1
      %p94 = por %p92, %p93
      %p96 = scmp.ne.s32.totalorder %s81, %s95
      %p97 = scmp.eq.s32.totalorder %s29, 0
      %p98 = por %p96, %p97
      %s100 = sadd.s32 %s99, 1
      %p103 = scmp.eq.s32.totalorder %s23, 1
      %p104 = scmp.ne.s32.totalorder %s99, %s101
      %p105 = scmp.eq.s32.totalorder %s23, 0
      %p106 = por %p104, %p105
      %p107 = scmp.ne.s32.totalorder %s99, %s101
      %p108 = scmp.eq.s32.totalorder %s28, 1
      %p109 = por %p107, %p108
      %p110 = scmp.ne.s32.totalorder %s101, %s102
      %p111 = scmp.eq.s32.totalorder %s28, 0
      %p112 = por %p110, %p111
      %p113 = scmp.ne.s32.totalorder %s101, %s102
      %p114 = scmp.eq.s32.totalorder %s29, 1
      %p115 = por %p113, %p114
      %p117 = scmp.ne.s32.totalorder %s102, %s116
      %p118 = scmp.eq.s32.totalorder %s29, 0
      %p119 = por %p117, %p118
      %s121 = sadd.s32 %s120, 1
      %p124 = scmp.eq.s32.totalorder %s23, 1
      %p125 = scmp.ne.s32.totalorder %s120, %s122
      %p126 = scmp.eq.s32.totalorder %s23, 0
      %p127 = por %p125, %p126
      %p128 = scmp.ne.s32.totalorder %s120, %s122
      %p129 = scmp.eq.s32.totalorder %s28, 1
      %p130 = por %p128, %p129
      %p131 = scmp.ne.s32.totalorder %s122, %s123
      %p132 = scmp.eq.s32.totalorder %s28, 0
      %p133 = por %p131, %p132
      %p134 = scmp.ne.s32.totalorder %s122, %s123
      %p135 = scmp.eq.s32.totalorder %s29, 1
      %p136 = por %p134, %p135
      %p138 = scmp.ne.s32.totalorder %s123, %s137
      %p139 = scmp.eq.s32.totalorder %s29, 0
      %p140 = por %p138, %p139
      %s142 = sadd.s32 %s141, 1
      %p145 = scmp.eq.s32.totalorder %s23, 1
      %p146 = scmp.ne.s32.totalorder %s141, %s143
      %p147 = scmp.eq.s32.totalorder %s23, 0
      %p148 = por %p146, %p147
      %p149 = scmp.ne.s32.totalorder %s141, %s143
      %p150 = scmp.eq.s32.totalorder %s28, 1
      %p151 = por %p149, %p150
      %p152 = scmp.ne.s32.totalorder %s143, %s144
      %p153 = scmp.eq.s32.totalorder %s28, 0
      %p154 = por %p152, %p153
      %p155 = scmp.ne.s32.totalorder %s143, %s144
      %p156 = scmp.eq.s32.totalorder %s29, 1
      %p157 = por %p155, %p156
      %p159 = scmp.ne.s32.totalorder %s144, %s158
      %p160 = scmp.eq.s32.totalorder %s29, 0
      %p161 = por %p159, %p160
      %s163 = sadd.s32 %s162, 1
      %p166 = scmp.eq.s32.totalorder %s23, 1
      %p167 = scmp.ne.s32.totalorder %s162, %s164
      %p168 = scmp.eq.s32.totalorder %s23, 0
      %p169 = por %p167, %p168
      %p170 = scmp.ne.s32.totalorder %s162, %s164
      %p171 = scmp.eq.s32.totalorder %s28, 1
      %p172 = por %p170, %p171
      %p173 = scmp.ne.s32.totalorder %s164, %s165
      %p174 = scmp.eq.s32.totalorder %s28, 0
      %p175 = por %p173, %p174
      %p176 = scmp.ne.s32.totalorder %s164, %s165
      %p177 = scmp.eq.s32.totalorder %s29, 1
      %p178 = por %p176, %p177
      %p180 = scmp.ne.s32.totalorder %s165, %s179
      %p181 = scmp.eq.s32.totalorder %s29, 0
      %p182 = por %p180, %p181
      %s183 = ssub.s32 %s23, %s30
      %p184 = scmp.eq.s32.totalorder %s183, 0
      %s186 = sadd.s32 %s185, 1
      %s187 = scalar_select %p184, %s185, %s186
      %p190 = pneg %p184
      %p191 = scmp.eq.s32.totalorder %s23, 1
      %p192 = por %p190, %p191
      %p193 = scmp.ne.s32.totalorder %s185, %s188
      %p194 = scmp.eq.s32.totalorder %s23, 0
      %p195 = por %p193, %p194
      %p196 = scmp.ne.s32.totalorder %s185, %s188
      %p197 = scmp.eq.s32.totalorder %s28, 1
      %p198 = por %p196, %p197
      %p199 = scmp.ne.s32.totalorder %s188, %s189
      %p200 = scmp.eq.s32.totalorder %s28, 0
      %p201 = por %p199, %p200
      %p202 = scmp.ne.s32.totalorder %s188, %s189
      %p203 = scmp.eq.s32.totalorder %s29, 1
      %p204 = por %p202, %p203
      %p206 = scmp.ne.s32.totalorder %s189, %s205
      %p207 = scmp.eq.s32.totalorder %s29, 0
      %p208 = por %p206, %p207
      %p209 = scmp.le.s32.totalorder 1, %s23
      %p210 = scmp.lt.s32.totalorder %s23, 3
      %p211 = pnand %p209, %p210
      %p212 = pneg %p211
      // Predicated region
      $region9: #{tpu_custom_call.1} parent=5 // pred_check
        _
      $region10: #{tpu_custom_call.1} parent=5 // pred_check_branch
        %214 = sbr.rel (%p211) target = $region12
      $region11: #{tpu_custom_call.1} parent=5 // pred_region
        %s215 = ssub.s32 %s23, 1
        // Predicated region
        $region13: #{tpu_custom_call.1} parent=11 // pred_check
          %p216 = pneg %p70
        $region14: #{tpu_custom_call.1} parent=11 // pred_check_branch
          %218 = sbr.rel (%p216) target = $region16
        $region15: #{tpu_custom_call.1} parent=11 // pred_region
          %s220 = ssub.s32 16, 16
          %221 = vsyncadd [#allocation8], %s220
          %s223 = sshll.u32 %s1, 4
          %s224 = int_to_ptr.vmem [resolvable:$true] %s223
          %226 = dma.vmem_to_smem %s224, 16, [#allocation9], [#allocation8]
        $region16: #{tpu_custom_call.1} parent=11 // pred_fallthru
          _
        // Predicated region
        $region17: #{tpu_custom_call.1} parent=11 // pred_check
          %p227 = pneg %p91
        $region18: #{tpu_custom_call.1} parent=11 // pred_check_branch
          %229 = sbr.rel (%p227) target = $region20
        $region19: #{tpu_custom_call.1} parent=11 // pred_region
          %s231 = ssub.s32 16, 16
          %232 = vsyncadd [#allocation7], %s231
          %235 = dma.hbm_to_smem %s2, 16, [#allocation10], [#allocation7]
        $region20: #{tpu_custom_call.1} parent=11 // pred_fallthru
          _
        // Predicated region
        $region21: #{tpu_custom_call.1} parent=11 // pred_check
          %p236 = pneg %p112
        $region22: #{tpu_custom_call.1} parent=11 // pred_check_branch
          %238 = sbr.rel (%p236) target = $region24
        $region23: #{tpu_custom_call.1} parent=11 // pred_region
          %s240 = ssub.s32 32, 32
          %241 = vsyncadd [#allocation12], %s240
          %s243 = sshll.u32 %s3, 4
          %s244 = int_to_ptr.vmem [resolvable:$true] %s243
          %246 = dma.vmem_to_smem %s244, 32, [#allocation11], [#allocation12]
        $region24: #{tpu_custom_call.1} parent=11 // pred_fallthru
          _
        // Predicated region
        $region25: #{tpu_custom_call.1} parent=11 // pred_check
          %p247 = pneg %p133
        $region26: #{tpu_custom_call.1} parent=11 // pred_check_branch
          %249 = sbr.rel (%p247) target = $region28
        $region27: #{tpu_custom_call.1} parent=11 // pred_region
          %s251 = ssub.s32 16, 16
          %252 = vsyncadd [#allocation12], %s251
          %s254 = sshll.u32 %s4, 4
          %s255 = int_to_ptr.vmem [resolvable:$true] %s254
          %257 = dma.vmem_to_smem %s255, 16, [#allocation13], [#allocation12]
        $region28: #{tpu_custom_call.1} parent=11 // pred_fallthru
          _
        // Predicated region
        $region29: #{tpu_custom_call.1} parent=11 // pred_check
          %p258 = pneg %p154
        $region30: #{tpu_custom_call.1} parent=11 // pred_check_branch
          %260 = sbr.rel (%p258) target = $region32
        $region31: #{tpu_custom_call.1} parent=11 // pred_region
          %s262 = ssub.s32 16, 16
          %263 = vsyncadd [#allocation15], %s262
          %s265 = sshll.u32 %s5, 4
          %s266 = int_to_ptr.vmem [resolvable:$true] %s265
          %268 = dma.vmem_to_smem %s266, 16, [#allocation14], [#allocation15]
        $region32: #{tpu_custom_call.1} parent=11 // pred_fallthru
          _
        // Predicated region
        $region33: #{tpu_custom_call.1} parent=11 // pred_check
          %p269 = pneg %p175
        $region34: #{tpu_custom_call.1} parent=11 // pred_check_branch
          %271 = sbr.rel (%p269) target = $region36
        $region35: #{tpu_custom_call.1} parent=11 // pred_region
          %s273 = ssub.s32 16, 16
          %274 = vsyncadd [#allocation15], %s273
          %s276 = sshll.u32 %s6, 4
          %s277 = int_to_ptr.vmem [resolvable:$true] %s276
          %279 = dma.vmem_to_smem %s277, 16, [#allocation16], [#allocation15]
        $region36: #{tpu_custom_call.1} parent=11 // pred_fallthru
          _
      $region12: #{tpu_custom_call.1} parent=5 // pred_fallthru
        _
      %p280 = scmp.lt.s32.totalorder %s23, 2
      // Predicated region
      $region37: #{tpu_custom_call.1} parent=5 // pred_check
        %p281 = pneg %p280
      $region38: #{tpu_custom_call.1} parent=5 // pred_check_branch
        %283 = sbr.rel (%p281) target = $region40
      $region39: #{tpu_custom_call.1} parent=5 // pred_region
        // Predicated region
        $region41: #{tpu_custom_call.1} parent=39 // pred_check
          %p284 = pneg %p43
        $region42: #{tpu_custom_call.1} parent=39 // pred_check_branch
          %286 = sbr.rel (%p284) target = $region44
        $region43: #{tpu_custom_call.1} parent=39 // pred_region
          %s287 = sand.u32 %s33, 1
          %s288 = scalar_lea.sflag [#allocation5], %s287
          %s289 = sand.u32 %s33, 1
          %s290 = smul.addr %s289, 32
          %s291 = scalar_lea.vmem [#allocation4], %s290
          %s292 = smul.u32 4, %s23
          %s294 = ssub.s32 512, 512
          %295 = vsyncadd %s288, %s294
          %s296 = smul.addr %s292, 2
          %s297 = smul.addr %s296, 64
          %s298 = scalar_lea.hbm %s0, %s297
          %s299 = sshll.u32 %s291, 4
          %s300 = int_to_ptr.vmem [resolvable:$true] %s299
          %305 = dma.hbm_to_vmem [thread:$0]  %s298, 512, %s300, %s288, 128, 128, 8
        $region44: #{tpu_custom_call.1} parent=39 // pred_fallthru
          _
      $region40: #{tpu_custom_call.1} parent=5 // pred_fallthru
        _
      %p306 = scmp.le.s32.totalorder 1, %s23
      %p307 = scmp.lt.s32.totalorder %s23, 3
      %p308 = pnand %p306, %p307
      %p309 = pneg %p308
      // Predicated region
      $region45: #{tpu_custom_call.1} parent=5 // pred_check
        _
      $region46: #{tpu_custom_call.1} parent=5 // pred_check_branch
        %311 = sbr.rel (%p308) target = $region48
      $region47: #{tpu_custom_call.1} parent=5 // pred_region
        %s312 = ssub.s32 %s23, 1
        %s313 = sand.u32 %s36, 1
        %s314 = scalar_lea.sflag [#allocation5], %s313
        %s315 = sand.u32 %s36, 1
        %s316 = smul.addr %s315, 32
        %s317 = scalar_lea.vmem [#allocation4], %s316
        // Predicated region
        $region49: #{tpu_custom_call.1} parent=47 // pred_check
          %p318 = pneg %p49
        $region50: #{tpu_custom_call.1} parent=47 // pred_check_branch
          %320 = sbr.rel (%p318) target = $region52
        $region51: #{tpu_custom_call.1} parent=47 // pred_region
          %321 = dma.done %s314, 512
        $region52: #{tpu_custom_call.1} parent=47 // pred_fallthru
          _
        // Predicated region
        $region53: #{tpu_custom_call.1} parent=47 // pred_check
          %p322 = pneg %p70
        $region54: #{tpu_custom_call.1} parent=47 // pred_check_branch
          %324 = sbr.rel (%p322) target = $region56
        $region55: #{tpu_custom_call.1} parent=47 // pred_region
          %325 = dma.done [#allocation8], 16
        $region56: #{tpu_custom_call.1} parent=47 // pred_fallthru
          _
        // Predicated region
        $region57: #{tpu_custom_call.1} parent=47 // pred_check
          %p326 = pneg %p91
        $region58: #{tpu_custom_call.1} parent=47 // pred_check_branch
          %328 = sbr.rel (%p326) target = $region60
        $region59: #{tpu_custom_call.1} parent=47 // pred_region
          %329 = dma.done [#allocation7], 16
        $region60: #{tpu_custom_call.1} parent=47 // pred_fallthru
          _
        // Predicated region
        $region61: #{tpu_custom_call.1} parent=47 // pred_check
          %p330 = pneg %p112
        $region62: #{tpu_custom_call.1} parent=47 // pred_check_branch
          %332 = sbr.rel (%p330) target = $region64
        $region63: #{tpu_custom_call.1} parent=47 // pred_region
          %333 = dma.done [#allocation12], 32
        $region64: #{tpu_custom_call.1} parent=47 // pred_fallthru
          _
        // Predicated region
        $region65: #{tpu_custom_call.1} parent=47 // pred_check
          %p334 = pneg %p133
        $region66: #{tpu_custom_call.1} parent=47 // pred_check_branch
          %336 = sbr.rel (%p334) target = $region68
        $region67: #{tpu_custom_call.1} parent=47 // pred_region
          %337 = dma.done [#allocation12], 16
        $region68: #{tpu_custom_call.1} parent=47 // pred_fallthru
          _
        // Predicated region
        $region69: #{tpu_custom_call.1} parent=47 // pred_check
          %p338 = pneg %p154
        $region70: #{tpu_custom_call.1} parent=47 // pred_check_branch
          %340 = sbr.rel (%p338) target = $region72
        $region71: #{tpu_custom_call.1} parent=47 // pred_region
          %341 = dma.done [#allocation15], 16
        $region72: #{tpu_custom_call.1} parent=47 // pred_fallthru
          _
        // Predicated region
        $region73: #{tpu_custom_call.1} parent=47 // pred_check
          %p342 = pneg %p175
        $region74: #{tpu_custom_call.1} parent=47 // pred_check_branch
          %344 = sbr.rel (%p342) target = $region76
        $region75: #{tpu_custom_call.1} parent=47 // pred_region
          %345 = dma.done [#allocation15], 16
        $region76: #{tpu_custom_call.1} parent=47 // pred_fallthru
          _
        %346 = sfence
        %s347 = sand.u32 %s36, 1
        %s348 = scalar_lea.sflag [#allocation5], %s347
        %s349 = sand.u32 %s36, 1
        %s350 = smul.addr %s349, 32
        %s351 = scalar_lea.vmem [#allocation4], %s350
        %p352 = pneg %p49
        %p353 = pneg %p46
        %p354 = pneg %p70
        %p355 = pneg %p67
        %p356 = pneg %p91
        %p357 = pneg %p88
        %p358 = pneg %p112
        %p359 = pneg %p109
        %p360 = pneg %p133
        %p361 = pneg %p130
        %p362 = pneg %p154
        %p363 = pneg %p151
        %p364 = pneg %p175
        %p365 = pneg %p172
        %p366 = pneg %p201
        %p367 = pneg %p198
        %s368 = sand.u32 %s188, 1
        %s369 = scalar_lea.sflag [#allocation6], %s368
        %s370 = sand.u32 %s188, 1
        %s371 = smul.addr %s370, 32
        %s372 = scalar_lea.vmem [#allocation17], %s371
        %s373 = smul.u32 4, %s28
        %s374 = smul.u32 4, %s28
        %v375 = vlaneseq
        %v376 = vand.u32 %v375, 127
        %v377 = vadd.s32 %v376, 128
        %v378 = vcvt.s32.f32 %v376
        %v379 = vcvt.s32.f32 %v377
        %v380 = vadd.f32 %v378, 0.5
        %v381 = vadd.f32 %v379, 0.5
        %v382 = vmul.f32 %v380, 0.0625
        %v383 = vmul.f32 %v381, 0.0625
        %v384 = vfloor.f32 %v382
        %v385 = vfloor.f32 %v383
        %v386 = vmul.f32 %v384, 16.0
        %v387 = vmul.f32 %v385, 16.0
        %v388 = vsub.f32 %v378, %v386
        %v389 = vsub.f32 %v379, %v387
        %vm390 = vcmp.ge.s32.totalorder %v376, 16
        %vm391 = vcmp.ge.s32.totalorder %v377, 16
        %vm392 = vcmp.lt.s32.totalorder %v376, 240
        %vm393 = vcmp.lt.s32.totalorder %v377, 240
        %vm394 = vcmp.ge.f32.partialorder %v388, 0.5
        %vm395 = vcmp.ge.f32.partialorder %v389, 0.5
        %vm396 = vcmp.lt.f32.partialorder %v388, 14.5
        %vm397 = vcmp.lt.f32.partialorder %v389, 14.5
        %v398 = vld [vmem:[%s317] ss:$4 sm:$0x3]
        %s399 = scalar_lea.vmem %s317, 8 [#allocation4]
        %v400 = vld [vmem:[%s399] ss:$4 sm:$0x3]
        %s401 = scalar_lea.vmem %s317, 16 [#allocation4]
        %v402 = vld [vmem:[%s401] ss:$4 sm:$0x3]
        %s403 = scalar_lea.vmem %s317, 24 [#allocation4]
        %v404 = vld [vmem:[%s403] ss:$4 sm:$0x3]
        %v409 = vcombine.low %v398, %v400
        %v410 = vcombine.low %v402, %v404
        %v412 = vunpack.c.l.s4 1966171168
        %v413 = vunpack.c.0.s8 %v412
        %v414 = vlaneseq
        %v415 = vshrl.u32 %v414, 7
        %v416 = vsub.s32 %v413, %v415
        %v417 = vrot.slane %v409, %v416
        %v419 = vunpack.c.l.s4 1966171168
        %v420 = vunpack.c.0.s8 %v419
        %v421 = vlaneseq
        %v422 = vshrl.u32 %v421, 7
        %v423 = vsub.s32 %v420, %v422
        %v424 = vrot.slane %v410, %v423
        %v425 = vcombine.low %v417, %v424
        %v426 = vcombine.high %v417, %v424
        %v428 = vunpack.c.l.s4 1966171168
        %v429 = vunpack.c.0.s8 %v428
        %v430 = vlaneseq
        %v431 = vshrl.u32 %v430, 7
        %v432 = vsub.s32 %v429, %v431
        %v433 = vrot.slane %v425, %v432
        %v435 = vunpack.c.l.s4 1966171168
        %v436 = vunpack.c.0.s8 %v435
        %v437 = vlaneseq
        %v438 = vshrl.u32 %v437, 7
        %v439 = vsub.s32 %v436, %v438
        %v440 = vrot.slane %v426, %v439
        %443 = vrot.lane.b32.xlu0 %v433, 112
        %v444 = vpop.permute.xlu0 %443
        %445 = vrot.lane.b32.xlu0 %v440, 112
        %v446 = vpop.permute.xlu0 %445
        %vm447 = vcmp.lt.s32.totalorder %v376, 112
        %v448 = vsel %vm447, %v444, %v446
        %v449 = vsel %vm447, %v446, %v444
        %v452 = vcombine.low %v448, %v449
        %v454 = vunpack.c.l.s4 1966171168
        %v455 = vunpack.c.0.s8 %v454
        %v456 = vlaneseq
        %v457 = vshrl.u32 %v456, 7
        %v458 = vsub.s32 %v455, %v457
        %v459 = vrot.slane %v452, %v458
        %v460 = vcombine.high %v459, %v459
        %v462 = vunpack.c.l.s4 1966171168
        %v463 = vunpack.c.0.s8 %v462
        %v464 = vlaneseq
        %v465 = vshrl.u32 %v464, 7
        %v466 = vsub.s32 %v463, %v465
        %v467 = vrot.slane %v459, %v466
        %v469 = vunpack.c.l.s4 1966171168
        %v470 = vunpack.c.0.s8 %v469
        %v471 = vlaneseq
        %v472 = vshrl.u32 %v471, 7
        %v473 = vsub.s32 %v470, %v472
        %v474 = vrot.slane %v460, %v473
        %v475 = vcombine.high %v467, %v467
        %v476 = vcombine.high %v474, %v474
        %v481 = vadd.f32 %v398, %v467
        %v482 = vadd.f32 %v400, %v474
        %v483 = vadd.f32 %v402, %v475
        %v484 = vadd.f32 %v404, %v476
        %v489 = vcombine.low %v481, %v482
        %v490 = vcombine.low %v483, %v484
        %v492 = vunpack.c.l.s4 1966171168
        %v493 = vunpack.c.0.s8 %v492
        %v494 = vlaneseq
        %v495 = vshrl.u32 %v494, 7
        %v496 = vsub.s32 %v493, %v495
        %v497 = vrot.slane %v489, %v496
        %v499 = vunpack.c.l.s4 1966171168
        %v500 = vunpack.c.0.s8 %v499
        %v501 = vlaneseq
        %v502 = vshrl.u32 %v501, 7
        %v503 = vsub.s32 %v500, %v502
        %v504 = vrot.slane %v490, %v503
        %v505 = vcombine.low %v497, %v504
        %v506 = vcombine.high %v497, %v504
        %v508 = vunpack.c.l.s4 1966171168
        %v509 = vunpack.c.0.s8 %v508
        %v510 = vlaneseq
        %v511 = vshrl.u32 %v510, 7
        %v512 = vsub.s32 %v509, %v511
        %v513 = vrot.slane %v505, %v512
        %v515 = vunpack.c.l.s4 1966171168
        %v516 = vunpack.c.0.s8 %v515
        %v517 = vlaneseq
        %v518 = vshrl.u32 %v517, 7
        %v519 = vsub.s32 %v516, %v518
        %v520 = vrot.slane %v506, %v519
        %523 = vrot.lane.b32.xlu0 %v513, 96
        %v524 = vpop.permute.xlu0 %523
        %525 = vrot.lane.b32.xlu0 %v520, 96
        %v526 = vpop.permute.xlu0 %525
        %vm527 = vcmp.lt.s32.totalorder %v376, 96
        %v528 = vsel %vm527, %v524, %v526
        %v529 = vsel %vm527, %v526, %v524
        %v532 = vcombine.low %v528, %v529
        %v534 = vunpack.c.l.s4 1966171168
        %v535 = vunpack.c.0.s8 %v534
        %v536 = vlaneseq
        %v537 = vshrl.u32 %v536, 7
        %v538 = vsub.s32 %v535, %v537
        %v539 = vrot.slane %v532, %v538
        %v540 = vcombine.high %v539, %v539
        %v542 = vunpack.c.l.s4 1966171168
        %v543 = vunpack.c.0.s8 %v542
        %v544 = vlaneseq
        %v545 = vshrl.u32 %v544, 7
        %v546 = vsub.s32 %v543, %v545
        %v547 = vrot.slane %v539, %v546
        %v549 = vunpack.c.l.s4 1966171168
        %v550 = vunpack.c.0.s8 %v549
        %v551 = vlaneseq
        %v552 = vshrl.u32 %v551, 7
        %v553 = vsub.s32 %v550, %v552
        %v554 = vrot.slane %v540, %v553
        %v555 = vcombine.high %v547, %v547
        %v556 = vcombine.high %v554, %v554
        %v561 = vadd.f32 %v481, %v547
        %v562 = vadd.f32 %v482, %v554
        %v563 = vadd.f32 %v483, %v555
        %v564 = vadd.f32 %v484, %v556
        %v569 = vcombine.low %v561, %v562
        %v570 = vcombine.low %v563, %v564
        %v572 = vunpack.c.l.s4 1966171168
        %v573 = vunpack.c.0.s8 %v572
        %v574 = vlaneseq
        %v575 = vshrl.u32 %v574, 7
        %v576 = vsub.s32 %v573, %v575
        %v577 = vrot.slane %v569, %v576
        %v579 = vunpack.c.l.s4 1966171168
        %v580 = vunpack.c.0.s8 %v579
        %v581 = vlaneseq
        %v582 = vshrl.u32 %v581, 7
        %v583 = vsub.s32 %v580, %v582
        %v584 = vrot.slane %v570, %v583
        %v585 = vcombine.low %v577, %v584
        %v586 = vcombine.high %v577, %v584
        %v588 = vunpack.c.l.s4 1966171168
        %v589 = vunpack.c.0.s8 %v588
        %v590 = vlaneseq
        %v591 = vshrl.u32 %v590, 7
        %v592 = vsub.s32 %v589, %v591
        %v593 = vrot.slane %v585, %v592
        %v595 = vunpack.c.l.s4 1966171168
        %v596 = vunpack.c.0.s8 %v595
        %v597 = vlaneseq
        %v598 = vshrl.u32 %v597, 7
        %v599 = vsub.s32 %v596, %v598
        %v600 = vrot.slane %v586, %v599
        %603 = vrot.lane.b32.xlu0 %v593, 64
        %v604 = vpop.permute.xlu0 %603
        %605 = vrot.lane.b32.xlu0 %v600, 64
        %v606 = vpop.permute.xlu0 %605
        %vm607 = vcmp.lt.s32.totalorder %v376, 64
        %v608 = vsel %vm607, %v604, %v606
        %v609 = vsel %vm607, %v606, %v604
        %v612 = vcombine.low %v608, %v609
        %v614 = vunpack.c.l.s4 1966171168
        %v615 = vunpack.c.0.s8 %v614
        %v616 = vlaneseq
        %v617 = vshrl.u32 %v616, 7
        %v618 = vsub.s32 %v615, %v617
        %v619 = vrot.slane %v612, %v618
        %v620 = vcombine.high %v619, %v619
        %v622 = vunpack.c.l.s4 1966171168
        %v623 = vunpack.c.0.s8 %v622
        %v624 = vlaneseq
        %v625 = vshrl.u32 %v624, 7
        %v626 = vsub.s32 %v623, %v625
        %v627 = vrot.slane %v619, %v626
        %v629 = vunpack.c.l.s4 1966171168
        %v630 = vunpack.c.0.s8 %v629
        %v631 = vlaneseq
        %v632 = vshrl.u32 %v631, 7
        %v633 = vsub.s32 %v630, %v632
        %v634 = vrot.slane %v620, %v633
        %v635 = vcombine.high %v627, %v627
        %v636 = vcombine.high %v634, %v634
        %v641 = vadd.f32 %v561, %v627
        %v642 = vadd.f32 %v562, %v634
        %v643 = vadd.f32 %v563, %v635
        %v644 = vadd.f32 %v564, %v636
        %v649 = vcombine.low %v641, %v642
        %v650 = vcombine.low %v643, %v644
        %v652 = vunpack.c.l.s4 1966171168
        %v653 = vunpack.c.0.s8 %v652
        %v654 = vlaneseq
        %v655 = vshrl.u32 %v654, 7
        %v656 = vsub.s32 %v653, %v655
        %v657 = vrot.slane %v649, %v656
        %v659 = vunpack.c.l.s4 1966171168
        %v660 = vunpack.c.0.s8 %v659
        %v661 = vlaneseq
        %v662 = vshrl.u32 %v661, 7
        %v663 = vsub.s32 %v660, %v662
        %v664 = vrot.slane %v650, %v663
        %v665 = vcombine.low %v657, %v664
        %v666 = vcombine.high %v657, %v664
        %v668 = vunpack.c.l.s4 1966171168
        %v669 = vunpack.c.0.s8 %v668
        %v670 = vlaneseq
        %v671 = vshrl.u32 %v670, 7
        %v672 = vsub.s32 %v669, %v671
        %v673 = vrot.slane %v665, %v672
        %v675 = vunpack.c.l.s4 1966171168
        %v676 = vunpack.c.0.s8 %v675
        %v677 = vlaneseq
        %v678 = vshrl.u32 %v677, 7
        %v679 = vsub.s32 %v676, %v678
        %v680 = vrot.slane %v666, %v679
        %v681 = vcombine.low %v680, %v673
        %v683 = vunpack.c.l.s4 1966171168
        %v684 = vunpack.c.0.s8 %v683
        %v685 = vlaneseq
        %v686 = vshrl.u32 %v685, 7
        %v687 = vsub.s32 %v684, %v686
        %v688 = vrot.slane %v681, %v687
        %v689 = vcombine.high %v688, %v688
        %v691 = vunpack.c.l.s4 1966171168
        %v692 = vunpack.c.0.s8 %v691
        %v693 = vlaneseq
        %v694 = vshrl.u32 %v693, 7
        %v695 = vsub.s32 %v692, %v694
        %v696 = vrot.slane %v688, %v695
        %v698 = vunpack.c.l.s4 1966171168
        %v699 = vunpack.c.0.s8 %v698
        %v700 = vlaneseq
        %v701 = vshrl.u32 %v700, 7
        %v702 = vsub.s32 %v699, %v701
        %v703 = vrot.slane %v689, %v702
        %v704 = vcombine.high %v696, %v696
        %v705 = vcombine.high %v703, %v703
        %v710 = vadd.f32 %v641, %v696
        %v711 = vadd.f32 %v642, %v703
        %v712 = vadd.f32 %v643, %v704
        %v713 = vadd.f32 %v644, %v705
        %v714 = vmul.f32 %v710, 0.0625
        %v715 = vmul.f32 %v711, 0.0625
        %v716 = vmul.f32 %v712, 0.0625
        %v717 = vmul.f32 %v713, 0.0625
        %718 = vrot.lane.b32.xlu0 %v433, 127
        %v719 = vpop.permute.xlu0 %718
        %720 = vrot.lane.b32.xlu0 %v440, 127
        %v721 = vpop.permute.xlu0 %720
        %vm722 = vcmp.lt.s32.totalorder %v376, 127
        %v723 = vsel %vm722, %v719, %v721
        %v724 = vsel %vm722, %v721, %v719
        %725 = vrot.lane.b32.xlu0 %v433, 15
        %v726 = vpop.permute.xlu0 %725
        %727 = vrot.lane.b32.xlu0 %v440, 15
        %v728 = vpop.permute.xlu0 %727
        %vm729 = vcmp.lt.s32.totalorder %v376, 15
        %v730 = vsel %vm729, %v726, %v728
        %v731 = vsel %vm729, %v728, %v726
        %vm732 = vcmp.lt.f32.partialorder %v388, 15.0
        %vm733 = vcmp.lt.f32.partialorder %v389, 15.0
        %v734 = vsel %vm732, 1, 0
        %v735 = vsel %vm733, 1, 0
        %vm736 = vcmp.eq.s32.totalorder %v734, 1
        %vm737 = vcmp.eq.s32.totalorder %v735, 1
        %v738 = vsel %vm736, %v723, %v731
        %v739 = vsel %vm737, %v724, %v730
        %v742 = vcombine.low %v738, %v739
        %v744 = vunpack.c.l.s4 1966171168
        %v745 = vunpack.c.0.s8 %v744
        %v746 = vlaneseq
        %v747 = vshrl.u32 %v746, 7
        %v748 = vsub.s32 %v745, %v747
        %v749 = vrot.slane %v742, %v748
        %v750 = vcombine.high %v749, %v749
        %v752 = vunpack.c.l.s4 1966171168
        %v753 = vunpack.c.0.s8 %v752
        %v754 = vlaneseq
        %v755 = vshrl.u32 %v754, 7
        %v756 = vsub.s32 %v753, %v755
        %v757 = vrot.slane %v749, %v756
        %v759 = vunpack.c.l.s4 1966171168
        %v760 = vunpack.c.0.s8 %v759
        %v761 = vlaneseq
        %v762 = vshrl.u32 %v761, 7
        %v763 = vsub.s32 %v760, %v762
        %v764 = vrot.slane %v750, %v763
        %v765 = vcombine.high %v757, %v757
        %v766 = vcombine.high %v764, %v764
        %v771 = vadd.f32 %v398, %v757
        %v772 = vadd.f32 %v400, %v764
        %v773 = vadd.f32 %v402, %v765
        %v774 = vadd.f32 %v404, %v766
        %v779 = vcombine.low %v771, %v772
        %v780 = vcombine.low %v773, %v774
        %v782 = vunpack.c.l.s4 1966171168
        %v783 = vunpack.c.0.s8 %v782
        %v784 = vlaneseq
        %v785 = vshrl.u32 %v784, 7
        %v786 = vsub.s32 %v783, %v785
        %v787 = vrot.slane %v779, %v786
        %v789 = vunpack.c.l.s4 1966171168
        %v790 = vunpack.c.0.s8 %v789
        %v791 = vlaneseq
        %v792 = vshrl.u32 %v791, 7
        %v793 = vsub.s32 %v790, %v792
        %v794 = vrot.slane %v780, %v793
        %v795 = vcombine.low %v787, %v794
        %v796 = vcombine.high %v787, %v794
        %v798 = vunpack.c.l.s4 1966171168
        %v799 = vunpack.c.0.s8 %v798
        %v800 = vlaneseq
        %v801 = vshrl.u32 %v800, 7
        %v802 = vsub.s32 %v799, %v801
        %v803 = vrot.slane %v795, %v802
        %v805 = vunpack.c.l.s4 1966171168
        %v806 = vunpack.c.0.s8 %v805
        %v807 = vlaneseq
        %v808 = vshrl.u32 %v807, 7
        %v809 = vsub.s32 %v806, %v808
        %v810 = vrot.slane %v796, %v809
        %813 = vrot.lane.b32.xlu0 %v803, 126
        %v814 = vpop.permute.xlu0 %813
        %815 = vrot.lane.b32.xlu0 %v810, 126
        %v816 = vpop.permute.xlu0 %815
        %vm817 = vcmp.lt.s32.totalorder %v376, 126
        %v818 = vsel %vm817, %v814, %v816
        %v819 = vsel %vm817, %v816, %v814
        %820 = vrot.lane.b32.xlu0 %v803, 14
        %v821 = vpop.permute.xlu0 %820
        %822 = vrot.lane.b32.xlu0 %v810, 14
        %v823 = vpop.permute.xlu0 %822
        %vm824 = vcmp.lt.s32.totalorder %v376, 14
        %v825 = vsel %vm824, %v821, %v823
        %v826 = vsel %vm824, %v823, %v821
        %vm827 = vcmp.lt.f32.partialorder %v388, 14.0
        %vm828 = vcmp.lt.f32.partialorder %v389, 14.0
        %v829 = vsel %vm827, 1, 0
        %v830 = vsel %vm828, 1, 0
        %vm831 = vcmp.eq.s32.totalorder %v829, 1
        %vm832 = vcmp.eq.s32.totalorder %v830, 1
        %v833 = vsel %vm831, %v818, %v826
        %v834 = vsel %vm832, %v819, %v825
        %v837 = vcombine.low %v833, %v834
        %v839 = vunpack.c.l.s4 1966171168
        %v840 = vunpack.c.0.s8 %v839
        %v841 = vlaneseq
        %v842 = vshrl.u32 %v841, 7
        %v843 = vsub.s32 %v840, %v842
        %v844 = vrot.slane %v837, %v843
        %v845 = vcombine.high %v844, %v844
        %v847 = vunpack.c.l.s4 1966171168
        %v848 = vunpack.c.0.s8 %v847
        %v849 = vlaneseq
        %v850 = vshrl.u32 %v849, 7
        %v851 = vsub.s32 %v848, %v850
        %v852 = vrot.slane %v844, %v851
        %v854 = vunpack.c.l.s4 1966171168
        %v855 = vunpack.c.0.s8 %v854
        %v856 = vlaneseq
        %v857 = vshrl.u32 %v856, 7
        %v858 = vsub.s32 %v855, %v857
        %v859 = vrot.slane %v845, %v858
        %v860 = vcombine.high %v852, %v852
        %v861 = vcombine.high %v859, %v859
        %v866 = vadd.f32 %v771, %v852
        %v867 = vadd.f32 %v772, %v859
        %v868 = vadd.f32 %v773, %v860
        %v869 = vadd.f32 %v774, %v861
        %v874 = vcombine.low %v866, %v867
        %v875 = vcombine.low %v868, %v869
        %v877 = vunpack.c.l.s4 1966171168
        %v878 = vunpack.c.0.s8 %v877
        %v879 = vlaneseq
        %v880 = vshrl.u32 %v879, 7
        %v881 = vsub.s32 %v878, %v880
        %v882 = vrot.slane %v874, %v881
        %v884 = vunpack.c.l.s4 1966171168
        %v885 = vunpack.c.0.s8 %v884
        %v886 = vlaneseq
        %v887 = vshrl.u32 %v886, 7
        %v888 = vsub.s32 %v885, %v887
        %v889 = vrot.slane %v875, %v888
        %v890 = vcombine.low %v882, %v889
        %v891 = vcombine.high %v882, %v889
        %v893 = vunpack.c.l.s4 1966171168
        %v894 = vunpack.c.0.s8 %v893
        %v895 = vlaneseq
        %v896 = vshrl.u32 %v895, 7
        %v897 = vsub.s32 %v894, %v896
        %v898 = vrot.slane %v890, %v897
        %v900 = vunpack.c.l.s4 1966171168
        %v901 = vunpack.c.0.s8 %v900
        %v902 = vlaneseq
        %v903 = vshrl.u32 %v902, 7
        %v904 = vsub.s32 %v901, %v903
        %v905 = vrot.slane %v891, %v904
        %908 = vrot.lane.b32.xlu0 %v898, 124
        %v909 = vpop.permute.xlu0 %908
        %910 = vrot.lane.b32.xlu0 %v905, 124
        %v911 = vpop.permute.xlu0 %910
        %vm912 = vcmp.lt.s32.totalorder %v376, 124
        %v913 = vsel %vm912, %v909, %v911
        %v914 = vsel %vm912, %v911, %v909
        %915 = vrot.lane.b32.xlu0 %v898, 12
        %v916 = vpop.permute.xlu0 %915
        %917 = vrot.lane.b32.xlu0 %v905, 12
        %v918 = vpop.permute.xlu0 %917
        %vm919 = vcmp.lt.s32.totalorder %v376, 12
        %v920 = vsel %vm919, %v916, %v918
        %v921 = vsel %vm919, %v918, %v916
        %vm922 = vcmp.lt.f32.partialorder %v388, 12.0
        %vm923 = vcmp.lt.f32.partialorder %v389, 12.0
        %v924 = vsel %vm922, 1, 0
        %v925 = vsel %vm923, 1, 0
        %vm926 = vcmp.eq.s32.totalorder %v924, 1
        %vm927 = vcmp.eq.s32.totalorder %v925, 1
        %v928 = vsel %vm926, %v913, %v921
        %v929 = vsel %vm927, %v914, %v920
        %v932 = vcombine.low %v928, %v929
        %v934 = vunpack.c.l.s4 1966171168
        %v935 = vunpack.c.0.s8 %v934
        %v936 = vlaneseq
        %v937 = vshrl.u32 %v936, 7
        %v938 = vsub.s32 %v935, %v937
        %v939 = vrot.slane %v932, %v938
        %v940 = vcombine.high %v939, %v939
        %v942 = vunpack.c.l.s4 1966171168
        %v943 = vunpack.c.0.s8 %v942
        %v944 = vlaneseq
        %v945 = vshrl.u32 %v944, 7
        %v946 = vsub.s32 %v943, %v945
        %v947 = vrot.slane %v939, %v946
        %v949 = vunpack.c.l.s4 1966171168
        %v950 = vunpack.c.0.s8 %v949
        %v951 = vlaneseq
        %v952 = vshrl.u32 %v951, 7
        %v953 = vsub.s32 %v950, %v952
        %v954 = vrot.slane %v940, %v953
        %v955 = vcombine.high %v947, %v947
        %v956 = vcombine.high %v954, %v954
        %v961 = vadd.f32 %v866, %v947
        %v962 = vadd.f32 %v867, %v954
        %v963 = vadd.f32 %v868, %v955
        %v964 = vadd.f32 %v869, %v956
        %v969 = vcombine.low %v961, %v962
        %v970 = vcombine.low %v963, %v964
        %v972 = vunpack.c.l.s4 1966171168
        %v973 = vunpack.c.0.s8 %v972
        %v974 = vlaneseq
        %v975 = vshrl.u32 %v974, 7
        %v976 = vsub.s32 %v973, %v975
        %v977 = vrot.slane %v969, %v976
        %v979 = vunpack.c.l.s4 1966171168
        %v980 = vunpack.c.0.s8 %v979
        %v981 = vlaneseq
        %v982 = vshrl.u32 %v981, 7
        %v983 = vsub.s32 %v980, %v982
        %v984 = vrot.slane %v970, %v983
        %v985 = vcombine.low %v977, %v984
        %v986 = vcombine.high %v977, %v984
        %v988 = vunpack.c.l.s4 1966171168
        %v989 = vunpack.c.0.s8 %v988
        %v990 = vlaneseq
        %v991 = vshrl.u32 %v990, 7
        %v992 = vsub.s32 %v989, %v991
        %v993 = vrot.slane %v985, %v992
        %v995 = vunpack.c.l.s4 1966171168
        %v996 = vunpack.c.0.s8 %v995
        %v997 = vlaneseq
        %v998 = vshrl.u32 %v997, 7
        %v999 = vsub.s32 %v996, %v998
        %v1000 = vrot.slane %v986, %v999
        %1003 = vrot.lane.b32.xlu0 %v993, 120
        %v1004 = vpop.permute.xlu0 %1003
        %1005 = vrot.lane.b32.xlu0 %v1000, 120
        %v1006 = vpop.permute.xlu0 %1005
        %vm1007 = vcmp.lt.s32.totalorder %v376, 120
        %v1008 = vsel %vm1007, %v1004, %v1006
        %v1009 = vsel %vm1007, %v1006, %v1004
        %1010 = vrot.lane.b32.xlu0 %v993, 8
        %v1011 = vpop.permute.xlu0 %1010
        %1012 = vrot.lane.b32.xlu0 %v1000, 8
        %v1013 = vpop.permute.xlu0 %1012
        %vm1014 = vcmp.lt.s32.totalorder %v376, 8
        %v1015 = vsel %vm1014, %v1011, %v1013
        %v1016 = vsel %vm1014, %v1013, %v1011
        %vm1017 = vcmp.lt.f32.partialorder %v388, 8.0
        %vm1018 = vcmp.lt.f32.partialorder %v389, 8.0
        %v1019 = vsel %vm1017, 1, 0
        %v1020 = vsel %vm1018, 1, 0
        %vm1021 = vcmp.eq.s32.totalorder %v1019, 1
        %vm1022 = vcmp.eq.s32.totalorder %v1020, 1
        %v1023 = vsel %vm1021, %v1008, %v1016
        %v1024 = vsel %vm1022, %v1009, %v1015
        %v1027 = vcombine.low %v1023, %v1024
        %v1029 = vunpack.c.l.s4 1966171168
        %v1030 = vunpack.c.0.s8 %v1029
        %v1031 = vlaneseq
        %v1032 = vshrl.u32 %v1031, 7
        %v1033 = vsub.s32 %v1030, %v1032
        %v1034 = vrot.slane %v1027, %v1033
        %v1035 = vcombine.high %v1034, %v1034
        %v1037 = vunpack.c.l.s4 1966171168
        %v1038 = vunpack.c.0.s8 %v1037
        %v1039 = vlaneseq
        %v1040 = vshrl.u32 %v1039, 7
        %v1041 = vsub.s32 %v1038, %v1040
        %v1042 = vrot.slane %v1034, %v1041
        %v1044 = vunpack.c.l.s4 1966171168
        %v1045 = vunpack.c.0.s8 %v1044
        %v1046 = vlaneseq
        %v1047 = vshrl.u32 %v1046, 7
        %v1048 = vsub.s32 %v1045, %v1047
        %v1049 = vrot.slane %v1035, %v1048
        %v1050 = vcombine.high %v1042, %v1042
        %v1051 = vcombine.high %v1049, %v1049
        %v1056 = vadd.f32 %v961, %v1042
        %v1057 = vadd.f32 %v962, %v1049
        %v1058 = vadd.f32 %v963, %v1050
        %v1059 = vadd.f32 %v964, %v1051
        %v1060 = vmul.f32 %v1056, 0.0625
        %v1061 = vmul.f32 %v1057, 0.0625
        %v1062 = vmul.f32 %v1058, 0.0625
        %v1063 = vmul.f32 %v1059, 0.0625
        %1064 = vrot.lane.b32.xlu0 %v433, 17
        %v1065 = vpop.permute.xlu0 %1064
        %1066 = vrot.lane.b32.xlu0 %v440, 17
        %v1067 = vpop.permute.xlu0 %1066
        %vm1068 = vcmp.lt.s32.totalorder %v376, 17
        %v1069 = vsel %vm1068, %v1065, %v1067
        %v1070 = vsel %vm1068, %v1067, %v1065
        %vm1071 = vmand %vm390, %vm394
        %vm1072 = vmand %vm391, %vm395
        %v1073 = vsel %vm1071, 1, 0
        %v1074 = vsel %vm1072, 1, 0
        %vm1075 = vcmp.eq.s32.totalorder %v1073, 1
        %vm1076 = vcmp.eq.s32.totalorder %v1074, 1
        %v1077 = vsel %vm1075, %v1070, 0.0
        %v1078 = vsel %vm1076, %v1069, 0.0
        %1079 = vrot.lane.b32.xlu0 %v433, 16
        %v1080 = vpop.permute.xlu0 %1079
        %1081 = vrot.lane.b32.xlu0 %v440, 16
        %v1082 = vpop.permute.xlu0 %1081
        %vm1083 = vcmp.lt.s32.totalorder %v376, 16
        %v1084 = vsel %vm1083, %v1080, %v1082
        %v1085 = vsel %vm1083, %v1082, %v1080
        %v1086 = vsel %vm390, 1, 0
        %v1087 = vsel %vm391, 1, 0
        %vm1088 = vcmp.eq.s32.totalorder %v1086, 1
        %vm1089 = vcmp.eq.s32.totalorder %v1087, 1
        %v1090 = vsel %vm1088, %v1085, 0.0
        %v1091 = vsel %vm1089, %v1084, 0.0
        %vm1092 = vmand %vm390, %vm396
        %vm1093 = vmand %vm391, %vm397
        %v1094 = vsel %vm1092, 1, 0
        %v1095 = vsel %vm1093, 1, 0
        %vm1096 = vcmp.eq.s32.totalorder %v1094, 1
        %vm1097 = vcmp.eq.s32.totalorder %v1095, 1
        %v1098 = vsel %vm1096, %v731, 0.0
        %v1099 = vsel %vm1097, %v730, 0.0
        %1100 = vrot.lane.b32.xlu0 %v433, 1
        %v1101 = vpop.permute.xlu0 %1100
        %1102 = vrot.lane.b32.xlu0 %v440, 1
        %v1103 = vpop.permute.xlu0 %1102
        %vm1104 = vcmp.lt.s32.totalorder %v376, 1
        %v1105 = vsel %vm1104, %v1101, %v1103
        %v1106 = vsel %vm1104, %v1103, %v1101
        %v1107 = vsel %vm394, 1, 0
        %v1108 = vsel %vm395, 1, 0
        %vm1109 = vcmp.eq.s32.totalorder %v1107, 1
        %vm1110 = vcmp.eq.s32.totalorder %v1108, 1
        %v1111 = vsel %vm1109, %v1106, 0.0
        %v1112 = vsel %vm1110, %v1105, 0.0
        %v1113 = vsel %vm396, 1, 0
        %v1114 = vsel %vm397, 1, 0
        %vm1115 = vcmp.eq.s32.totalorder %v1113, 1
        %vm1116 = vcmp.eq.s32.totalorder %v1114, 1
        %v1117 = vsel %vm1115, %v723, 0.0
        %v1118 = vsel %vm1116, %v724, 0.0
        %1119 = vrot.lane.b32.xlu0 %v433, 113
        %v1120 = vpop.permute.xlu0 %1119
        %1121 = vrot.lane.b32.xlu0 %v440, 113
        %v1122 = vpop.permute.xlu0 %1121
        %vm1123 = vcmp.lt.s32.totalorder %v376, 113
        %v1124 = vsel %vm1123, %v1120, %v1122
        %v1125 = vsel %vm1123, %v1122, %v1120
        %vm1126 = vmand %vm392, %vm394
        %vm1127 = vmand %vm393, %vm395
        %v1128 = vsel %vm1126, 1, 0
        %v1129 = vsel %vm1127, 1, 0
        %vm1130 = vcmp.eq.s32.totalorder %v1128, 1
        %vm1131 = vcmp.eq.s32.totalorder %v1129, 1
        %v1132 = vsel %vm1130, %v1124, 0.0
        %v1133 = vsel %vm1131, %v1125, 0.0
        %v1134 = vsel %vm392, 1, 0
        %v1135 = vsel %vm393, 1, 0
        %vm1136 = vcmp.eq.s32.totalorder %v1134, 1
        %vm1137 = vcmp.eq.s32.totalorder %v1135, 1
        %v1138 = vsel %vm1136, %v448, 0.0
        %v1139 = vsel %vm1137, %v449, 0.0
        %1140 = vrot.lane.b32.xlu0 %v433, 111
        %v1141 = vpop.permute.xlu0 %1140
        %1142 = vrot.lane.b32.xlu0 %v440, 111
        %v1143 = vpop.permute.xlu0 %1142
        %vm1144 = vcmp.lt.s32.totalorder %v376, 111
        %v1145 = vsel %vm1144, %v1141, %v1143
        %v1146 = vsel %vm1144, %v1143, %v1141
        %vm1147 = vmand %vm392, %vm396
        %vm1148 = vmand %vm393, %vm397
        %v1149 = vsel %vm1147, 1, 0
        %v1150 = vsel %vm1148, 1, 0
        %vm1151 = vcmp.eq.s32.totalorder %v1149, 1
        %vm1152 = vcmp.eq.s32.totalorder %v1150, 1
        %v1153 = vsel %vm1151, %v1145, 0.0
        %v1154 = vsel %vm1152, %v1146, 0.0
        %s1155 = scalar_lea.vmem %s317, 1 [#allocation4]
        %v1156 = vld [vmem:[%s1155] ss:$4 sm:$0x3]
        %s1157 = scalar_lea.vmem %s317, 9 [#allocation4]
        %v1158 = vld [vmem:[%s1157] ss:$4 sm:$0x3]
        %s1159 = scalar_lea.vmem %s317, 17 [#allocation4]
        %v1160 = vld [vmem:[%s1159] ss:$4 sm:$0x3]
        %s1161 = scalar_lea.vmem %s317, 25 [#allocation4]
        %v1162 = vld [vmem:[%s1161] ss:$4 sm:$0x3]
        %v1167 = vcombine.low %v1156, %v1158
        %v1168 = vcombine.low %v1160, %v1162
        %v1170 = vunpack.c.l.s4 1966171168
        %v1171 = vunpack.c.0.s8 %v1170
        %v1172 = vlaneseq
        %v1173 = vshrl.u32 %v1172, 7
        %v1174 = vsub.s32 %v1171, %v1173
        %v1175 = vrot.slane %v1167, %v1174
        %v1177 = vunpack.c.l.s4 1966171168
        %v1178 = vunpack.c.0.s8 %v1177
        %v1179 = vlaneseq
        %v1180 = vshrl.u32 %v1179, 7
        %v1181 = vsub.s32 %v1178, %v1180
        %v1182 = vrot.slane %v1168, %v1181
        %v1183 = vcombine.low %v1175, %v1182
        %v1184 = vcombine.high %v1175, %v1182
        %v1186 = vunpack.c.l.s4 1966171168
        %v1187 = vunpack.c.0.s8 %v1186
        %v1188 = vlaneseq
        %v1189 = vshrl.u32 %v1188, 7
        %v1190 = vsub.s32 %v1187, %v1189
        %v1191 = vrot.slane %v1183, %v1190
        %v1193 = vunpack.c.l.s4 1966171168
        %v1194 = vunpack.c.0.s8 %v1193
        %v1195 = vlaneseq
        %v1196 = vshrl.u32 %v1195, 7
        %v1197 = vsub.s32 %v1194, %v1196
        %v1198 = vrot.slane %v1184, %v1197
        %1201 = vrot.lane.b32.xlu0 %v1191, 112
        %v1202 = vpop.permute.xlu0 %1201
        %1203 = vrot.lane.b32.xlu0 %v1198, 112
        %v1204 = vpop.permute.xlu0 %1203
        %v1205 = vsel %vm447, %v1202, %v1204
        %v1206 = vsel %vm447, %v1204, %v1202
        %v1209 = vcombine.low %v1205, %v1206
        %v1211 = vunpack.c.l.s4 1966171168
        %v1212 = vunpack.c.0.s8 %v1211
        %v1213 = vlaneseq
        %v1214 = vshrl.u32 %v1213, 7
        %v1215 = vsub.s32 %v1212, %v1214
        %v1216 = vrot.slane %v1209, %v1215
        %v1217 = vcombine.high %v1216, %v1216
        %v1219 = vunpack.c.l.s4 1966171168
        %v1220 = vunpack.c.0.s8 %v1219
        %v1221 = vlaneseq
        %v1222 = vshrl.u32 %v1221, 7
        %v1223 = vsub.s32 %v1220, %v1222
        %v1224 = vrot.slane %v1216, %v1223
        %v1226 = vunpack.c.l.s4 1966171168
        %v1227 = vunpack.c.0.s8 %v1226
        %v1228 = vlaneseq
        %v1229 = vshrl.u32 %v1228, 7
        %v1230 = vsub.s32 %v1227, %v1229
        %v1231 = vrot.slane %v1217, %v1230
        %v1232 = vcombine.high %v1224, %v1224
        %v1233 = vcombine.high %v1231, %v1231
        %v1238 = vadd.f32 %v1156, %v1224
        %v1239 = vadd.f32 %v1158, %v1231
        %v1240 = vadd.f32 %v1160, %v1232
        %v1241 = vadd.f32 %v1162, %v1233
        %v1246 = vcombine.low %v1238, %v1239
        %v1247 = vcombine.low %v1240, %v1241
        %v1249 = vunpack.c.l.s4 1966171168
        %v1250 = vunpack.c.0.s8 %v1249
        %v1251 = vlaneseq
        %v1252 = vshrl.u32 %v1251, 7
        %v1253 = vsub.s32 %v1250, %v1252
        %v1254 = vrot.slane %v1246, %v1253
        %v1256 = vunpack.c.l.s4 1966171168
        %v1257 = vunpack.c.0.s8 %v1256
        %v1258 = vlaneseq
        %v1259 = vshrl.u32 %v1258, 7
        %v1260 = vsub.s32 %v1257, %v1259
        %v1261 = vrot.slane %v1247, %v1260
        %v1262 = vcombine.low %v1254, %v1261
        %v1263 = vcombine.high %v1254, %v1261
        %v1265 = vunpack.c.l.s4 1966171168
        %v1266 = vunpack.c.0.s8 %v1265
        %v1267 = vlaneseq
        %v1268 = vshrl.u32 %v1267, 7
        %v1269 = vsub.s32 %v1266, %v1268
        %v1270 = vrot.slane %v1262, %v1269
        %v1272 = vunpack.c.l.s4 1966171168
        %v1273 = vunpack.c.0.s8 %v1272
        %v1274 = vlaneseq
        %v1275 = vshrl.u32 %v1274, 7
        %v1276 = vsub.s32 %v1273, %v1275
        %v1277 = vrot.slane %v1263, %v1276
        %1280 = vrot.lane.b32.xlu0 %v1270, 96
        %v1281 = vpop.permute.xlu0 %1280
        %1282 = vrot.lane.b32.xlu0 %v1277, 96
        %v1283 = vpop.permute.xlu0 %1282
        %v1284 = vsel %vm527, %v1281, %v1283
        %v1285 = vsel %vm527, %v1283, %v1281
        %v1288 = vcombine.low %v1284, %v1285
        %v1290 = vunpack.c.l.s4 1966171168
        %v1291 = vunpack.c.0.s8 %v1290
        %v1292 = vlaneseq
        %v1293 = vshrl.u32 %v1292, 7
        %v1294 = vsub.s32 %v1291, %v1293
        %v1295 = vrot.slane %v1288, %v1294
        %v1296 = vcombine.high %v1295, %v1295
        %v1298 = vunpack.c.l.s4 1966171168
        %v1299 = vunpack.c.0.s8 %v1298
        %v1300 = vlaneseq
        %v1301 = vshrl.u32 %v1300, 7
        %v1302 = vsub.s32 %v1299, %v1301
        %v1303 = vrot.slane %v1295, %v1302
        %v1305 = vunpack.c.l.s4 1966171168
        %v1306 = vunpack.c.0.s8 %v1305
        %v1307 = vlaneseq
        %v1308 = vshrl.u32 %v1307, 7
        %v1309 = vsub.s32 %v1306, %v1308
        %v1310 = vrot.slane %v1296, %v1309
        %v1311 = vcombine.high %v1303, %v1303
        %v1312 = vcombine.high %v1310, %v1310
        %v1317 = vadd.f32 %v1238, %v1303
        %v1318 = vadd.f32 %v1239, %v1310
        %v1319 = vadd.f32 %v1240, %v1311
        %v1320 = vadd.f32 %v1241, %v1312
        %v1325 = vcombine.low %v1317, %v1318
        %v1326 = vcombine.low %v1319, %v1320
        %v1328 = vunpack.c.l.s4 1966171168
        %v1329 = vunpack.c.0.s8 %v1328
        %v1330 = vlaneseq
        %v1331 = vshrl.u32 %v1330, 7
        %v1332 = vsub.s32 %v1329, %v1331
        %v1333 = vrot.slane %v1325, %v1332
        %v1335 = vunpack.c.l.s4 1966171168
        %v1336 = vunpack.c.0.s8 %v1335
        %v1337 = vlaneseq
        %v1338 = vshrl.u32 %v1337, 7
        %v1339 = vsub.s32 %v1336, %v1338
        %v1340 = vrot.slane %v1326, %v1339
        %v1341 = vcombine.low %v1333, %v1340
        %v1342 = vcombine.high %v1333, %v1340
        %v1344 = vunpack.c.l.s4 1966171168
        %v1345 = vunpack.c.0.s8 %v1344
        %v1346 = vlaneseq
        %v1347 = vshrl.u32 %v1346, 7
        %v1348 = vsub.s32 %v1345, %v1347
        %v1349 = vrot.slane %v1341, %v1348
        %v1351 = vunpack.c.l.s4 1966171168
        %v1352 = vunpack.c.0.s8 %v1351
        %v1353 = vlaneseq
        %v1354 = vshrl.u32 %v1353, 7
        %v1355 = vsub.s32 %v1352, %v1354
        %v1356 = vrot.slane %v1342, %v1355
        %1359 = vrot.lane.b32.xlu0 %v1349, 64
        %v1360 = vpop.permute.xlu0 %1359
        %1361 = vrot.lane.b32.xlu0 %v1356, 64
        %v1362 = vpop.permute.xlu0 %1361
        %v1363 = vsel %vm607, %v1360, %v1362
        %v1364 = vsel %vm607, %v1362, %v1360
        %v1367 = vcombine.low %v1363, %v1364
        %v1369 = vunpack.c.l.s4 1966171168
        %v1370 = vunpack.c.0.s8 %v1369
        %v1371 = vlaneseq
        %v1372 = vshrl.u32 %v1371, 7
        %v1373 = vsub.s32 %v1370, %v1372
        %v1374 = vrot.slane %v1367, %v1373
        %v1375 = vcombine.high %v1374, %v1374
        %v1377 = vunpack.c.l.s4 1966171168
        %v1378 = vunpack.c.0.s8 %v1377
        %v1379 = vlaneseq
        %v1380 = vshrl.u32 %v1379, 7
        %v1381 = vsub.s32 %v1378, %v1380
        %v1382 = vrot.slane %v1374, %v1381
        %v1384 = vunpack.c.l.s4 1966171168
        %v1385 = vunpack.c.0.s8 %v1384
        %v1386 = vlaneseq
        %v1387 = vshrl.u32 %v1386, 7
        %v1388 = vsub.s32 %v1385, %v1387
        %v1389 = vrot.slane %v1375, %v1388
        %v1390 = vcombine.high %v1382, %v1382
        %v1391 = vcombine.high %v1389, %v1389
        %v1396 = vadd.f32 %v1317, %v1382
        %v1397 = vadd.f32 %v1318, %v1389
        %v1398 = vadd.f32 %v1319, %v1390
        %v1399 = vadd.f32 %v1320, %v1391
        %v1404 = vcombine.low %v1396, %v1397
        %v1405 = vcombine.low %v1398, %v1399
        %v1407 = vunpack.c.l.s4 1966171168
        %v1408 = vunpack.c.0.s8 %v1407
        %v1409 = vlaneseq
        %v1410 = vshrl.u32 %v1409, 7
        %v1411 = vsub.s32 %v1408, %v1410
        %v1412 = vrot.slane %v1404, %v1411
        %v1414 = vunpack.c.l.s4 1966171168
        %v1415 = vunpack.c.0.s8 %v1414
        %v1416 = vlaneseq
        %v1417 = vshrl.u32 %v1416, 7
        %v1418 = vsub.s32 %v1415, %v1417
        %v1419 = vrot.slane %v1405, %v1418
        %v1420 = vcombine.low %v1412, %v1419
        %v1421 = vcombine.high %v1412, %v1419
        %v1423 = vunpack.c.l.s4 1966171168
        %v1424 = vunpack.c.0.s8 %v1423
        %v1425 = vlaneseq
        %v1426 = vshrl.u32 %v1425, 7
        %v1427 = vsub.s32 %v1424, %v1426
        %v1428 = vrot.slane %v1420, %v1427
        %v1430 = vunpack.c.l.s4 1966171168
        %v1431 = vunpack.c.0.s8 %v1430
        %v1432 = vlaneseq
        %v1433 = vshrl.u32 %v1432, 7
        %v1434 = vsub.s32 %v1431, %v1433
        %v1435 = vrot.slane %v1421, %v1434
        %v1436 = vcombine.low %v1435, %v1428
        %v1438 = vunpack.c.l.s4 1966171168
        %v1439 = vunpack.c.0.s8 %v1438
        %v1440 = vlaneseq
        %v1441 = vshrl.u32 %v1440, 7
        %v1442 = vsub.s32 %v1439, %v1441
        %v1443 = vrot.slane %v1436, %v1442
        %v1444 = vcombine.high %v1443, %v1443
        %v1446 = vunpack.c.l.s4 1966171168
        %v1447 = vunpack.c.0.s8 %v1446
        %v1448 = vlaneseq
        %v1449 = vshrl.u32 %v1448, 7
        %v1450 = vsub.s32 %v1447, %v1449
        %v1451 = vrot.slane %v1443, %v1450
        %v1453 = vunpack.c.l.s4 1966171168
        %v1454 = vunpack.c.0.s8 %v1453
        %v1455 = vlaneseq
        %v1456 = vshrl.u32 %v1455, 7
        %v1457 = vsub.s32 %v1454, %v1456
        %v1458 = vrot.slane %v1444, %v1457
        %v1459 = vcombine.high %v1451, %v1451
        %v1460 = vcombine.high %v1458, %v1458
        %v1465 = vadd.f32 %v1396, %v1451
        %v1466 = vadd.f32 %v1397, %v1458
        %v1467 = vadd.f32 %v1398, %v1459
        %v1468 = vadd.f32 %v1399, %v1460
        %v1469 = vmul.f32 %v1465, 0.0625
        %v1470 = vmul.f32 %v1466, 0.0625
        %v1471 = vmul.f32 %v1467, 0.0625
        %v1472 = vmul.f32 %v1468, 0.0625
        %1473 = vrot.lane.b32.xlu0 %v1191, 127
        %v1474 = vpop.permute.xlu0 %1473
        %1475 = vrot.lane.b32.xlu0 %v1198, 127
        %v1476 = vpop.permute.xlu0 %1475
        %v1477 = vsel %vm722, %v1474, %v1476
        %v1478 = vsel %vm722, %v1476, %v1474
        %1479 = vrot.lane.b32.xlu0 %v1191, 15
        %v1480 = vpop.permute.xlu0 %1479
        %1481 = vrot.lane.b32.xlu0 %v1198, 15
        %v1482 = vpop.permute.xlu0 %1481
        %v1483 = vsel %vm729, %v1480, %v1482
        %v1484 = vsel %vm729, %v1482, %v1480
        %v1485 = vsel %vm736, %v1477, %v1484
        %v1486 = vsel %vm737, %v1478, %v1483
        %v1489 = vcombine.low %v1485, %v1486
        %v1491 = vunpack.c.l.s4 1966171168
        %v1492 = vunpack.c.0.s8 %v1491
        %v1493 = vlaneseq
        %v1494 = vshrl.u32 %v1493, 7
        %v1495 = vsub.s32 %v1492, %v1494
        %v1496 = vrot.slane %v1489, %v1495
        %v1497 = vcombine.high %v1496, %v1496
        %v1499 = vunpack.c.l.s4 1966171168
        %v1500 = vunpack.c.0.s8 %v1499
        %v1501 = vlaneseq
        %v1502 = vshrl.u32 %v1501, 7
        %v1503 = vsub.s32 %v1500, %v1502
        %v1504 = vrot.slane %v1496, %v1503
        %v1506 = vunpack.c.l.s4 1966171168
        %v1507 = vunpack.c.0.s8 %v1506
        %v1508 = vlaneseq
        %v1509 = vshrl.u32 %v1508, 7
        %v1510 = vsub.s32 %v1507, %v1509
        %v1511 = vrot.slane %v1497, %v1510
        %v1512 = vcombine.high %v1504, %v1504
        %v1513 = vcombine.high %v1511, %v1511
        %v1518 = vadd.f32 %v1156, %v1504
        %v1519 = vadd.f32 %v1158, %v1511
        %v1520 = vadd.f32 %v1160, %v1512
        %v1521 = vadd.f32 %v1162, %v1513
        %v1526 = vcombine.low %v1518, %v1519
        %v1527 = vcombine.low %v1520, %v1521
        %v1529 = vunpack.c.l.s4 1966171168
        %v1530 = vunpack.c.0.s8 %v1529
        %v1531 = vlaneseq
        %v1532 = vshrl.u32 %v1531, 7
        %v1533 = vsub.s32 %v1530, %v1532
        %v1534 = vrot.slane %v1526, %v1533
        %v1536 = vunpack.c.l.s4 1966171168
        %v1537 = vunpack.c.0.s8 %v1536
        %v1538 = vlaneseq
        %v1539 = vshrl.u32 %v1538, 7
        %v1540 = vsub.s32 %v1537, %v1539
        %v1541 = vrot.slane %v1527, %v1540
        %v1542 = vcombine.low %v1534, %v1541
        %v1543 = vcombine.high %v1534, %v1541
        %v1545 = vunpack.c.l.s4 1966171168
        %v1546 = vunpack.c.0.s8 %v1545
        %v1547 = vlaneseq
        %v1548 = vshrl.u32 %v1547, 7
        %v1549 = vsub.s32 %v1546, %v1548
        %v1550 = vrot.slane %v1542, %v1549
        %v1552 = vunpack.c.l.s4 1966171168
        %v1553 = vunpack.c.0.s8 %v1552
        %v1554 = vlaneseq
        %v1555 = vshrl.u32 %v1554, 7
        %v1556 = vsub.s32 %v1553, %v1555
        %v1557 = vrot.slane %v1543, %v1556
        %1560 = vrot.lane.b32.xlu0 %v1550, 126
        %v1561 = vpop.permute.xlu0 %1560
        %1562 = vrot.lane.b32.xlu0 %v1557, 126
        %v1563 = vpop.permute.xlu0 %1562
        %v1564 = vsel %vm817, %v1561, %v1563
        %v1565 = vsel %vm817, %v1563, %v1561
        %1566 = vrot.lane.b32.xlu0 %v1550, 14
        %v1567 = vpop.permute.xlu0 %1566
        %1568 = vrot.lane.b32.xlu0 %v1557, 14
        %v1569 = vpop.permute.xlu0 %1568
        %v1570 = vsel %vm824, %v1567, %v1569
        %v1571 = vsel %vm824, %v1569, %v1567
        %v1572 = vsel %vm831, %v1564, %v1571
        %v1573 = vsel %vm832, %v1565, %v1570
        %v1576 = vcombine.low %v1572, %v1573
        %v1578 = vunpack.c.l.s4 1966171168
        %v1579 = vunpack.c.0.s8 %v1578
        %v1580 = vlaneseq
        %v1581 = vshrl.u32 %v1580, 7
        %v1582 = vsub.s32 %v1579, %v1581
        %v1583 = vrot.slane %v1576, %v1582
        %v1584 = vcombine.high %v1583, %v1583
        %v1586 = vunpack.c.l.s4 1966171168
        %v1587 = vunpack.c.0.s8 %v1586
        %v1588 = vlaneseq
        %v1589 = vshrl.u32 %v1588, 7
        %v1590 = vsub.s32 %v1587, %v1589
        %v1591 = vrot.slane %v1583, %v1590
        %v1593 = vunpack.c.l.s4 1966171168
        %v1594 = vunpack.c.0.s8 %v1593
        %v1595 = vlaneseq
        %v1596 = vshrl.u32 %v1595, 7
        %v1597 = vsub.s32 %v1594, %v1596
        %v1598 = vrot.slane %v1584, %v1597
        %v1599 = vcombine.high %v1591, %v1591
        %v1600 = vcombine.high %v1598, %v1598
        %v1605 = vadd.f32 %v1518, %v1591
        %v1606 = vadd.f32 %v1519, %v1598
        %v1607 = vadd.f32 %v1520, %v1599
        %v1608 = vadd.f32 %v1521, %v1600
        %v1613 = vcombine.low %v1605, %v1606
        %v1614 = vcombine.low %v1607, %v1608
        %v1616 = vunpack.c.l.s4 1966171168
        %v1617 = vunpack.c.0.s8 %v1616
        %v1618 = vlaneseq
        %v1619 = vshrl.u32 %v1618, 7
        %v1620 = vsub.s32 %v1617, %v1619
        %v1621 = vrot.slane %v1613, %v1620
        %v1623 = vunpack.c.l.s4 1966171168
        %v1624 = vunpack.c.0.s8 %v1623
        %v1625 = vlaneseq
        %v1626 = vshrl.u32 %v1625, 7
        %v1627 = vsub.s32 %v1624, %v1626
        %v1628 = vrot.slane %v1614, %v1627
        %v1629 = vcombine.low %v1621, %v1628
        %v1630 = vcombine.high %v1621, %v1628
        %v1632 = vunpack.c.l.s4 1966171168
        %v1633 = vunpack.c.0.s8 %v1632
        %v1634 = vlaneseq
        %v1635 = vshrl.u32 %v1634, 7
        %v1636 = vsub.s32 %v1633, %v1635
        %v1637 = vrot.slane %v1629, %v1636
        %v1639 = vunpack.c.l.s4 1966171168
        %v1640 = vunpack.c.0.s8 %v1639
        %v1641 = vlaneseq
        %v1642 = vshrl.u32 %v1641, 7
        %v1643 = vsub.s32 %v1640, %v1642
        %v1644 = vrot.slane %v1630, %v1643
        %1647 = vrot.lane.b32.xlu0 %v1637, 124
        %v1648 = vpop.permute.xlu0 %1647
        %1649 = vrot.lane.b32.xlu0 %v1644, 124
        %v1650 = vpop.permute.xlu0 %1649
        %v1651 = vsel %vm912, %v1648, %v1650
        %v1652 = vsel %vm912, %v1650, %v1648
        %1653 = vrot.lane.b32.xlu0 %v1637, 12
        %v1654 = vpop.permute.xlu0 %1653
        %1655 = vrot.lane.b32.xlu0 %v1644, 12
        %v1656 = vpop.permute.xlu0 %1655
        %v1657 = vsel %vm919, %v1654, %v1656
        %v1658 = vsel %vm919, %v1656, %v1654
        %v1659 = vsel %vm926, %v1651, %v1658
        %v1660 = vsel %vm927, %v1652, %v1657
        %v1663 = vcombine.low %v1659, %v1660
        %v1665 = vunpack.c.l.s4 1966171168
        %v1666 = vunpack.c.0.s8 %v1665
        %v1667 = vlaneseq
        %v1668 = vshrl.u32 %v1667, 7
        %v1669 = vsub.s32 %v1666, %v1668
        %v1670 = vrot.slane %v1663, %v1669
        %v1671 = vcombine.high %v1670, %v1670
        %v1673 = vunpack.c.l.s4 1966171168
        %v1674 = vunpack.c.0.s8 %v1673
        %v1675 = vlaneseq
        %v1676 = vshrl.u32 %v1675, 7
        %v1677 = vsub.s32 %v1674, %v1676
        %v1678 = vrot.slane %v1670, %v1677
        %v1680 = vunpack.c.l.s4 1966171168
        %v1681 = vunpack.c.0.s8 %v1680
        %v1682 = vlaneseq
        %v1683 = vshrl.u32 %v1682, 7
        %v1684 = vsub.s32 %v1681, %v1683
        %v1685 = vrot.slane %v1671, %v1684
        %v1686 = vcombine.high %v1678, %v1678
        %v1687 = vcombine.high %v1685, %v1685
        %v1692 = vadd.f32 %v1605, %v1678
        %v1693 = vadd.f32 %v1606, %v1685
        %v1694 = vadd.f32 %v1607, %v1686
        %v1695 = vadd.f32 %v1608, %v1687
        %v1700 = vcombine.low %v1692, %v1693
        %v1701 = vcombine.low %v1694, %v1695
        %v1703 = vunpack.c.l.s4 1966171168
        %v1704 = vunpack.c.0.s8 %v1703
        %v1705 = vlaneseq
        %v1706 = vshrl.u32 %v1705, 7
        %v1707 = vsub.s32 %v1704, %v1706
        %v1708 = vrot.slane %v1700, %v1707
        %v1710 = vunpack.c.l.s4 1966171168
        %v1711 = vunpack.c.0.s8 %v1710
        %v1712 = vlaneseq
        %v1713 = vshrl.u32 %v1712, 7
        %v1714 = vsub.s32 %v1711, %v1713
        %v1715 = vrot.slane %v1701, %v1714
        %v1716 = vcombine.low %v1708, %v1715
        %v1717 = vcombine.high %v1708, %v1715
        %v1719 = vunpack.c.l.s4 1966171168
        %v1720 = vunpack.c.0.s8 %v1719
        %v1721 = vlaneseq
        %v1722 = vshrl.u32 %v1721, 7
        %v1723 = vsub.s32 %v1720, %v1722
        %v1724 = vrot.slane %v1716, %v1723
        %v1726 = vunpack.c.l.s4 1966171168
        %v1727 = vunpack.c.0.s8 %v1726
        %v1728 = vlaneseq
        %v1729 = vshrl.u32 %v1728, 7
        %v1730 = vsub.s32 %v1727, %v1729
        %v1731 = vrot.slane %v1717, %v1730
        %1734 = vrot.lane.b32.xlu0 %v1724, 120
        %v1735 = vpop.permute.xlu0 %1734
        %1736 = vrot.lane.b32.xlu0 %v1731, 120
        %v1737 = vpop.permute.xlu0 %1736
        %v1738 = vsel %vm1007, %v1735, %v1737
        %v1739 = vsel %vm1007, %v1737, %v1735
        %1740 = vrot.lane.b32.xlu0 %v1724, 8
        %v1741 = vpop.permute.xlu0 %1740
        %1742 = vrot.lane.b32.xlu0 %v1731, 8
        %v1743 = vpop.permute.xlu0 %1742
        %v1744 = vsel %vm1014, %v1741, %v1743
        %v1745 = vsel %vm1014, %v1743, %v1741
        %v1746 = vsel %vm1021, %v1738, %v1745
        %v1747 = vsel %vm1022, %v1739, %v1744
        %v1750 = vcombine.low %v1746, %v1747
        %v1752 = vunpack.c.l.s4 1966171168
        %v1753 = vunpack.c.0.s8 %v1752
        %v1754 = vlaneseq
        %v1755 = vshrl.u32 %v1754, 7
        %v1756 = vsub.s32 %v1753, %v1755
        %v1757 = vrot.slane %v1750, %v1756
        %v1758 = vcombine.high %v1757, %v1757
        %v1760 = vunpack.c.l.s4 1966171168
        %v1761 = vunpack.c.0.s8 %v1760
        %v1762 = vlaneseq
        %v1763 = vshrl.u32 %v1762, 7
        %v1764 = vsub.s32 %v1761, %v1763
        %v1765 = vrot.slane %v1757, %v1764
        %v1767 = vunpack.c.l.s4 1966171168
        %v1768 = vunpack.c.0.s8 %v1767
        %v1769 = vlaneseq
        %v1770 = vshrl.u32 %v1769, 7
        %v1771 = vsub.s32 %v1768, %v1770
        %v1772 = vrot.slane %v1758, %v1771
        %v1773 = vcombine.high %v1765, %v1765
        %v1774 = vcombine.high %v1772, %v1772
        %v1779 = vadd.f32 %v1692, %v1765
        %v1780 = vadd.f32 %v1693, %v1772
        %v1781 = vadd.f32 %v1694, %v1773
        %v1782 = vadd.f32 %v1695, %v1774
        %v1783 = vmul.f32 %v1779, 0.0625
        %v1784 = vmul.f32 %v1780, 0.0625
        %v1785 = vmul.f32 %v1781, 0.0625
        %v1786 = vmul.f32 %v1782, 0.0625
        %1787 = vrot.lane.b32.xlu0 %v1191, 17
        %v1788 = vpop.permute.xlu0 %1787
        %1789 = vrot.lane.b32.xlu0 %v1198, 17
        %v1790 = vpop.permute.xlu0 %1789
        %v1791 = vsel %vm1068, %v1788, %v1790
        %v1792 = vsel %vm1068, %v1790, %v1788
        %v1793 = vsel %vm1075, %v1792, 0.0
        %v1794 = vsel %vm1076, %v1791, 0.0
        %1795 = vrot.lane.b32.xlu0 %v1191, 16
        %v1796 = vpop.permute.xlu0 %1795
        %1797 = vrot.lane.b32.xlu0 %v1198, 16
        %v1798 = vpop.permute.xlu0 %1797
        %v1799 = vsel %vm1083, %v1796, %v1798
        %v1800 = vsel %vm1083, %v1798, %v1796
        %v1801 = vsel %vm1088, %v1800, 0.0
        %v1802 = vsel %vm1089, %v1799, 0.0
        %v1803 = vsel %vm1096, %v1484, 0.0
        %v1804 = vsel %vm1097, %v1483, 0.0
        %1805 = vrot.lane.b32.xlu0 %v1191, 1
        %v1806 = vpop.permute.xlu0 %1805
        %1807 = vrot.lane.b32.xlu0 %v1198, 1
        %v1808 = vpop.permute.xlu0 %1807
        %v1809 = vsel %vm1104, %v1806, %v1808
        %v1810 = vsel %vm1104, %v1808, %v1806
        %v1811 = vsel %vm1109, %v1810, 0.0
        %v1812 = vsel %vm1110, %v1809, 0.0
        %v1813 = vsel %vm1115, %v1477, 0.0
        %v1814 = vsel %vm1116, %v1478, 0.0
        %1815 = vrot.lane.b32.xlu0 %v1191, 113
        %v1816 = vpop.permute.xlu0 %1815
        %1817 = vrot.lane.b32.xlu0 %v1198, 113
        %v1818 = vpop.permute.xlu0 %1817
        %v1819 = vsel %vm1123, %v1816, %v1818
        %v1820 = vsel %vm1123, %v1818, %v1816
        %v1821 = vsel %vm1130, %v1819, 0.0
        %v1822 = vsel %vm1131, %v1820, 0.0
        %v1823 = vsel %vm1136, %v1205, 0.0
        %v1824 = vsel %vm1137, %v1206, 0.0
        %1825 = vrot.lane.b32.xlu0 %v1191, 111
        %v1826 = vpop.permute.xlu0 %1825
        %1827 = vrot.lane.b32.xlu0 %v1198, 111
        %v1828 = vpop.permute.xlu0 %1827
        %v1829 = vsel %vm1144, %v1826, %v1828
        %v1830 = vsel %vm1144, %v1828, %v1826
        %v1831 = vsel %vm1151, %v1829, 0.0
        %v1832 = vsel %vm1152, %v1830, 0.0
        %s1833 = scalar_lea.vmem %s317, 2 [#allocation4]
        %v1834 = vld [vmem:[%s1833] ss:$4 sm:$0x3]
        %s1835 = scalar_lea.vmem %s317, 10 [#allocation4]
        %v1836 = vld [vmem:[%s1835] ss:$4 sm:$0x3]
        %s1837 = scalar_lea.vmem %s317, 18 [#allocation4]
        %v1838 = vld [vmem:[%s1837] ss:$4 sm:$0x3]
        %s1839 = scalar_lea.vmem %s317, 26 [#allocation4]
        %v1840 = vld [vmem:[%s1839] ss:$4 sm:$0x3]
        %v1845 = vcombine.low %v1834, %v1836
        %v1846 = vcombine.low %v1838, %v1840
        %v1848 = vunpack.c.l.s4 1966171168
        %v1849 = vunpack.c.0.s8 %v1848
        %v1850 = vlaneseq
        %v1851 = vshrl.u32 %v1850, 7
        %v1852 = vsub.s32 %v1849, %v1851
        %v1853 = vrot.slane %v1845, %v1852
        %v1855 = vunpack.c.l.s4 1966171168
        %v1856 = vunpack.c.0.s8 %v1855
        %v1857 = vlaneseq
        %v1858 = vshrl.u32 %v1857, 7
        %v1859 = vsub.s32 %v1856, %v1858
        %v1860 = vrot.slane %v1846, %v1859
        %v1861 = vcombine.low %v1853, %v1860
        %v1862 = vcombine.high %v1853, %v1860
        %v1864 = vunpack.c.l.s4 1966171168
        %v1865 = vunpack.c.0.s8 %v1864
        %v1866 = vlaneseq
        %v1867 = vshrl.u32 %v1866, 7
        %v1868 = vsub.s32 %v1865, %v1867
        %v1869 = vrot.slane %v1861, %v1868
        %v1871 = vunpack.c.l.s4 1966171168
        %v1872 = vunpack.c.0.s8 %v1871
        %v1873 = vlaneseq
        %v1874 = vshrl.u32 %v1873, 7
        %v1875 = vsub.s32 %v1872, %v1874
        %v1876 = vrot.slane %v1862, %v1875
        %1879 = vrot.lane.b32.xlu0 %v1869, 112
        %v1880 = vpop.permute.xlu0 %1879
        %1881 = vrot.lane.b32.xlu0 %v1876, 112
        %v1882 = vpop.permute.xlu0 %1881
        %v1883 = vsel %vm447, %v1880, %v1882
        %v1884 = vsel %vm447, %v1882, %v1880
        %v1887 = vcombine.low %v1883, %v1884
        %v1889 = vunpack.c.l.s4 1966171168
        %v1890 = vunpack.c.0.s8 %v1889
        %v1891 = vlaneseq
        %v1892 = vshrl.u32 %v1891, 7
        %v1893 = vsub.s32 %v1890, %v1892
        %v1894 = vrot.slane %v1887, %v1893
        %v1895 = vcombine.high %v1894, %v1894
        %v1897 = vunpack.c.l.s4 1966171168
        %v1898 = vunpack.c.0.s8 %v1897
        %v1899 = vlaneseq
        %v1900 = vshrl.u32 %v1899, 7
        %v1901 = vsub.s32 %v1898, %v1900
        %v1902 = vrot.slane %v1894, %v1901
        %v1904 = vunpack.c.l.s4 1966171168
        %v1905 = vunpack.c.0.s8 %v1904
        %v1906 = vlaneseq
        %v1907 = vshrl.u32 %v1906, 7
        %v1908 = vsub.s32 %v1905, %v1907
        %v1909 = vrot.slane %v1895, %v1908
        %v1910 = vcombine.high %v1902, %v1902
        %v1911 = vcombine.high %v1909, %v1909
        %v1916 = vadd.f32 %v1834, %v1902
        %v1917 = vadd.f32 %v1836, %v1909
        %v1918 = vadd.f32 %v1838, %v1910
        %v1919 = vadd.f32 %v1840, %v1911
        %v1924 = vcombine.low %v1916, %v1917
        %v1925 = vcombine.low %v1918, %v1919
        %v1927 = vunpack.c.l.s4 1966171168
        %v1928 = vunpack.c.0.s8 %v1927
        %v1929 = vlaneseq
        %v1930 = vshrl.u32 %v1929, 7
        %v1931 = vsub.s32 %v1928, %v1930
        %v1932 = vrot.slane %v1924, %v1931
        %v1934 = vunpack.c.l.s4 1966171168
        %v1935 = vunpack.c.0.s8 %v1934
        %v1936 = vlaneseq
        %v1937 = vshrl.u32 %v1936, 7
        %v1938 = vsub.s32 %v1935, %v1937
        %v1939 = vrot.slane %v1925, %v1938
        %v1940 = vcombine.low %v1932, %v1939
        %v1941 = vcombine.high %v1932, %v1939
        %v1943 = vunpack.c.l.s4 1966171168
        %v1944 = vunpack.c.0.s8 %v1943
        %v1945 = vlaneseq
        %v1946 = vshrl.u32 %v1945, 7
        %v1947 = vsub.s32 %v1944, %v1946
        %v1948 = vrot.slane %v1940, %v1947
        %v1950 = vunpack.c.l.s4 1966171168
        %v1951 = vunpack.c.0.s8 %v1950
        %v1952 = vlaneseq
        %v1953 = vshrl.u32 %v1952, 7
        %v1954 = vsub.s32 %v1951, %v1953
        %v1955 = vrot.slane %v1941, %v1954
        %1958 = vrot.lane.b32.xlu0 %v1948, 96
        %v1959 = vpop.permute.xlu0 %1958
        %1960 = vrot.lane.b32.xlu0 %v1955, 96
        %v1961 = vpop.permute.xlu0 %1960
        %v1962 = vsel %vm527, %v1959, %v1961
        %v1963 = vsel %vm527, %v1961, %v1959
        %v1966 = vcombine.low %v1962, %v1963
        %v1968 = vunpack.c.l.s4 1966171168
        %v1969 = vunpack.c.0.s8 %v1968
        %v1970 = vlaneseq
        %v1971 = vshrl.u32 %v1970, 7
        %v1972 = vsub.s32 %v1969, %v1971
        %v1973 = vrot.slane %v1966, %v1972
        %v1974 = vcombine.high %v1973, %v1973
        %v1976 = vunpack.c.l.s4 1966171168
        %v1977 = vunpack.c.0.s8 %v1976
        %v1978 = vlaneseq
        %v1979 = vshrl.u32 %v1978, 7
        %v1980 = vsub.s32 %v1977, %v1979
        %v1981 = vrot.slane %v1973, %v1980
        %v1983 = vunpack.c.l.s4 1966171168
        %v1984 = vunpack.c.0.s8 %v1983
        %v1985 = vlaneseq
        %v1986 = vshrl.u32 %v1985, 7
        %v1987 = vsub.s32 %v1984, %v1986
        %v1988 = vrot.slane %v1974, %v1987
        %v1989 = vcombine.high %v1981, %v1981
        %v1990 = vcombine.high %v1988, %v1988
        %v1995 = vadd.f32 %v1916, %v1981
        %v1996 = vadd.f32 %v1917, %v1988
        %v1997 = vadd.f32 %v1918, %v1989
        %v1998 = vadd.f32 %v1919, %v1990
        %v2003 = vcombine.low %v1995, %v1996
        %v2004 = vcombine.low %v1997, %v1998
        %v2006 = vunpack.c.l.s4 1966171168
        %v2007 = vunpack.c.0.s8 %v2006
        %v2008 = vlaneseq
        %v2009 = vshrl.u32 %v2008, 7
        %v2010 = vsub.s32 %v2007, %v2009
        %v2011 = vrot.slane %v2003, %v2010
        %v2013 = vunpack.c.l.s4 1966171168
        %v2014 = vunpack.c.0.s8 %v2013
        %v2015 = vlaneseq
        %v2016 = vshrl.u32 %v2015, 7
        %v2017 = vsub.s32 %v2014, %v2016
        %v2018 = vrot.slane %v2004, %v2017
        %v2019 = vcombine.low %v2011, %v2018
        %v2020 = vcombine.high %v2011, %v2018
        %v2022 = vunpack.c.l.s4 1966171168
        %v2023 = vunpack.c.0.s8 %v2022
        %v2024 = vlaneseq
        %v2025 = vshrl.u32 %v2024, 7
        %v2026 = vsub.s32 %v2023, %v2025
        %v2027 = vrot.slane %v2019, %v2026
        %v2029 = vunpack.c.l.s4 1966171168
        %v2030 = vunpack.c.0.s8 %v2029
        %v2031 = vlaneseq
        %v2032 = vshrl.u32 %v2031, 7
        %v2033 = vsub.s32 %v2030, %v2032
        %v2034 = vrot.slane %v2020, %v2033
        %2037 = vrot.lane.b32.xlu0 %v2027, 64
        %v2038 = vpop.permute.xlu0 %2037
        %2039 = vrot.lane.b32.xlu0 %v2034, 64
        %v2040 = vpop.permute.xlu0 %2039
        %v2041 = vsel %vm607, %v2038, %v2040
        %v2042 = vsel %vm607, %v2040, %v2038
        %v2045 = vcombine.low %v2041, %v2042
        %v2047 = vunpack.c.l.s4 1966171168
        %v2048 = vunpack.c.0.s8 %v2047
        %v2049 = vlaneseq
        %v2050 = vshrl.u32 %v2049, 7
        %v2051 = vsub.s32 %v2048, %v2050
        %v2052 = vrot.slane %v2045, %v2051
        %v2053 = vcombine.high %v2052, %v2052
        %v2055 = vunpack.c.l.s4 1966171168
        %v2056 = vunpack.c.0.s8 %v2055
        %v2057 = vlaneseq
        %v2058 = vshrl.u32 %v2057, 7
        %v2059 = vsub.s32 %v2056, %v2058
        %v2060 = vrot.slane %v2052, %v2059
        %v2062 = vunpack.c.l.s4 1966171168
        %v2063 = vunpack.c.0.s8 %v2062
        %v2064 = vlaneseq
        %v2065 = vshrl.u32 %v2064, 7
        %v2066 = vsub.s32 %v2063, %v2065
        %v2067 = vrot.slane %v2053, %v2066
        %v2068 = vcombine.high %v2060, %v2060
        %v2069 = vcombine.high %v2067, %v2067
        %v2074 = vadd.f32 %v1995, %v2060
        %v2075 = vadd.f32 %v1996, %v2067
        %v2076 = vadd.f32 %v1997, %v2068
        %v2077 = vadd.f32 %v1998, %v2069
        %v2082 = vcombine.low %v2074, %v2075
        %v2083 = vcombine.low %v2076, %v2077
        %v2085 = vunpack.c.l.s4 1966171168
        %v2086 = vunpack.c.0.s8 %v2085
        %v2087 = vlaneseq
        %v2088 = vshrl.u32 %v2087, 7
        %v2089 = vsub.s32 %v2086, %v2088
        %v2090 = vrot.slane %v2082, %v2089
        %v2092 = vunpack.c.l.s4 1966171168
        %v2093 = vunpack.c.0.s8 %v2092
        %v2094 = vlaneseq
        %v2095 = vshrl.u32 %v2094, 7
        %v2096 = vsub.s32 %v2093, %v2095
        %v2097 = vrot.slane %v2083, %v2096
        %v2098 = vcombine.low %v2090, %v2097
        %v2099 = vcombine.high %v2090, %v2097
        %v2101 = vunpack.c.l.s4 1966171168
        %v2102 = vunpack.c.0.s8 %v2101
        %v2103 = vlaneseq
        %v2104 = vshrl.u32 %v2103, 7
        %v2105 = vsub.s32 %v2102, %v2104
        %v2106 = vrot.slane %v2098, %v2105
        %v2108 = vunpack.c.l.s4 1966171168
        %v2109 = vunpack.c.0.s8 %v2108
        %v2110 = vlaneseq
        %v2111 = vshrl.u32 %v2110, 7
        %v2112 = vsub.s32 %v2109, %v2111
        %v2113 = vrot.slane %v2099, %v2112
        %v2114 = vcombine.low %v2113, %v2106
        %v2116 = vunpack.c.l.s4 1966171168
        %v2117 = vunpack.c.0.s8 %v2116
        %v2118 = vlaneseq
        %v2119 = vshrl.u32 %v2118, 7
        %v2120 = vsub.s32 %v2117, %v2119
        %v2121 = vrot.slane %v2114, %v2120
        %v2122 = vcombine.high %v2121, %v2121
        %v2124 = vunpack.c.l.s4 1966171168
        %v2125 = vunpack.c.0.s8 %v2124
        %v2126 = vlaneseq
        %v2127 = vshrl.u32 %v2126, 7
        %v2128 = vsub.s32 %v2125, %v2127
        %v2129 = vrot.slane %v2121, %v2128
        %v2131 = vunpack.c.l.s4 1966171168
        %v2132 = vunpack.c.0.s8 %v2131
        %v2133 = vlaneseq
        %v2134 = vshrl.u32 %v2133, 7
        %v2135 = vsub.s32 %v2132, %v2134
        %v2136 = vrot.slane %v2122, %v2135
        %v2137 = vcombine.high %v2129, %v2129
        %v2138 = vcombine.high %v2136, %v2136
        %v2143 = vadd.f32 %v2074, %v2129
        %v2144 = vadd.f32 %v2075, %v2136
        %v2145 = vadd.f32 %v2076, %v2137
        %v2146 = vadd.f32 %v2077, %v2138
        %v2147 = vmul.f32 %v2143, 0.0625
        %v2148 = vmul.f32 %v2144, 0.0625
        %v2149 = vmul.f32 %v2145, 0.0625
        %v2150 = vmul.f32 %v2146, 0.0625
        %2151 = vrot.lane.b32.xlu0 %v1869, 127
        %v2152 = vpop.permute.xlu0 %2151
        %2153 = vrot.lane.b32.xlu0 %v1876, 127
        %v2154 = vpop.permute.xlu0 %2153
        %v2155 = vsel %vm722, %v2152, %v2154
        %v2156 = vsel %vm722, %v2154, %v2152
        %2157 = vrot.lane.b32.xlu0 %v1869, 15
        %v2158 = vpop.permute.xlu0 %2157
        %2159 = vrot.lane.b32.xlu0 %v1876, 15
        %v2160 = vpop.permute.xlu0 %2159
        %v2161 = vsel %vm729, %v2158, %v2160
        %v2162 = vsel %vm729, %v2160, %v2158
        %v2163 = vsel %vm736, %v2155, %v2162
        %v2164 = vsel %vm737, %v2156, %v2161
        %v2167 = vcombine.low %v2163, %v2164
        %v2169 = vunpack.c.l.s4 1966171168
        %v2170 = vunpack.c.0.s8 %v2169
        %v2171 = vlaneseq
        %v2172 = vshrl.u32 %v2171, 7
        %v2173 = vsub.s32 %v2170, %v2172
        %v2174 = vrot.slane %v2167, %v2173
        %v2175 = vcombine.high %v2174, %v2174
        %v2177 = vunpack.c.l.s4 1966171168
        %v2178 = vunpack.c.0.s8 %v2177
        %v2179 = vlaneseq
        %v2180 = vshrl.u32 %v2179, 7
        %v2181 = vsub.s32 %v2178, %v2180
        %v2182 = vrot.slane %v2174, %v2181
        %v2184 = vunpack.c.l.s4 1966171168
        %v2185 = vunpack.c.0.s8 %v2184
        %v2186 = vlaneseq
        %v2187 = vshrl.u32 %v2186, 7
        %v2188 = vsub.s32 %v2185, %v2187
        %v2189 = vrot.slane %v2175, %v2188
        %v2190 = vcombine.high %v2182, %v2182
        %v2191 = vcombine.high %v2189, %v2189
        %v2196 = vadd.f32 %v1834, %v2182
        %v2197 = vadd.f32 %v1836, %v2189
        %v2198 = vadd.f32 %v1838, %v2190
        %v2199 = vadd.f32 %v1840, %v2191
        %v2204 = vcombine.low %v2196, %v2197
        %v2205 = vcombine.low %v2198, %v2199
        %v2207 = vunpack.c.l.s4 1966171168
        %v2208 = vunpack.c.0.s8 %v2207
        %v2209 = vlaneseq
        %v2210 = vshrl.u32 %v2209, 7
        %v2211 = vsub.s32 %v2208, %v2210
        %v2212 = vrot.slane %v2204, %v2211
        %v2214 = vunpack.c.l.s4 1966171168
        %v2215 = vunpack.c.0.s8 %v2214
        %v2216 = vlaneseq
        %v2217 = vshrl.u32 %v2216, 7
        %v2218 = vsub.s32 %v2215, %v2217
        %v2219 = vrot.slane %v2205, %v2218
        %v2220 = vcombine.low %v2212, %v2219
        %v2221 = vcombine.high %v2212, %v2219
        %v2223 = vunpack.c.l.s4 1966171168
        %v2224 = vunpack.c.0.s8 %v2223
        %v2225 = vlaneseq
        %v2226 = vshrl.u32 %v2225, 7
        %v2227 = vsub.s32 %v2224, %v2226
        %v2228 = vrot.slane %v2220, %v2227
        %v2230 = vunpack.c.l.s4 1966171168
        %v2231 = vunpack.c.0.s8 %v2230
        %v2232 = vlaneseq
        %v2233 = vshrl.u32 %v2232, 7
        %v2234 = vsub.s32 %v2231, %v2233
        %v2235 = vrot.slane %v2221, %v2234
        %2238 = vrot.lane.b32.xlu0 %v2228, 126
        %v2239 = vpop.permute.xlu0 %2238
        %2240 = vrot.lane.b32.xlu0 %v2235, 126
        %v2241 = vpop.permute.xlu0 %2240
        %v2242 = vsel %vm817, %v2239, %v2241
        %v2243 = vsel %vm817, %v2241, %v2239
        %2244 = vrot.lane.b32.xlu0 %v2228, 14
        %v2245 = vpop.permute.xlu0 %2244
        %2246 = vrot.lane.b32.xlu0 %v2235, 14
        %v2247 = vpop.permute.xlu0 %2246
        %v2248 = vsel %vm824, %v2245, %v2247
        %v2249 = vsel %vm824, %v2247, %v2245
        %v2250 = vsel %vm831, %v2242, %v2249
        %v2251 = vsel %vm832, %v2243, %v2248
        %v2254 = vcombine.low %v2250, %v2251
        %v2256 = vunpack.c.l.s4 1966171168
        %v2257 = vunpack.c.0.s8 %v2256
        %v2258 = vlaneseq
        %v2259 = vshrl.u32 %v2258, 7
        %v2260 = vsub.s32 %v2257, %v2259
        %v2261 = vrot.slane %v2254, %v2260
        %v2262 = vcombine.high %v2261, %v2261
        %v2264 = vunpack.c.l.s4 1966171168
        %v2265 = vunpack.c.0.s8 %v2264
        %v2266 = vlaneseq
        %v2267 = vshrl.u32 %v2266, 7
        %v2268 = vsub.s32 %v2265, %v2267
        %v2269 = vrot.slane %v2261, %v2268
        %v2271 = vunpack.c.l.s4 1966171168
        %v2272 = vunpack.c.0.s8 %v2271
        %v2273 = vlaneseq
        %v2274 = vshrl.u32 %v2273, 7
        %v2275 = vsub.s32 %v2272, %v2274
        %v2276 = vrot.slane %v2262, %v2275
        %v2277 = vcombine.high %v2269, %v2269
        %v2278 = vcombine.high %v2276, %v2276
        %v2283 = vadd.f32 %v2196, %v2269
        %v2284 = vadd.f32 %v2197, %v2276
        %v2285 = vadd.f32 %v2198, %v2277
        %v2286 = vadd.f32 %v2199, %v2278
        %v2291 = vcombine.low %v2283, %v2284
        %v2292 = vcombine.low %v2285, %v2286
        %v2294 = vunpack.c.l.s4 1966171168
        %v2295 = vunpack.c.0.s8 %v2294
        %v2296 = vlaneseq
        %v2297 = vshrl.u32 %v2296, 7
        %v2298 = vsub.s32 %v2295, %v2297
        %v2299 = vrot.slane %v2291, %v2298
        %v2301 = vunpack.c.l.s4 1966171168
        %v2302 = vunpack.c.0.s8 %v2301
        %v2303 = vlaneseq
        %v2304 = vshrl.u32 %v2303, 7
        %v2305 = vsub.s32 %v2302, %v2304
        %v2306 = vrot.slane %v2292, %v2305
        %v2307 = vcombine.low %v2299, %v2306
        %v2308 = vcombine.high %v2299, %v2306
        %v2310 = vunpack.c.l.s4 1966171168
        %v2311 = vunpack.c.0.s8 %v2310
        %v2312 = vlaneseq
        %v2313 = vshrl.u32 %v2312, 7
        %v2314 = vsub.s32 %v2311, %v2313
        %v2315 = vrot.slane %v2307, %v2314
        %v2317 = vunpack.c.l.s4 1966171168
        %v2318 = vunpack.c.0.s8 %v2317
        %v2319 = vlaneseq
        %v2320 = vshrl.u32 %v2319, 7
        %v2321 = vsub.s32 %v2318, %v2320
        %v2322 = vrot.slane %v2308, %v2321
        %2325 = vrot.lane.b32.xlu0 %v2315, 124
        %v2326 = vpop.permute.xlu0 %2325
        %2327 = vrot.lane.b32.xlu0 %v2322, 124
        %v2328 = vpop.permute.xlu0 %2327
        %v2329 = vsel %vm912, %v2326, %v2328
        %v2330 = vsel %vm912, %v2328, %v2326
        %2331 = vrot.lane.b32.xlu0 %v2315, 12
        %v2332 = vpop.permute.xlu0 %2331
        %2333 = vrot.lane.b32.xlu0 %v2322, 12
        %v2334 = vpop.permute.xlu0 %2333
        %v2335 = vsel %vm919, %v2332, %v2334
        %v2336 = vsel %vm919, %v2334, %v2332
        %v2337 = vsel %vm926, %v2329, %v2336
        %v2338 = vsel %vm927, %v2330, %v2335
        %v2341 = vcombine.low %v2337, %v2338
        %v2343 = vunpack.c.l.s4 1966171168
        %v2344 = vunpack.c.0.s8 %v2343
        %v2345 = vlaneseq
        %v2346 = vshrl.u32 %v2345, 7
        %v2347 = vsub.s32 %v2344, %v2346
        %v2348 = vrot.slane %v2341, %v2347
        %v2349 = vcombine.high %v2348, %v2348
        %v2351 = vunpack.c.l.s4 1966171168
        %v2352 = vunpack.c.0.s8 %v2351
        %v2353 = vlaneseq
        %v2354 = vshrl.u32 %v2353, 7
        %v2355 = vsub.s32 %v2352, %v2354
        %v2356 = vrot.slane %v2348, %v2355
        %v2358 = vunpack.c.l.s4 1966171168
        %v2359 = vunpack.c.0.s8 %v2358
        %v2360 = vlaneseq
        %v2361 = vshrl.u32 %v2360, 7
        %v2362 = vsub.s32 %v2359, %v2361
        %v2363 = vrot.slane %v2349, %v2362
        %v2364 = vcombine.high %v2356, %v2356
        %v2365 = vcombine.high %v2363, %v2363
        %v2370 = vadd.f32 %v2283, %v2356
        %v2371 = vadd.f32 %v2284, %v2363
        %v2372 = vadd.f32 %v2285, %v2364
        %v2373 = vadd.f32 %v2286, %v2365
        %v2378 = vcombine.low %v2370, %v2371
        %v2379 = vcombine.low %v2372, %v2373
        %v2381 = vunpack.c.l.s4 1966171168
        %v2382 = vunpack.c.0.s8 %v2381
        %v2383 = vlaneseq
        %v2384 = vshrl.u32 %v2383, 7
        %v2385 = vsub.s32 %v2382, %v2384
        %v2386 = vrot.slane %v2378, %v2385
        %v2388 = vunpack.c.l.s4 1966171168
        %v2389 = vunpack.c.0.s8 %v2388
        %v2390 = vlaneseq
        %v2391 = vshrl.u32 %v2390, 7
        %v2392 = vsub.s32 %v2389, %v2391
        %v2393 = vrot.slane %v2379, %v2392
        %v2394 = vcombine.low %v2386, %v2393
        %v2395 = vcombine.high %v2386, %v2393
        %v2397 = vunpack.c.l.s4 1966171168
        %v2398 = vunpack.c.0.s8 %v2397
        %v2399 = vlaneseq
        %v2400 = vshrl.u32 %v2399, 7
        %v2401 = vsub.s32 %v2398, %v2400
        %v2402 = vrot.slane %v2394, %v2401
        %v2404 = vunpack.c.l.s4 1966171168
        %v2405 = vunpack.c.0.s8 %v2404
        %v2406 = vlaneseq
        %v2407 = vshrl.u32 %v2406, 7
        %v2408 = vsub.s32 %v2405, %v2407
        %v2409 = vrot.slane %v2395, %v2408
        %2412 = vrot.lane.b32.xlu0 %v2402, 120
        %v2413 = vpop.permute.xlu0 %2412
        %2414 = vrot.lane.b32.xlu0 %v2409, 120
        %v2415 = vpop.permute.xlu0 %2414
        %v2416 = vsel %vm1007, %v2413, %v2415
        %v2417 = vsel %vm1007, %v2415, %v2413
        %2418 = vrot.lane.b32.xlu0 %v2402, 8
        %v2419 = vpop.permute.xlu0 %2418
        %2420 = vrot.lane.b32.xlu0 %v2409, 8
        %v2421 = vpop.permute.xlu0 %2420
        %v2422 = vsel %vm1014, %v2419, %v2421
        %v2423 = vsel %vm1014, %v2421, %v2419
        %v2424 = vsel %vm1021, %v2416, %v2423
        %v2425 = vsel %vm1022, %v2417, %v2422
        %v2428 = vcombine.low %v2424, %v2425
        %v2430 = vunpack.c.l.s4 1966171168
        %v2431 = vunpack.c.0.s8 %v2430
        %v2432 = vlaneseq
        %v2433 = vshrl.u32 %v2432, 7
        %v2434 = vsub.s32 %v2431, %v2433
        %v2435 = vrot.slane %v2428, %v2434
        %v2436 = vcombine.high %v2435, %v2435
        %v2438 = vunpack.c.l.s4 1966171168
        %v2439 = vunpack.c.0.s8 %v2438
        %v2440 = vlaneseq
        %v2441 = vshrl.u32 %v2440, 7
        %v2442 = vsub.s32 %v2439, %v2441
        %v2443 = vrot.slane %v2435, %v2442
        %v2445 = vunpack.c.l.s4 1966171168
        %v2446 = vunpack.c.0.s8 %v2445
        %v2447 = vlaneseq
        %v2448 = vshrl.u32 %v2447, 7
        %v2449 = vsub.s32 %v2446, %v2448
        %v2450 = vrot.slane %v2436, %v2449
        %v2451 = vcombine.high %v2443, %v2443
        %v2452 = vcombine.high %v2450, %v2450
        %v2457 = vadd.f32 %v2370, %v2443
        %v2458 = vadd.f32 %v2371, %v2450
        %v2459 = vadd.f32 %v2372, %v2451
        %v2460 = vadd.f32 %v2373, %v2452
        %v2461 = vmul.f32 %v2457, 0.0625
        %v2462 = vmul.f32 %v2458, 0.0625
        %v2463 = vmul.f32 %v2459, 0.0625
        %v2464 = vmul.f32 %v2460, 0.0625
        %2465 = vrot.lane.b32.xlu0 %v1869, 17
        %v2466 = vpop.permute.xlu0 %2465
        %2467 = vrot.lane.b32.xlu0 %v1876, 17
        %v2468 = vpop.permute.xlu0 %2467
        %v2469 = vsel %vm1068, %v2466, %v2468
        %v2470 = vsel %vm1068, %v2468, %v2466
        %v2471 = vsel %vm1075, %v2470, 0.0
        %v2472 = vsel %vm1076, %v2469, 0.0
        %2473 = vrot.lane.b32.xlu0 %v1869, 16
        %v2474 = vpop.permute.xlu0 %2473
        %2475 = vrot.lane.b32.xlu0 %v1876, 16
        %v2476 = vpop.permute.xlu0 %2475
        %v2477 = vsel %vm1083, %v2474, %v2476
        %v2478 = vsel %vm1083, %v2476, %v2474
        %v2479 = vsel %vm1088, %v2478, 0.0
        %v2480 = vsel %vm1089, %v2477, 0.0
        %v2481 = vsel %vm1096, %v2162, 0.0
        %v2482 = vsel %vm1097, %v2161, 0.0
        %2483 = vrot.lane.b32.xlu0 %v1869, 1
        %v2484 = vpop.permute.xlu0 %2483
        %2485 = vrot.lane.b32.xlu0 %v1876, 1
        %v2486 = vpop.permute.xlu0 %2485
        %v2487 = vsel %vm1104, %v2484, %v2486
        %v2488 = vsel %vm1104, %v2486, %v2484
        %v2489 = vsel %vm1109, %v2488, 0.0
        %v2490 = vsel %vm1110, %v2487, 0.0
        %v2491 = vsel %vm1115, %v2155, 0.0
        %v2492 = vsel %vm1116, %v2156, 0.0
        %2493 = vrot.lane.b32.xlu0 %v1869, 113
        %v2494 = vpop.permute.xlu0 %2493
        %2495 = vrot.lane.b32.xlu0 %v1876, 113
        %v2496 = vpop.permute.xlu0 %2495
        %v2497 = vsel %vm1123, %v2494, %v2496
        %v2498 = vsel %vm1123, %v2496, %v2494
        %v2499 = vsel %vm1130, %v2497, 0.0
        %v2500 = vsel %vm1131, %v2498, 0.0
        %v2501 = vsel %vm1136, %v1883, 0.0
        %v2502 = vsel %vm1137, %v1884, 0.0
        %2503 = vrot.lane.b32.xlu0 %v1869, 111
        %v2504 = vpop.permute.xlu0 %2503
        %2505 = vrot.lane.b32.xlu0 %v1876, 111
        %v2506 = vpop.permute.xlu0 %2505
        %v2507 = vsel %vm1144, %v2504, %v2506
        %v2508 = vsel %vm1144, %v2506, %v2504
        %v2509 = vsel %vm1151, %v2507, 0.0
        %v2510 = vsel %vm1152, %v2508, 0.0
        %s2511 = scalar_lea.vmem %s317, 3 [#allocation4]
        %v2512 = vld [vmem:[%s2511] ss:$4 sm:$0x3]
        %s2513 = scalar_lea.vmem %s317, 11 [#allocation4]
        %v2514 = vld [vmem:[%s2513] ss:$4 sm:$0x3]
        %s2515 = scalar_lea.vmem %s317, 19 [#allocation4]
        %v2516 = vld [vmem:[%s2515] ss:$4 sm:$0x3]
        %s2517 = scalar_lea.vmem %s317, 27 [#allocation4]
        %v2518 = vld [vmem:[%s2517] ss:$4 sm:$0x3]
        %v2523 = vcombine.low %v2512, %v2514
        %v2524 = vcombine.low %v2516, %v2518
        %v2526 = vunpack.c.l.s4 1966171168
        %v2527 = vunpack.c.0.s8 %v2526
        %v2528 = vlaneseq
        %v2529 = vshrl.u32 %v2528, 7
        %v2530 = vsub.s32 %v2527, %v2529
        %v2531 = vrot.slane %v2523, %v2530
        %v2533 = vunpack.c.l.s4 1966171168
        %v2534 = vunpack.c.0.s8 %v2533
        %v2535 = vlaneseq
        %v2536 = vshrl.u32 %v2535, 7
        %v2537 = vsub.s32 %v2534, %v2536
        %v2538 = vrot.slane %v2524, %v2537
        %v2539 = vcombine.low %v2531, %v2538
        %v2540 = vcombine.high %v2531, %v2538
        %v2542 = vunpack.c.l.s4 1966171168
        %v2543 = vunpack.c.0.s8 %v2542
        %v2544 = vlaneseq
        %v2545 = vshrl.u32 %v2544, 7
        %v2546 = vsub.s32 %v2543, %v2545
        %v2547 = vrot.slane %v2539, %v2546
        %v2549 = vunpack.c.l.s4 1966171168
        %v2550 = vunpack.c.0.s8 %v2549
        %v2551 = vlaneseq
        %v2552 = vshrl.u32 %v2551, 7
        %v2553 = vsub.s32 %v2550, %v2552
        %v2554 = vrot.slane %v2540, %v2553
        %2557 = vrot.lane.b32.xlu0 %v2547, 112
        %v2558 = vpop.permute.xlu0 %2557
        %2559 = vrot.lane.b32.xlu0 %v2554, 112
        %v2560 = vpop.permute.xlu0 %2559
        %v2561 = vsel %vm447, %v2558, %v2560
        %v2562 = vsel %vm447, %v2560, %v2558
        %v2565 = vcombine.low %v2561, %v2562
        %v2567 = vunpack.c.l.s4 1966171168
        %v2568 = vunpack.c.0.s8 %v2567
        %v2569 = vlaneseq
        %v2570 = vshrl.u32 %v2569, 7
        %v2571 = vsub.s32 %v2568, %v2570
        %v2572 = vrot.slane %v2565, %v2571
        %v2573 = vcombine.high %v2572, %v2572
        %v2575 = vunpack.c.l.s4 1966171168
        %v2576 = vunpack.c.0.s8 %v2575
        %v2577 = vlaneseq
        %v2578 = vshrl.u32 %v2577, 7
        %v2579 = vsub.s32 %v2576, %v2578
        %v2580 = vrot.slane %v2572, %v2579
        %v2582 = vunpack.c.l.s4 1966171168
        %v2583 = vunpack.c.0.s8 %v2582
        %v2584 = vlaneseq
        %v2585 = vshrl.u32 %v2584, 7
        %v2586 = vsub.s32 %v2583, %v2585
        %v2587 = vrot.slane %v2573, %v2586
        %v2588 = vcombine.high %v2580, %v2580
        %v2589 = vcombine.high %v2587, %v2587
        %v2594 = vadd.f32 %v2512, %v2580
        %v2595 = vadd.f32 %v2514, %v2587
        %v2596 = vadd.f32 %v2516, %v2588
        %v2597 = vadd.f32 %v2518, %v2589
        %v2602 = vcombine.low %v2594, %v2595
        %v2603 = vcombine.low %v2596, %v2597
        %v2605 = vunpack.c.l.s4 1966171168
        %v2606 = vunpack.c.0.s8 %v2605
        %v2607 = vlaneseq
        %v2608 = vshrl.u32 %v2607, 7
        %v2609 = vsub.s32 %v2606, %v2608
        %v2610 = vrot.slane %v2602, %v2609
        %v2612 = vunpack.c.l.s4 1966171168
        %v2613 = vunpack.c.0.s8 %v2612
        %v2614 = vlaneseq
        %v2615 = vshrl.u32 %v2614, 7
        %v2616 = vsub.s32 %v2613, %v2615
        %v2617 = vrot.slane %v2603, %v2616
        %v2618 = vcombine.low %v2610, %v2617
        %v2619 = vcombine.high %v2610, %v2617
        %v2621 = vunpack.c.l.s4 1966171168
        %v2622 = vunpack.c.0.s8 %v2621
        %v2623 = vlaneseq
        %v2624 = vshrl.u32 %v2623, 7
        %v2625 = vsub.s32 %v2622, %v2624
        %v2626 = vrot.slane %v2618, %v2625
        %v2628 = vunpack.c.l.s4 1966171168
        %v2629 = vunpack.c.0.s8 %v2628
        %v2630 = vlaneseq
        %v2631 = vshrl.u32 %v2630, 7
        %v2632 = vsub.s32 %v2629, %v2631
        %v2633 = vrot.slane %v2619, %v2632
        %2636 = vrot.lane.b32.xlu0 %v2626, 96
        %v2637 = vpop.permute.xlu0 %2636
        %2638 = vrot.lane.b32.xlu0 %v2633, 96
        %v2639 = vpop.permute.xlu0 %2638
        %v2640 = vsel %vm527, %v2637, %v2639
        %v2641 = vsel %vm527, %v2639, %v2637
        %v2644 = vcombine.low %v2640, %v2641
        %v2646 = vunpack.c.l.s4 1966171168
        %v2647 = vunpack.c.0.s8 %v2646
        %v2648 = vlaneseq
        %v2649 = vshrl.u32 %v2648, 7
        %v2650 = vsub.s32 %v2647, %v2649
        %v2651 = vrot.slane %v2644, %v2650
        %v2652 = vcombine.high %v2651, %v2651
        %v2654 = vunpack.c.l.s4 1966171168
        %v2655 = vunpack.c.0.s8 %v2654
        %v2656 = vlaneseq
        %v2657 = vshrl.u32 %v2656, 7
        %v2658 = vsub.s32 %v2655, %v2657
        %v2659 = vrot.slane %v2651, %v2658
        %v2661 = vunpack.c.l.s4 1966171168
        %v2662 = vunpack.c.0.s8 %v2661
        %v2663 = vlaneseq
        %v2664 = vshrl.u32 %v2663, 7
        %v2665 = vsub.s32 %v2662, %v2664
        %v2666 = vrot.slane %v2652, %v2665
        %v2667 = vcombine.high %v2659, %v2659
        %v2668 = vcombine.high %v2666, %v2666
        %v2673 = vadd.f32 %v2594, %v2659
        %v2674 = vadd.f32 %v2595, %v2666
        %v2675 = vadd.f32 %v2596, %v2667
        %v2676 = vadd.f32 %v2597, %v2668
        %v2681 = vcombine.low %v2673, %v2674
        %v2682 = vcombine.low %v2675, %v2676
        %v2684 = vunpack.c.l.s4 1966171168
        %v2685 = vunpack.c.0.s8 %v2684
        %v2686 = vlaneseq
        %v2687 = vshrl.u32 %v2686, 7
        %v2688 = vsub.s32 %v2685, %v2687
        %v2689 = vrot.slane %v2681, %v2688
        %v2691 = vunpack.c.l.s4 1966171168
        %v2692 = vunpack.c.0.s8 %v2691
        %v2693 = vlaneseq
        %v2694 = vshrl.u32 %v2693, 7
        %v2695 = vsub.s32 %v2692, %v2694
        %v2696 = vrot.slane %v2682, %v2695
        %v2697 = vcombine.low %v2689, %v2696
        %v2698 = vcombine.high %v2689, %v2696
        %v2700 = vunpack.c.l.s4 1966171168
        %v2701 = vunpack.c.0.s8 %v2700
        %v2702 = vlaneseq
        %v2703 = vshrl.u32 %v2702, 7
        %v2704 = vsub.s32 %v2701, %v2703
        %v2705 = vrot.slane %v2697, %v2704
        %v2707 = vunpack.c.l.s4 1966171168
        %v2708 = vunpack.c.0.s8 %v2707
        %v2709 = vlaneseq
        %v2710 = vshrl.u32 %v2709, 7
        %v2711 = vsub.s32 %v2708, %v2710
        %v2712 = vrot.slane %v2698, %v2711
        %2715 = vrot.lane.b32.xlu0 %v2705, 64
        %v2716 = vpop.permute.xlu0 %2715
        %2717 = vrot.lane.b32.xlu0 %v2712, 64
        %v2718 = vpop.permute.xlu0 %2717
        %v2719 = vsel %vm607, %v2716, %v2718
        %v2720 = vsel %vm607, %v2718, %v2716
        %v2723 = vcombine.low %v2719, %v2720
        %v2725 = vunpack.c.l.s4 1966171168
        %v2726 = vunpack.c.0.s8 %v2725
        %v2727 = vlaneseq
        %v2728 = vshrl.u32 %v2727, 7
        %v2729 = vsub.s32 %v2726, %v2728
        %v2730 = vrot.slane %v2723, %v2729
        %v2731 = vcombine.high %v2730, %v2730
        %v2733 = vunpack.c.l.s4 1966171168
        %v2734 = vunpack.c.0.s8 %v2733
        %v2735 = vlaneseq
        %v2736 = vshrl.u32 %v2735, 7
        %v2737 = vsub.s32 %v2734, %v2736
        %v2738 = vrot.slane %v2730, %v2737
        %v2740 = vunpack.c.l.s4 1966171168
        %v2741 = vunpack.c.0.s8 %v2740
        %v2742 = vlaneseq
        %v2743 = vshrl.u32 %v2742, 7
        %v2744 = vsub.s32 %v2741, %v2743
        %v2745 = vrot.slane %v2731, %v2744
        %v2746 = vcombine.high %v2738, %v2738
        %v2747 = vcombine.high %v2745, %v2745
        %v2752 = vadd.f32 %v2673, %v2738
        %v2753 = vadd.f32 %v2674, %v2745
        %v2754 = vadd.f32 %v2675, %v2746
        %v2755 = vadd.f32 %v2676, %v2747
        %v2760 = vcombine.low %v2752, %v2753
        %v2761 = vcombine.low %v2754, %v2755
        %v2763 = vunpack.c.l.s4 1966171168
        %v2764 = vunpack.c.0.s8 %v2763
        %v2765 = vlaneseq
        %v2766 = vshrl.u32 %v2765, 7
        %v2767 = vsub.s32 %v2764, %v2766
        %v2768 = vrot.slane %v2760, %v2767
        %v2770 = vunpack.c.l.s4 1966171168
        %v2771 = vunpack.c.0.s8 %v2770
        %v2772 = vlaneseq
        %v2773 = vshrl.u32 %v2772, 7
        %v2774 = vsub.s32 %v2771, %v2773
        %v2775 = vrot.slane %v2761, %v2774
        %v2776 = vcombine.low %v2768, %v2775
        %v2777 = vcombine.high %v2768, %v2775
        %v2779 = vunpack.c.l.s4 1966171168
        %v2780 = vunpack.c.0.s8 %v2779
        %v2781 = vlaneseq
        %v2782 = vshrl.u32 %v2781, 7
        %v2783 = vsub.s32 %v2780, %v2782
        %v2784 = vrot.slane %v2776, %v2783
        %v2786 = vunpack.c.l.s4 1966171168
        %v2787 = vunpack.c.0.s8 %v2786
        %v2788 = vlaneseq
        %v2789 = vshrl.u32 %v2788, 7
        %v2790 = vsub.s32 %v2787, %v2789
        %v2791 = vrot.slane %v2777, %v2790
        %v2792 = vcombine.low %v2791, %v2784
        %v2794 = vunpack.c.l.s4 1966171168
        %v2795 = vunpack.c.0.s8 %v2794
        %v2796 = vlaneseq
        %v2797 = vshrl.u32 %v2796, 7
        %v2798 = vsub.s32 %v2795, %v2797
        %v2799 = vrot.slane %v2792, %v2798
        %v2800 = vcombine.high %v2799, %v2799
        %v2802 = vunpack.c.l.s4 1966171168
        %v2803 = vunpack.c.0.s8 %v2802
        %v2804 = vlaneseq
        %v2805 = vshrl.u32 %v2804, 7
        %v2806 = vsub.s32 %v2803, %v2805
        %v2807 = vrot.slane %v2799, %v2806
        %v2809 = vunpack.c.l.s4 1966171168
        %v2810 = vunpack.c.0.s8 %v2809
        %v2811 = vlaneseq
        %v2812 = vshrl.u32 %v2811, 7
        %v2813 = vsub.s32 %v2810, %v2812
        %v2814 = vrot.slane %v2800, %v2813
        %v2815 = vcombine.high %v2807, %v2807
        %v2816 = vcombine.high %v2814, %v2814
        %v2821 = vadd.f32 %v2752, %v2807
        %v2822 = vadd.f32 %v2753, %v2814
        %v2823 = vadd.f32 %v2754, %v2815
        %v2824 = vadd.f32 %v2755, %v2816
        %v2825 = vmul.f32 %v2821, 0.0625
        %v2826 = vmul.f32 %v2822, 0.0625
        %v2827 = vmul.f32 %v2823, 0.0625
        %v2828 = vmul.f32 %v2824, 0.0625
        %2829 = vrot.lane.b32.xlu0 %v2547, 127
        %v2830 = vpop.permute.xlu0 %2829
        %2831 = vrot.lane.b32.xlu0 %v2554, 127
        %v2832 = vpop.permute.xlu0 %2831
        %v2833 = vsel %vm722, %v2830, %v2832
        %v2834 = vsel %vm722, %v2832, %v2830
        %2835 = vrot.lane.b32.xlu0 %v2547, 15
        %v2836 = vpop.permute.xlu0 %2835
        %2837 = vrot.lane.b32.xlu0 %v2554, 15
        %v2838 = vpop.permute.xlu0 %2837
        %v2839 = vsel %vm729, %v2836, %v2838
        %v2840 = vsel %vm729, %v2838, %v2836
        %v2841 = vsel %vm736, %v2833, %v2840
        %v2842 = vsel %vm737, %v2834, %v2839
        %v2845 = vcombine.low %v2841, %v2842
        %v2847 = vunpack.c.l.s4 1966171168
        %v2848 = vunpack.c.0.s8 %v2847
        %v2849 = vlaneseq
        %v2850 = vshrl.u32 %v2849, 7
        %v2851 = vsub.s32 %v2848, %v2850
        %v2852 = vrot.slane %v2845, %v2851
        %v2853 = vcombine.high %v2852, %v2852
        %v2855 = vunpack.c.l.s4 1966171168
        %v2856 = vunpack.c.0.s8 %v2855
        %v2857 = vlaneseq
        %v2858 = vshrl.u32 %v2857, 7
        %v2859 = vsub.s32 %v2856, %v2858
        %v2860 = vrot.slane %v2852, %v2859
        %v2862 = vunpack.c.l.s4 1966171168
        %v2863 = vunpack.c.0.s8 %v2862
        %v2864 = vlaneseq
        %v2865 = vshrl.u32 %v2864, 7
        %v2866 = vsub.s32 %v2863, %v2865
        %v2867 = vrot.slane %v2853, %v2866
        %v2868 = vcombine.high %v2860, %v2860
        %v2869 = vcombine.high %v2867, %v2867
        %v2874 = vadd.f32 %v2512, %v2860
        %v2875 = vadd.f32 %v2514, %v2867
        %v2876 = vadd.f32 %v2516, %v2868
        %v2877 = vadd.f32 %v2518, %v2869
        %v2882 = vcombine.low %v2874, %v2875
        %v2883 = vcombine.low %v2876, %v2877
        %v2885 = vunpack.c.l.s4 1966171168
        %v2886 = vunpack.c.0.s8 %v2885
        %v2887 = vlaneseq
        %v2888 = vshrl.u32 %v2887, 7
        %v2889 = vsub.s32 %v2886, %v2888
        %v2890 = vrot.slane %v2882, %v2889
        %v2892 = vunpack.c.l.s4 1966171168
        %v2893 = vunpack.c.0.s8 %v2892
        %v2894 = vlaneseq
        %v2895 = vshrl.u32 %v2894, 7
        %v2896 = vsub.s32 %v2893, %v2895
        %v2897 = vrot.slane %v2883, %v2896
        %v2898 = vcombine.low %v2890, %v2897
        %v2899 = vcombine.high %v2890, %v2897
        %v2901 = vunpack.c.l.s4 1966171168
        %v2902 = vunpack.c.0.s8 %v2901
        %v2903 = vlaneseq
        %v2904 = vshrl.u32 %v2903, 7
        %v2905 = vsub.s32 %v2902, %v2904
        %v2906 = vrot.slane %v2898, %v2905
        %v2908 = vunpack.c.l.s4 1966171168
        %v2909 = vunpack.c.0.s8 %v2908
        %v2910 = vlaneseq
        %v2911 = vshrl.u32 %v2910, 7
        %v2912 = vsub.s32 %v2909, %v2911
        %v2913 = vrot.slane %v2899, %v2912
        %2916 = vrot.lane.b32.xlu0 %v2906, 126
        %v2917 = vpop.permute.xlu0 %2916
        %2918 = vrot.lane.b32.xlu0 %v2913, 126
        %v2919 = vpop.permute.xlu0 %2918
        %v2920 = vsel %vm817, %v2917, %v2919
        %v2921 = vsel %vm817, %v2919, %v2917
        %2922 = vrot.lane.b32.xlu0 %v2906, 14
        %v2923 = vpop.permute.xlu0 %2922
        %2924 = vrot.lane.b32.xlu0 %v2913, 14
        %v2925 = vpop.permute.xlu0 %2924
        %v2926 = vsel %vm824, %v2923, %v2925
        %v2927 = vsel %vm824, %v2925, %v2923
        %v2928 = vsel %vm831, %v2920, %v2927
        %v2929 = vsel %vm832, %v2921, %v2926
        %v2932 = vcombine.low %v2928, %v2929
        %v2934 = vunpack.c.l.s4 1966171168
        %v2935 = vunpack.c.0.s8 %v2934
        %v2936 = vlaneseq
        %v2937 = vshrl.u32 %v2936, 7
        %v2938 = vsub.s32 %v2935, %v2937
        %v2939 = vrot.slane %v2932, %v2938
        %v2940 = vcombine.high %v2939, %v2939
        %v2942 = vunpack.c.l.s4 1966171168
        %v2943 = vunpack.c.0.s8 %v2942
        %v2944 = vlaneseq
        %v2945 = vshrl.u32 %v2944, 7
        %v2946 = vsub.s32 %v2943, %v2945
        %v2947 = vrot.slane %v2939, %v2946
        %v2949 = vunpack.c.l.s4 1966171168
        %v2950 = vunpack.c.0.s8 %v2949
        %v2951 = vlaneseq
        %v2952 = vshrl.u32 %v2951, 7
        %v2953 = vsub.s32 %v2950, %v2952
        %v2954 = vrot.slane %v2940, %v2953
        %v2955 = vcombine.high %v2947, %v2947
        %v2956 = vcombine.high %v2954, %v2954
        %v2961 = vadd.f32 %v2874, %v2947
        %v2962 = vadd.f32 %v2875, %v2954
        %v2963 = vadd.f32 %v2876, %v2955
        %v2964 = vadd.f32 %v2877, %v2956
        %v2969 = vcombine.low %v2961, %v2962
        %v2970 = vcombine.low %v2963, %v2964
        %v2972 = vunpack.c.l.s4 1966171168
        %v2973 = vunpack.c.0.s8 %v2972
        %v2974 = vlaneseq
        %v2975 = vshrl.u32 %v2974, 7
        %v2976 = vsub.s32 %v2973, %v2975
        %v2977 = vrot.slane %v2969, %v2976
        %v2979 = vunpack.c.l.s4 1966171168
        %v2980 = vunpack.c.0.s8 %v2979
        %v2981 = vlaneseq
        %v2982 = vshrl.u32 %v2981, 7
        %v2983 = vsub.s32 %v2980, %v2982
        %v2984 = vrot.slane %v2970, %v2983
        %v2985 = vcombine.low %v2977, %v2984
        %v2986 = vcombine.high %v2977, %v2984
        %v2988 = vunpack.c.l.s4 1966171168
        %v2989 = vunpack.c.0.s8 %v2988
        %v2990 = vlaneseq
        %v2991 = vshrl.u32 %v2990, 7
        %v2992 = vsub.s32 %v2989, %v2991
        %v2993 = vrot.slane %v2985, %v2992
        %v2995 = vunpack.c.l.s4 1966171168
        %v2996 = vunpack.c.0.s8 %v2995
        %v2997 = vlaneseq
        %v2998 = vshrl.u32 %v2997, 7
        %v2999 = vsub.s32 %v2996, %v2998
        %v3000 = vrot.slane %v2986, %v2999
        %3003 = vrot.lane.b32.xlu0 %v2993, 124
        %v3004 = vpop.permute.xlu0 %3003
        %3005 = vrot.lane.b32.xlu0 %v3000, 124
        %v3006 = vpop.permute.xlu0 %3005
        %v3007 = vsel %vm912, %v3004, %v3006
        %v3008 = vsel %vm912, %v3006, %v3004
        %3009 = vrot.lane.b32.xlu0 %v2993, 12
        %v3010 = vpop.permute.xlu0 %3009
        %3011 = vrot.lane.b32.xlu0 %v3000, 12
        %v3012 = vpop.permute.xlu0 %3011
        %v3013 = vsel %vm919, %v3010, %v3012
        %v3014 = vsel %vm919, %v3012, %v3010
        %v3015 = vsel %vm926, %v3007, %v3014
        %v3016 = vsel %vm927, %v3008, %v3013
        %v3019 = vcombine.low %v3015, %v3016
        %v3021 = vunpack.c.l.s4 1966171168
        %v3022 = vunpack.c.0.s8 %v3021
        %v3023 = vlaneseq
        %v3024 = vshrl.u32 %v3023, 7
        %v3025 = vsub.s32 %v3022, %v3024
        %v3026 = vrot.slane %v3019, %v3025
        %v3027 = vcombine.high %v3026, %v3026
        %v3029 = vunpack.c.l.s4 1966171168
        %v3030 = vunpack.c.0.s8 %v3029
        %v3031 = vlaneseq
        %v3032 = vshrl.u32 %v3031, 7
        %v3033 = vsub.s32 %v3030, %v3032
        %v3034 = vrot.slane %v3026, %v3033
        %v3036 = vunpack.c.l.s4 1966171168
        %v3037 = vunpack.c.0.s8 %v3036
        %v3038 = vlaneseq
        %v3039 = vshrl.u32 %v3038, 7
        %v3040 = vsub.s32 %v3037, %v3039
        %v3041 = vrot.slane %v3027, %v3040
        %v3042 = vcombine.high %v3034, %v3034
        %v3043 = vcombine.high %v3041, %v3041
        %v3048 = vadd.f32 %v2961, %v3034
        %v3049 = vadd.f32 %v2962, %v3041
        %v3050 = vadd.f32 %v2963, %v3042
        %v3051 = vadd.f32 %v2964, %v3043
        %v3056 = vcombine.low %v3048, %v3049
        %v3057 = vcombine.low %v3050, %v3051
        %v3059 = vunpack.c.l.s4 1966171168
        %v3060 = vunpack.c.0.s8 %v3059
        %v3061 = vlaneseq
        %v3062 = vshrl.u32 %v3061, 7
        %v3063 = vsub.s32 %v3060, %v3062
        %v3064 = vrot.slane %v3056, %v3063
        %v3066 = vunpack.c.l.s4 1966171168
        %v3067 = vunpack.c.0.s8 %v3066
        %v3068 = vlaneseq
        %v3069 = vshrl.u32 %v3068, 7
        %v3070 = vsub.s32 %v3067, %v3069
        %v3071 = vrot.slane %v3057, %v3070
        %v3072 = vcombine.low %v3064, %v3071
        %v3073 = vcombine.high %v3064, %v3071
        %v3075 = vunpack.c.l.s4 1966171168
        %v3076 = vunpack.c.0.s8 %v3075
        %v3077 = vlaneseq
        %v3078 = vshrl.u32 %v3077, 7
        %v3079 = vsub.s32 %v3076, %v3078
        %v3080 = vrot.slane %v3072, %v3079
        %v3082 = vunpack.c.l.s4 1966171168
        %v3083 = vunpack.c.0.s8 %v3082
        %v3084 = vlaneseq
        %v3085 = vshrl.u32 %v3084, 7
        %v3086 = vsub.s32 %v3083, %v3085
        %v3087 = vrot.slane %v3073, %v3086
        %3090 = vrot.lane.b32.xlu0 %v3080, 120
        %v3091 = vpop.permute.xlu0 %3090
        %3092 = vrot.lane.b32.xlu0 %v3087, 120
        %v3093 = vpop.permute.xlu0 %3092
        %v3094 = vsel %vm1007, %v3091, %v3093
        %v3095 = vsel %vm1007, %v3093, %v3091
        %3096 = vrot.lane.b32.xlu0 %v3080, 8
        %v3097 = vpop.permute.xlu0 %3096
        %3098 = vrot.lane.b32.xlu0 %v3087, 8
        %v3099 = vpop.permute.xlu0 %3098
        %v3100 = vsel %vm1014, %v3097, %v3099
        %v3101 = vsel %vm1014, %v3099, %v3097
        %v3102 = vsel %vm1021, %v3094, %v3101
        %v3103 = vsel %vm1022, %v3095, %v3100
        %v3106 = vcombine.low %v3102, %v3103
        %v3108 = vunpack.c.l.s4 1966171168
        %v3109 = vunpack.c.0.s8 %v3108
        %v3110 = vlaneseq
        %v3111 = vshrl.u32 %v3110, 7
        %v3112 = vsub.s32 %v3109, %v3111
        %v3113 = vrot.slane %v3106, %v3112
        %v3114 = vcombine.high %v3113, %v3113
        %v3116 = vunpack.c.l.s4 1966171168
        %v3117 = vunpack.c.0.s8 %v3116
        %v3118 = vlaneseq
        %v3119 = vshrl.u32 %v3118, 7
        %v3120 = vsub.s32 %v3117, %v3119
        %v3121 = vrot.slane %v3113, %v3120
        %v3123 = vunpack.c.l.s4 1966171168
        %v3124 = vunpack.c.0.s8 %v3123
        %v3125 = vlaneseq
        %v3126 = vshrl.u32 %v3125, 7
        %v3127 = vsub.s32 %v3124, %v3126
        %v3128 = vrot.slane %v3114, %v3127
        %v3129 = vcombine.high %v3121, %v3121
        %v3130 = vcombine.high %v3128, %v3128
        %v3135 = vadd.f32 %v3048, %v3121
        %v3136 = vadd.f32 %v3049, %v3128
        %v3137 = vadd.f32 %v3050, %v3129
        %v3138 = vadd.f32 %v3051, %v3130
        %v3139 = vmul.f32 %v3135, 0.0625
        %v3140 = vmul.f32 %v3136, 0.0625
        %v3141 = vmul.f32 %v3137, 0.0625
        %v3142 = vmul.f32 %v3138, 0.0625
        %3143 = vrot.lane.b32.xlu0 %v2547, 17
        %v3144 = vpop.permute.xlu0 %3143
        %3145 = vrot.lane.b32.xlu0 %v2554, 17
        %v3146 = vpop.permute.xlu0 %3145
        %v3147 = vsel %vm1068, %v3144, %v3146
        %v3148 = vsel %vm1068, %v3146, %v3144
        %v3149 = vsel %vm1075, %v3148, 0.0
        %v3150 = vsel %vm1076, %v3147, 0.0
        %3151 = vrot.lane.b32.xlu0 %v2547, 16
        %v3152 = vpop.permute.xlu0 %3151
        %3153 = vrot.lane.b32.xlu0 %v2554, 16
        %v3154 = vpop.permute.xlu0 %3153
        %v3155 = vsel %vm1083, %v3152, %v3154
        %v3156 = vsel %vm1083, %v3154, %v3152
        %v3157 = vsel %vm1088, %v3156, 0.0
        %v3158 = vsel %vm1089, %v3155, 0.0
        %v3159 = vsel %vm1096, %v2840, 0.0
        %v3160 = vsel %vm1097, %v2839, 0.0
        %3161 = vrot.lane.b32.xlu0 %v2547, 1
        %v3162 = vpop.permute.xlu0 %3161
        %3163 = vrot.lane.b32.xlu0 %v2554, 1
        %v3164 = vpop.permute.xlu0 %3163
        %v3165 = vsel %vm1104, %v3162, %v3164
        %v3166 = vsel %vm1104, %v3164, %v3162
        %v3167 = vsel %vm1109, %v3166, 0.0
        %v3168 = vsel %vm1110, %v3165, 0.0
        %v3169 = vsel %vm1115, %v2833, 0.0
        %v3170 = vsel %vm1116, %v2834, 0.0
        %3171 = vrot.lane.b32.xlu0 %v2547, 113
        %v3172 = vpop.permute.xlu0 %3171
        %3173 = vrot.lane.b32.xlu0 %v2554, 113
        %v3174 = vpop.permute.xlu0 %3173
        %v3175 = vsel %vm1123, %v3172, %v3174
        %v3176 = vsel %vm1123, %v3174, %v3172
        %v3177 = vsel %vm1130, %v3175, 0.0
        %v3178 = vsel %vm1131, %v3176, 0.0
        %v3179 = vsel %vm1136, %v2561, 0.0
        %v3180 = vsel %vm1137, %v2562, 0.0
        %3181 = vrot.lane.b32.xlu0 %v2547, 111
        %v3182 = vpop.permute.xlu0 %3181
        %3183 = vrot.lane.b32.xlu0 %v2554, 111
        %v3184 = vpop.permute.xlu0 %3183
        %v3185 = vsel %vm1144, %v3182, %v3184
        %v3186 = vsel %vm1144, %v3184, %v3182
        %v3187 = vsel %vm1151, %v3185, 0.0
        %v3188 = vsel %vm1152, %v3186, 0.0
        %s3189 = sld [smem:[#allocation9]]
        %v3190 = vstv %s3189
        %v3191 = vmul.f32 %v3190, %v1060
        %v3192 = vmul.f32 %v3190, %v1061
        %v3193 = vmul.f32 %v3190, %v1062
        %v3194 = vmul.f32 %v3190, %v1063
        %s3195 = sld [smem:[#allocation9 + $0x1]]
        %v3196 = vstv %s3195
        %v3197 = vmul.f32 %v3196, %v1783
        %v3198 = vmul.f32 %v3196, %v1784
        %v3199 = vmul.f32 %v3196, %v1785
        %v3200 = vmul.f32 %v3196, %v1786
        %s3201 = sld [smem:[#allocation9 + $0x2]]
        %v3202 = vstv %s3201
        %v3203 = vmul.f32 %v3202, %v2461
        %v3204 = vmul.f32 %v3202, %v2462
        %v3205 = vmul.f32 %v3202, %v2463
        %v3206 = vmul.f32 %v3202, %v2464
        %s3207 = sld [smem:[#allocation9 + $0x3]]
        %v3208 = vstv %s3207
        %v3209 = vmul.f32 %v3208, %v3139
        %v3210 = vmul.f32 %v3208, %v3140
        %v3211 = vmul.f32 %v3208, %v3141
        %v3212 = vmul.f32 %v3208, %v3142
        %v3213 = vadd.f32 %v3191, %v3197
        %v3214 = vadd.f32 %v3192, %v3198
        %v3215 = vadd.f32 %v3193, %v3199
        %v3216 = vadd.f32 %v3194, %v3200
        %v3217 = vadd.f32 %v3203, %v3209
        %v3218 = vadd.f32 %v3204, %v3210
        %v3219 = vadd.f32 %v3205, %v3211
        %v3220 = vadd.f32 %v3206, %v3212
        %v3221 = vadd.f32 %v3213, %v3217
        %v3222 = vadd.f32 %v3214, %v3218
        %v3223 = vadd.f32 %v3215, %v3219
        %v3224 = vadd.f32 %v3216, %v3220
        %v3225 = vmul.f32 %v3190, %v714
        %v3226 = vmul.f32 %v3190, %v715
        %v3227 = vmul.f32 %v3190, %v716
        %v3228 = vmul.f32 %v3190, %v717
        %v3229 = vmul.f32 %v3196, %v1469
        %v3230 = vmul.f32 %v3196, %v1470
        %v3231 = vmul.f32 %v3196, %v1471
        %v3232 = vmul.f32 %v3196, %v1472
        %v3233 = vmul.f32 %v3202, %v2147
        %v3234 = vmul.f32 %v3202, %v2148
        %v3235 = vmul.f32 %v3202, %v2149
        %v3236 = vmul.f32 %v3202, %v2150
        %v3237 = vmul.f32 %v3208, %v2825
        %v3238 = vmul.f32 %v3208, %v2826
        %v3239 = vmul.f32 %v3208, %v2827
        %v3240 = vmul.f32 %v3208, %v2828
        %v3241 = vadd.f32 %v3225, %v3229
        %v3242 = vadd.f32 %v3226, %v3230
        %v3243 = vadd.f32 %v3227, %v3231
        %v3244 = vadd.f32 %v3228, %v3232
        %v3245 = vadd.f32 %v3233, %v3237
        %v3246 = vadd.f32 %v3234, %v3238
        %v3247 = vadd.f32 %v3235, %v3239
        %v3248 = vadd.f32 %v3236, %v3240
        %v3249 = vadd.f32 %v3241, %v3245
        %v3250 = vadd.f32 %v3242, %v3246
        %v3251 = vadd.f32 %v3243, %v3247
        %v3252 = vadd.f32 %v3244, %v3248
        %s3253 = sld [smem:[#allocation10]]
        %v3254 = vstv %s3253
        %v3255 = vadd.f32 %v3221, %v3254
        %v3256 = vadd.f32 %v3222, %v3254
        %v3257 = vadd.f32 %v3223, %v3254
        %v3258 = vadd.f32 %v3224, %v3254
        %v3259 = vxor.u32 %v3255, 2147483648
        %v3260 = vxor.u32 %v3256, 2147483648
        %v3261 = vxor.u32 %v3257, 2147483648
        %v3262 = vxor.u32 %v3258, 2147483648
        %v3263 = vmul.f32 %v3259, 1.442695
        %v3264 = vpow.pop %v3263
        %v3265 = vmul.f32 %v3260, 1.442695
        %v3266 = vpow.pop %v3265
        %v3267 = vmul.f32 %v3261, 1.442695
        %v3268 = vpow.pop %v3267
        %v3269 = vmul.f32 %v3262, 1.442695
        %v3270 = vpow.pop %v3269
        %v3271 = vadd.f32 %v3264, 1.0
        %v3272 = vadd.f32 %v3266, 1.0
        %v3273 = vadd.f32 %v3268, 1.0
        %v3274 = vadd.f32 %v3270, 1.0
        %v3275 = vrcp.pop %v3271
        %v3276 = vmul.f32 1.0, %v3275
        %v3277 = vrcp.pop %v3272
        %v3278 = vmul.f32 1.0, %v3277
        %v3279 = vrcp.pop %v3273
        %v3280 = vmul.f32 1.0, %v3279
        %v3281 = vrcp.pop %v3274
        %v3282 = vmul.f32 1.0, %v3281
        %v3283 = vadd.f32 %v3249, %v3254
        %v3284 = vadd.f32 %v3250, %v3254
        %v3285 = vadd.f32 %v3251, %v3254
        %v3286 = vadd.f32 %v3252, %v3254
        %v3287 = vxor.u32 %v3283, 2147483648
        %v3288 = vxor.u32 %v3284, 2147483648
        %v3289 = vxor.u32 %v3285, 2147483648
        %v3290 = vxor.u32 %v3286, 2147483648
        %v3291 = vmul.f32 %v3287, 1.442695
        %v3292 = vpow.pop %v3291
        %v3293 = vmul.f32 %v3288, 1.442695
        %v3294 = vpow.pop %v3293
        %v3295 = vmul.f32 %v3289, 1.442695
        %v3296 = vpow.pop %v3295
        %v3297 = vmul.f32 %v3290, 1.442695
        %v3298 = vpow.pop %v3297
        %v3299 = vadd.f32 %v3292, 1.0
        %v3300 = vadd.f32 %v3294, 1.0
        %v3301 = vadd.f32 %v3296, 1.0
        %v3302 = vadd.f32 %v3298, 1.0
        %v3303 = vrcp.pop %v3299
        %v3304 = vmul.f32 1.0, %v3303
        %v3305 = vrcp.pop %v3300
        %v3306 = vmul.f32 1.0, %v3305
        %v3307 = vrcp.pop %v3301
        %v3308 = vmul.f32 1.0, %v3307
        %v3309 = vrcp.pop %v3302
        %v3310 = vmul.f32 1.0, %v3309
        %v3311 = vmul.f32 %v3276, %v3304
        %v3312 = vmul.f32 %v3278, %v3306
        %v3313 = vmul.f32 %v3280, %v3308
        %v3314 = vmul.f32 %v3282, %v3310
        %v3315 = vmul.f32 %v398, %v3311
        %v3316 = vmul.f32 %v400, %v3312
        %v3317 = vmul.f32 %v402, %v3313
        %v3318 = vmul.f32 %v404, %v3314
        %v3323 = vcombine.low %v3315, %v3316
        %v3324 = vcombine.low %v3317, %v3318
        %v3326 = vunpack.c.l.s4 1966171168
        %v3327 = vunpack.c.0.s8 %v3326
        %v3328 = vlaneseq
        %v3329 = vshrl.u32 %v3328, 7
        %v3330 = vsub.s32 %v3327, %v3329
        %v3331 = vrot.slane %v3323, %v3330
        %v3333 = vunpack.c.l.s4 1966171168
        %v3334 = vunpack.c.0.s8 %v3333
        %v3335 = vlaneseq
        %v3336 = vshrl.u32 %v3335, 7
        %v3337 = vsub.s32 %v3334, %v3336
        %v3338 = vrot.slane %v3324, %v3337
        %v3339 = vcombine.low %v3331, %v3338
        %v3340 = vcombine.high %v3331, %v3338
        %v3342 = vunpack.c.l.s4 1966171168
        %v3343 = vunpack.c.0.s8 %v3342
        %v3344 = vlaneseq
        %v3345 = vshrl.u32 %v3344, 7
        %v3346 = vsub.s32 %v3343, %v3345
        %v3347 = vrot.slane %v3339, %v3346
        %v3349 = vunpack.c.l.s4 1966171168
        %v3350 = vunpack.c.0.s8 %v3349
        %v3351 = vlaneseq
        %v3352 = vshrl.u32 %v3351, 7
        %v3353 = vsub.s32 %v3350, %v3352
        %v3354 = vrot.slane %v3340, %v3353
        %vm3357 = vcmask 1043456
        %v3358 = vsel %vm3357, %v3347, 0.0
        %v3359 = vsel %vm3357, %v3354, 0.0
        %v3360 = vadd.f32 %v3358, %v3359
        %3361 = vadd.xlane.f32.xlu0 %v3360
        %v3362 = vpop.xlane.xlu0 %3361
        %v3363 = vmul.f32 %v3362, 0.00390625
        %v3364 = vmul.f32 %v3315, %v3315
        %v3365 = vmul.f32 %v3316, %v3316
        %v3366 = vmul.f32 %v3317, %v3317
        %v3367 = vmul.f32 %v3318, %v3318
        %v3372 = vcombine.low %v3364, %v3365
        %v3373 = vcombine.low %v3366, %v3367
        %v3375 = vunpack.c.l.s4 1966171168
        %v3376 = vunpack.c.0.s8 %v3375
        %v3377 = vlaneseq
        %v3378 = vshrl.u32 %v3377, 7
        %v3379 = vsub.s32 %v3376, %v3378
        %v3380 = vrot.slane %v3372, %v3379
        %v3382 = vunpack.c.l.s4 1966171168
        %v3383 = vunpack.c.0.s8 %v3382
        %v3384 = vlaneseq
        %v3385 = vshrl.u32 %v3384, 7
        %v3386 = vsub.s32 %v3383, %v3385
        %v3387 = vrot.slane %v3373, %v3386
        %v3388 = vcombine.low %v3380, %v3387
        %v3389 = vcombine.high %v3380, %v3387
        %v3391 = vunpack.c.l.s4 1966171168
        %v3392 = vunpack.c.0.s8 %v3391
        %v3393 = vlaneseq
        %v3394 = vshrl.u32 %v3393, 7
        %v3395 = vsub.s32 %v3392, %v3394
        %v3396 = vrot.slane %v3388, %v3395
        %v3398 = vunpack.c.l.s4 1966171168
        %v3399 = vunpack.c.0.s8 %v3398
        %v3400 = vlaneseq
        %v3401 = vshrl.u32 %v3400, 7
        %v3402 = vsub.s32 %v3399, %v3401
        %v3403 = vrot.slane %v3389, %v3402
        %v3406 = vsel %vm3357, %v3396, 0.0
        %v3407 = vsel %vm3357, %v3403, 0.0
        %v3408 = vadd.f32 %v3406, %v3407
        %3409 = vadd.xlane.f32.xlu0 %v3408
        %v3410 = vpop.xlane.xlu0 %3409
        %v3411 = vmul.f32 %v3410, 0.00390625
        %v3412 = vmul.f32 %v3363, %v3363
        %v3413 = vsub.f32 %v3411, %v3412
        %v3414 = vmax.f32 %v3413, 0.0
        %v3416 = vlaneseq
        %v3417 = vshrl.u32 %v3416, 7
        %v3418 = vsub.s32 0, %v3417
        %v3419 = vrot.slane %v3363, %v3418
        %v3420 = vlaneseq
        %v3421 = vshrl.u32 %v3420, 7
        %v3422 = vsub.s32 1, %v3421
        %v3423 = vrot.slane %v3363, %v3422
        %v3424 = vlaneseq
        %v3425 = vshrl.u32 %v3424, 7
        %v3426 = vsub.s32 2, %v3425
        %v3427 = vrot.slane %v3363, %v3426
        %v3428 = vlaneseq
        %v3429 = vshrl.u32 %v3428, 7
        %v3430 = vsub.s32 3, %v3429
        %v3431 = vrot.slane %v3363, %v3430
        %v3436 = vsub.f32 %v3315, %v3419
        %v3437 = vsub.f32 %v3316, %v3423
        %v3438 = vsub.f32 %v3317, %v3427
        %v3439 = vsub.f32 %v3318, %v3431
        %v3440 = vadd.f32 %v3414, 1e-05
        %v3441 = vrsqrt.pop %v3440
        %v3443 = vlaneseq
        %v3444 = vshrl.u32 %v3443, 7
        %v3445 = vsub.s32 0, %v3444
        %v3446 = vrot.slane %v3441, %v3445
        %v3447 = vlaneseq
        %v3448 = vshrl.u32 %v3447, 7
        %v3449 = vsub.s32 1, %v3448
        %v3450 = vrot.slane %v3441, %v3449
        %v3451 = vlaneseq
        %v3452 = vshrl.u32 %v3451, 7
        %v3453 = vsub.s32 2, %v3452
        %v3454 = vrot.slane %v3441, %v3453
        %v3455 = vlaneseq
        %v3456 = vshrl.u32 %v3455, 7
        %v3457 = vsub.s32 3, %v3456
        %v3458 = vrot.slane %v3441, %v3457
        %v3463 = vmul.f32 %v3436, %v3446
        %v3464 = vmul.f32 %v3437, %v3450
        %v3465 = vmul.f32 %v3438, %v3454
        %v3466 = vmul.f32 %v3439, %v3458
        %s3467 = sld [smem:[#allocation14]]
        %v3468 = vstv %s3467
        %v3469 = vmul.f32 %v3463, %v3468
        %v3470 = vmul.f32 %v3464, %v3468
        %v3471 = vmul.f32 %v3465, %v3468
        %v3472 = vmul.f32 %v3466, %v3468
        %s3473 = sld [smem:[#allocation16]]
        %v3474 = vstv %s3473
        %v3475 = vadd.f32 %v3469, %v3474
        %v3476 = vadd.f32 %v3470, %v3474
        %v3477 = vadd.f32 %v3471, %v3474
        %v3478 = vadd.f32 %v3472, %v3474
        %v3483 = vcombine.low %v3475, %v3477
        %v3484 = vcombine.low %v3476, %v3478
        %v3486 = vunpack.c.l.s4 1935823168
        %v3487 = vunpack.c.0.s8 %v3486
        %v3488 = vlaneseq
        %v3489 = vshrl.u32 %v3488, 7
        %v3490 = vsub.s32 %v3487, %v3489
        %v3491 = vrot.slane %v3483, %v3490
        %v3493 = vunpack.c.l.s4 1935823168
        %v3494 = vunpack.c.0.s8 %v3493
        %v3495 = vlaneseq
        %v3496 = vshrl.u32 %v3495, 7
        %v3497 = vsub.s32 %v3494, %v3496
        %v3498 = vrot.slane %v3484, %v3497
        %v3499 = vcombine.low %v3491, %v3498
        %v3501 = vunpack.c.l.s4 1935823168
        %v3502 = vunpack.c.0.s8 %v3501
        %v3503 = vlaneseq
        %v3504 = vshrl.u32 %v3503, 7
        %v3505 = vsub.s32 %v3502, %v3504
        %v3506 = vrot.slane %v3499, %v3505
        %3508 = vst [vmem:[#allocation2] sm:$0xff] %v3506
        %v3509 = vcombine.low %v3475, %v3476
        %v3510 = vcombine.low %v3477, %v3478
        %v3512 = vunpack.c.l.s4 1966171168
        %v3513 = vunpack.c.0.s8 %v3512
        %v3514 = vlaneseq
        %v3515 = vshrl.u32 %v3514, 7
        %v3516 = vsub.s32 %v3513, %v3515
        %v3517 = vrot.slane %v3509, %v3516
        %v3519 = vunpack.c.l.s4 1966171168
        %v3520 = vunpack.c.0.s8 %v3519
        %v3521 = vlaneseq
        %v3522 = vshrl.u32 %v3521, 7
        %v3523 = vsub.s32 %v3520, %v3522
        %v3524 = vrot.slane %v3510, %v3523
        %v3525 = vcombine.low %v3517, %v3524
        %v3526 = vcombine.high %v3517, %v3524
        %v3528 = vunpack.c.l.s4 1966171168
        %v3529 = vunpack.c.0.s8 %v3528
        %v3530 = vlaneseq
        %v3531 = vshrl.u32 %v3530, 7
        %v3532 = vsub.s32 %v3529, %v3531
        %v3533 = vrot.slane %v3525, %v3532
        %v3535 = vunpack.c.l.s4 1966171168
        %v3536 = vunpack.c.0.s8 %v3535
        %v3537 = vlaneseq
        %v3538 = vshrl.u32 %v3537, 7
        %v3539 = vsub.s32 %v3536, %v3538
        %v3540 = vrot.slane %v3526, %v3539
        %v3543 = vsel %vm3357, %v3533, 0.0
        %v3544 = vsel %vm3357, %v3540, 0.0
        %v3545 = vadd.f32 %v3543, %v3544
        %3546 = vadd.xlane.f32.xlu0 %v3545
        %v3547 = vpop.xlane.xlu0 %3546
        %v3548 = vmul.f32 %v3547, 0.00390625
        %s3549 = sld [smem:[#allocation11]]
        %v3550 = vstv %s3549
        %v3551 = vmul.f32 %v3550, %v1077
        %v3552 = vmul.f32 %v3550, %v1078
        %s3553 = sld [smem:[#allocation11 + $0x1]]
        %v3554 = vstv %s3553
        %v3555 = vmul.f32 %v3554, %v1090
        %v3556 = vmul.f32 %v3554, %v1091
        %s3557 = sld [smem:[#allocation11 + $0x2]]
        %v3558 = vstv %s3557
        %v3559 = vmul.f32 %v3558, %v1098
        %v3560 = vmul.f32 %v3558, %v1099
        %s3561 = sld [smem:[#allocation11 + $0x3]]
        %v3562 = vstv %s3561
        %v3563 = vmul.f32 %v3562, %v1111
        %v3564 = vmul.f32 %v3562, %v1112
        %s3565 = sld [smem:[#allocation11 + $0x4]]
        %v3566 = vstv %s3565
        %v3567 = vmul.f32 %v3566, %v398
        %v3568 = vmul.f32 %v3566, %v400
        %v3569 = vmul.f32 %v3566, %v402
        %v3570 = vmul.f32 %v3566, %v404
        %s3571 = sld [smem:[#allocation11 + $0x5]]
        %v3572 = vstv %s3571
        %v3573 = vmul.f32 %v3572, %v1117
        %v3574 = vmul.f32 %v3572, %v1118
        %s3575 = sld [smem:[#allocation11 + $0x6]]
        %v3576 = vstv %s3575
        %v3577 = vmul.f32 %v3576, %v1132
        %v3578 = vmul.f32 %v3576, %v1133
        %s3579 = sld [smem:[#allocation11 + $0x7]]
        %v3580 = vstv %s3579
        %v3581 = vmul.f32 %v3580, %v1138
        %v3582 = vmul.f32 %v3580, %v1139
        %s3583 = sld [smem:[#allocation11 + $0x8]]
        %v3584 = vstv %s3583
        %v3585 = vmul.f32 %v3584, %v1153
        %v3586 = vmul.f32 %v3584, %v1154
        %v3587 = vadd.f32 %v3551, %v3555
        %v3588 = vadd.f32 %v3552, %v3556
        %v3589 = vadd.f32 %v3559, %v3563
        %v3590 = vadd.f32 %v3560, %v3564
        %v3593 = vcombine.low %v3573, %v3574
        %v3595 = vunpack.c.l.s4 1966171168
        %v3596 = vunpack.c.0.s8 %v3595
        %v3597 = vlaneseq
        %v3598 = vshrl.u32 %v3597, 7
        %v3599 = vsub.s32 %v3596, %v3598
        %v3600 = vrot.slane %v3593, %v3599
        %v3601 = vcombine.high %v3600, %v3600
        %v3603 = vunpack.c.l.s4 1966171168
        %v3604 = vunpack.c.0.s8 %v3603
        %v3605 = vlaneseq
        %v3606 = vshrl.u32 %v3605, 7
        %v3607 = vsub.s32 %v3604, %v3606
        %v3608 = vrot.slane %v3600, %v3607
        %v3610 = vunpack.c.l.s4 1966171168
        %v3611 = vunpack.c.0.s8 %v3610
        %v3612 = vlaneseq
        %v3613 = vshrl.u32 %v3612, 7
        %v3614 = vsub.s32 %v3611, %v3613
        %v3615 = vrot.slane %v3601, %v3614
        %v3616 = vcombine.high %v3608, %v3608
        %v3617 = vcombine.high %v3615, %v3615
        %v3622 = vadd.f32 %v3567, %v3608
        %v3623 = vadd.f32 %v3568, %v3615
        %v3624 = vadd.f32 %v3569, %v3616
        %v3625 = vadd.f32 %v3570, %v3617
        %v3626 = vadd.f32 %v3577, %v3581
        %v3627 = vadd.f32 %v3578, %v3582
        %v3628 = vadd.f32 %v3587, %v3589
        %v3629 = vadd.f32 %v3588, %v3590
        %v3632 = vcombine.low %v3626, %v3627
        %v3634 = vunpack.c.l.s4 1966171168
        %v3635 = vunpack.c.0.s8 %v3634
        %v3636 = vlaneseq
        %v3637 = vshrl.u32 %v3636, 7
        %v3638 = vsub.s32 %v3635, %v3637
        %v3639 = vrot.slane %v3632, %v3638
        %v3640 = vcombine.high %v3639, %v3639
        %v3642 = vunpack.c.l.s4 1966171168
        %v3643 = vunpack.c.0.s8 %v3642
        %v3644 = vlaneseq
        %v3645 = vshrl.u32 %v3644, 7
        %v3646 = vsub.s32 %v3643, %v3645
        %v3647 = vrot.slane %v3639, %v3646
        %v3649 = vunpack.c.l.s4 1966171168
        %v3650 = vunpack.c.0.s8 %v3649
        %v3651 = vlaneseq
        %v3652 = vshrl.u32 %v3651, 7
        %v3653 = vsub.s32 %v3650, %v3652
        %v3654 = vrot.slane %v3640, %v3653
        %v3655 = vcombine.high %v3647, %v3647
        %v3656 = vcombine.high %v3654, %v3654
        %v3661 = vadd.f32 %v3622, %v3647
        %v3662 = vadd.f32 %v3623, %v3654
        %v3663 = vadd.f32 %v3624, %v3655
        %v3664 = vadd.f32 %v3625, %v3656
        %v3669 = vcombine.low %v3661, %v3662
        %v3670 = vcombine.low %v3663, %v3664
        %v3672 = vunpack.c.l.s4 1966171168
        %v3673 = vunpack.c.0.s8 %v3672
        %v3674 = vlaneseq
        %v3675 = vshrl.u32 %v3674, 7
        %v3676 = vsub.s32 %v3673, %v3675
        %v3677 = vrot.slane %v3669, %v3676
        %v3679 = vunpack.c.l.s4 1966171168
        %v3680 = vunpack.c.0.s8 %v3679
        %v3681 = vlaneseq
        %v3682 = vshrl.u32 %v3681, 7
        %v3683 = vsub.s32 %v3680, %v3682
        %v3684 = vrot.slane %v3670, %v3683
        %v3685 = vcombine.low %v3677, %v3684
        %v3686 = vcombine.high %v3677, %v3684
        %v3688 = vunpack.c.l.s4 1966171168
        %v3689 = vunpack.c.0.s8 %v3688
        %v3690 = vlaneseq
        %v3691 = vshrl.u32 %v3690, 7
        %v3692 = vsub.s32 %v3689, %v3691
        %v3693 = vrot.slane %v3685, %v3692
        %v3695 = vunpack.c.l.s4 1966171168
        %v3696 = vunpack.c.0.s8 %v3695
        %v3697 = vlaneseq
        %v3698 = vshrl.u32 %v3697, 7
        %v3699 = vsub.s32 %v3696, %v3698
        %v3700 = vrot.slane %v3686, %v3699
        %v3703 = vadd.f32 %v3628, %v3693
        %v3704 = vadd.f32 %v3629, %v3700
        %v3705 = vadd.f32 %v3703, %v3585
        %v3706 = vadd.f32 %v3704, %v3586
        %s3707 = sld [smem:[#allocation11 + $0x9]]
        %v3708 = vstv %s3707
        %v3709 = vmul.f32 %v3708, %v1793
        %v3710 = vmul.f32 %v3708, %v1794
        %s3711 = sld [smem:[#allocation11 + $0xa]]
        %v3712 = vstv %s3711
        %v3713 = vmul.f32 %v3712, %v1801
        %v3714 = vmul.f32 %v3712, %v1802
        %s3715 = sld [smem:[#allocation11 + $0xb]]
        %v3716 = vstv %s3715
        %v3717 = vmul.f32 %v3716, %v1803
        %v3718 = vmul.f32 %v3716, %v1804
        %s3719 = sld [smem:[#allocation11 + $0xc]]
        %v3720 = vstv %s3719
        %v3721 = vmul.f32 %v3720, %v1811
        %v3722 = vmul.f32 %v3720, %v1812
        %s3723 = sld [smem:[#allocation11 + $0xd]]
        %v3724 = vstv %s3723
        %v3725 = vmul.f32 %v3724, %v1156
        %v3726 = vmul.f32 %v3724, %v1158
        %v3727 = vmul.f32 %v3724, %v1160
        %v3728 = vmul.f32 %v3724, %v1162
        %s3729 = sld [smem:[#allocation11 + $0xe]]
        %v3730 = vstv %s3729
        %v3731 = vmul.f32 %v3730, %v1813
        %v3732 = vmul.f32 %v3730, %v1814
        %s3733 = sld [smem:[#allocation11 + $0xf]]
        %v3734 = vstv %s3733
        %v3735 = vmul.f32 %v3734, %v1821
        %v3736 = vmul.f32 %v3734, %v1822
        %s3737 = sld [smem:[#allocation11 + $0x10]]
        %v3738 = vstv %s3737
        %v3739 = vmul.f32 %v3738, %v1823
        %v3740 = vmul.f32 %v3738, %v1824
        %s3741 = sld [smem:[#allocation11 + $0x11]]
        %v3742 = vstv %s3741
        %v3743 = vmul.f32 %v3742, %v1831
        %v3744 = vmul.f32 %v3742, %v1832
        %v3745 = vadd.f32 %v3709, %v3713
        %v3746 = vadd.f32 %v3710, %v3714
        %v3747 = vadd.f32 %v3717, %v3721
        %v3748 = vadd.f32 %v3718, %v3722
        %v3751 = vcombine.low %v3731, %v3732
        %v3753 = vunpack.c.l.s4 1966171168
        %v3754 = vunpack.c.0.s8 %v3753
        %v3755 = vlaneseq
        %v3756 = vshrl.u32 %v3755, 7
        %v3757 = vsub.s32 %v3754, %v3756
        %v3758 = vrot.slane %v3751, %v3757
        %v3759 = vcombine.high %v3758, %v3758
        %v3761 = vunpack.c.l.s4 1966171168
        %v3762 = vunpack.c.0.s8 %v3761
        %v3763 = vlaneseq
        %v3764 = vshrl.u32 %v3763, 7
        %v3765 = vsub.s32 %v3762, %v3764
        %v3766 = vrot.slane %v3758, %v3765
        %v3768 = vunpack.c.l.s4 1966171168
        %v3769 = vunpack.c.0.s8 %v3768
        %v3770 = vlaneseq
        %v3771 = vshrl.u32 %v3770, 7
        %v3772 = vsub.s32 %v3769, %v3771
        %v3773 = vrot.slane %v3759, %v3772
        %v3774 = vcombine.high %v3766, %v3766
        %v3775 = vcombine.high %v3773, %v3773
        %v3780 = vadd.f32 %v3725, %v3766
        %v3781 = vadd.f32 %v3726, %v3773
        %v3782 = vadd.f32 %v3727, %v3774
        %v3783 = vadd.f32 %v3728, %v3775
        %v3784 = vadd.f32 %v3735, %v3739
        %v3785 = vadd.f32 %v3736, %v3740
        %v3786 = vadd.f32 %v3745, %v3747
        %v3787 = vadd.f32 %v3746, %v3748
        %v3790 = vcombine.low %v3784, %v3785
        %v3792 = vunpack.c.l.s4 1966171168
        %v3793 = vunpack.c.0.s8 %v3792
        %v3794 = vlaneseq
        %v3795 = vshrl.u32 %v3794, 7
        %v3796 = vsub.s32 %v3793, %v3795
        %v3797 = vrot.slane %v3790, %v3796
        %v3798 = vcombine.high %v3797, %v3797
        %v3800 = vunpack.c.l.s4 1966171168
        %v3801 = vunpack.c.0.s8 %v3800
        %v3802 = vlaneseq
        %v3803 = vshrl.u32 %v3802, 7
        %v3804 = vsub.s32 %v3801, %v3803
        %v3805 = vrot.slane %v3797, %v3804
        %v3807 = vunpack.c.l.s4 1966171168
        %v3808 = vunpack.c.0.s8 %v3807
        %v3809 = vlaneseq
        %v3810 = vshrl.u32 %v3809, 7
        %v3811 = vsub.s32 %v3808, %v3810
        %v3812 = vrot.slane %v3798, %v3811
        %v3813 = vcombine.high %v3805, %v3805
        %v3814 = vcombine.high %v3812, %v3812
        %v3819 = vadd.f32 %v3780, %v3805
        %v3820 = vadd.f32 %v3781, %v3812
        %v3821 = vadd.f32 %v3782, %v3813
        %v3822 = vadd.f32 %v3783, %v3814
        %v3827 = vcombine.low %v3819, %v3820
        %v3828 = vcombine.low %v3821, %v3822
        %v3830 = vunpack.c.l.s4 1966171168
        %v3831 = vunpack.c.0.s8 %v3830
        %v3832 = vlaneseq
        %v3833 = vshrl.u32 %v3832, 7
        %v3834 = vsub.s32 %v3831, %v3833
        %v3835 = vrot.slane %v3827, %v3834
        %v3837 = vunpack.c.l.s4 1966171168
        %v3838 = vunpack.c.0.s8 %v3837
        %v3839 = vlaneseq
        %v3840 = vshrl.u32 %v3839, 7
        %v3841 = vsub.s32 %v3838, %v3840
        %v3842 = vrot.slane %v3828, %v3841
        %v3843 = vcombine.low %v3835, %v3842
        %v3844 = vcombine.high %v3835, %v3842
        %v3846 = vunpack.c.l.s4 1966171168
        %v3847 = vunpack.c.0.s8 %v3846
        %v3848 = vlaneseq
        %v3849 = vshrl.u32 %v3848, 7
        %v3850 = vsub.s32 %v3847, %v3849
        %v3851 = vrot.slane %v3843, %v3850
        %v3853 = vunpack.c.l.s4 1966171168
        %v3854 = vunpack.c.0.s8 %v3853
        %v3855 = vlaneseq
        %v3856 = vshrl.u32 %v3855, 7
        %v3857 = vsub.s32 %v3854, %v3856
        %v3858 = vrot.slane %v3844, %v3857
        %v3861 = vadd.f32 %v3786, %v3851
        %v3862 = vadd.f32 %v3787, %v3858
        %v3863 = vadd.f32 %v3861, %v3743
        %v3864 = vadd.f32 %v3862, %v3744
        %s3865 = sld [smem:[#allocation11 + $0x12]]
        %v3866 = vstv %s3865
        %v3867 = vmul.f32 %v3866, %v2471
        %v3868 = vmul.f32 %v3866, %v2472
        %s3869 = sld [smem:[#allocation11 + $0x13]]
        %v3870 = vstv %s3869
        %v3871 = vmul.f32 %v3870, %v2479
        %v3872 = vmul.f32 %v3870, %v2480
        %s3873 = sld [smem:[#allocation11 + $0x14]]
        %v3874 = vstv %s3873
        %v3875 = vmul.f32 %v3874, %v2481
        %v3876 = vmul.f32 %v3874, %v2482
        %s3877 = sld [smem:[#allocation11 + $0x15]]
        %v3878 = vstv %s3877
        %v3879 = vmul.f32 %v3878, %v2489
        %v3880 = vmul.f32 %v3878, %v2490
        %s3881 = sld [smem:[#allocation11 + $0x16]]
        %v3882 = vstv %s3881
        %v3883 = vmul.f32 %v3882, %v1834
        %v3884 = vmul.f32 %v3882, %v1836
        %v3885 = vmul.f32 %v3882, %v1838
        %v3886 = vmul.f32 %v3882, %v1840
        %s3887 = sld [smem:[#allocation11 + $0x17]]
        %v3888 = vstv %s3887
        %v3889 = vmul.f32 %v3888, %v2491
        %v3890 = vmul.f32 %v3888, %v2492
        %s3891 = sld [smem:[#allocation11 + $0x18]]
        %v3892 = vstv %s3891
        %v3893 = vmul.f32 %v3892, %v2499
        %v3894 = vmul.f32 %v3892, %v2500
        %s3895 = sld [smem:[#allocation11 + $0x19]]
        %v3896 = vstv %s3895
        %v3897 = vmul.f32 %v3896, %v2501
        %v3898 = vmul.f32 %v3896, %v2502
        %s3899 = sld [smem:[#allocation11 + $0x1a]]
        %v3900 = vstv %s3899
        %v3901 = vmul.f32 %v3900, %v2509
        %v3902 = vmul.f32 %v3900, %v2510
        %v3903 = vadd.f32 %v3867, %v3871
        %v3904 = vadd.f32 %v3868, %v3872
        %v3905 = vadd.f32 %v3875, %v3879
        %v3906 = vadd.f32 %v3876, %v3880
        %v3909 = vcombine.low %v3889, %v3890
        %v3911 = vunpack.c.l.s4 1966171168
        %v3912 = vunpack.c.0.s8 %v3911
        %v3913 = vlaneseq
        %v3914 = vshrl.u32 %v3913, 7
        %v3915 = vsub.s32 %v3912, %v3914
        %v3916 = vrot.slane %v3909, %v3915
        %v3917 = vcombine.high %v3916, %v3916
        %v3919 = vunpack.c.l.s4 1966171168
        %v3920 = vunpack.c.0.s8 %v3919
        %v3921 = vlaneseq
        %v3922 = vshrl.u32 %v3921, 7
        %v3923 = vsub.s32 %v3920, %v3922
        %v3924 = vrot.slane %v3916, %v3923
        %v3926 = vunpack.c.l.s4 1966171168
        %v3927 = vunpack.c.0.s8 %v3926
        %v3928 = vlaneseq
        %v3929 = vshrl.u32 %v3928, 7
        %v3930 = vsub.s32 %v3927, %v3929
        %v3931 = vrot.slane %v3917, %v3930
        %v3932 = vcombine.high %v3924, %v3924
        %v3933 = vcombine.high %v3931, %v3931
        %v3938 = vadd.f32 %v3883, %v3924
        %v3939 = vadd.f32 %v3884, %v3931
        %v3940 = vadd.f32 %v3885, %v3932
        %v3941 = vadd.f32 %v3886, %v3933
        %v3942 = vadd.f32 %v3893, %v3897
        %v3943 = vadd.f32 %v3894, %v3898
        %v3944 = vadd.f32 %v3903, %v3905
        %v3945 = vadd.f32 %v3904, %v3906
        %v3948 = vcombine.low %v3942, %v3943
        %v3950 = vunpack.c.l.s4 1966171168
        %v3951 = vunpack.c.0.s8 %v3950
        %v3952 = vlaneseq
        %v3953 = vshrl.u32 %v3952, 7
        %v3954 = vsub.s32 %v3951, %v3953
        %v3955 = vrot.slane %v3948, %v3954
        %v3956 = vcombine.high %v3955, %v3955
        %v3958 = vunpack.c.l.s4 1966171168
        %v3959 = vunpack.c.0.s8 %v3958
        %v3960 = vlaneseq
        %v3961 = vshrl.u32 %v3960, 7
        %v3962 = vsub.s32 %v3959, %v3961
        %v3963 = vrot.slane %v3955, %v3962
        %v3965 = vunpack.c.l.s4 1966171168
        %v3966 = vunpack.c.0.s8 %v3965
        %v3967 = vlaneseq
        %v3968 = vshrl.u32 %v3967, 7
        %v3969 = vsub.s32 %v3966, %v3968
        %v3970 = vrot.slane %v3956, %v3969
        %v3971 = vcombine.high %v3963, %v3963
        %v3972 = vcombine.high %v3970, %v3970
        %v3977 = vadd.f32 %v3938, %v3963
        %v3978 = vadd.f32 %v3939, %v3970
        %v3979 = vadd.f32 %v3940, %v3971
        %v3980 = vadd.f32 %v3941, %v3972
        %v3985 = vcombine.low %v3977, %v3978
        %v3986 = vcombine.low %v3979, %v3980
        %v3988 = vunpack.c.l.s4 1966171168
        %v3989 = vunpack.c.0.s8 %v3988
        %v3990 = vlaneseq
        %v3991 = vshrl.u32 %v3990, 7
        %v3992 = vsub.s32 %v3989, %v3991
        %v3993 = vrot.slane %v3985, %v3992
        %v3995 = vunpack.c.l.s4 1966171168
        %v3996 = vunpack.c.0.s8 %v3995
        %v3997 = vlaneseq
        %v3998 = vshrl.u32 %v3997, 7
        %v3999 = vsub.s32 %v3996, %v3998
        %v4000 = vrot.slane %v3986, %v3999
        %v4001 = vcombine.low %v3993, %v4000
        %v4002 = vcombine.high %v3993, %v4000
        %v4004 = vunpack.c.l.s4 1966171168
        %v4005 = vunpack.c.0.s8 %v4004
        %v4006 = vlaneseq
        %v4007 = vshrl.u32 %v4006, 7
        %v4008 = vsub.s32 %v4005, %v4007
        %v4009 = vrot.slane %v4001, %v4008
        %v4011 = vunpack.c.l.s4 1966171168
        %v4012 = vunpack.c.0.s8 %v4011
        %v4013 = vlaneseq
        %v4014 = vshrl.u32 %v4013, 7
        %v4015 = vsub.s32 %v4012, %v4014
        %v4016 = vrot.slane %v4002, %v4015
        %v4019 = vadd.f32 %v3944, %v4009
        %v4020 = vadd.f32 %v3945, %v4016
        %v4021 = vadd.f32 %v4019, %v3901
        %v4022 = vadd.f32 %v4020, %v3902
        %s4023 = sld [smem:[#allocation11 + $0x1b]]
        %v4024 = vstv %s4023
        %v4025 = vmul.f32 %v4024, %v3149
        %v4026 = vmul.f32 %v4024, %v3150
        %s4027 = sld [smem:[#allocation11 + $0x1c]]
        %v4028 = vstv %s4027
        %v4029 = vmul.f32 %v4028, %v3157
        %v4030 = vmul.f32 %v4028, %v3158
        %s4031 = sld [smem:[#allocation11 + $0x1d]]
        %v4032 = vstv %s4031
        %v4033 = vmul.f32 %v4032, %v3159
        %v4034 = vmul.f32 %v4032, %v3160
        %s4035 = sld [smem:[#allocation11 + $0x1e]]
        %v4036 = vstv %s4035
        %v4037 = vmul.f32 %v4036, %v3167
        %v4038 = vmul.f32 %v4036, %v3168
        %s4039 = sld [smem:[#allocation11 + $0x1f]]
        %v4040 = vstv %s4039
        %v4041 = vmul.f32 %v4040, %v2512
        %v4042 = vmul.f32 %v4040, %v2514
        %v4043 = vmul.f32 %v4040, %v2516
        %v4044 = vmul.f32 %v4040, %v2518
        %s4045 = sld [smem:[#allocation11 + $0x20]]
        %v4046 = vstv %s4045
        %v4047 = vmul.f32 %v4046, %v3169
        %v4048 = vmul.f32 %v4046, %v3170
        %s4049 = sld [smem:[#allocation11 + $0x21]]
        %v4050 = vstv %s4049
        %v4051 = vmul.f32 %v4050, %v3177
        %v4052 = vmul.f32 %v4050, %v3178
        %s4053 = sld [smem:[#allocation11 + $0x22]]
        %v4054 = vstv %s4053
        %v4055 = vmul.f32 %v4054, %v3179
        %v4056 = vmul.f32 %v4054, %v3180
        %s4057 = sld [smem:[#allocation11 + $0x23]]
        %v4058 = vstv %s4057
        %v4059 = vmul.f32 %v4058, %v3187
        %v4060 = vmul.f32 %v4058, %v3188
        %v4061 = vadd.f32 %v4025, %v4029
        %v4062 = vadd.f32 %v4026, %v4030
        %v4063 = vadd.f32 %v4033, %v4037
        %v4064 = vadd.f32 %v4034, %v4038
        %v4067 = vcombine.low %v4047, %v4048
        %v4069 = vunpack.c.l.s4 1966171168
        %v4070 = vunpack.c.0.s8 %v4069
        %v4071 = vlaneseq
        %v4072 = vshrl.u32 %v4071, 7
        %v4073 = vsub.s32 %v4070, %v4072
        %v4074 = vrot.slane %v4067, %v4073
        %v4075 = vcombine.high %v4074, %v4074
        %v4077 = vunpack.c.l.s4 1966171168
        %v4078 = vunpack.c.0.s8 %v4077
        %v4079 = vlaneseq
        %v4080 = vshrl.u32 %v4079, 7
        %v4081 = vsub.s32 %v4078, %v4080
        %v4082 = vrot.slane %v4074, %v4081
        %v4084 = vunpack.c.l.s4 1966171168
        %v4085 = vunpack.c.0.s8 %v4084
        %v4086 = vlaneseq
        %v4087 = vshrl.u32 %v4086, 7
        %v4088 = vsub.s32 %v4085, %v4087
        %v4089 = vrot.slane %v4075, %v4088
        %v4090 = vcombine.high %v4082, %v4082
        %v4091 = vcombine.high %v4089, %v4089
        %v4096 = vadd.f32 %v4041, %v4082
        %v4097 = vadd.f32 %v4042, %v4089
        %v4098 = vadd.f32 %v4043, %v4090
        %v4099 = vadd.f32 %v4044, %v4091
        %v4100 = vadd.f32 %v4051, %v4055
        %v4101 = vadd.f32 %v4052, %v4056
        %v4102 = vadd.f32 %v4061, %v4063
        %v4103 = vadd.f32 %v4062, %v4064
        %v4106 = vcombine.low %v4100, %v4101
        %v4108 = vunpack.c.l.s4 1966171168
        %v4109 = vunpack.c.0.s8 %v4108
        %v4110 = vlaneseq
        %v4111 = vshrl.u32 %v4110, 7
        %v4112 = vsub.s32 %v4109, %v4111
        %v4113 = vrot.slane %v4106, %v4112
        %v4114 = vcombine.high %v4113, %v4113
        %v4116 = vunpack.c.l.s4 1966171168
        %v4117 = vunpack.c.0.s8 %v4116
        %v4118 = vlaneseq
        %v4119 = vshrl.u32 %v4118, 7
        %v4120 = vsub.s32 %v4117, %v4119
        %v4121 = vrot.slane %v4113, %v4120
        %v4123 = vunpack.c.l.s4 1966171168
        %v4124 = vunpack.c.0.s8 %v4123
        %v4125 = vlaneseq
        %v4126 = vshrl.u32 %v4125, 7
        %v4127 = vsub.s32 %v4124, %v4126
        %v4128 = vrot.slane %v4114, %v4127
        %v4129 = vcombine.high %v4121, %v4121
        %v4130 = vcombine.high %v4128, %v4128
        %v4135 = vadd.f32 %v4096, %v4121
        %v4136 = vadd.f32 %v4097, %v4128
        %v4137 = vadd.f32 %v4098, %v4129
        %v4138 = vadd.f32 %v4099, %v4130
        %v4143 = vcombine.low %v4135, %v4136
        %v4144 = vcombine.low %v4137, %v4138
        %v4146 = vunpack.c.l.s4 1966171168
        %v4147 = vunpack.c.0.s8 %v4146
        %v4148 = vlaneseq
        %v4149 = vshrl.u32 %v4148, 7
        %v4150 = vsub.s32 %v4147, %v4149
        %v4151 = vrot.slane %v4143, %v4150
        %v4153 = vunpack.c.l.s4 1966171168
        %v4154 = vunpack.c.0.s8 %v4153
        %v4155 = vlaneseq
        %v4156 = vshrl.u32 %v4155, 7
        %v4157 = vsub.s32 %v4154, %v4156
        %v4158 = vrot.slane %v4144, %v4157
        %v4159 = vcombine.low %v4151, %v4158
        %v4160 = vcombine.high %v4151, %v4158
        %v4162 = vunpack.c.l.s4 1966171168
        %v4163 = vunpack.c.0.s8 %v4162
        %v4164 = vlaneseq
        %v4165 = vshrl.u32 %v4164, 7
        %v4166 = vsub.s32 %v4163, %v4165
        %v4167 = vrot.slane %v4159, %v4166
        %v4169 = vunpack.c.l.s4 1966171168
        %v4170 = vunpack.c.0.s8 %v4169
        %v4171 = vlaneseq
        %v4172 = vshrl.u32 %v4171, 7
        %v4173 = vsub.s32 %v4170, %v4172
        %v4174 = vrot.slane %v4160, %v4173
        %v4177 = vadd.f32 %v4102, %v4167
        %v4178 = vadd.f32 %v4103, %v4174
        %v4179 = vadd.f32 %v4177, %v4059
        %v4180 = vadd.f32 %v4178, %v4060
        %v4181 = vadd.f32 %v3705, %v3863
        %v4182 = vadd.f32 %v3706, %v3864
        %v4183 = vadd.f32 %v4021, %v4179
        %v4184 = vadd.f32 %v4022, %v4180
        %v4185 = vadd.f32 %v4181, %v4183
        %v4186 = vadd.f32 %v4182, %v4184
        %s4187 = sld [smem:[#allocation13]]
        %v4188 = vstv %s4187
        %v4189 = vadd.f32 %v4185, %v4188
        %v4190 = vadd.f32 %v4186, %v4188
        %v4193 = vcombine.low %v4189, %v4190
        %4195 = vst [vmem:[#allocation3] sm:$0xff] %v4193
        %v4196 = vsel %vm3357, %v4189, 0.0
        %v4197 = vsel %vm3357, %v4190, 0.0
        %v4198 = vadd.f32 %v4196, %v4197
        %4199 = vadd.xlane.f32.xlu0 %v4198
        %v4200 = vpop.xlane.xlu0 %4199
        %v4201 = vmul.f32 %v4200, 0.00390625
        %s4202 = sld [smem:[#allocation9 + $0x4]]
        %v4203 = vstv %s4202
        %v4204 = vmul.f32 %v4203, %v1060
        %v4205 = vmul.f32 %v4203, %v1061
        %v4206 = vmul.f32 %v4203, %v1062
        %v4207 = vmul.f32 %v4203, %v1063
        %s4208 = sld [smem:[#allocation9 + $0x5]]
        %v4209 = vstv %s4208
        %v4210 = vmul.f32 %v4209, %v1783
        %v4211 = vmul.f32 %v4209, %v1784
        %v4212 = vmul.f32 %v4209, %v1785
        %v4213 = vmul.f32 %v4209, %v1786
        %s4214 = sld [smem:[#allocation9 + $0x6]]
        %v4215 = vstv %s4214
        %v4216 = vmul.f32 %v4215, %v2461
        %v4217 = vmul.f32 %v4215, %v2462
        %v4218 = vmul.f32 %v4215, %v2463
        %v4219 = vmul.f32 %v4215, %v2464
        %s4220 = sld [smem:[#allocation9 + $0x7]]
        %v4221 = vstv %s4220
        %v4222 = vmul.f32 %v4221, %v3139
        %v4223 = vmul.f32 %v4221, %v3140
        %v4224 = vmul.f32 %v4221, %v3141
        %v4225 = vmul.f32 %v4221, %v3142
        %v4226 = vadd.f32 %v4204, %v4210
        %v4227 = vadd.f32 %v4205, %v4211
        %v4228 = vadd.f32 %v4206, %v4212
        %v4229 = vadd.f32 %v4207, %v4213
        %v4230 = vadd.f32 %v4216, %v4222
        %v4231 = vadd.f32 %v4217, %v4223
        %v4232 = vadd.f32 %v4218, %v4224
        %v4233 = vadd.f32 %v4219, %v4225
        %v4234 = vadd.f32 %v4226, %v4230
        %v4235 = vadd.f32 %v4227, %v4231
        %v4236 = vadd.f32 %v4228, %v4232
        %v4237 = vadd.f32 %v4229, %v4233
        %v4238 = vmul.f32 %v4203, %v714
        %v4239 = vmul.f32 %v4203, %v715
        %v4240 = vmul.f32 %v4203, %v716
        %v4241 = vmul.f32 %v4203, %v717
        %v4242 = vmul.f32 %v4209, %v1469
        %v4243 = vmul.f32 %v4209, %v1470
        %v4244 = vmul.f32 %v4209, %v1471
        %v4245 = vmul.f32 %v4209, %v1472
        %v4246 = vmul.f32 %v4215, %v2147
        %v4247 = vmul.f32 %v4215, %v2148
        %v4248 = vmul.f32 %v4215, %v2149
        %v4249 = vmul.f32 %v4215, %v2150
        %v4250 = vmul.f32 %v4221, %v2825
        %v4251 = vmul.f32 %v4221, %v2826
        %v4252 = vmul.f32 %v4221, %v2827
        %v4253 = vmul.f32 %v4221, %v2828
        %v4254 = vadd.f32 %v4238, %v4242
        %v4255 = vadd.f32 %v4239, %v4243
        %v4256 = vadd.f32 %v4240, %v4244
        %v4257 = vadd.f32 %v4241, %v4245
        %v4258 = vadd.f32 %v4246, %v4250
        %v4259 = vadd.f32 %v4247, %v4251
        %v4260 = vadd.f32 %v4248, %v4252
        %v4261 = vadd.f32 %v4249, %v4253
        %v4262 = vadd.f32 %v4254, %v4258
        %v4263 = vadd.f32 %v4255, %v4259
        %v4264 = vadd.f32 %v4256, %v4260
        %v4265 = vadd.f32 %v4257, %v4261
        %s4266 = sld [smem:[#allocation10 + $0x1]]
        %v4267 = vstv %s4266
        %v4268 = vadd.f32 %v4234, %v4267
        %v4269 = vadd.f32 %v4235, %v4267
        %v4270 = vadd.f32 %v4236, %v4267
        %v4271 = vadd.f32 %v4237, %v4267
        %v4272 = vxor.u32 %v4268, 2147483648
        %v4273 = vxor.u32 %v4269, 2147483648
        %v4274 = vxor.u32 %v4270, 2147483648
        %v4275 = vxor.u32 %v4271, 2147483648
        %v4276 = vmul.f32 %v4272, 1.442695
        %v4277 = vpow.pop %v4276
        %v4278 = vmul.f32 %v4273, 1.442695
        %v4279 = vpow.pop %v4278
        %v4280 = vmul.f32 %v4274, 1.442695
        %v4281 = vpow.pop %v4280
        %v4282 = vmul.f32 %v4275, 1.442695
        %v4283 = vpow.pop %v4282
        %v4284 = vadd.f32 %v4277, 1.0
        %v4285 = vadd.f32 %v4279, 1.0
        %v4286 = vadd.f32 %v4281, 1.0
        %v4287 = vadd.f32 %v4283, 1.0
        %v4288 = vrcp.pop %v4284
        %v4289 = vmul.f32 1.0, %v4288
        %v4290 = vrcp.pop %v4285
        %v4291 = vmul.f32 1.0, %v4290
        %v4292 = vrcp.pop %v4286
        %v4293 = vmul.f32 1.0, %v4292
        %v4294 = vrcp.pop %v4287
        %v4295 = vmul.f32 1.0, %v4294
        %v4296 = vadd.f32 %v4262, %v4267
        %v4297 = vadd.f32 %v4263, %v4267
        %v4298 = vadd.f32 %v4264, %v4267
        %v4299 = vadd.f32 %v4265, %v4267
        %v4300 = vxor.u32 %v4296, 2147483648
        %v4301 = vxor.u32 %v4297, 2147483648
        %v4302 = vxor.u32 %v4298, 2147483648
        %v4303 = vxor.u32 %v4299, 2147483648
        %v4304 = vmul.f32 %v4300, 1.442695
        %v4305 = vpow.pop %v4304
        %v4306 = vmul.f32 %v4301, 1.442695
        %v4307 = vpow.pop %v4306
        %v4308 = vmul.f32 %v4302, 1.442695
        %v4309 = vpow.pop %v4308
        %v4310 = vmul.f32 %v4303, 1.442695
        %v4311 = vpow.pop %v4310
        %v4312 = vadd.f32 %v4305, 1.0
        %v4313 = vadd.f32 %v4307, 1.0
        %v4314 = vadd.f32 %v4309, 1.0
        %v4315 = vadd.f32 %v4311, 1.0
        %v4316 = vrcp.pop %v4312
        %v4317 = vmul.f32 1.0, %v4316
        %v4318 = vrcp.pop %v4313
        %v4319 = vmul.f32 1.0, %v4318
        %v4320 = vrcp.pop %v4314
        %v4321 = vmul.f32 1.0, %v4320
        %v4322 = vrcp.pop %v4315
        %v4323 = vmul.f32 1.0, %v4322
        %v4324 = vmul.f32 %v4289, %v4317
        %v4325 = vmul.f32 %v4291, %v4319
        %v4326 = vmul.f32 %v4293, %v4321
        %v4327 = vmul.f32 %v4295, %v4323
        %v4328 = vmul.f32 %v1156, %v4324
        %v4329 = vmul.f32 %v1158, %v4325
        %v4330 = vmul.f32 %v1160, %v4326
        %v4331 = vmul.f32 %v1162, %v4327
        %v4336 = vcombine.low %v4328, %v4329
        %v4337 = vcombine.low %v4330, %v4331
        %v4339 = vunpack.c.l.s4 1966171168
        %v4340 = vunpack.c.0.s8 %v4339
        %v4341 = vlaneseq
        %v4342 = vshrl.u32 %v4341, 7
        %v4343 = vsub.s32 %v4340, %v4342
        %v4344 = vrot.slane %v4336, %v4343
        %v4346 = vunpack.c.l.s4 1966171168
        %v4347 = vunpack.c.0.s8 %v4346
        %v4348 = vlaneseq
        %v4349 = vshrl.u32 %v4348, 7
        %v4350 = vsub.s32 %v4347, %v4349
        %v4351 = vrot.slane %v4337, %v4350
        %v4352 = vcombine.low %v4344, %v4351
        %v4353 = vcombine.high %v4344, %v4351
        %v4355 = vunpack.c.l.s4 1966171168
        %v4356 = vunpack.c.0.s8 %v4355
        %v4357 = vlaneseq
        %v4358 = vshrl.u32 %v4357, 7
        %v4359 = vsub.s32 %v4356, %v4358
        %v4360 = vrot.slane %v4352, %v4359
        %v4362 = vunpack.c.l.s4 1966171168
        %v4363 = vunpack.c.0.s8 %v4362
        %v4364 = vlaneseq
        %v4365 = vshrl.u32 %v4364, 7
        %v4366 = vsub.s32 %v4363, %v4365
        %v4367 = vrot.slane %v4353, %v4366
        %v4370 = vsel %vm3357, %v4360, 0.0
        %v4371 = vsel %vm3357, %v4367, 0.0
        %v4372 = vadd.f32 %v4370, %v4371
        %4373 = vadd.xlane.f32.xlu0 %v4372
        %v4374 = vpop.xlane.xlu0 %4373
        %v4375 = vmul.f32 %v4374, 0.00390625
        %v4376 = vmul.f32 %v4328, %v4328
        %v4377 = vmul.f32 %v4329, %v4329
        %v4378 = vmul.f32 %v4330, %v4330
        %v4379 = vmul.f32 %v4331, %v4331
        %v4384 = vcombine.low %v4376, %v4377
        %v4385 = vcombine.low %v4378, %v4379
        %v4387 = vunpack.c.l.s4 1966171168
        %v4388 = vunpack.c.0.s8 %v4387
        %v4389 = vlaneseq
        %v4390 = vshrl.u32 %v4389, 7
        %v4391 = vsub.s32 %v4388, %v4390
        %v4392 = vrot.slane %v4384, %v4391
        %v4394 = vunpack.c.l.s4 1966171168
        %v4395 = vunpack.c.0.s8 %v4394
        %v4396 = vlaneseq
        %v4397 = vshrl.u32 %v4396, 7
        %v4398 = vsub.s32 %v4395, %v4397
        %v4399 = vrot.slane %v4385, %v4398
        %v4400 = vcombine.low %v4392, %v4399
        %v4401 = vcombine.high %v4392, %v4399
        %v4403 = vunpack.c.l.s4 1966171168
        %v4404 = vunpack.c.0.s8 %v4403
        %v4405 = vlaneseq
        %v4406 = vshrl.u32 %v4405, 7
        %v4407 = vsub.s32 %v4404, %v4406
        %v4408 = vrot.slane %v4400, %v4407
        %v4410 = vunpack.c.l.s4 1966171168
        %v4411 = vunpack.c.0.s8 %v4410
        %v4412 = vlaneseq
        %v4413 = vshrl.u32 %v4412, 7
        %v4414 = vsub.s32 %v4411, %v4413
        %v4415 = vrot.slane %v4401, %v4414
        %v4418 = vsel %vm3357, %v4408, 0.0
        %v4419 = vsel %vm3357, %v4415, 0.0
        %v4420 = vadd.f32 %v4418, %v4419
        %4421 = vadd.xlane.f32.xlu0 %v4420
        %v4422 = vpop.xlane.xlu0 %4421
        %v4423 = vmul.f32 %v4422, 0.00390625
        %v4424 = vmul.f32 %v4375, %v4375
        %v4425 = vsub.f32 %v4423, %v4424
        %v4426 = vmax.f32 %v4425, 0.0
        %v4428 = vlaneseq
        %v4429 = vshrl.u32 %v4428, 7
        %v4430 = vsub.s32 0, %v4429
        %v4431 = vrot.slane %v4375, %v4430
        %v4432 = vlaneseq
        %v4433 = vshrl.u32 %v4432, 7
        %v4434 = vsub.s32 1, %v4433
        %v4435 = vrot.slane %v4375, %v4434
        %v4436 = vlaneseq
        %v4437 = vshrl.u32 %v4436, 7
        %v4438 = vsub.s32 2, %v4437
        %v4439 = vrot.slane %v4375, %v4438
        %v4440 = vlaneseq
        %v4441 = vshrl.u32 %v4440, 7
        %v4442 = vsub.s32 3, %v4441
        %v4443 = vrot.slane %v4375, %v4442
        %v4448 = vsub.f32 %v4328, %v4431
        %v4449 = vsub.f32 %v4329, %v4435
        %v4450 = vsub.f32 %v4330, %v4439
        %v4451 = vsub.f32 %v4331, %v4443
        %v4452 = vadd.f32 %v4426, 1e-05
        %v4453 = vrsqrt.pop %v4452
        %v4455 = vlaneseq
        %v4456 = vshrl.u32 %v4455, 7
        %v4457 = vsub.s32 0, %v4456
        %v4458 = vrot.slane %v4453, %v4457
        %v4459 = vlaneseq
        %v4460 = vshrl.u32 %v4459, 7
        %v4461 = vsub.s32 1, %v4460
        %v4462 = vrot.slane %v4453, %v4461
        %v4463 = vlaneseq
        %v4464 = vshrl.u32 %v4463, 7
        %v4465 = vsub.s32 2, %v4464
        %v4466 = vrot.slane %v4453, %v4465
        %v4467 = vlaneseq
        %v4468 = vshrl.u32 %v4467, 7
        %v4469 = vsub.s32 3, %v4468
        %v4470 = vrot.slane %v4453, %v4469
        %v4475 = vmul.f32 %v4448, %v4458
        %v4476 = vmul.f32 %v4449, %v4462
        %v4477 = vmul.f32 %v4450, %v4466
        %v4478 = vmul.f32 %v4451, %v4470
        %s4479 = sld [smem:[#allocation14 + $0x1]]
        %v4480 = vstv %s4479
        %v4481 = vmul.f32 %v4475, %v4480
        %v4482 = vmul.f32 %v4476, %v4480
        %v4483 = vmul.f32 %v4477, %v4480
        %v4484 = vmul.f32 %v4478, %v4480
        %s4485 = sld [smem:[#allocation16 + $0x1]]
        %v4486 = vstv %s4485
        %v4487 = vadd.f32 %v4481, %v4486
        %v4488 = vadd.f32 %v4482, %v4486
        %v4489 = vadd.f32 %v4483, %v4486
        %v4490 = vadd.f32 %v4484, %v4486
        %v4495 = vcombine.low %v4487, %v4489
        %v4496 = vcombine.low %v4488, %v4490
        %v4498 = vunpack.c.l.s4 1935823168
        %v4499 = vunpack.c.0.s8 %v4498
        %v4500 = vlaneseq
        %v4501 = vshrl.u32 %v4500, 7
        %v4502 = vsub.s32 %v4499, %v4501
        %v4503 = vrot.slane %v4495, %v4502
        %v4505 = vunpack.c.l.s4 1935823168
        %v4506 = vunpack.c.0.s8 %v4505
        %v4507 = vlaneseq
        %v4508 = vshrl.u32 %v4507, 7
        %v4509 = vsub.s32 %v4506, %v4508
        %v4510 = vrot.slane %v4496, %v4509
        %v4511 = vcombine.low %v4503, %v4510
        %v4513 = vunpack.c.l.s4 1935823168
        %v4514 = vunpack.c.0.s8 %v4513
        %v4515 = vlaneseq
        %v4516 = vshrl.u32 %v4515, 7
        %v4517 = vsub.s32 %v4514, %v4516
        %v4518 = vrot.slane %v4511, %v4517
        %s4520 = scalar_lea.vmem [#allocation2], 8
        %4521 = vst [vmem:[%s4520] sm:$0xff] %v4518
        %v4522 = vcombine.low %v4487, %v4488
        %v4523 = vcombine.low %v4489, %v4490
        %v4525 = vunpack.c.l.s4 1966171168
        %v4526 = vunpack.c.0.s8 %v4525
        %v4527 = vlaneseq
        %v4528 = vshrl.u32 %v4527, 7
        %v4529 = vsub.s32 %v4526, %v4528
        %v4530 = vrot.slane %v4522, %v4529
        %v4532 = vunpack.c.l.s4 1966171168
        %v4533 = vunpack.c.0.s8 %v4532
        %v4534 = vlaneseq
        %v4535 = vshrl.u32 %v4534, 7
        %v4536 = vsub.s32 %v4533, %v4535
        %v4537 = vrot.slane %v4523, %v4536
        %v4538 = vcombine.low %v4530, %v4537
        %v4539 = vcombine.high %v4530, %v4537
        %v4541 = vunpack.c.l.s4 1966171168
        %v4542 = vunpack.c.0.s8 %v4541
        %v4543 = vlaneseq
        %v4544 = vshrl.u32 %v4543, 7
        %v4545 = vsub.s32 %v4542, %v4544
        %v4546 = vrot.slane %v4538, %v4545
        %v4548 = vunpack.c.l.s4 1966171168
        %v4549 = vunpack.c.0.s8 %v4548
        %v4550 = vlaneseq
        %v4551 = vshrl.u32 %v4550, 7
        %v4552 = vsub.s32 %v4549, %v4551
        %v4553 = vrot.slane %v4539, %v4552
        %v4556 = vsel %vm3357, %v4546, 0.0
        %v4557 = vsel %vm3357, %v4553, 0.0
        %v4558 = vadd.f32 %v4556, %v4557
        %4559 = vadd.xlane.f32.xlu0 %v4558
        %v4560 = vpop.xlane.xlu0 %4559
        %v4561 = vmul.f32 %v4560, 0.00390625
        %s4562 = sld [smem:[#allocation11 + $0x24]]
        %v4563 = vstv %s4562
        %v4564 = vmul.f32 %v4563, %v1077
        %v4565 = vmul.f32 %v4563, %v1078
        %s4566 = sld [smem:[#allocation11 + $0x25]]
        %v4567 = vstv %s4566
        %v4568 = vmul.f32 %v4567, %v1090
        %v4569 = vmul.f32 %v4567, %v1091
        %s4570 = sld [smem:[#allocation11 + $0x26]]
        %v4571 = vstv %s4570
        %v4572 = vmul.f32 %v4571, %v1098
        %v4573 = vmul.f32 %v4571, %v1099
        %s4574 = sld [smem:[#allocation11 + $0x27]]
        %v4575 = vstv %s4574
        %v4576 = vmul.f32 %v4575, %v1111
        %v4577 = vmul.f32 %v4575, %v1112
        %s4578 = sld [smem:[#allocation11 + $0x28]]
        %v4579 = vstv %s4578
        %v4580 = vmul.f32 %v4579, %v398
        %v4581 = vmul.f32 %v4579, %v400
        %v4582 = vmul.f32 %v4579, %v402
        %v4583 = vmul.f32 %v4579, %v404
        %s4584 = sld [smem:[#allocation11 + $0x29]]
        %v4585 = vstv %s4584
        %v4586 = vmul.f32 %v4585, %v1117
        %v4587 = vmul.f32 %v4585, %v1118
        %s4588 = sld [smem:[#allocation11 + $0x2a]]
        %v4589 = vstv %s4588
        %v4590 = vmul.f32 %v4589, %v1132
        %v4591 = vmul.f32 %v4589, %v1133
        %s4592 = sld [smem:[#allocation11 + $0x2b]]
        %v4593 = vstv %s4592
        %v4594 = vmul.f32 %v4593, %v1138
        %v4595 = vmul.f32 %v4593, %v1139
        %s4596 = sld [smem:[#allocation11 + $0x2c]]
        %v4597 = vstv %s4596
        %v4598 = vmul.f32 %v4597, %v1153
        %v4599 = vmul.f32 %v4597, %v1154
        %v4600 = vadd.f32 %v4564, %v4568
        %v4601 = vadd.f32 %v4565, %v4569
        %v4602 = vadd.f32 %v4572, %v4576
        %v4603 = vadd.f32 %v4573, %v4577
        %v4606 = vcombine.low %v4586, %v4587
        %v4608 = vunpack.c.l.s4 1966171168
        %v4609 = vunpack.c.0.s8 %v4608
        %v4610 = vlaneseq
        %v4611 = vshrl.u32 %v4610, 7
        %v4612 = vsub.s32 %v4609, %v4611
        %v4613 = vrot.slane %v4606, %v4612
        %v4614 = vcombine.high %v4613, %v4613
        %v4616 = vunpack.c.l.s4 1966171168
        %v4617 = vunpack.c.0.s8 %v4616
        %v4618 = vlaneseq
        %v4619 = vshrl.u32 %v4618, 7
        %v4620 = vsub.s32 %v4617, %v4619
        %v4621 = vrot.slane %v4613, %v4620
        %v4623 = vunpack.c.l.s4 1966171168
        %v4624 = vunpack.c.0.s8 %v4623
        %v4625 = vlaneseq
        %v4626 = vshrl.u32 %v4625, 7
        %v4627 = vsub.s32 %v4624, %v4626
        %v4628 = vrot.slane %v4614, %v4627
        %v4629 = vcombine.high %v4621, %v4621
        %v4630 = vcombine.high %v4628, %v4628
        %v4635 = vadd.f32 %v4580, %v4621
        %v4636 = vadd.f32 %v4581, %v4628
        %v4637 = vadd.f32 %v4582, %v4629
        %v4638 = vadd.f32 %v4583, %v4630
        %v4639 = vadd.f32 %v4590, %v4594
        %v4640 = vadd.f32 %v4591, %v4595
        %v4641 = vadd.f32 %v4600, %v4602
        %v4642 = vadd.f32 %v4601, %v4603
        %v4645 = vcombine.low %v4639, %v4640
        %v4647 = vunpack.c.l.s4 1966171168
        %v4648 = vunpack.c.0.s8 %v4647
        %v4649 = vlaneseq
        %v4650 = vshrl.u32 %v4649, 7
        %v4651 = vsub.s32 %v4648, %v4650
        %v4652 = vrot.slane %v4645, %v4651
        %v4653 = vcombine.high %v4652, %v4652
        %v4655 = vunpack.c.l.s4 1966171168
        %v4656 = vunpack.c.0.s8 %v4655
        %v4657 = vlaneseq
        %v4658 = vshrl.u32 %v4657, 7
        %v4659 = vsub.s32 %v4656, %v4658
        %v4660 = vrot.slane %v4652, %v4659
        %v4662 = vunpack.c.l.s4 1966171168
        %v4663 = vunpack.c.0.s8 %v4662
        %v4664 = vlaneseq
        %v4665 = vshrl.u32 %v4664, 7
        %v4666 = vsub.s32 %v4663, %v4665
        %v4667 = vrot.slane %v4653, %v4666
        %v4668 = vcombine.high %v4660, %v4660
        %v4669 = vcombine.high %v4667, %v4667
        %v4674 = vadd.f32 %v4635, %v4660
        %v4675 = vadd.f32 %v4636, %v4667
        %v4676 = vadd.f32 %v4637, %v4668
        %v4677 = vadd.f32 %v4638, %v4669
        %v4682 = vcombine.low %v4674, %v4675
        %v4683 = vcombine.low %v4676, %v4677
        %v4685 = vunpack.c.l.s4 1966171168
        %v4686 = vunpack.c.0.s8 %v4685
        %v4687 = vlaneseq
        %v4688 = vshrl.u32 %v4687, 7
        %v4689 = vsub.s32 %v4686, %v4688
        %v4690 = vrot.slane %v4682, %v4689
        %v4692 = vunpack.c.l.s4 1966171168
        %v4693 = vunpack.c.0.s8 %v4692
        %v4694 = vlaneseq
        %v4695 = vshrl.u32 %v4694, 7
        %v4696 = vsub.s32 %v4693, %v4695
        %v4697 = vrot.slane %v4683, %v4696
        %v4698 = vcombine.low %v4690, %v4697
        %v4699 = vcombine.high %v4690, %v4697
        %v4701 = vunpack.c.l.s4 1966171168
        %v4702 = vunpack.c.0.s8 %v4701
        %v4703 = vlaneseq
        %v4704 = vshrl.u32 %v4703, 7
        %v4705 = vsub.s32 %v4702, %v4704
        %v4706 = vrot.slane %v4698, %v4705
        %v4708 = vunpack.c.l.s4 1966171168
        %v4709 = vunpack.c.0.s8 %v4708
        %v4710 = vlaneseq
        %v4711 = vshrl.u32 %v4710, 7
        %v4712 = vsub.s32 %v4709, %v4711
        %v4713 = vrot.slane %v4699, %v4712
        %v4716 = vadd.f32 %v4641, %v4706
        %v4717 = vadd.f32 %v4642, %v4713
        %v4718 = vadd.f32 %v4716, %v4598
        %v4719 = vadd.f32 %v4717, %v4599
        %s4720 = sld [smem:[#allocation11 + $0x2d]]
        %v4721 = vstv %s4720
        %v4722 = vmul.f32 %v4721, %v1793
        %v4723 = vmul.f32 %v4721, %v1794
        %s4724 = sld [smem:[#allocation11 + $0x2e]]
        %v4725 = vstv %s4724
        %v4726 = vmul.f32 %v4725, %v1801
        %v4727 = vmul.f32 %v4725, %v1802
        %s4728 = sld [smem:[#allocation11 + $0x2f]]
        %v4729 = vstv %s4728
        %v4730 = vmul.f32 %v4729, %v1803
        %v4731 = vmul.f32 %v4729, %v1804
        %s4732 = sld [smem:[#allocation11 + $0x30]]
        %v4733 = vstv %s4732
        %v4734 = vmul.f32 %v4733, %v1811
        %v4735 = vmul.f32 %v4733, %v1812
        %s4736 = sld [smem:[#allocation11 + $0x31]]
        %v4737 = vstv %s4736
        %v4738 = vmul.f32 %v4737, %v1156
        %v4739 = vmul.f32 %v4737, %v1158
        %v4740 = vmul.f32 %v4737, %v1160
        %v4741 = vmul.f32 %v4737, %v1162
        %s4742 = sld [smem:[#allocation11 + $0x32]]
        %v4743 = vstv %s4742
        %v4744 = vmul.f32 %v4743, %v1813
        %v4745 = vmul.f32 %v4743, %v1814
        %s4746 = sld [smem:[#allocation11 + $0x33]]
        %v4747 = vstv %s4746
        %v4748 = vmul.f32 %v4747, %v1821
        %v4749 = vmul.f32 %v4747, %v1822
        %s4750 = sld [smem:[#allocation11 + $0x34]]
        %v4751 = vstv %s4750
        %v4752 = vmul.f32 %v4751, %v1823
        %v4753 = vmul.f32 %v4751, %v1824
        %s4754 = sld [smem:[#allocation11 + $0x35]]
        %v4755 = vstv %s4754
        %v4756 = vmul.f32 %v4755, %v1831
        %v4757 = vmul.f32 %v4755, %v1832
        %v4758 = vadd.f32 %v4722, %v4726
        %v4759 = vadd.f32 %v4723, %v4727
        %v4760 = vadd.f32 %v4730, %v4734
        %v4761 = vadd.f32 %v4731, %v4735
        %v4764 = vcombine.low %v4744, %v4745
        %v4766 = vunpack.c.l.s4 1966171168
        %v4767 = vunpack.c.0.s8 %v4766
        %v4768 = vlaneseq
        %v4769 = vshrl.u32 %v4768, 7
        %v4770 = vsub.s32 %v4767, %v4769
        %v4771 = vrot.slane %v4764, %v4770
        %v4772 = vcombine.high %v4771, %v4771
        %v4774 = vunpack.c.l.s4 1966171168
        %v4775 = vunpack.c.0.s8 %v4774
        %v4776 = vlaneseq
        %v4777 = vshrl.u32 %v4776, 7
        %v4778 = vsub.s32 %v4775, %v4777
        %v4779 = vrot.slane %v4771, %v4778
        %v4781 = vunpack.c.l.s4 1966171168
        %v4782 = vunpack.c.0.s8 %v4781
        %v4783 = vlaneseq
        %v4784 = vshrl.u32 %v4783, 7
        %v4785 = vsub.s32 %v4782, %v4784
        %v4786 = vrot.slane %v4772, %v4785
        %v4787 = vcombine.high %v4779, %v4779
        %v4788 = vcombine.high %v4786, %v4786
        %v4793 = vadd.f32 %v4738, %v4779
        %v4794 = vadd.f32 %v4739, %v4786
        %v4795 = vadd.f32 %v4740, %v4787
        %v4796 = vadd.f32 %v4741, %v4788
        %v4797 = vadd.f32 %v4748, %v4752
        %v4798 = vadd.f32 %v4749, %v4753
        %v4799 = vadd.f32 %v4758, %v4760
        %v4800 = vadd.f32 %v4759, %v4761
        %v4803 = vcombine.low %v4797, %v4798
        %v4805 = vunpack.c.l.s4 1966171168
        %v4806 = vunpack.c.0.s8 %v4805
        %v4807 = vlaneseq
        %v4808 = vshrl.u32 %v4807, 7
        %v4809 = vsub.s32 %v4806, %v4808
        %v4810 = vrot.slane %v4803, %v4809
        %v4811 = vcombine.high %v4810, %v4810
        %v4813 = vunpack.c.l.s4 1966171168
        %v4814 = vunpack.c.0.s8 %v4813
        %v4815 = vlaneseq
        %v4816 = vshrl.u32 %v4815, 7
        %v4817 = vsub.s32 %v4814, %v4816
        %v4818 = vrot.slane %v4810, %v4817
        %v4820 = vunpack.c.l.s4 1966171168
        %v4821 = vunpack.c.0.s8 %v4820
        %v4822 = vlaneseq
        %v4823 = vshrl.u32 %v4822, 7
        %v4824 = vsub.s32 %v4821, %v4823
        %v4825 = vrot.slane %v4811, %v4824
        %v4826 = vcombine.high %v4818, %v4818
        %v4827 = vcombine.high %v4825, %v4825
        %v4832 = vadd.f32 %v4793, %v4818
        %v4833 = vadd.f32 %v4794, %v4825
        %v4834 = vadd.f32 %v4795, %v4826
        %v4835 = vadd.f32 %v4796, %v4827
        %v4840 = vcombine.low %v4832, %v4833
        %v4841 = vcombine.low %v4834, %v4835
        %v4843 = vunpack.c.l.s4 1966171168
        %v4844 = vunpack.c.0.s8 %v4843
        %v4845 = vlaneseq
        %v4846 = vshrl.u32 %v4845, 7
        %v4847 = vsub.s32 %v4844, %v4846
        %v4848 = vrot.slane %v4840, %v4847
        %v4850 = vunpack.c.l.s4 1966171168
        %v4851 = vunpack.c.0.s8 %v4850
        %v4852 = vlaneseq
        %v4853 = vshrl.u32 %v4852, 7
        %v4854 = vsub.s32 %v4851, %v4853
        %v4855 = vrot.slane %v4841, %v4854
        %v4856 = vcombine.low %v4848, %v4855
        %v4857 = vcombine.high %v4848, %v4855
        %v4859 = vunpack.c.l.s4 1966171168
        %v4860 = vunpack.c.0.s8 %v4859
        %v4861 = vlaneseq
        %v4862 = vshrl.u32 %v4861, 7
        %v4863 = vsub.s32 %v4860, %v4862
        %v4864 = vrot.slane %v4856, %v4863
        %v4866 = vunpack.c.l.s4 1966171168
        %v4867 = vunpack.c.0.s8 %v4866
        %v4868 = vlaneseq
        %v4869 = vshrl.u32 %v4868, 7
        %v4870 = vsub.s32 %v4867, %v4869
        %v4871 = vrot.slane %v4857, %v4870
        %v4874 = vadd.f32 %v4799, %v4864
        %v4875 = vadd.f32 %v4800, %v4871
        %v4876 = vadd.f32 %v4874, %v4756
        %v4877 = vadd.f32 %v4875, %v4757
        %s4878 = sld [smem:[#allocation11 + $0x36]]
        %v4879 = vstv %s4878
        %v4880 = vmul.f32 %v4879, %v2471
        %v4881 = vmul.f32 %v4879, %v2472
        %s4882 = sld [smem:[#allocation11 + $0x37]]
        %v4883 = vstv %s4882
        %v4884 = vmul.f32 %v4883, %v2479
        %v4885 = vmul.f32 %v4883, %v2480
        %s4886 = sld [smem:[#allocation11 + $0x38]]
        %v4887 = vstv %s4886
        %v4888 = vmul.f32 %v4887, %v2481
        %v4889 = vmul.f32 %v4887, %v2482
        %s4890 = sld [smem:[#allocation11 + $0x39]]
        %v4891 = vstv %s4890
        %v4892 = vmul.f32 %v4891, %v2489
        %v4893 = vmul.f32 %v4891, %v2490
        %s4894 = sld [smem:[#allocation11 + $0x3a]]
        %v4895 = vstv %s4894
        %v4896 = vmul.f32 %v4895, %v1834
        %v4897 = vmul.f32 %v4895, %v1836
        %v4898 = vmul.f32 %v4895, %v1838
        %v4899 = vmul.f32 %v4895, %v1840
        %s4900 = sld [smem:[#allocation11 + $0x3b]]
        %v4901 = vstv %s4900
        %v4902 = vmul.f32 %v4901, %v2491
        %v4903 = vmul.f32 %v4901, %v2492
        %s4904 = sld [smem:[#allocation11 + $0x3c]]
        %v4905 = vstv %s4904
        %v4906 = vmul.f32 %v4905, %v2499
        %v4907 = vmul.f32 %v4905, %v2500
        %s4908 = sld [smem:[#allocation11 + $0x3d]]
        %v4909 = vstv %s4908
        %v4910 = vmul.f32 %v4909, %v2501
        %v4911 = vmul.f32 %v4909, %v2502
        %s4912 = sld [smem:[#allocation11 + $0x3e]]
        %v4913 = vstv %s4912
        %v4914 = vmul.f32 %v4913, %v2509
        %v4915 = vmul.f32 %v4913, %v2510
        %v4916 = vadd.f32 %v4880, %v4884
        %v4917 = vadd.f32 %v4881, %v4885
        %v4918 = vadd.f32 %v4888, %v4892
        %v4919 = vadd.f32 %v4889, %v4893
        %v4922 = vcombine.low %v4902, %v4903
        %v4924 = vunpack.c.l.s4 1966171168
        %v4925 = vunpack.c.0.s8 %v4924
        %v4926 = vlaneseq
        %v4927 = vshrl.u32 %v4926, 7
        %v4928 = vsub.s32 %v4925, %v4927
        %v4929 = vrot.slane %v4922, %v4928
        %v4930 = vcombine.high %v4929, %v4929
        %v4932 = vunpack.c.l.s4 1966171168
        %v4933 = vunpack.c.0.s8 %v4932
        %v4934 = vlaneseq
        %v4935 = vshrl.u32 %v4934, 7
        %v4936 = vsub.s32 %v4933, %v4935
        %v4937 = vrot.slane %v4929, %v4936
        %v4939 = vunpack.c.l.s4 1966171168
        %v4940 = vunpack.c.0.s8 %v4939
        %v4941 = vlaneseq
        %v4942 = vshrl.u32 %v4941, 7
        %v4943 = vsub.s32 %v4940, %v4942
        %v4944 = vrot.slane %v4930, %v4943
        %v4945 = vcombine.high %v4937, %v4937
        %v4946 = vcombine.high %v4944, %v4944
        %v4951 = vadd.f32 %v4896, %v4937
        %v4952 = vadd.f32 %v4897, %v4944
        %v4953 = vadd.f32 %v4898, %v4945
        %v4954 = vadd.f32 %v4899, %v4946
        %v4955 = vadd.f32 %v4906, %v4910
        %v4956 = vadd.f32 %v4907, %v4911
        %v4957 = vadd.f32 %v4916, %v4918
        %v4958 = vadd.f32 %v4917, %v4919
        %v4961 = vcombine.low %v4955, %v4956
        %v4963 = vunpack.c.l.s4 1966171168
        %v4964 = vunpack.c.0.s8 %v4963
        %v4965 = vlaneseq
        %v4966 = vshrl.u32 %v4965, 7
        %v4967 = vsub.s32 %v4964, %v4966
        %v4968 = vrot.slane %v4961, %v4967
        %v4969 = vcombine.high %v4968, %v4968
        %v4971 = vunpack.c.l.s4 1966171168
        %v4972 = vunpack.c.0.s8 %v4971
        %v4973 = vlaneseq
        %v4974 = vshrl.u32 %v4973, 7
        %v4975 = vsub.s32 %v4972, %v4974
        %v4976 = vrot.slane %v4968, %v4975
        %v4978 = vunpack.c.l.s4 1966171168
        %v4979 = vunpack.c.0.s8 %v4978
        %v4980 = vlaneseq
        %v4981 = vshrl.u32 %v4980, 7
        %v4982 = vsub.s32 %v4979, %v4981
        %v4983 = vrot.slane %v4969, %v4982
        %v4984 = vcombine.high %v4976, %v4976
        %v4985 = vcombine.high %v4983, %v4983
        %v4990 = vadd.f32 %v4951, %v4976
        %v4991 = vadd.f32 %v4952, %v4983
        %v4992 = vadd.f32 %v4953, %v4984
        %v4993 = vadd.f32 %v4954, %v4985
        %v4998 = vcombine.low %v4990, %v4991
        %v4999 = vcombine.low %v4992, %v4993
        %v5001 = vunpack.c.l.s4 1966171168
        %v5002 = vunpack.c.0.s8 %v5001
        %v5003 = vlaneseq
        %v5004 = vshrl.u32 %v5003, 7
        %v5005 = vsub.s32 %v5002, %v5004
        %v5006 = vrot.slane %v4998, %v5005
        %v5008 = vunpack.c.l.s4 1966171168
        %v5009 = vunpack.c.0.s8 %v5008
        %v5010 = vlaneseq
        %v5011 = vshrl.u32 %v5010, 7
        %v5012 = vsub.s32 %v5009, %v5011
        %v5013 = vrot.slane %v4999, %v5012
        %v5014 = vcombine.low %v5006, %v5013
        %v5015 = vcombine.high %v5006, %v5013
        %v5017 = vunpack.c.l.s4 1966171168
        %v5018 = vunpack.c.0.s8 %v5017
        %v5019 = vlaneseq
        %v5020 = vshrl.u32 %v5019, 7
        %v5021 = vsub.s32 %v5018, %v5020
        %v5022 = vrot.slane %v5014, %v5021
        %v5024 = vunpack.c.l.s4 1966171168
        %v5025 = vunpack.c.0.s8 %v5024
        %v5026 = vlaneseq
        %v5027 = vshrl.u32 %v5026, 7
        %v5028 = vsub.s32 %v5025, %v5027
        %v5029 = vrot.slane %v5015, %v5028
        %v5032 = vadd.f32 %v4957, %v5022
        %v5033 = vadd.f32 %v4958, %v5029
        %v5034 = vadd.f32 %v5032, %v4914
        %v5035 = vadd.f32 %v5033, %v4915
        %s5036 = sld [smem:[#allocation11 + $0x3f]]
        %v5037 = vstv %s5036
        %v5038 = vmul.f32 %v5037, %v3149
        %v5039 = vmul.f32 %v5037, %v3150
        %s5040 = sld [smem:[#allocation11 + $0x40]]
        %v5041 = vstv %s5040
        %v5042 = vmul.f32 %v5041, %v3157
        %v5043 = vmul.f32 %v5041, %v3158
        %s5044 = sld [smem:[#allocation11 + $0x41]]
        %v5045 = vstv %s5044
        %v5046 = vmul.f32 %v5045, %v3159
        %v5047 = vmul.f32 %v5045, %v3160
        %s5048 = sld [smem:[#allocation11 + $0x42]]
        %v5049 = vstv %s5048
        %v5050 = vmul.f32 %v5049, %v3167
        %v5051 = vmul.f32 %v5049, %v3168
        %s5052 = sld [smem:[#allocation11 + $0x43]]
        %v5053 = vstv %s5052
        %v5054 = vmul.f32 %v5053, %v2512
        %v5055 = vmul.f32 %v5053, %v2514
        %v5056 = vmul.f32 %v5053, %v2516
        %v5057 = vmul.f32 %v5053, %v2518
        %s5058 = sld [smem:[#allocation11 + $0x44]]
        %v5059 = vstv %s5058
        %v5060 = vmul.f32 %v5059, %v3169
        %v5061 = vmul.f32 %v5059, %v3170
        %s5062 = sld [smem:[#allocation11 + $0x45]]
        %v5063 = vstv %s5062
        %v5064 = vmul.f32 %v5063, %v3177
        %v5065 = vmul.f32 %v5063, %v3178
        %s5066 = sld [smem:[#allocation11 + $0x46]]
        %v5067 = vstv %s5066
        %v5068 = vmul.f32 %v5067, %v3179
        %v5069 = vmul.f32 %v5067, %v3180
        %s5070 = sld [smem:[#allocation11 + $0x47]]
        %v5071 = vstv %s5070
        %v5072 = vmul.f32 %v5071, %v3187
        %v5073 = vmul.f32 %v5071, %v3188
        %v5074 = vadd.f32 %v5038, %v5042
        %v5075 = vadd.f32 %v5039, %v5043
        %v5076 = vadd.f32 %v5046, %v5050
        %v5077 = vadd.f32 %v5047, %v5051
        %v5080 = vcombine.low %v5060, %v5061
        %v5082 = vunpack.c.l.s4 1966171168
        %v5083 = vunpack.c.0.s8 %v5082
        %v5084 = vlaneseq
        %v5085 = vshrl.u32 %v5084, 7
        %v5086 = vsub.s32 %v5083, %v5085
        %v5087 = vrot.slane %v5080, %v5086
        %v5088 = vcombine.high %v5087, %v5087
        %v5090 = vunpack.c.l.s4 1966171168
        %v5091 = vunpack.c.0.s8 %v5090
        %v5092 = vlaneseq
        %v5093 = vshrl.u32 %v5092, 7
        %v5094 = vsub.s32 %v5091, %v5093
        %v5095 = vrot.slane %v5087, %v5094
        %v5097 = vunpack.c.l.s4 1966171168
        %v5098 = vunpack.c.0.s8 %v5097
        %v5099 = vlaneseq
        %v5100 = vshrl.u32 %v5099, 7
        %v5101 = vsub.s32 %v5098, %v5100
        %v5102 = vrot.slane %v5088, %v5101
        %v5103 = vcombine.high %v5095, %v5095
        %v5104 = vcombine.high %v5102, %v5102
        %v5109 = vadd.f32 %v5054, %v5095
        %v5110 = vadd.f32 %v5055, %v5102
        %v5111 = vadd.f32 %v5056, %v5103
        %v5112 = vadd.f32 %v5057, %v5104
        %v5113 = vadd.f32 %v5064, %v5068
        %v5114 = vadd.f32 %v5065, %v5069
        %v5115 = vadd.f32 %v5074, %v5076
        %v5116 = vadd.f32 %v5075, %v5077
        %v5119 = vcombine.low %v5113, %v5114
        %v5121 = vunpack.c.l.s4 1966171168
        %v5122 = vunpack.c.0.s8 %v5121
        %v5123 = vlaneseq
        %v5124 = vshrl.u32 %v5123, 7
        %v5125 = vsub.s32 %v5122, %v5124
        %v5126 = vrot.slane %v5119, %v5125
        %v5127 = vcombine.high %v5126, %v5126
        %v5129 = vunpack.c.l.s4 1966171168
        %v5130 = vunpack.c.0.s8 %v5129
        %v5131 = vlaneseq
        %v5132 = vshrl.u32 %v5131, 7
        %v5133 = vsub.s32 %v5130, %v5132
        %v5134 = vrot.slane %v5126, %v5133
        %v5136 = vunpack.c.l.s4 1966171168
        %v5137 = vunpack.c.0.s8 %v5136
        %v5138 = vlaneseq
        %v5139 = vshrl.u32 %v5138, 7
        %v5140 = vsub.s32 %v5137, %v5139
        %v5141 = vrot.slane %v5127, %v5140
        %v5142 = vcombine.high %v5134, %v5134
        %v5143 = vcombine.high %v5141, %v5141
        %v5148 = vadd.f32 %v5109, %v5134
        %v5149 = vadd.f32 %v5110, %v5141
        %v5150 = vadd.f32 %v5111, %v5142
        %v5151 = vadd.f32 %v5112, %v5143
        %v5156 = vcombine.low %v5148, %v5149
        %v5157 = vcombine.low %v5150, %v5151
        %v5159 = vunpack.c.l.s4 1966171168
        %v5160 = vunpack.c.0.s8 %v5159
        %v5161 = vlaneseq
        %v5162 = vshrl.u32 %v5161, 7
        %v5163 = vsub.s32 %v5160, %v5162
        %v5164 = vrot.slane %v5156, %v5163
        %v5166 = vunpack.c.l.s4 1966171168
        %v5167 = vunpack.c.0.s8 %v5166
        %v5168 = vlaneseq
        %v5169 = vshrl.u32 %v5168, 7
        %v5170 = vsub.s32 %v5167, %v5169
        %v5171 = vrot.slane %v5157, %v5170
        %v5172 = vcombine.low %v5164, %v5171
        %v5173 = vcombine.high %v5164, %v5171
        %v5175 = vunpack.c.l.s4 1966171168
        %v5176 = vunpack.c.0.s8 %v5175
        %v5177 = vlaneseq
        %v5178 = vshrl.u32 %v5177, 7
        %v5179 = vsub.s32 %v5176, %v5178
        %v5180 = vrot.slane %v5172, %v5179
        %v5182 = vunpack.c.l.s4 1966171168
        %v5183 = vunpack.c.0.s8 %v5182
        %v5184 = vlaneseq
        %v5185 = vshrl.u32 %v5184, 7
        %v5186 = vsub.s32 %v5183, %v5185
        %v5187 = vrot.slane %v5173, %v5186
        %v5190 = vadd.f32 %v5115, %v5180
        %v5191 = vadd.f32 %v5116, %v5187
        %v5192 = vadd.f32 %v5190, %v5072
        %v5193 = vadd.f32 %v5191, %v5073
        %v5194 = vadd.f32 %v4718, %v4876
        %v5195 = vadd.f32 %v4719, %v4877
        %v5196 = vadd.f32 %v5034, %v5192
        %v5197 = vadd.f32 %v5035, %v5193
        %v5198 = vadd.f32 %v5194, %v5196
        %v5199 = vadd.f32 %v5195, %v5197
        %s5200 = sld [smem:[#allocation13 + $0x1]]
        %v5201 = vstv %s5200
        %v5202 = vadd.f32 %v5198, %v5201
        %v5203 = vadd.f32 %v5199, %v5201
        %v5206 = vcombine.low %v5202, %v5203
        %s5208 = scalar_lea.vmem [#allocation3], 8
        %5209 = vst [vmem:[%s5208] sm:$0xff] %v5206
        %v5210 = vsel %vm3357, %v5202, 0.0
        %v5211 = vsel %vm3357, %v5203, 0.0
        %v5212 = vadd.f32 %v5210, %v5211
        %5213 = vadd.xlane.f32.xlu0 %v5212
        %v5214 = vpop.xlane.xlu0 %5213
        %v5215 = vmul.f32 %v5214, 0.00390625
        %s5216 = sld [smem:[#allocation9 + $0x8]]
        %v5217 = vstv %s5216
        %v5218 = vmul.f32 %v5217, %v1060
        %v5219 = vmul.f32 %v5217, %v1061
        %v5220 = vmul.f32 %v5217, %v1062
        %v5221 = vmul.f32 %v5217, %v1063
        %s5222 = sld [smem:[#allocation9 + $0x9]]
        %v5223 = vstv %s5222
        %v5224 = vmul.f32 %v5223, %v1783
        %v5225 = vmul.f32 %v5223, %v1784
        %v5226 = vmul.f32 %v5223, %v1785
        %v5227 = vmul.f32 %v5223, %v1786
        %s5228 = sld [smem:[#allocation9 + $0xa]]
        %v5229 = vstv %s5228
        %v5230 = vmul.f32 %v5229, %v2461
        %v5231 = vmul.f32 %v5229, %v2462
        %v5232 = vmul.f32 %v5229, %v2463
        %v5233 = vmul.f32 %v5229, %v2464
        %s5234 = sld [smem:[#allocation9 + $0xb]]
        %v5235 = vstv %s5234
        %v5236 = vmul.f32 %v5235, %v3139
        %v5237 = vmul.f32 %v5235, %v3140
        %v5238 = vmul.f32 %v5235, %v3141
        %v5239 = vmul.f32 %v5235, %v3142
        %v5240 = vadd.f32 %v5218, %v5224
        %v5241 = vadd.f32 %v5219, %v5225
        %v5242 = vadd.f32 %v5220, %v5226
        %v5243 = vadd.f32 %v5221, %v5227
        %v5244 = vadd.f32 %v5230, %v5236
        %v5245 = vadd.f32 %v5231, %v5237
        %v5246 = vadd.f32 %v5232, %v5238
        %v5247 = vadd.f32 %v5233, %v5239
        %v5248 = vadd.f32 %v5240, %v5244
        %v5249 = vadd.f32 %v5241, %v5245
        %v5250 = vadd.f32 %v5242, %v5246
        %v5251 = vadd.f32 %v5243, %v5247
        %v5252 = vmul.f32 %v5217, %v714
        %v5253 = vmul.f32 %v5217, %v715
        %v5254 = vmul.f32 %v5217, %v716
        %v5255 = vmul.f32 %v5217, %v717
        %v5256 = vmul.f32 %v5223, %v1469
        %v5257 = vmul.f32 %v5223, %v1470
        %v5258 = vmul.f32 %v5223, %v1471
        %v5259 = vmul.f32 %v5223, %v1472
        %v5260 = vmul.f32 %v5229, %v2147
        %v5261 = vmul.f32 %v5229, %v2148
        %v5262 = vmul.f32 %v5229, %v2149
        %v5263 = vmul.f32 %v5229, %v2150
        %v5264 = vmul.f32 %v5235, %v2825
        %v5265 = vmul.f32 %v5235, %v2826
        %v5266 = vmul.f32 %v5235, %v2827
        %v5267 = vmul.f32 %v5235, %v2828
        %v5268 = vadd.f32 %v5252, %v5256
        %v5269 = vadd.f32 %v5253, %v5257
        %v5270 = vadd.f32 %v5254, %v5258
        %v5271 = vadd.f32 %v5255, %v5259
        %v5272 = vadd.f32 %v5260, %v5264
        %v5273 = vadd.f32 %v5261, %v5265
        %v5274 = vadd.f32 %v5262, %v5266
        %v5275 = vadd.f32 %v5263, %v5267
        %v5276 = vadd.f32 %v5268, %v5272
        %v5277 = vadd.f32 %v5269, %v5273
        %v5278 = vadd.f32 %v5270, %v5274
        %v5279 = vadd.f32 %v5271, %v5275
        %s5280 = sld [smem:[#allocation10 + $0x2]]
        %v5281 = vstv %s5280
        %v5282 = vadd.f32 %v5248, %v5281
        %v5283 = vadd.f32 %v5249, %v5281
        %v5284 = vadd.f32 %v5250, %v5281
        %v5285 = vadd.f32 %v5251, %v5281
        %v5286 = vxor.u32 %v5282, 2147483648
        %v5287 = vxor.u32 %v5283, 2147483648
        %v5288 = vxor.u32 %v5284, 2147483648
        %v5289 = vxor.u32 %v5285, 2147483648
        %v5290 = vmul.f32 %v5286, 1.442695
        %v5291 = vpow.pop %v5290
        %v5292 = vmul.f32 %v5287, 1.442695
        %v5293 = vpow.pop %v5292
        %v5294 = vmul.f32 %v5288, 1.442695
        %v5295 = vpow.pop %v5294
        %v5296 = vmul.f32 %v5289, 1.442695
        %v5297 = vpow.pop %v5296
        %v5298 = vadd.f32 %v5291, 1.0
        %v5299 = vadd.f32 %v5293, 1.0
        %v5300 = vadd.f32 %v5295, 1.0
        %v5301 = vadd.f32 %v5297, 1.0
        %v5302 = vrcp.pop %v5298
        %v5303 = vmul.f32 1.0, %v5302
        %v5304 = vrcp.pop %v5299
        %v5305 = vmul.f32 1.0, %v5304
        %v5306 = vrcp.pop %v5300
        %v5307 = vmul.f32 1.0, %v5306
        %v5308 = vrcp.pop %v5301
        %v5309 = vmul.f32 1.0, %v5308
        %v5310 = vadd.f32 %v5276, %v5281
        %v5311 = vadd.f32 %v5277, %v5281
        %v5312 = vadd.f32 %v5278, %v5281
        %v5313 = vadd.f32 %v5279, %v5281
        %v5314 = vxor.u32 %v5310, 2147483648
        %v5315 = vxor.u32 %v5311, 2147483648
        %v5316 = vxor.u32 %v5312, 2147483648
        %v5317 = vxor.u32 %v5313, 2147483648
        %v5318 = vmul.f32 %v5314, 1.442695
        %v5319 = vpow.pop %v5318
        %v5320 = vmul.f32 %v5315, 1.442695
        %v5321 = vpow.pop %v5320
        %v5322 = vmul.f32 %v5316, 1.442695
        %v5323 = vpow.pop %v5322
        %v5324 = vmul.f32 %v5317, 1.442695
        %v5325 = vpow.pop %v5324
        %v5326 = vadd.f32 %v5319, 1.0
        %v5327 = vadd.f32 %v5321, 1.0
        %v5328 = vadd.f32 %v5323, 1.0
        %v5329 = vadd.f32 %v5325, 1.0
        %v5330 = vrcp.pop %v5326
        %v5331 = vmul.f32 1.0, %v5330
        %v5332 = vrcp.pop %v5327
        %v5333 = vmul.f32 1.0, %v5332
        %v5334 = vrcp.pop %v5328
        %v5335 = vmul.f32 1.0, %v5334
        %v5336 = vrcp.pop %v5329
        %v5337 = vmul.f32 1.0, %v5336
        %v5338 = vmul.f32 %v5303, %v5331
        %v5339 = vmul.f32 %v5305, %v5333
        %v5340 = vmul.f32 %v5307, %v5335
        %v5341 = vmul.f32 %v5309, %v5337
        %v5342 = vmul.f32 %v1834, %v5338
        %v5343 = vmul.f32 %v1836, %v5339
        %v5344 = vmul.f32 %v1838, %v5340
        %v5345 = vmul.f32 %v1840, %v5341
        %v5350 = vcombine.low %v5342, %v5343
        %v5351 = vcombine.low %v5344, %v5345
        %v5353 = vunpack.c.l.s4 1966171168
        %v5354 = vunpack.c.0.s8 %v5353
        %v5355 = vlaneseq
        %v5356 = vshrl.u32 %v5355, 7
        %v5357 = vsub.s32 %v5354, %v5356
        %v5358 = vrot.slane %v5350, %v5357
        %v5360 = vunpack.c.l.s4 1966171168
        %v5361 = vunpack.c.0.s8 %v5360
        %v5362 = vlaneseq
        %v5363 = vshrl.u32 %v5362, 7
        %v5364 = vsub.s32 %v5361, %v5363
        %v5365 = vrot.slane %v5351, %v5364
        %v5366 = vcombine.low %v5358, %v5365
        %v5367 = vcombine.high %v5358, %v5365
        %v5369 = vunpack.c.l.s4 1966171168
        %v5370 = vunpack.c.0.s8 %v5369
        %v5371 = vlaneseq
        %v5372 = vshrl.u32 %v5371, 7
        %v5373 = vsub.s32 %v5370, %v5372
        %v5374 = vrot.slane %v5366, %v5373
        %v5376 = vunpack.c.l.s4 1966171168
        %v5377 = vunpack.c.0.s8 %v5376
        %v5378 = vlaneseq
        %v5379 = vshrl.u32 %v5378, 7
        %v5380 = vsub.s32 %v5377, %v5379
        %v5381 = vrot.slane %v5367, %v5380
        %v5384 = vsel %vm3357, %v5374, 0.0
        %v5385 = vsel %vm3357, %v5381, 0.0
        %v5386 = vadd.f32 %v5384, %v5385
        %5387 = vadd.xlane.f32.xlu0 %v5386
        %v5388 = vpop.xlane.xlu0 %5387
        %v5389 = vmul.f32 %v5388, 0.00390625
        %v5390 = vmul.f32 %v5342, %v5342
        %v5391 = vmul.f32 %v5343, %v5343
        %v5392 = vmul.f32 %v5344, %v5344
        %v5393 = vmul.f32 %v5345, %v5345
        %v5398 = vcombine.low %v5390, %v5391
        %v5399 = vcombine.low %v5392, %v5393
        %v5401 = vunpack.c.l.s4 1966171168
        %v5402 = vunpack.c.0.s8 %v5401
        %v5403 = vlaneseq
        %v5404 = vshrl.u32 %v5403, 7
        %v5405 = vsub.s32 %v5402, %v5404
        %v5406 = vrot.slane %v5398, %v5405
        %v5408 = vunpack.c.l.s4 1966171168
        %v5409 = vunpack.c.0.s8 %v5408
        %v5410 = vlaneseq
        %v5411 = vshrl.u32 %v5410, 7
        %v5412 = vsub.s32 %v5409, %v5411
        %v5413 = vrot.slane %v5399, %v5412
        %v5414 = vcombine.low %v5406, %v5413
        %v5415 = vcombine.high %v5406, %v5413
        %v5417 = vunpack.c.l.s4 1966171168
        %v5418 = vunpack.c.0.s8 %v5417
        %v5419 = vlaneseq
        %v5420 = vshrl.u32 %v5419, 7
        %v5421 = vsub.s32 %v5418, %v5420
        %v5422 = vrot.slane %v5414, %v5421
        %v5424 = vunpack.c.l.s4 1966171168
        %v5425 = vunpack.c.0.s8 %v5424
        %v5426 = vlaneseq
        %v5427 = vshrl.u32 %v5426, 7
        %v5428 = vsub.s32 %v5425, %v5427
        %v5429 = vrot.slane %v5415, %v5428
        %v5432 = vsel %vm3357, %v5422, 0.0
        %v5433 = vsel %vm3357, %v5429, 0.0
        %v5434 = vadd.f32 %v5432, %v5433
        %5435 = vadd.xlane.f32.xlu0 %v5434
        %v5436 = vpop.xlane.xlu0 %5435
        %v5437 = vmul.f32 %v5436, 0.00390625
        %v5438 = vmul.f32 %v5389, %v5389
        %v5439 = vsub.f32 %v5437, %v5438
        %v5440 = vmax.f32 %v5439, 0.0
        %v5442 = vlaneseq
        %v5443 = vshrl.u32 %v5442, 7
        %v5444 = vsub.s32 0, %v5443
        %v5445 = vrot.slane %v5389, %v5444
        %v5446 = vlaneseq
        %v5447 = vshrl.u32 %v5446, 7
        %v5448 = vsub.s32 1, %v5447
        %v5449 = vrot.slane %v5389, %v5448
        %v5450 = vlaneseq
        %v5451 = vshrl.u32 %v5450, 7
        %v5452 = vsub.s32 2, %v5451
        %v5453 = vrot.slane %v5389, %v5452
        %v5454 = vlaneseq
        %v5455 = vshrl.u32 %v5454, 7
        %v5456 = vsub.s32 3, %v5455
        %v5457 = vrot.slane %v5389, %v5456
        %v5462 = vsub.f32 %v5342, %v5445
        %v5463 = vsub.f32 %v5343, %v5449
        %v5464 = vsub.f32 %v5344, %v5453
        %v5465 = vsub.f32 %v5345, %v5457
        %v5466 = vadd.f32 %v5440, 1e-05
        %v5467 = vrsqrt.pop %v5466
        %v5469 = vlaneseq
        %v5470 = vshrl.u32 %v5469, 7
        %v5471 = vsub.s32 0, %v5470
        %v5472 = vrot.slane %v5467, %v5471
        %v5473 = vlaneseq
        %v5474 = vshrl.u32 %v5473, 7
        %v5475 = vsub.s32 1, %v5474
        %v5476 = vrot.slane %v5467, %v5475
        %v5477 = vlaneseq
        %v5478 = vshrl.u32 %v5477, 7
        %v5479 = vsub.s32 2, %v5478
        %v5480 = vrot.slane %v5467, %v5479
        %v5481 = vlaneseq
        %v5482 = vshrl.u32 %v5481, 7
        %v5483 = vsub.s32 3, %v5482
        %v5484 = vrot.slane %v5467, %v5483
        %v5489 = vmul.f32 %v5462, %v5472
        %v5490 = vmul.f32 %v5463, %v5476
        %v5491 = vmul.f32 %v5464, %v5480
        %v5492 = vmul.f32 %v5465, %v5484
        %s5493 = sld [smem:[#allocation14 + $0x2]]
        %v5494 = vstv %s5493
        %v5495 = vmul.f32 %v5489, %v5494
        %v5496 = vmul.f32 %v5490, %v5494
        %v5497 = vmul.f32 %v5491, %v5494
        %v5498 = vmul.f32 %v5492, %v5494
        %s5499 = sld [smem:[#allocation16 + $0x2]]
        %v5500 = vstv %s5499
        %v5501 = vadd.f32 %v5495, %v5500
        %v5502 = vadd.f32 %v5496, %v5500
        %v5503 = vadd.f32 %v5497, %v5500
        %v5504 = vadd.f32 %v5498, %v5500
        %v5509 = vcombine.low %v5501, %v5503
        %v5510 = vcombine.low %v5502, %v5504
        %v5512 = vunpack.c.l.s4 1935823168
        %v5513 = vunpack.c.0.s8 %v5512
        %v5514 = vlaneseq
        %v5515 = vshrl.u32 %v5514, 7
        %v5516 = vsub.s32 %v5513, %v5515
        %v5517 = vrot.slane %v5509, %v5516
        %v5519 = vunpack.c.l.s4 1935823168
        %v5520 = vunpack.c.0.s8 %v5519
        %v5521 = vlaneseq
        %v5522 = vshrl.u32 %v5521, 7
        %v5523 = vsub.s32 %v5520, %v5522
        %v5524 = vrot.slane %v5510, %v5523
        %v5525 = vcombine.low %v5517, %v5524
        %v5527 = vunpack.c.l.s4 1935823168
        %v5528 = vunpack.c.0.s8 %v5527
        %v5529 = vlaneseq
        %v5530 = vshrl.u32 %v5529, 7
        %v5531 = vsub.s32 %v5528, %v5530
        %v5532 = vrot.slane %v5525, %v5531
        %s5534 = scalar_lea.vmem [#allocation2], 16
        %5535 = vst [vmem:[%s5534] sm:$0xff] %v5532
        %v5536 = vcombine.low %v5501, %v5502
        %v5537 = vcombine.low %v5503, %v5504
        %v5539 = vunpack.c.l.s4 1966171168
        %v5540 = vunpack.c.0.s8 %v5539
        %v5541 = vlaneseq
        %v5542 = vshrl.u32 %v5541, 7
        %v5543 = vsub.s32 %v5540, %v5542
        %v5544 = vrot.slane %v5536, %v5543
        %v5546 = vunpack.c.l.s4 1966171168
        %v5547 = vunpack.c.0.s8 %v5546
        %v5548 = vlaneseq
        %v5549 = vshrl.u32 %v5548, 7
        %v5550 = vsub.s32 %v5547, %v5549
        %v5551 = vrot.slane %v5537, %v5550
        %v5552 = vcombine.low %v5544, %v5551
        %v5553 = vcombine.high %v5544, %v5551
        %v5555 = vunpack.c.l.s4 1966171168
        %v5556 = vunpack.c.0.s8 %v5555
        %v5557 = vlaneseq
        %v5558 = vshrl.u32 %v5557, 7
        %v5559 = vsub.s32 %v5556, %v5558
        %v5560 = vrot.slane %v5552, %v5559
        %v5562 = vunpack.c.l.s4 1966171168
        %v5563 = vunpack.c.0.s8 %v5562
        %v5564 = vlaneseq
        %v5565 = vshrl.u32 %v5564, 7
        %v5566 = vsub.s32 %v5563, %v5565
        %v5567 = vrot.slane %v5553, %v5566
        %v5570 = vsel %vm3357, %v5560, 0.0
        %v5571 = vsel %vm3357, %v5567, 0.0
        %v5572 = vadd.f32 %v5570, %v5571
        %5573 = vadd.xlane.f32.xlu0 %v5572
        %v5574 = vpop.xlane.xlu0 %5573
        %v5575 = vmul.f32 %v5574, 0.00390625
        %s5576 = sld [smem:[#allocation11 + $0x48]]
        %v5577 = vstv %s5576
        %v5578 = vmul.f32 %v5577, %v1077
        %v5579 = vmul.f32 %v5577, %v1078
        %s5580 = sld [smem:[#allocation11 + $0x49]]
        %v5581 = vstv %s5580
        %v5582 = vmul.f32 %v5581, %v1090
        %v5583 = vmul.f32 %v5581, %v1091
        %s5584 = sld [smem:[#allocation11 + $0x4a]]
        %v5585 = vstv %s5584
        %v5586 = vmul.f32 %v5585, %v1098
        %v5587 = vmul.f32 %v5585, %v1099
        %s5588 = sld [smem:[#allocation11 + $0x4b]]
        %v5589 = vstv %s5588
        %v5590 = vmul.f32 %v5589, %v1111
        %v5591 = vmul.f32 %v5589, %v1112
        %s5592 = sld [smem:[#allocation11 + $0x4c]]
        %v5593 = vstv %s5592
        %v5594 = vmul.f32 %v5593, %v398
        %v5595 = vmul.f32 %v5593, %v400
        %v5596 = vmul.f32 %v5593, %v402
        %v5597 = vmul.f32 %v5593, %v404
        %s5598 = sld [smem:[#allocation11 + $0x4d]]
        %v5599 = vstv %s5598
        %v5600 = vmul.f32 %v5599, %v1117
        %v5601 = vmul.f32 %v5599, %v1118
        %s5602 = sld [smem:[#allocation11 + $0x4e]]
        %v5603 = vstv %s5602
        %v5604 = vmul.f32 %v5603, %v1132
        %v5605 = vmul.f32 %v5603, %v1133
        %s5606 = sld [smem:[#allocation11 + $0x4f]]
        %v5607 = vstv %s5606
        %v5608 = vmul.f32 %v5607, %v1138
        %v5609 = vmul.f32 %v5607, %v1139
        %s5610 = sld [smem:[#allocation11 + $0x50]]
        %v5611 = vstv %s5610
        %v5612 = vmul.f32 %v5611, %v1153
        %v5613 = vmul.f32 %v5611, %v1154
        %v5614 = vadd.f32 %v5578, %v5582
        %v5615 = vadd.f32 %v5579, %v5583
        %v5616 = vadd.f32 %v5586, %v5590
        %v5617 = vadd.f32 %v5587, %v5591
        %v5620 = vcombine.low %v5600, %v5601
        %v5622 = vunpack.c.l.s4 1966171168
        %v5623 = vunpack.c.0.s8 %v5622
        %v5624 = vlaneseq
        %v5625 = vshrl.u32 %v5624, 7
        %v5626 = vsub.s32 %v5623, %v5625
        %v5627 = vrot.slane %v5620, %v5626
        %v5628 = vcombine.high %v5627, %v5627
        %v5630 = vunpack.c.l.s4 1966171168
        %v5631 = vunpack.c.0.s8 %v5630
        %v5632 = vlaneseq
        %v5633 = vshrl.u32 %v5632, 7
        %v5634 = vsub.s32 %v5631, %v5633
        %v5635 = vrot.slane %v5627, %v5634
        %v5637 = vunpack.c.l.s4 1966171168
        %v5638 = vunpack.c.0.s8 %v5637
        %v5639 = vlaneseq
        %v5640 = vshrl.u32 %v5639, 7
        %v5641 = vsub.s32 %v5638, %v5640
        %v5642 = vrot.slane %v5628, %v5641
        %v5643 = vcombine.high %v5635, %v5635
        %v5644 = vcombine.high %v5642, %v5642
        %v5649 = vadd.f32 %v5594, %v5635
        %v5650 = vadd.f32 %v5595, %v5642
        %v5651 = vadd.f32 %v5596, %v5643
        %v5652 = vadd.f32 %v5597, %v5644
        %v5653 = vadd.f32 %v5604, %v5608
        %v5654 = vadd.f32 %v5605, %v5609
        %v5655 = vadd.f32 %v5614, %v5616
        %v5656 = vadd.f32 %v5615, %v5617
        %v5659 = vcombine.low %v5653, %v5654
        %v5661 = vunpack.c.l.s4 1966171168
        %v5662 = vunpack.c.0.s8 %v5661
        %v5663 = vlaneseq
        %v5664 = vshrl.u32 %v5663, 7
        %v5665 = vsub.s32 %v5662, %v5664
        %v5666 = vrot.slane %v5659, %v5665
        %v5667 = vcombine.high %v5666, %v5666
        %v5669 = vunpack.c.l.s4 1966171168
        %v5670 = vunpack.c.0.s8 %v5669
        %v5671 = vlaneseq
        %v5672 = vshrl.u32 %v5671, 7
        %v5673 = vsub.s32 %v5670, %v5672
        %v5674 = vrot.slane %v5666, %v5673
        %v5676 = vunpack.c.l.s4 1966171168
        %v5677 = vunpack.c.0.s8 %v5676
        %v5678 = vlaneseq
        %v5679 = vshrl.u32 %v5678, 7
        %v5680 = vsub.s32 %v5677, %v5679
        %v5681 = vrot.slane %v5667, %v5680
        %v5682 = vcombine.high %v5674, %v5674
        %v5683 = vcombine.high %v5681, %v5681
        %v5688 = vadd.f32 %v5649, %v5674
        %v5689 = vadd.f32 %v5650, %v5681
        %v5690 = vadd.f32 %v5651, %v5682
        %v5691 = vadd.f32 %v5652, %v5683
        %v5696 = vcombine.low %v5688, %v5689
        %v5697 = vcombine.low %v5690, %v5691
        %v5699 = vunpack.c.l.s4 1966171168
        %v5700 = vunpack.c.0.s8 %v5699
        %v5701 = vlaneseq
        %v5702 = vshrl.u32 %v5701, 7
        %v5703 = vsub.s32 %v5700, %v5702
        %v5704 = vrot.slane %v5696, %v5703
        %v5706 = vunpack.c.l.s4 1966171168
        %v5707 = vunpack.c.0.s8 %v5706
        %v5708 = vlaneseq
        %v5709 = vshrl.u32 %v5708, 7
        %v5710 = vsub.s32 %v5707, %v5709
        %v5711 = vrot.slane %v5697, %v5710
        %v5712 = vcombine.low %v5704, %v5711
        %v5713 = vcombine.high %v5704, %v5711
        %v5715 = vunpack.c.l.s4 1966171168
        %v5716 = vunpack.c.0.s8 %v5715
        %v5717 = vlaneseq
        %v5718 = vshrl.u32 %v5717, 7
        %v5719 = vsub.s32 %v5716, %v5718
        %v5720 = vrot.slane %v5712, %v5719
        %v5722 = vunpack.c.l.s4 1966171168
        %v5723 = vunpack.c.0.s8 %v5722
        %v5724 = vlaneseq
        %v5725 = vshrl.u32 %v5724, 7
        %v5726 = vsub.s32 %v5723, %v5725
        %v5727 = vrot.slane %v5713, %v5726
        %v5730 = vadd.f32 %v5655, %v5720
        %v5731 = vadd.f32 %v5656, %v5727
        %v5732 = vadd.f32 %v5730, %v5612
        %v5733 = vadd.f32 %v5731, %v5613
        %s5734 = sld [smem:[#allocation11 + $0x51]]
        %v5735 = vstv %s5734
        %v5736 = vmul.f32 %v5735, %v1793
        %v5737 = vmul.f32 %v5735, %v1794
        %s5738 = sld [smem:[#allocation11 + $0x52]]
        %v5739 = vstv %s5738
        %v5740 = vmul.f32 %v5739, %v1801
        %v5741 = vmul.f32 %v5739, %v1802
        %s5742 = sld [smem:[#allocation11 + $0x53]]
        %v5743 = vstv %s5742
        %v5744 = vmul.f32 %v5743, %v1803
        %v5745 = vmul.f32 %v5743, %v1804
        %s5746 = sld [smem:[#allocation11 + $0x54]]
        %v5747 = vstv %s5746
        %v5748 = vmul.f32 %v5747, %v1811
        %v5749 = vmul.f32 %v5747, %v1812
        %s5750 = sld [smem:[#allocation11 + $0x55]]
        %v5751 = vstv %s5750
        %v5752 = vmul.f32 %v5751, %v1156
        %v5753 = vmul.f32 %v5751, %v1158
        %v5754 = vmul.f32 %v5751, %v1160
        %v5755 = vmul.f32 %v5751, %v1162
        %s5756 = sld [smem:[#allocation11 + $0x56]]
        %v5757 = vstv %s5756
        %v5758 = vmul.f32 %v5757, %v1813
        %v5759 = vmul.f32 %v5757, %v1814
        %s5760 = sld [smem:[#allocation11 + $0x57]]
        %v5761 = vstv %s5760
        %v5762 = vmul.f32 %v5761, %v1821
        %v5763 = vmul.f32 %v5761, %v1822
        %s5764 = sld [smem:[#allocation11 + $0x58]]
        %v5765 = vstv %s5764
        %v5766 = vmul.f32 %v5765, %v1823
        %v5767 = vmul.f32 %v5765, %v1824
        %s5768 = sld [smem:[#allocation11 + $0x59]]
        %v5769 = vstv %s5768
        %v5770 = vmul.f32 %v5769, %v1831
        %v5771 = vmul.f32 %v5769, %v1832
        %v5772 = vadd.f32 %v5736, %v5740
        %v5773 = vadd.f32 %v5737, %v5741
        %v5774 = vadd.f32 %v5744, %v5748
        %v5775 = vadd.f32 %v5745, %v5749
        %v5778 = vcombine.low %v5758, %v5759
        %v5780 = vunpack.c.l.s4 1966171168
        %v5781 = vunpack.c.0.s8 %v5780
        %v5782 = vlaneseq
        %v5783 = vshrl.u32 %v5782, 7
        %v5784 = vsub.s32 %v5781, %v5783
        %v5785 = vrot.slane %v5778, %v5784
        %v5786 = vcombine.high %v5785, %v5785
        %v5788 = vunpack.c.l.s4 1966171168
        %v5789 = vunpack.c.0.s8 %v5788
        %v5790 = vlaneseq
        %v5791 = vshrl.u32 %v5790, 7
        %v5792 = vsub.s32 %v5789, %v5791
        %v5793 = vrot.slane %v5785, %v5792
        %v5795 = vunpack.c.l.s4 1966171168
        %v5796 = vunpack.c.0.s8 %v5795
        %v5797 = vlaneseq
        %v5798 = vshrl.u32 %v5797, 7
        %v5799 = vsub.s32 %v5796, %v5798
        %v5800 = vrot.slane %v5786, %v5799
        %v5801 = vcombine.high %v5793, %v5793
        %v5802 = vcombine.high %v5800, %v5800
        %v5807 = vadd.f32 %v5752, %v5793
        %v5808 = vadd.f32 %v5753, %v5800
        %v5809 = vadd.f32 %v5754, %v5801
        %v5810 = vadd.f32 %v5755, %v5802
        %v5811 = vadd.f32 %v5762, %v5766
        %v5812 = vadd.f32 %v5763, %v5767
        %v5813 = vadd.f32 %v5772, %v5774
        %v5814 = vadd.f32 %v5773, %v5775
        %v5817 = vcombine.low %v5811, %v5812
        %v5819 = vunpack.c.l.s4 1966171168
        %v5820 = vunpack.c.0.s8 %v5819
        %v5821 = vlaneseq
        %v5822 = vshrl.u32 %v5821, 7
        %v5823 = vsub.s32 %v5820, %v5822
        %v5824 = vrot.slane %v5817, %v5823
        %v5825 = vcombine.high %v5824, %v5824
        %v5827 = vunpack.c.l.s4 1966171168
        %v5828 = vunpack.c.0.s8 %v5827
        %v5829 = vlaneseq
        %v5830 = vshrl.u32 %v5829, 7
        %v5831 = vsub.s32 %v5828, %v5830
        %v5832 = vrot.slane %v5824, %v5831
        %v5834 = vunpack.c.l.s4 1966171168
        %v5835 = vunpack.c.0.s8 %v5834
        %v5836 = vlaneseq
        %v5837 = vshrl.u32 %v5836, 7
        %v5838 = vsub.s32 %v5835, %v5837
        %v5839 = vrot.slane %v5825, %v5838
        %v5840 = vcombine.high %v5832, %v5832
        %v5841 = vcombine.high %v5839, %v5839
        %v5846 = vadd.f32 %v5807, %v5832
        %v5847 = vadd.f32 %v5808, %v5839
        %v5848 = vadd.f32 %v5809, %v5840
        %v5849 = vadd.f32 %v5810, %v5841
        %v5854 = vcombine.low %v5846, %v5847
        %v5855 = vcombine.low %v5848, %v5849
        %v5857 = vunpack.c.l.s4 1966171168
        %v5858 = vunpack.c.0.s8 %v5857
        %v5859 = vlaneseq
        %v5860 = vshrl.u32 %v5859, 7
        %v5861 = vsub.s32 %v5858, %v5860
        %v5862 = vrot.slane %v5854, %v5861
        %v5864 = vunpack.c.l.s4 1966171168
        %v5865 = vunpack.c.0.s8 %v5864
        %v5866 = vlaneseq
        %v5867 = vshrl.u32 %v5866, 7
        %v5868 = vsub.s32 %v5865, %v5867
        %v5869 = vrot.slane %v5855, %v5868
        %v5870 = vcombine.low %v5862, %v5869
        %v5871 = vcombine.high %v5862, %v5869
        %v5873 = vunpack.c.l.s4 1966171168
        %v5874 = vunpack.c.0.s8 %v5873
        %v5875 = vlaneseq
        %v5876 = vshrl.u32 %v5875, 7
        %v5877 = vsub.s32 %v5874, %v5876
        %v5878 = vrot.slane %v5870, %v5877
        %v5880 = vunpack.c.l.s4 1966171168
        %v5881 = vunpack.c.0.s8 %v5880
        %v5882 = vlaneseq
        %v5883 = vshrl.u32 %v5882, 7
        %v5884 = vsub.s32 %v5881, %v5883
        %v5885 = vrot.slane %v5871, %v5884
        %v5888 = vadd.f32 %v5813, %v5878
        %v5889 = vadd.f32 %v5814, %v5885
        %v5890 = vadd.f32 %v5888, %v5770
        %v5891 = vadd.f32 %v5889, %v5771
        %s5892 = sld [smem:[#allocation11 + $0x5a]]
        %v5893 = vstv %s5892
        %v5894 = vmul.f32 %v5893, %v2471
        %v5895 = vmul.f32 %v5893, %v2472
        %s5896 = sld [smem:[#allocation11 + $0x5b]]
        %v5897 = vstv %s5896
        %v5898 = vmul.f32 %v5897, %v2479
        %v5899 = vmul.f32 %v5897, %v2480
        %s5900 = sld [smem:[#allocation11 + $0x5c]]
        %v5901 = vstv %s5900
        %v5902 = vmul.f32 %v5901, %v2481
        %v5903 = vmul.f32 %v5901, %v2482
        %s5904 = sld [smem:[#allocation11 + $0x5d]]
        %v5905 = vstv %s5904
        %v5906 = vmul.f32 %v5905, %v2489
        %v5907 = vmul.f32 %v5905, %v2490
        %s5908 = sld [smem:[#allocation11 + $0x5e]]
        %v5909 = vstv %s5908
        %v5910 = vmul.f32 %v5909, %v1834
        %v5911 = vmul.f32 %v5909, %v1836
        %v5912 = vmul.f32 %v5909, %v1838
        %v5913 = vmul.f32 %v5909, %v1840
        %s5914 = sld [smem:[#allocation11 + $0x5f]]
        %v5915 = vstv %s5914
        %v5916 = vmul.f32 %v5915, %v2491
        %v5917 = vmul.f32 %v5915, %v2492
        %s5918 = sld [smem:[#allocation11 + $0x60]]
        %v5919 = vstv %s5918
        %v5920 = vmul.f32 %v5919, %v2499
        %v5921 = vmul.f32 %v5919, %v2500
        %s5922 = sld [smem:[#allocation11 + $0x61]]
        %v5923 = vstv %s5922
        %v5924 = vmul.f32 %v5923, %v2501
        %v5925 = vmul.f32 %v5923, %v2502
        %s5926 = sld [smem:[#allocation11 + $0x62]]
        %v5927 = vstv %s5926
        %v5928 = vmul.f32 %v5927, %v2509
        %v5929 = vmul.f32 %v5927, %v2510
        %v5930 = vadd.f32 %v5894, %v5898
        %v5931 = vadd.f32 %v5895, %v5899
        %v5932 = vadd.f32 %v5902, %v5906
        %v5933 = vadd.f32 %v5903, %v5907
        %v5936 = vcombine.low %v5916, %v5917
        %v5938 = vunpack.c.l.s4 1966171168
        %v5939 = vunpack.c.0.s8 %v5938
        %v5940 = vlaneseq
        %v5941 = vshrl.u32 %v5940, 7
        %v5942 = vsub.s32 %v5939, %v5941
        %v5943 = vrot.slane %v5936, %v5942
        %v5944 = vcombine.high %v5943, %v5943
        %v5946 = vunpack.c.l.s4 1966171168
        %v5947 = vunpack.c.0.s8 %v5946
        %v5948 = vlaneseq
        %v5949 = vshrl.u32 %v5948, 7
        %v5950 = vsub.s32 %v5947, %v5949
        %v5951 = vrot.slane %v5943, %v5950
        %v5953 = vunpack.c.l.s4 1966171168
        %v5954 = vunpack.c.0.s8 %v5953
        %v5955 = vlaneseq
        %v5956 = vshrl.u32 %v5955, 7
        %v5957 = vsub.s32 %v5954, %v5956
        %v5958 = vrot.slane %v5944, %v5957
        %v5959 = vcombine.high %v5951, %v5951
        %v5960 = vcombine.high %v5958, %v5958
        %v5965 = vadd.f32 %v5910, %v5951
        %v5966 = vadd.f32 %v5911, %v5958
        %v5967 = vadd.f32 %v5912, %v5959
        %v5968 = vadd.f32 %v5913, %v5960
        %v5969 = vadd.f32 %v5920, %v5924
        %v5970 = vadd.f32 %v5921, %v5925
        %v5971 = vadd.f32 %v5930, %v5932
        %v5972 = vadd.f32 %v5931, %v5933
        %v5975 = vcombine.low %v5969, %v5970
        %v5977 = vunpack.c.l.s4 1966171168
        %v5978 = vunpack.c.0.s8 %v5977
        %v5979 = vlaneseq
        %v5980 = vshrl.u32 %v5979, 7
        %v5981 = vsub.s32 %v5978, %v5980
        %v5982 = vrot.slane %v5975, %v5981
        %v5983 = vcombine.high %v5982, %v5982
        %v5985 = vunpack.c.l.s4 1966171168
        %v5986 = vunpack.c.0.s8 %v5985
        %v5987 = vlaneseq
        %v5988 = vshrl.u32 %v5987, 7
        %v5989 = vsub.s32 %v5986, %v5988
        %v5990 = vrot.slane %v5982, %v5989
        %v5992 = vunpack.c.l.s4 1966171168
        %v5993 = vunpack.c.0.s8 %v5992
        %v5994 = vlaneseq
        %v5995 = vshrl.u32 %v5994, 7
        %v5996 = vsub.s32 %v5993, %v5995
        %v5997 = vrot.slane %v5983, %v5996
        %v5998 = vcombine.high %v5990, %v5990
        %v5999 = vcombine.high %v5997, %v5997
        %v6004 = vadd.f32 %v5965, %v5990
        %v6005 = vadd.f32 %v5966, %v5997
        %v6006 = vadd.f32 %v5967, %v5998
        %v6007 = vadd.f32 %v5968, %v5999
        %v6012 = vcombine.low %v6004, %v6005
        %v6013 = vcombine.low %v6006, %v6007
        %v6015 = vunpack.c.l.s4 1966171168
        %v6016 = vunpack.c.0.s8 %v6015
        %v6017 = vlaneseq
        %v6018 = vshrl.u32 %v6017, 7
        %v6019 = vsub.s32 %v6016, %v6018
        %v6020 = vrot.slane %v6012, %v6019
        %v6022 = vunpack.c.l.s4 1966171168
        %v6023 = vunpack.c.0.s8 %v6022
        %v6024 = vlaneseq
        %v6025 = vshrl.u32 %v6024, 7
        %v6026 = vsub.s32 %v6023, %v6025
        %v6027 = vrot.slane %v6013, %v6026
        %v6028 = vcombine.low %v6020, %v6027
        %v6029 = vcombine.high %v6020, %v6027
        %v6031 = vunpack.c.l.s4 1966171168
        %v6032 = vunpack.c.0.s8 %v6031
        %v6033 = vlaneseq
        %v6034 = vshrl.u32 %v6033, 7
        %v6035 = vsub.s32 %v6032, %v6034
        %v6036 = vrot.slane %v6028, %v6035
        %v6038 = vunpack.c.l.s4 1966171168
        %v6039 = vunpack.c.0.s8 %v6038
        %v6040 = vlaneseq
        %v6041 = vshrl.u32 %v6040, 7
        %v6042 = vsub.s32 %v6039, %v6041
        %v6043 = vrot.slane %v6029, %v6042
        %v6046 = vadd.f32 %v5971, %v6036
        %v6047 = vadd.f32 %v5972, %v6043
        %v6048 = vadd.f32 %v6046, %v5928
        %v6049 = vadd.f32 %v6047, %v5929
        %s6050 = sld [smem:[#allocation11 + $0x63]]
        %v6051 = vstv %s6050
        %v6052 = vmul.f32 %v6051, %v3149
        %v6053 = vmul.f32 %v6051, %v3150
        %s6054 = sld [smem:[#allocation11 + $0x64]]
        %v6055 = vstv %s6054
        %v6056 = vmul.f32 %v6055, %v3157
        %v6057 = vmul.f32 %v6055, %v3158
        %s6058 = sld [smem:[#allocation11 + $0x65]]
        %v6059 = vstv %s6058
        %v6060 = vmul.f32 %v6059, %v3159
        %v6061 = vmul.f32 %v6059, %v3160
        %s6062 = sld [smem:[#allocation11 + $0x66]]
        %v6063 = vstv %s6062
        %v6064 = vmul.f32 %v6063, %v3167
        %v6065 = vmul.f32 %v6063, %v3168
        %s6066 = sld [smem:[#allocation11 + $0x67]]
        %v6067 = vstv %s6066
        %v6068 = vmul.f32 %v6067, %v2512
        %v6069 = vmul.f32 %v6067, %v2514
        %v6070 = vmul.f32 %v6067, %v2516
        %v6071 = vmul.f32 %v6067, %v2518
        %s6072 = sld [smem:[#allocation11 + $0x68]]
        %v6073 = vstv %s6072
        %v6074 = vmul.f32 %v6073, %v3169
        %v6075 = vmul.f32 %v6073, %v3170
        %s6076 = sld [smem:[#allocation11 + $0x69]]
        %v6077 = vstv %s6076
        %v6078 = vmul.f32 %v6077, %v3177
        %v6079 = vmul.f32 %v6077, %v3178
        %s6080 = sld [smem:[#allocation11 + $0x6a]]
        %v6081 = vstv %s6080
        %v6082 = vmul.f32 %v6081, %v3179
        %v6083 = vmul.f32 %v6081, %v3180
        %s6084 = sld [smem:[#allocation11 + $0x6b]]
        %v6085 = vstv %s6084
        %v6086 = vmul.f32 %v6085, %v3187
        %v6087 = vmul.f32 %v6085, %v3188
        %v6088 = vadd.f32 %v6052, %v6056
        %v6089 = vadd.f32 %v6053, %v6057
        %v6090 = vadd.f32 %v6060, %v6064
        %v6091 = vadd.f32 %v6061, %v6065
        %v6094 = vcombine.low %v6074, %v6075
        %v6096 = vunpack.c.l.s4 1966171168
        %v6097 = vunpack.c.0.s8 %v6096
        %v6098 = vlaneseq
        %v6099 = vshrl.u32 %v6098, 7
        %v6100 = vsub.s32 %v6097, %v6099
        %v6101 = vrot.slane %v6094, %v6100
        %v6102 = vcombine.high %v6101, %v6101
        %v6104 = vunpack.c.l.s4 1966171168
        %v6105 = vunpack.c.0.s8 %v6104
        %v6106 = vlaneseq
        %v6107 = vshrl.u32 %v6106, 7
        %v6108 = vsub.s32 %v6105, %v6107
        %v6109 = vrot.slane %v6101, %v6108
        %v6111 = vunpack.c.l.s4 1966171168
        %v6112 = vunpack.c.0.s8 %v6111
        %v6113 = vlaneseq
        %v6114 = vshrl.u32 %v6113, 7
        %v6115 = vsub.s32 %v6112, %v6114
        %v6116 = vrot.slane %v6102, %v6115
        %v6117 = vcombine.high %v6109, %v6109
        %v6118 = vcombine.high %v6116, %v6116
        %v6123 = vadd.f32 %v6068, %v6109
        %v6124 = vadd.f32 %v6069, %v6116
        %v6125 = vadd.f32 %v6070, %v6117
        %v6126 = vadd.f32 %v6071, %v6118
        %v6127 = vadd.f32 %v6078, %v6082
        %v6128 = vadd.f32 %v6079, %v6083
        %v6129 = vadd.f32 %v6088, %v6090
        %v6130 = vadd.f32 %v6089, %v6091
        %v6133 = vcombine.low %v6127, %v6128
        %v6135 = vunpack.c.l.s4 1966171168
        %v6136 = vunpack.c.0.s8 %v6135
        %v6137 = vlaneseq
        %v6138 = vshrl.u32 %v6137, 7
        %v6139 = vsub.s32 %v6136, %v6138
        %v6140 = vrot.slane %v6133, %v6139
        %v6141 = vcombine.high %v6140, %v6140
        %v6143 = vunpack.c.l.s4 1966171168
        %v6144 = vunpack.c.0.s8 %v6143
        %v6145 = vlaneseq
        %v6146 = vshrl.u32 %v6145, 7
        %v6147 = vsub.s32 %v6144, %v6146
        %v6148 = vrot.slane %v6140, %v6147
        %v6150 = vunpack.c.l.s4 1966171168
        %v6151 = vunpack.c.0.s8 %v6150
        %v6152 = vlaneseq
        %v6153 = vshrl.u32 %v6152, 7
        %v6154 = vsub.s32 %v6151, %v6153
        %v6155 = vrot.slane %v6141, %v6154
        %v6156 = vcombine.high %v6148, %v6148
        %v6157 = vcombine.high %v6155, %v6155
        %v6162 = vadd.f32 %v6123, %v6148
        %v6163 = vadd.f32 %v6124, %v6155
        %v6164 = vadd.f32 %v6125, %v6156
        %v6165 = vadd.f32 %v6126, %v6157
        %v6170 = vcombine.low %v6162, %v6163
        %v6171 = vcombine.low %v6164, %v6165
        %v6173 = vunpack.c.l.s4 1966171168
        %v6174 = vunpack.c.0.s8 %v6173
        %v6175 = vlaneseq
        %v6176 = vshrl.u32 %v6175, 7
        %v6177 = vsub.s32 %v6174, %v6176
        %v6178 = vrot.slane %v6170, %v6177
        %v6180 = vunpack.c.l.s4 1966171168
        %v6181 = vunpack.c.0.s8 %v6180
        %v6182 = vlaneseq
        %v6183 = vshrl.u32 %v6182, 7
        %v6184 = vsub.s32 %v6181, %v6183
        %v6185 = vrot.slane %v6171, %v6184
        %v6186 = vcombine.low %v6178, %v6185
        %v6187 = vcombine.high %v6178, %v6185
        %v6189 = vunpack.c.l.s4 1966171168
        %v6190 = vunpack.c.0.s8 %v6189
        %v6191 = vlaneseq
        %v6192 = vshrl.u32 %v6191, 7
        %v6193 = vsub.s32 %v6190, %v6192
        %v6194 = vrot.slane %v6186, %v6193
        %v6196 = vunpack.c.l.s4 1966171168
        %v6197 = vunpack.c.0.s8 %v6196
        %v6198 = vlaneseq
        %v6199 = vshrl.u32 %v6198, 7
        %v6200 = vsub.s32 %v6197, %v6199
        %v6201 = vrot.slane %v6187, %v6200
        %v6204 = vadd.f32 %v6129, %v6194
        %v6205 = vadd.f32 %v6130, %v6201
        %v6206 = vadd.f32 %v6204, %v6086
        %v6207 = vadd.f32 %v6205, %v6087
        %v6208 = vadd.f32 %v5732, %v5890
        %v6209 = vadd.f32 %v5733, %v5891
        %v6210 = vadd.f32 %v6048, %v6206
        %v6211 = vadd.f32 %v6049, %v6207
        %v6212 = vadd.f32 %v6208, %v6210
        %v6213 = vadd.f32 %v6209, %v6211
        %s6214 = sld [smem:[#allocation13 + $0x2]]
        %v6215 = vstv %s6214
        %v6216 = vadd.f32 %v6212, %v6215
        %v6217 = vadd.f32 %v6213, %v6215
        %v6220 = vcombine.low %v6216, %v6217
        %s6222 = scalar_lea.vmem [#allocation3], 16
        %6223 = vst [vmem:[%s6222] sm:$0xff] %v6220
        %v6224 = vsel %vm3357, %v6216, 0.0
        %v6225 = vsel %vm3357, %v6217, 0.0
        %v6226 = vadd.f32 %v6224, %v6225
        %6227 = vadd.xlane.f32.xlu0 %v6226
        %v6228 = vpop.xlane.xlu0 %6227
        %v6229 = vmul.f32 %v6228, 0.00390625
        %s6230 = sld [smem:[#allocation9 + $0xc]]
        %v6231 = vstv %s6230
        %v6232 = vmul.f32 %v6231, %v1060
        %v6233 = vmul.f32 %v6231, %v1061
        %v6234 = vmul.f32 %v6231, %v1062
        %v6235 = vmul.f32 %v6231, %v1063
        %s6236 = sld [smem:[#allocation9 + $0xd]]
        %v6237 = vstv %s6236
        %v6238 = vmul.f32 %v6237, %v1783
        %v6239 = vmul.f32 %v6237, %v1784
        %v6240 = vmul.f32 %v6237, %v1785
        %v6241 = vmul.f32 %v6237, %v1786
        %s6242 = sld [smem:[#allocation9 + $0xe]]
        %v6243 = vstv %s6242
        %v6244 = vmul.f32 %v6243, %v2461
        %v6245 = vmul.f32 %v6243, %v2462
        %v6246 = vmul.f32 %v6243, %v2463
        %v6247 = vmul.f32 %v6243, %v2464
        %s6248 = sld [smem:[#allocation9 + $0xf]]
        %v6249 = vstv %s6248
        %v6250 = vmul.f32 %v6249, %v3139
        %v6251 = vmul.f32 %v6249, %v3140
        %v6252 = vmul.f32 %v6249, %v3141
        %v6253 = vmul.f32 %v6249, %v3142
        %v6254 = vadd.f32 %v6232, %v6238
        %v6255 = vadd.f32 %v6233, %v6239
        %v6256 = vadd.f32 %v6234, %v6240
        %v6257 = vadd.f32 %v6235, %v6241
        %v6258 = vadd.f32 %v6244, %v6250
        %v6259 = vadd.f32 %v6245, %v6251
        %v6260 = vadd.f32 %v6246, %v6252
        %v6261 = vadd.f32 %v6247, %v6253
        %v6262 = vadd.f32 %v6254, %v6258
        %v6263 = vadd.f32 %v6255, %v6259
        %v6264 = vadd.f32 %v6256, %v6260
        %v6265 = vadd.f32 %v6257, %v6261
        %v6266 = vmul.f32 %v6231, %v714
        %v6267 = vmul.f32 %v6231, %v715
        %v6268 = vmul.f32 %v6231, %v716
        %v6269 = vmul.f32 %v6231, %v717
        %v6270 = vmul.f32 %v6237, %v1469
        %v6271 = vmul.f32 %v6237, %v1470
        %v6272 = vmul.f32 %v6237, %v1471
        %v6273 = vmul.f32 %v6237, %v1472
        %v6274 = vmul.f32 %v6243, %v2147
        %v6275 = vmul.f32 %v6243, %v2148
        %v6276 = vmul.f32 %v6243, %v2149
        %v6277 = vmul.f32 %v6243, %v2150
        %v6278 = vmul.f32 %v6249, %v2825
        %v6279 = vmul.f32 %v6249, %v2826
        %v6280 = vmul.f32 %v6249, %v2827
        %v6281 = vmul.f32 %v6249, %v2828
        %v6282 = vadd.f32 %v6266, %v6270
        %v6283 = vadd.f32 %v6267, %v6271
        %v6284 = vadd.f32 %v6268, %v6272
        %v6285 = vadd.f32 %v6269, %v6273
        %v6286 = vadd.f32 %v6274, %v6278
        %v6287 = vadd.f32 %v6275, %v6279
        %v6288 = vadd.f32 %v6276, %v6280
        %v6289 = vadd.f32 %v6277, %v6281
        %v6290 = vadd.f32 %v6282, %v6286
        %v6291 = vadd.f32 %v6283, %v6287
        %v6292 = vadd.f32 %v6284, %v6288
        %v6293 = vadd.f32 %v6285, %v6289
        %s6294 = sld [smem:[#allocation10 + $0x3]]
        %v6295 = vstv %s6294
        %v6296 = vadd.f32 %v6262, %v6295
        %v6297 = vadd.f32 %v6263, %v6295
        %v6298 = vadd.f32 %v6264, %v6295
        %v6299 = vadd.f32 %v6265, %v6295
        %v6300 = vxor.u32 %v6296, 2147483648
        %v6301 = vxor.u32 %v6297, 2147483648
        %v6302 = vxor.u32 %v6298, 2147483648
        %v6303 = vxor.u32 %v6299, 2147483648
        %v6304 = vmul.f32 %v6300, 1.442695
        %v6305 = vpow.pop %v6304
        %v6306 = vmul.f32 %v6301, 1.442695
        %v6307 = vpow.pop %v6306
        %v6308 = vmul.f32 %v6302, 1.442695
        %v6309 = vpow.pop %v6308
        %v6310 = vmul.f32 %v6303, 1.442695
        %v6311 = vpow.pop %v6310
        %v6312 = vadd.f32 %v6305, 1.0
        %v6313 = vadd.f32 %v6307, 1.0
        %v6314 = vadd.f32 %v6309, 1.0
        %v6315 = vadd.f32 %v6311, 1.0
        %v6316 = vrcp.pop %v6312
        %v6317 = vmul.f32 1.0, %v6316
        %v6318 = vrcp.pop %v6313
        %v6319 = vmul.f32 1.0, %v6318
        %v6320 = vrcp.pop %v6314
        %v6321 = vmul.f32 1.0, %v6320
        %v6322 = vrcp.pop %v6315
        %v6323 = vmul.f32 1.0, %v6322
        %v6324 = vadd.f32 %v6290, %v6295
        %v6325 = vadd.f32 %v6291, %v6295
        %v6326 = vadd.f32 %v6292, %v6295
        %v6327 = vadd.f32 %v6293, %v6295
        %v6328 = vxor.u32 %v6324, 2147483648
        %v6329 = vxor.u32 %v6325, 2147483648
        %v6330 = vxor.u32 %v6326, 2147483648
        %v6331 = vxor.u32 %v6327, 2147483648
        %v6332 = vmul.f32 %v6328, 1.442695
        %v6333 = vpow.pop %v6332
        %v6334 = vmul.f32 %v6329, 1.442695
        %v6335 = vpow.pop %v6334
        %v6336 = vmul.f32 %v6330, 1.442695
        %v6337 = vpow.pop %v6336
        %v6338 = vmul.f32 %v6331, 1.442695
        %v6339 = vpow.pop %v6338
        %v6340 = vadd.f32 %v6333, 1.0
        %v6341 = vadd.f32 %v6335, 1.0
        %v6342 = vadd.f32 %v6337, 1.0
        %v6343 = vadd.f32 %v6339, 1.0
        %v6344 = vrcp.pop %v6340
        %v6345 = vmul.f32 1.0, %v6344
        %v6346 = vrcp.pop %v6341
        %v6347 = vmul.f32 1.0, %v6346
        %v6348 = vrcp.pop %v6342
        %v6349 = vmul.f32 1.0, %v6348
        %v6350 = vrcp.pop %v6343
        %v6351 = vmul.f32 1.0, %v6350
        %v6352 = vmul.f32 %v6317, %v6345
        %v6353 = vmul.f32 %v6319, %v6347
        %v6354 = vmul.f32 %v6321, %v6349
        %v6355 = vmul.f32 %v6323, %v6351
        %v6356 = vmul.f32 %v2512, %v6352
        %v6357 = vmul.f32 %v2514, %v6353
        %v6358 = vmul.f32 %v2516, %v6354
        %v6359 = vmul.f32 %v2518, %v6355
        %v6364 = vcombine.low %v6356, %v6357
        %v6365 = vcombine.low %v6358, %v6359
        %v6367 = vunpack.c.l.s4 1966171168
        %v6368 = vunpack.c.0.s8 %v6367
        %v6369 = vlaneseq
        %v6370 = vshrl.u32 %v6369, 7
        %v6371 = vsub.s32 %v6368, %v6370
        %v6372 = vrot.slane %v6364, %v6371
        %v6374 = vunpack.c.l.s4 1966171168
        %v6375 = vunpack.c.0.s8 %v6374
        %v6376 = vlaneseq
        %v6377 = vshrl.u32 %v6376, 7
        %v6378 = vsub.s32 %v6375, %v6377
        %v6379 = vrot.slane %v6365, %v6378
        %v6380 = vcombine.low %v6372, %v6379
        %v6381 = vcombine.high %v6372, %v6379
        %v6383 = vunpack.c.l.s4 1966171168
        %v6384 = vunpack.c.0.s8 %v6383
        %v6385 = vlaneseq
        %v6386 = vshrl.u32 %v6385, 7
        %v6387 = vsub.s32 %v6384, %v6386
        %v6388 = vrot.slane %v6380, %v6387
        %v6390 = vunpack.c.l.s4 1966171168
        %v6391 = vunpack.c.0.s8 %v6390
        %v6392 = vlaneseq
        %v6393 = vshrl.u32 %v6392, 7
        %v6394 = vsub.s32 %v6391, %v6393
        %v6395 = vrot.slane %v6381, %v6394
        %v6398 = vsel %vm3357, %v6388, 0.0
        %v6399 = vsel %vm3357, %v6395, 0.0
        %v6400 = vadd.f32 %v6398, %v6399
        %6401 = vadd.xlane.f32.xlu0 %v6400
        %v6402 = vpop.xlane.xlu0 %6401
        %v6403 = vmul.f32 %v6402, 0.00390625
        %v6404 = vmul.f32 %v6356, %v6356
        %v6405 = vmul.f32 %v6357, %v6357
        %v6406 = vmul.f32 %v6358, %v6358
        %v6407 = vmul.f32 %v6359, %v6359
        %v6412 = vcombine.low %v6404, %v6405
        %v6413 = vcombine.low %v6406, %v6407
        %v6415 = vunpack.c.l.s4 1966171168
        %v6416 = vunpack.c.0.s8 %v6415
        %v6417 = vlaneseq
        %v6418 = vshrl.u32 %v6417, 7
        %v6419 = vsub.s32 %v6416, %v6418
        %v6420 = vrot.slane %v6412, %v6419
        %v6422 = vunpack.c.l.s4 1966171168
        %v6423 = vunpack.c.0.s8 %v6422
        %v6424 = vlaneseq
        %v6425 = vshrl.u32 %v6424, 7
        %v6426 = vsub.s32 %v6423, %v6425
        %v6427 = vrot.slane %v6413, %v6426
        %v6428 = vcombine.low %v6420, %v6427
        %v6429 = vcombine.high %v6420, %v6427
        %v6431 = vunpack.c.l.s4 1966171168
        %v6432 = vunpack.c.0.s8 %v6431
        %v6433 = vlaneseq
        %v6434 = vshrl.u32 %v6433, 7
        %v6435 = vsub.s32 %v6432, %v6434
        %v6436 = vrot.slane %v6428, %v6435
        %v6438 = vunpack.c.l.s4 1966171168
        %v6439 = vunpack.c.0.s8 %v6438
        %v6440 = vlaneseq
        %v6441 = vshrl.u32 %v6440, 7
        %v6442 = vsub.s32 %v6439, %v6441
        %v6443 = vrot.slane %v6429, %v6442
        %v6446 = vsel %vm3357, %v6436, 0.0
        %v6447 = vsel %vm3357, %v6443, 0.0
        %v6448 = vadd.f32 %v6446, %v6447
        %6449 = vadd.xlane.f32.xlu0 %v6448
        %v6450 = vpop.xlane.xlu0 %6449
        %v6451 = vmul.f32 %v6450, 0.00390625
        %v6452 = vmul.f32 %v6403, %v6403
        %v6453 = vsub.f32 %v6451, %v6452
        %v6454 = vmax.f32 %v6453, 0.0
        %v6456 = vlaneseq
        %v6457 = vshrl.u32 %v6456, 7
        %v6458 = vsub.s32 0, %v6457
        %v6459 = vrot.slane %v6403, %v6458
        %v6460 = vlaneseq
        %v6461 = vshrl.u32 %v6460, 7
        %v6462 = vsub.s32 1, %v6461
        %v6463 = vrot.slane %v6403, %v6462
        %v6464 = vlaneseq
        %v6465 = vshrl.u32 %v6464, 7
        %v6466 = vsub.s32 2, %v6465
        %v6467 = vrot.slane %v6403, %v6466
        %v6468 = vlaneseq
        %v6469 = vshrl.u32 %v6468, 7
        %v6470 = vsub.s32 3, %v6469
        %v6471 = vrot.slane %v6403, %v6470
        %v6476 = vsub.f32 %v6356, %v6459
        %v6477 = vsub.f32 %v6357, %v6463
        %v6478 = vsub.f32 %v6358, %v6467
        %v6479 = vsub.f32 %v6359, %v6471
        %v6480 = vadd.f32 %v6454, 1e-05
        %v6481 = vrsqrt.pop %v6480
        %v6483 = vlaneseq
        %v6484 = vshrl.u32 %v6483, 7
        %v6485 = vsub.s32 0, %v6484
        %v6486 = vrot.slane %v6481, %v6485
        %v6487 = vlaneseq
        %v6488 = vshrl.u32 %v6487, 7
        %v6489 = vsub.s32 1, %v6488
        %v6490 = vrot.slane %v6481, %v6489
        %v6491 = vlaneseq
        %v6492 = vshrl.u32 %v6491, 7
        %v6493 = vsub.s32 2, %v6492
        %v6494 = vrot.slane %v6481, %v6493
        %v6495 = vlaneseq
        %v6496 = vshrl.u32 %v6495, 7
        %v6497 = vsub.s32 3, %v6496
        %v6498 = vrot.slane %v6481, %v6497
        %v6503 = vmul.f32 %v6476, %v6486
        %v6504 = vmul.f32 %v6477, %v6490
        %v6505 = vmul.f32 %v6478, %v6494
        %v6506 = vmul.f32 %v6479, %v6498
        %s6507 = sld [smem:[#allocation14 + $0x3]]
        %v6508 = vstv %s6507
        %v6509 = vmul.f32 %v6503, %v6508
        %v6510 = vmul.f32 %v6504, %v6508
        %v6511 = vmul.f32 %v6505, %v6508
        %v6512 = vmul.f32 %v6506, %v6508
        %s6513 = sld [smem:[#allocation16 + $0x3]]
        %v6514 = vstv %s6513
        %v6515 = vadd.f32 %v6509, %v6514
        %v6516 = vadd.f32 %v6510, %v6514
        %v6517 = vadd.f32 %v6511, %v6514
        %v6518 = vadd.f32 %v6512, %v6514
        %v6523 = vcombine.low %v6515, %v6517
        %v6524 = vcombine.low %v6516, %v6518
        %v6526 = vunpack.c.l.s4 1935823168
        %v6527 = vunpack.c.0.s8 %v6526
        %v6528 = vlaneseq
        %v6529 = vshrl.u32 %v6528, 7
        %v6530 = vsub.s32 %v6527, %v6529
        %v6531 = vrot.slane %v6523, %v6530
        %v6533 = vunpack.c.l.s4 1935823168
        %v6534 = vunpack.c.0.s8 %v6533
        %v6535 = vlaneseq
        %v6536 = vshrl.u32 %v6535, 7
        %v6537 = vsub.s32 %v6534, %v6536
        %v6538 = vrot.slane %v6524, %v6537
        %v6539 = vcombine.low %v6531, %v6538
        %v6541 = vunpack.c.l.s4 1935823168
        %v6542 = vunpack.c.0.s8 %v6541
        %v6543 = vlaneseq
        %v6544 = vshrl.u32 %v6543, 7
        %v6545 = vsub.s32 %v6542, %v6544
        %v6546 = vrot.slane %v6539, %v6545
        %s6548 = scalar_lea.vmem [#allocation2], 24
        %6549 = vst [vmem:[%s6548] sm:$0xff] %v6546
        %v6550 = vcombine.low %v6515, %v6516
        %v6551 = vcombine.low %v6517, %v6518
        %v6553 = vunpack.c.l.s4 1966171168
        %v6554 = vunpack.c.0.s8 %v6553
        %v6555 = vlaneseq
        %v6556 = vshrl.u32 %v6555, 7
        %v6557 = vsub.s32 %v6554, %v6556
        %v6558 = vrot.slane %v6550, %v6557
        %v6560 = vunpack.c.l.s4 1966171168
        %v6561 = vunpack.c.0.s8 %v6560
        %v6562 = vlaneseq
        %v6563 = vshrl.u32 %v6562, 7
        %v6564 = vsub.s32 %v6561, %v6563
        %v6565 = vrot.slane %v6551, %v6564
        %v6566 = vcombine.low %v6558, %v6565
        %v6567 = vcombine.high %v6558, %v6565
        %v6569 = vunpack.c.l.s4 1966171168
        %v6570 = vunpack.c.0.s8 %v6569
        %v6571 = vlaneseq
        %v6572 = vshrl.u32 %v6571, 7
        %v6573 = vsub.s32 %v6570, %v6572
        %v6574 = vrot.slane %v6566, %v6573
        %v6576 = vunpack.c.l.s4 1966171168
        %v6577 = vunpack.c.0.s8 %v6576
        %v6578 = vlaneseq
        %v6579 = vshrl.u32 %v6578, 7
        %v6580 = vsub.s32 %v6577, %v6579
        %v6581 = vrot.slane %v6567, %v6580
        %v6584 = vsel %vm3357, %v6574, 0.0
        %v6585 = vsel %vm3357, %v6581, 0.0
        %v6586 = vadd.f32 %v6584, %v6585
        %6587 = vadd.xlane.f32.xlu0 %v6586
        %v6588 = vpop.xlane.xlu0 %6587
        %v6589 = vmul.f32 %v6588, 0.00390625
        %s6590 = sld [smem:[#allocation11 + $0x6c]]
        %v6591 = vstv %s6590
        %v6592 = vmul.f32 %v6591, %v1077
        %v6593 = vmul.f32 %v6591, %v1078
        %s6594 = sld [smem:[#allocation11 + $0x6d]]
        %v6595 = vstv %s6594
        %v6596 = vmul.f32 %v6595, %v1090
        %v6597 = vmul.f32 %v6595, %v1091
        %s6598 = sld [smem:[#allocation11 + $0x6e]]
        %v6599 = vstv %s6598
        %v6600 = vmul.f32 %v6599, %v1098
        %v6601 = vmul.f32 %v6599, %v1099
        %s6602 = sld [smem:[#allocation11 + $0x6f]]
        %v6603 = vstv %s6602
        %v6604 = vmul.f32 %v6603, %v1111
        %v6605 = vmul.f32 %v6603, %v1112
        %s6606 = sld [smem:[#allocation11 + $0x70]]
        %v6607 = vstv %s6606
        %v6608 = vmul.f32 %v6607, %v398
        %v6609 = vmul.f32 %v6607, %v400
        %v6610 = vmul.f32 %v6607, %v402
        %v6611 = vmul.f32 %v6607, %v404
        %s6612 = sld [smem:[#allocation11 + $0x71]]
        %v6613 = vstv %s6612
        %v6614 = vmul.f32 %v6613, %v1117
        %v6615 = vmul.f32 %v6613, %v1118
        %s6616 = sld [smem:[#allocation11 + $0x72]]
        %v6617 = vstv %s6616
        %v6618 = vmul.f32 %v6617, %v1132
        %v6619 = vmul.f32 %v6617, %v1133
        %s6620 = sld [smem:[#allocation11 + $0x73]]
        %v6621 = vstv %s6620
        %v6622 = vmul.f32 %v6621, %v1138
        %v6623 = vmul.f32 %v6621, %v1139
        %s6624 = sld [smem:[#allocation11 + $0x74]]
        %v6625 = vstv %s6624
        %v6626 = vmul.f32 %v6625, %v1153
        %v6627 = vmul.f32 %v6625, %v1154
        %v6628 = vadd.f32 %v6592, %v6596
        %v6629 = vadd.f32 %v6593, %v6597
        %v6630 = vadd.f32 %v6600, %v6604
        %v6631 = vadd.f32 %v6601, %v6605
        %v6634 = vcombine.low %v6614, %v6615
        %v6636 = vunpack.c.l.s4 1966171168
        %v6637 = vunpack.c.0.s8 %v6636
        %v6638 = vlaneseq
        %v6639 = vshrl.u32 %v6638, 7
        %v6640 = vsub.s32 %v6637, %v6639
        %v6641 = vrot.slane %v6634, %v6640
        %v6642 = vcombine.high %v6641, %v6641
        %v6644 = vunpack.c.l.s4 1966171168
        %v6645 = vunpack.c.0.s8 %v6644
        %v6646 = vlaneseq
        %v6647 = vshrl.u32 %v6646, 7
        %v6648 = vsub.s32 %v6645, %v6647
        %v6649 = vrot.slane %v6641, %v6648
        %v6651 = vunpack.c.l.s4 1966171168
        %v6652 = vunpack.c.0.s8 %v6651
        %v6653 = vlaneseq
        %v6654 = vshrl.u32 %v6653, 7
        %v6655 = vsub.s32 %v6652, %v6654
        %v6656 = vrot.slane %v6642, %v6655
        %v6657 = vcombine.high %v6649, %v6649
        %v6658 = vcombine.high %v6656, %v6656
        %v6663 = vadd.f32 %v6608, %v6649
        %v6664 = vadd.f32 %v6609, %v6656
        %v6665 = vadd.f32 %v6610, %v6657
        %v6666 = vadd.f32 %v6611, %v6658
        %v6667 = vadd.f32 %v6618, %v6622
        %v6668 = vadd.f32 %v6619, %v6623
        %v6669 = vadd.f32 %v6628, %v6630
        %v6670 = vadd.f32 %v6629, %v6631
        %v6673 = vcombine.low %v6667, %v6668
        %v6675 = vunpack.c.l.s4 1966171168
        %v6676 = vunpack.c.0.s8 %v6675
        %v6677 = vlaneseq
        %v6678 = vshrl.u32 %v6677, 7
        %v6679 = vsub.s32 %v6676, %v6678
        %v6680 = vrot.slane %v6673, %v6679
        %v6681 = vcombine.high %v6680, %v6680
        %v6683 = vunpack.c.l.s4 1966171168
        %v6684 = vunpack.c.0.s8 %v6683
        %v6685 = vlaneseq
        %v6686 = vshrl.u32 %v6685, 7
        %v6687 = vsub.s32 %v6684, %v6686
        %v6688 = vrot.slane %v6680, %v6687
        %v6690 = vunpack.c.l.s4 1966171168
        %v6691 = vunpack.c.0.s8 %v6690
        %v6692 = vlaneseq
        %v6693 = vshrl.u32 %v6692, 7
        %v6694 = vsub.s32 %v6691, %v6693
        %v6695 = vrot.slane %v6681, %v6694
        %v6696 = vcombine.high %v6688, %v6688
        %v6697 = vcombine.high %v6695, %v6695
        %v6702 = vadd.f32 %v6663, %v6688
        %v6703 = vadd.f32 %v6664, %v6695
        %v6704 = vadd.f32 %v6665, %v6696
        %v6705 = vadd.f32 %v6666, %v6697
        %v6710 = vcombine.low %v6702, %v6703
        %v6711 = vcombine.low %v6704, %v6705
        %v6713 = vunpack.c.l.s4 1966171168
        %v6714 = vunpack.c.0.s8 %v6713
        %v6715 = vlaneseq
        %v6716 = vshrl.u32 %v6715, 7
        %v6717 = vsub.s32 %v6714, %v6716
        %v6718 = vrot.slane %v6710, %v6717
        %v6720 = vunpack.c.l.s4 1966171168
        %v6721 = vunpack.c.0.s8 %v6720
        %v6722 = vlaneseq
        %v6723 = vshrl.u32 %v6722, 7
        %v6724 = vsub.s32 %v6721, %v6723
        %v6725 = vrot.slane %v6711, %v6724
        %v6726 = vcombine.low %v6718, %v6725
        %v6727 = vcombine.high %v6718, %v6725
        %v6729 = vunpack.c.l.s4 1966171168
        %v6730 = vunpack.c.0.s8 %v6729
        %v6731 = vlaneseq
        %v6732 = vshrl.u32 %v6731, 7
        %v6733 = vsub.s32 %v6730, %v6732
        %v6734 = vrot.slane %v6726, %v6733
        %v6736 = vunpack.c.l.s4 1966171168
        %v6737 = vunpack.c.0.s8 %v6736
        %v6738 = vlaneseq
        %v6739 = vshrl.u32 %v6738, 7
        %v6740 = vsub.s32 %v6737, %v6739
        %v6741 = vrot.slane %v6727, %v6740
        %v6744 = vadd.f32 %v6669, %v6734
        %v6745 = vadd.f32 %v6670, %v6741
        %v6746 = vadd.f32 %v6744, %v6626
        %v6747 = vadd.f32 %v6745, %v6627
        %s6748 = sld [smem:[#allocation11 + $0x75]]
        %v6749 = vstv %s6748
        %v6750 = vmul.f32 %v6749, %v1793
        %v6751 = vmul.f32 %v6749, %v1794
        %s6752 = sld [smem:[#allocation11 + $0x76]]
        %v6753 = vstv %s6752
        %v6754 = vmul.f32 %v6753, %v1801
        %v6755 = vmul.f32 %v6753, %v1802
        %s6756 = sld [smem:[#allocation11 + $0x77]]
        %v6757 = vstv %s6756
        %v6758 = vmul.f32 %v6757, %v1803
        %v6759 = vmul.f32 %v6757, %v1804
        %s6760 = sld [smem:[#allocation11 + $0x78]]
        %v6761 = vstv %s6760
        %v6762 = vmul.f32 %v6761, %v1811
        %v6763 = vmul.f32 %v6761, %v1812
        %s6764 = sld [smem:[#allocation11 + $0x79]]
        %v6765 = vstv %s6764
        %v6766 = vmul.f32 %v6765, %v1156
        %v6767 = vmul.f32 %v6765, %v1158
        %v6768 = vmul.f32 %v6765, %v1160
        %v6769 = vmul.f32 %v6765, %v1162
        %s6770 = sld [smem:[#allocation11 + $0x7a]]
        %v6771 = vstv %s6770
        %v6772 = vmul.f32 %v6771, %v1813
        %v6773 = vmul.f32 %v6771, %v1814
        %s6774 = sld [smem:[#allocation11 + $0x7b]]
        %v6775 = vstv %s6774
        %v6776 = vmul.f32 %v6775, %v1821
        %v6777 = vmul.f32 %v6775, %v1822
        %s6778 = sld [smem:[#allocation11 + $0x7c]]
        %v6779 = vstv %s6778
        %v6780 = vmul.f32 %v6779, %v1823
        %v6781 = vmul.f32 %v6779, %v1824
        %s6782 = sld [smem:[#allocation11 + $0x7d]]
        %v6783 = vstv %s6782
        %v6784 = vmul.f32 %v6783, %v1831
        %v6785 = vmul.f32 %v6783, %v1832
        %v6786 = vadd.f32 %v6750, %v6754
        %v6787 = vadd.f32 %v6751, %v6755
        %v6788 = vadd.f32 %v6758, %v6762
        %v6789 = vadd.f32 %v6759, %v6763
        %v6792 = vcombine.low %v6772, %v6773
        %v6794 = vunpack.c.l.s4 1966171168
        %v6795 = vunpack.c.0.s8 %v6794
        %v6796 = vlaneseq
        %v6797 = vshrl.u32 %v6796, 7
        %v6798 = vsub.s32 %v6795, %v6797
        %v6799 = vrot.slane %v6792, %v6798
        %v6800 = vcombine.high %v6799, %v6799
        %v6802 = vunpack.c.l.s4 1966171168
        %v6803 = vunpack.c.0.s8 %v6802
        %v6804 = vlaneseq
        %v6805 = vshrl.u32 %v6804, 7
        %v6806 = vsub.s32 %v6803, %v6805
        %v6807 = vrot.slane %v6799, %v6806
        %v6809 = vunpack.c.l.s4 1966171168
        %v6810 = vunpack.c.0.s8 %v6809
        %v6811 = vlaneseq
        %v6812 = vshrl.u32 %v6811, 7
        %v6813 = vsub.s32 %v6810, %v6812
        %v6814 = vrot.slane %v6800, %v6813
        %v6815 = vcombine.high %v6807, %v6807
        %v6816 = vcombine.high %v6814, %v6814
        %v6821 = vadd.f32 %v6766, %v6807
        %v6822 = vadd.f32 %v6767, %v6814
        %v6823 = vadd.f32 %v6768, %v6815
        %v6824 = vadd.f32 %v6769, %v6816
        %v6825 = vadd.f32 %v6776, %v6780
        %v6826 = vadd.f32 %v6777, %v6781
        %v6827 = vadd.f32 %v6786, %v6788
        %v6828 = vadd.f32 %v6787, %v6789
        %v6831 = vcombine.low %v6825, %v6826
        %v6833 = vunpack.c.l.s4 1966171168
        %v6834 = vunpack.c.0.s8 %v6833
        %v6835 = vlaneseq
        %v6836 = vshrl.u32 %v6835, 7
        %v6837 = vsub.s32 %v6834, %v6836
        %v6838 = vrot.slane %v6831, %v6837
        %v6839 = vcombine.high %v6838, %v6838
        %v6841 = vunpack.c.l.s4 1966171168
        %v6842 = vunpack.c.0.s8 %v6841
        %v6843 = vlaneseq
        %v6844 = vshrl.u32 %v6843, 7
        %v6845 = vsub.s32 %v6842, %v6844
        %v6846 = vrot.slane %v6838, %v6845
        %v6848 = vunpack.c.l.s4 1966171168
        %v6849 = vunpack.c.0.s8 %v6848
        %v6850 = vlaneseq
        %v6851 = vshrl.u32 %v6850, 7
        %v6852 = vsub.s32 %v6849, %v6851
        %v6853 = vrot.slane %v6839, %v6852
        %v6854 = vcombine.high %v6846, %v6846
        %v6855 = vcombine.high %v6853, %v6853
        %v6860 = vadd.f32 %v6821, %v6846
        %v6861 = vadd.f32 %v6822, %v6853
        %v6862 = vadd.f32 %v6823, %v6854
        %v6863 = vadd.f32 %v6824, %v6855
        %v6868 = vcombine.low %v6860, %v6861
        %v6869 = vcombine.low %v6862, %v6863
        %v6871 = vunpack.c.l.s4 1966171168
        %v6872 = vunpack.c.0.s8 %v6871
        %v6873 = vlaneseq
        %v6874 = vshrl.u32 %v6873, 7
        %v6875 = vsub.s32 %v6872, %v6874
        %v6876 = vrot.slane %v6868, %v6875
        %v6878 = vunpack.c.l.s4 1966171168
        %v6879 = vunpack.c.0.s8 %v6878
        %v6880 = vlaneseq
        %v6881 = vshrl.u32 %v6880, 7
        %v6882 = vsub.s32 %v6879, %v6881
        %v6883 = vrot.slane %v6869, %v6882
        %v6884 = vcombine.low %v6876, %v6883
        %v6885 = vcombine.high %v6876, %v6883
        %v6887 = vunpack.c.l.s4 1966171168
        %v6888 = vunpack.c.0.s8 %v6887
        %v6889 = vlaneseq
        %v6890 = vshrl.u32 %v6889, 7
        %v6891 = vsub.s32 %v6888, %v6890
        %v6892 = vrot.slane %v6884, %v6891
        %v6894 = vunpack.c.l.s4 1966171168
        %v6895 = vunpack.c.0.s8 %v6894
        %v6896 = vlaneseq
        %v6897 = vshrl.u32 %v6896, 7
        %v6898 = vsub.s32 %v6895, %v6897
        %v6899 = vrot.slane %v6885, %v6898
        %v6902 = vadd.f32 %v6827, %v6892
        %v6903 = vadd.f32 %v6828, %v6899
        %v6904 = vadd.f32 %v6902, %v6784
        %v6905 = vadd.f32 %v6903, %v6785
        %s6906 = sld [smem:[#allocation11 + $0x7e]]
        %v6907 = vstv %s6906
        %v6908 = vmul.f32 %v6907, %v2471
        %v6909 = vmul.f32 %v6907, %v2472
        %s6910 = sld [smem:[#allocation11 + $0x7f]]
        %v6911 = vstv %s6910
        %v6912 = vmul.f32 %v6911, %v2479
        %v6913 = vmul.f32 %v6911, %v2480
        %s6914 = sld [smem:[#allocation11 + $0x80]]
        %v6915 = vstv %s6914
        %v6916 = vmul.f32 %v6915, %v2481
        %v6917 = vmul.f32 %v6915, %v2482
        %s6918 = sld [smem:[#allocation11 + $0x81]]
        %v6919 = vstv %s6918
        %v6920 = vmul.f32 %v6919, %v2489
        %v6921 = vmul.f32 %v6919, %v2490
        %s6922 = sld [smem:[#allocation11 + $0x82]]
        %v6923 = vstv %s6922
        %v6924 = vmul.f32 %v6923, %v1834
        %v6925 = vmul.f32 %v6923, %v1836
        %v6926 = vmul.f32 %v6923, %v1838
        %v6927 = vmul.f32 %v6923, %v1840
        %s6928 = sld [smem:[#allocation11 + $0x83]]
        %v6929 = vstv %s6928
        %v6930 = vmul.f32 %v6929, %v2491
        %v6931 = vmul.f32 %v6929, %v2492
        %s6932 = sld [smem:[#allocation11 + $0x84]]
        %v6933 = vstv %s6932
        %v6934 = vmul.f32 %v6933, %v2499
        %v6935 = vmul.f32 %v6933, %v2500
        %s6936 = sld [smem:[#allocation11 + $0x85]]
        %v6937 = vstv %s6936
        %v6938 = vmul.f32 %v6937, %v2501
        %v6939 = vmul.f32 %v6937, %v2502
        %s6940 = sld [smem:[#allocation11 + $0x86]]
        %v6941 = vstv %s6940
        %v6942 = vmul.f32 %v6941, %v2509
        %v6943 = vmul.f32 %v6941, %v2510
        %v6944 = vadd.f32 %v6908, %v6912
        %v6945 = vadd.f32 %v6909, %v6913
        %v6946 = vadd.f32 %v6916, %v6920
        %v6947 = vadd.f32 %v6917, %v6921
        %v6950 = vcombine.low %v6930, %v6931
        %v6952 = vunpack.c.l.s4 1966171168
        %v6953 = vunpack.c.0.s8 %v6952
        %v6954 = vlaneseq
        %v6955 = vshrl.u32 %v6954, 7
        %v6956 = vsub.s32 %v6953, %v6955
        %v6957 = vrot.slane %v6950, %v6956
        %v6958 = vcombine.high %v6957, %v6957
        %v6960 = vunpack.c.l.s4 1966171168
        %v6961 = vunpack.c.0.s8 %v6960
        %v6962 = vlaneseq
        %v6963 = vshrl.u32 %v6962, 7
        %v6964 = vsub.s32 %v6961, %v6963
        %v6965 = vrot.slane %v6957, %v6964
        %v6967 = vunpack.c.l.s4 1966171168
        %v6968 = vunpack.c.0.s8 %v6967
        %v6969 = vlaneseq
        %v6970 = vshrl.u32 %v6969, 7
        %v6971 = vsub.s32 %v6968, %v6970
        %v6972 = vrot.slane %v6958, %v6971
        %v6973 = vcombine.high %v6965, %v6965
        %v6974 = vcombine.high %v6972, %v6972
        %v6979 = vadd.f32 %v6924, %v6965
        %v6980 = vadd.f32 %v6925, %v6972
        %v6981 = vadd.f32 %v6926, %v6973
        %v6982 = vadd.f32 %v6927, %v6974
        %v6983 = vadd.f32 %v6934, %v6938
        %v6984 = vadd.f32 %v6935, %v6939
        %v6985 = vadd.f32 %v6944, %v6946
        %v6986 = vadd.f32 %v6945, %v6947
        %v6989 = vcombine.low %v6983, %v6984
        %v6991 = vunpack.c.l.s4 1966171168
        %v6992 = vunpack.c.0.s8 %v6991
        %v6993 = vlaneseq
        %v6994 = vshrl.u32 %v6993, 7
        %v6995 = vsub.s32 %v6992, %v6994
        %v6996 = vrot.slane %v6989, %v6995
        %v6997 = vcombine.high %v6996, %v6996
        %v6999 = vunpack.c.l.s4 1966171168
        %v7000 = vunpack.c.0.s8 %v6999
        %v7001 = vlaneseq
        %v7002 = vshrl.u32 %v7001, 7
        %v7003 = vsub.s32 %v7000, %v7002
        %v7004 = vrot.slane %v6996, %v7003
        %v7006 = vunpack.c.l.s4 1966171168
        %v7007 = vunpack.c.0.s8 %v7006
        %v7008 = vlaneseq
        %v7009 = vshrl.u32 %v7008, 7
        %v7010 = vsub.s32 %v7007, %v7009
        %v7011 = vrot.slane %v6997, %v7010
        %v7012 = vcombine.high %v7004, %v7004
        %v7013 = vcombine.high %v7011, %v7011
        %v7018 = vadd.f32 %v6979, %v7004
        %v7019 = vadd.f32 %v6980, %v7011
        %v7020 = vadd.f32 %v6981, %v7012
        %v7021 = vadd.f32 %v6982, %v7013
        %v7026 = vcombine.low %v7018, %v7019
        %v7027 = vcombine.low %v7020, %v7021
        %v7029 = vunpack.c.l.s4 1966171168
        %v7030 = vunpack.c.0.s8 %v7029
        %v7031 = vlaneseq
        %v7032 = vshrl.u32 %v7031, 7
        %v7033 = vsub.s32 %v7030, %v7032
        %v7034 = vrot.slane %v7026, %v7033
        %v7036 = vunpack.c.l.s4 1966171168
        %v7037 = vunpack.c.0.s8 %v7036
        %v7038 = vlaneseq
        %v7039 = vshrl.u32 %v7038, 7
        %v7040 = vsub.s32 %v7037, %v7039
        %v7041 = vrot.slane %v7027, %v7040
        %v7042 = vcombine.low %v7034, %v7041
        %v7043 = vcombine.high %v7034, %v7041
        %v7045 = vunpack.c.l.s4 1966171168
        %v7046 = vunpack.c.0.s8 %v7045
        %v7047 = vlaneseq
        %v7048 = vshrl.u32 %v7047, 7
        %v7049 = vsub.s32 %v7046, %v7048
        %v7050 = vrot.slane %v7042, %v7049
        %v7052 = vunpack.c.l.s4 1966171168
        %v7053 = vunpack.c.0.s8 %v7052
        %v7054 = vlaneseq
        %v7055 = vshrl.u32 %v7054, 7
        %v7056 = vsub.s32 %v7053, %v7055
        %v7057 = vrot.slane %v7043, %v7056
        %v7060 = vadd.f32 %v6985, %v7050
        %v7061 = vadd.f32 %v6986, %v7057
        %v7062 = vadd.f32 %v7060, %v6942
        %v7063 = vadd.f32 %v7061, %v6943
        %s7064 = sld [smem:[#allocation11 + $0x87]]
        %v7065 = vstv %s7064
        %v7066 = vmul.f32 %v7065, %v3149
        %v7067 = vmul.f32 %v7065, %v3150
        %s7068 = sld [smem:[#allocation11 + $0x88]]
        %v7069 = vstv %s7068
        %v7070 = vmul.f32 %v7069, %v3157
        %v7071 = vmul.f32 %v7069, %v3158
        %s7072 = sld [smem:[#allocation11 + $0x89]]
        %v7073 = vstv %s7072
        %v7074 = vmul.f32 %v7073, %v3159
        %v7075 = vmul.f32 %v7073, %v3160
        %s7076 = sld [smem:[#allocation11 + $0x8a]]
        %v7077 = vstv %s7076
        %v7078 = vmul.f32 %v7077, %v3167
        %v7079 = vmul.f32 %v7077, %v3168
        %s7080 = sld [smem:[#allocation11 + $0x8b]]
        %v7081 = vstv %s7080
        %v7082 = vmul.f32 %v7081, %v2512
        %v7083 = vmul.f32 %v7081, %v2514
        %v7084 = vmul.f32 %v7081, %v2516
        %v7085 = vmul.f32 %v7081, %v2518
        %s7086 = sld [smem:[#allocation11 + $0x8c]]
        %v7087 = vstv %s7086
        %v7088 = vmul.f32 %v7087, %v3169
        %v7089 = vmul.f32 %v7087, %v3170
        %s7090 = sld [smem:[#allocation11 + $0x8d]]
        %v7091 = vstv %s7090
        %v7092 = vmul.f32 %v7091, %v3177
        %v7093 = vmul.f32 %v7091, %v3178
        %s7094 = sld [smem:[#allocation11 + $0x8e]]
        %v7095 = vstv %s7094
        %v7096 = vmul.f32 %v7095, %v3179
        %v7097 = vmul.f32 %v7095, %v3180
        %s7098 = sld [smem:[#allocation11 + $0x8f]]
        %v7099 = vstv %s7098
        %v7100 = vmul.f32 %v7099, %v3187
        %v7101 = vmul.f32 %v7099, %v3188
        %v7102 = vadd.f32 %v7066, %v7070
        %v7103 = vadd.f32 %v7067, %v7071
        %v7104 = vadd.f32 %v7074, %v7078
        %v7105 = vadd.f32 %v7075, %v7079
        %v7108 = vcombine.low %v7088, %v7089
        %v7110 = vunpack.c.l.s4 1966171168
        %v7111 = vunpack.c.0.s8 %v7110
        %v7112 = vlaneseq
        %v7113 = vshrl.u32 %v7112, 7
        %v7114 = vsub.s32 %v7111, %v7113
        %v7115 = vrot.slane %v7108, %v7114
        %v7116 = vcombine.high %v7115, %v7115
        %v7118 = vunpack.c.l.s4 1966171168
        %v7119 = vunpack.c.0.s8 %v7118
        %v7120 = vlaneseq
        %v7121 = vshrl.u32 %v7120, 7
        %v7122 = vsub.s32 %v7119, %v7121
        %v7123 = vrot.slane %v7115, %v7122
        %v7125 = vunpack.c.l.s4 1966171168
        %v7126 = vunpack.c.0.s8 %v7125
        %v7127 = vlaneseq
        %v7128 = vshrl.u32 %v7127, 7
        %v7129 = vsub.s32 %v7126, %v7128
        %v7130 = vrot.slane %v7116, %v7129
        %v7131 = vcombine.high %v7123, %v7123
        %v7132 = vcombine.high %v7130, %v7130
        %v7137 = vadd.f32 %v7082, %v7123
        %v7138 = vadd.f32 %v7083, %v7130
        %v7139 = vadd.f32 %v7084, %v7131
        %v7140 = vadd.f32 %v7085, %v7132
        %v7141 = vadd.f32 %v7092, %v7096
        %v7142 = vadd.f32 %v7093, %v7097
        %v7143 = vadd.f32 %v7102, %v7104
        %v7144 = vadd.f32 %v7103, %v7105
        %v7147 = vcombine.low %v7141, %v7142
        %v7149 = vunpack.c.l.s4 1966171168
        %v7150 = vunpack.c.0.s8 %v7149
        %v7151 = vlaneseq
        %v7152 = vshrl.u32 %v7151, 7
        %v7153 = vsub.s32 %v7150, %v7152
        %v7154 = vrot.slane %v7147, %v7153
        %v7155 = vcombine.high %v7154, %v7154
        %v7157 = vunpack.c.l.s4 1966171168
        %v7158 = vunpack.c.0.s8 %v7157
        %v7159 = vlaneseq
        %v7160 = vshrl.u32 %v7159, 7
        %v7161 = vsub.s32 %v7158, %v7160
        %v7162 = vrot.slane %v7154, %v7161
        %v7164 = vunpack.c.l.s4 1966171168
        %v7165 = vunpack.c.0.s8 %v7164
        %v7166 = vlaneseq
        %v7167 = vshrl.u32 %v7166, 7
        %v7168 = vsub.s32 %v7165, %v7167
        %v7169 = vrot.slane %v7155, %v7168
        %v7170 = vcombine.high %v7162, %v7162
        %v7171 = vcombine.high %v7169, %v7169
        %v7176 = vadd.f32 %v7137, %v7162
        %v7177 = vadd.f32 %v7138, %v7169
        %v7178 = vadd.f32 %v7139, %v7170
        %v7179 = vadd.f32 %v7140, %v7171
        %v7184 = vcombine.low %v7176, %v7177
        %v7185 = vcombine.low %v7178, %v7179
        %v7187 = vunpack.c.l.s4 1966171168
        %v7188 = vunpack.c.0.s8 %v7187
        %v7189 = vlaneseq
        %v7190 = vshrl.u32 %v7189, 7
        %v7191 = vsub.s32 %v7188, %v7190
        %v7192 = vrot.slane %v7184, %v7191
        %v7194 = vunpack.c.l.s4 1966171168
        %v7195 = vunpack.c.0.s8 %v7194
        %v7196 = vlaneseq
        %v7197 = vshrl.u32 %v7196, 7
        %v7198 = vsub.s32 %v7195, %v7197
        %v7199 = vrot.slane %v7185, %v7198
        %v7200 = vcombine.low %v7192, %v7199
        %v7201 = vcombine.high %v7192, %v7199
        %v7203 = vunpack.c.l.s4 1966171168
        %v7204 = vunpack.c.0.s8 %v7203
        %v7205 = vlaneseq
        %v7206 = vshrl.u32 %v7205, 7
        %v7207 = vsub.s32 %v7204, %v7206
        %v7208 = vrot.slane %v7200, %v7207
        %v7210 = vunpack.c.l.s4 1966171168
        %v7211 = vunpack.c.0.s8 %v7210
        %v7212 = vlaneseq
        %v7213 = vshrl.u32 %v7212, 7
        %v7214 = vsub.s32 %v7211, %v7213
        %v7215 = vrot.slane %v7201, %v7214
        %v7218 = vadd.f32 %v7143, %v7208
        %v7219 = vadd.f32 %v7144, %v7215
        %v7220 = vadd.f32 %v7218, %v7100
        %v7221 = vadd.f32 %v7219, %v7101
        %v7222 = vadd.f32 %v6746, %v6904
        %v7223 = vadd.f32 %v6747, %v6905
        %v7224 = vadd.f32 %v7062, %v7220
        %v7225 = vadd.f32 %v7063, %v7221
        %v7226 = vadd.f32 %v7222, %v7224
        %v7227 = vadd.f32 %v7223, %v7225
        %s7228 = sld [smem:[#allocation13 + $0x3]]
        %v7229 = vstv %s7228
        %v7230 = vadd.f32 %v7226, %v7229
        %v7231 = vadd.f32 %v7227, %v7229
        %v7234 = vcombine.low %v7230, %v7231
        %s7236 = scalar_lea.vmem [#allocation3], 24
        %7237 = vst [vmem:[%s7236] sm:$0xff] %v7234
        %v7238 = vsel %vm3357, %v7230, 0.0
        %v7239 = vsel %vm3357, %v7231, 0.0
        %v7240 = vadd.f32 %v7238, %v7239
        %7241 = vadd.xlane.f32.xlu0 %v7240
        %v7242 = vpop.xlane.xlu0 %7241
        %v7243 = vmul.f32 %v7242, 0.00390625
        %v7244 = vmax.f32 %v3548, %v4561
        %v7245 = vmax.f32 %v7244, %v5575
        %v7246 = vmax.f32 %v7245, %v6589
        %v7247 = vsub.f32 %v3548, %v7246
        %v7248 = vmul.f32 %v7247, 1.442695
        %v7249 = vpow.pop %v7248
        %v7250 = vsub.f32 %v4561, %v7246
        %v7251 = vmul.f32 %v7250, 1.442695
        %v7252 = vpow.pop %v7251
        %v7253 = vsub.f32 %v5575, %v7246
        %v7254 = vmul.f32 %v7253, 1.442695
        %v7255 = vpow.pop %v7254
        %v7256 = vsub.f32 %v6589, %v7246
        %v7257 = vmul.f32 %v7256, 1.442695
        %v7258 = vpow.pop %v7257
        %v7259 = vadd.f32 %v7249, %v7252
        %v7260 = vadd.f32 %v7255, %v7258
        %v7261 = vadd.f32 %v7259, %v7260
        %v7262 = vrcp.pop %v7261
        %v7263 = vmul.f32 1.0, %v7262
        %v7264 = vmul.f32 %v7249, %v7263
        %v7265 = vmul.f32 %v7252, %v7263
        %v7266 = vmul.f32 %v7255, %v7263
        %v7267 = vmul.f32 %v7258, %v7263
        %v7268 = vmax.f32 %v4201, %v5215
        %v7269 = vmax.f32 %v7268, %v6229
        %v7270 = vmax.f32 %v7269, %v7243
        %v7271 = vsub.f32 %v4201, %v7270
        %v7272 = vmul.f32 %v7271, 1.442695
        %v7273 = vpow.pop %v7272
        %v7274 = vsub.f32 %v5215, %v7270
        %v7275 = vmul.f32 %v7274, 1.442695
        %v7276 = vpow.pop %v7275
        %v7277 = vsub.f32 %v6229, %v7270
        %v7278 = vmul.f32 %v7277, 1.442695
        %v7279 = vpow.pop %v7278
        %v7280 = vsub.f32 %v7243, %v7270
        %v7281 = vmul.f32 %v7280, 1.442695
        %v7282 = vpow.pop %v7281
        %v7283 = vadd.f32 %v7273, %v7276
        %v7284 = vadd.f32 %v7279, %v7282
        %v7285 = vadd.f32 %v7283, %v7284
        %v7286 = vrcp.pop %v7285
        %v7287 = vmul.f32 1.0, %v7286
        %v7288 = vmul.f32 %v7273, %v7287
        %v7289 = vmul.f32 %v7276, %v7287
        %v7290 = vmul.f32 %v7279, %v7287
        %v7291 = vmul.f32 %v7282, %v7287
        %v7292 = vld [vmem:[#allocation3] sm:$0xff]
        %v7294 = vcombine.high %v7292, %v7292
        %v7296 = vmul.f32 %v7264, %v7292
        %v7297 = vmul.f32 %v7264, %v7294
        %v7298 = vld [vmem:[#allocation2] sm:$0xff]
        %v7300 = vcombine.high %v7298, %v7298
        %v7302 = vmul.f32 %v7288, %v7298
        %v7303 = vmul.f32 %v7288, %v7300
        %v7304 = vadd.f32 %v7296, %v7302
        %v7305 = vadd.f32 %v7297, %v7303
        %v7306 = vld [vmem:[%s5208] sm:$0xff]
        %v7308 = vcombine.high %v7306, %v7306
        %v7310 = vmul.f32 %v7265, %v7306
        %v7311 = vmul.f32 %v7265, %v7308
        %v7312 = vld [vmem:[%s4520] sm:$0xff]
        %v7314 = vcombine.high %v7312, %v7312
        %v7316 = vmul.f32 %v7289, %v7312
        %v7317 = vmul.f32 %v7289, %v7314
        %v7318 = vadd.f32 %v7310, %v7316
        %v7319 = vadd.f32 %v7311, %v7317
        %v7320 = vld [vmem:[%s6222] sm:$0xff]
        %v7322 = vcombine.high %v7320, %v7320
        %v7324 = vmul.f32 %v7266, %v7320
        %v7325 = vmul.f32 %v7266, %v7322
        %v7326 = vld [vmem:[%s5534] sm:$0xff]
        %v7328 = vcombine.high %v7326, %v7326
        %v7330 = vmul.f32 %v7290, %v7326
        %v7331 = vmul.f32 %v7290, %v7328
        %v7332 = vadd.f32 %v7324, %v7330
        %v7333 = vadd.f32 %v7325, %v7331
        %v7334 = vld [vmem:[%s7236] sm:$0xff]
        %v7336 = vcombine.high %v7334, %v7334
        %v7338 = vmul.f32 %v7267, %v7334
        %v7339 = vmul.f32 %v7267, %v7336
        %v7340 = vld [vmem:[%s6548] sm:$0xff]
        %v7342 = vcombine.high %v7340, %v7340
        %v7344 = vmul.f32 %v7291, %v7340
        %v7345 = vmul.f32 %v7291, %v7342
        %v7346 = vadd.f32 %v7338, %v7344
        %v7347 = vadd.f32 %v7339, %v7345
        %v7348 = vadd.f32 %v7304, %v7318
        %v7349 = vadd.f32 %v7305, %v7319
        %v7350 = vadd.f32 %v7332, %v7346
        %v7351 = vadd.f32 %v7333, %v7347
        %v7352 = vadd.f32 %v7348, %v7350
        %v7353 = vadd.f32 %v7349, %v7351
        %v7354 = vxor.u32 %v7352, 2147483648
        %v7355 = vxor.u32 %v7353, 2147483648
        %v7356 = vmul.f32 %v7354, 1.442695
        %v7357 = vpow.pop %v7356
        %v7358 = vmul.f32 %v7355, 1.442695
        %v7359 = vpow.pop %v7358
        %v7360 = vadd.f32 %v7357, 1.0
        %v7361 = vadd.f32 %v7359, 1.0
        %v7362 = vrcp.pop %v7360
        %v7363 = vmul.f32 1.0, %v7362
        %v7364 = vrcp.pop %v7361
        %v7365 = vmul.f32 1.0, %v7364
        %v7366 = vld [vmem:[%s317] sm:$0xff]
        %v7367 = vld [vmem:[%s317 + $0x8] sm:$0xff]
        %v7368 = vld [vmem:[%s317 + $0x10] sm:$0xff]
        %v7369 = vld [vmem:[%s317 + $0x18] sm:$0xff]
        %v7372 = vcombine.low %v7363, %v7365
        %v7374 = vunpack.c.l.s4 1966171168
        %v7375 = vunpack.c.0.s8 %v7374
        %v7376 = vlaneseq
        %v7377 = vshrl.u32 %v7376, 7
        %v7378 = vsub.s32 %v7375, %v7377
        %v7379 = vrot.slane %v7372, %v7378
        %v7380 = vcombine.high %v7379, %v7379
        %v7382 = vunpack.c.l.s4 1966171168
        %v7383 = vunpack.c.0.s8 %v7382
        %v7384 = vlaneseq
        %v7385 = vshrl.u32 %v7384, 7
        %v7386 = vsub.s32 %v7383, %v7385
        %v7387 = vrot.slane %v7379, %v7386
        %v7389 = vunpack.c.l.s4 1966171168
        %v7390 = vunpack.c.0.s8 %v7389
        %v7391 = vlaneseq
        %v7392 = vshrl.u32 %v7391, 7
        %v7393 = vsub.s32 %v7390, %v7392
        %v7394 = vrot.slane %v7380, %v7393
        %v7395 = vcombine.high %v7387, %v7387
        %v7396 = vcombine.high %v7394, %v7394
        %v7397 = vlaneseq
        %v7398 = vshrl.u32 %v7397, 7
        %v7399 = vsub.s32 0, %v7398
        %v7400 = vrot.slane %v7387, %v7399
        %v7401 = vlaneseq
        %v7402 = vshrl.u32 %v7401, 7
        %v7403 = vsub.s32 1, %v7402
        %v7404 = vrot.slane %v7387, %v7403
        %v7405 = vlaneseq
        %v7406 = vshrl.u32 %v7405, 7
        %v7407 = vsub.s32 0, %v7406
        %v7408 = vrot.slane %v7394, %v7407
        %v7409 = vlaneseq
        %v7410 = vshrl.u32 %v7409, 7
        %v7411 = vsub.s32 1, %v7410
        %v7412 = vrot.slane %v7394, %v7411
        %v7413 = vlaneseq
        %v7414 = vshrl.u32 %v7413, 7
        %v7415 = vsub.s32 0, %v7414
        %v7416 = vrot.slane %v7395, %v7415
        %v7417 = vlaneseq
        %v7418 = vshrl.u32 %v7417, 7
        %v7419 = vsub.s32 1, %v7418
        %v7420 = vrot.slane %v7395, %v7419
        %v7421 = vlaneseq
        %v7422 = vshrl.u32 %v7421, 7
        %v7423 = vsub.s32 0, %v7422
        %v7424 = vrot.slane %v7396, %v7423
        %v7425 = vlaneseq
        %v7426 = vshrl.u32 %v7425, 7
        %v7427 = vsub.s32 1, %v7426
        %v7428 = vrot.slane %v7396, %v7427
        %v7429 = vcombine.low %v7400, %v7404
        %v7430 = vcombine.low %v7408, %v7412
        %v7431 = vcombine.low %v7416, %v7420
        %v7432 = vcombine.low %v7424, %v7428
        %v7437 = vmul.f32 %v7366, %v7429
        %v7438 = vmul.f32 %v7367, %v7430
        %v7439 = vmul.f32 %v7368, %v7431
        %v7440 = vmul.f32 %v7369, %v7432
        %7441 = vst [vmem:[%s372] sm:$0xff] %v7437
        %7442 = vst [vmem:[%s372 + $0x8] sm:$0xff] %v7438
        %7443 = vst [vmem:[%s372 + $0x10] sm:$0xff] %v7439
        %7444 = vst [vmem:[%s372 + $0x18] sm:$0xff] %v7440
        %s7445 = sand.u32 %s188, 1
        %s7446 = scalar_lea.sflag [#allocation6], %s7445
        %s7447 = sand.u32 %s188, 1
        %s7448 = smul.addr %s7447, 32
        %s7449 = scalar_lea.vmem [#allocation17], %s7448
        // Predicated region
        $region77: #{tpu_custom_call.1} parent=47 // pred_check
          %p7450 = pneg %p198
        $region78: #{tpu_custom_call.1} parent=47 // pred_check_branch
          %7452 = sbr.rel (%p7450) target = $region80
        $region79: #{tpu_custom_call.1} parent=47 // pred_region
          %s7453 = smul.u32 4, %s28
          %s7455 = ssub.s32 512, 512
          %7456 = vsyncadd %s7446, %s7455
          %s7457 = smul.addr %s7453, 2
          %s7458 = smul.addr %s7457, 64
          %s7459 = scalar_lea.hbm %s7, %s7458
          %s7460 = sshll.u32 %s7449, 4
          %s7461 = int_to_ptr.vmem [resolvable:$true] %s7460
          %7466 = dma.vmem_to_hbm [thread:$0]  %s7461, 512, %s7459, %s7446, 128, 128, 8
        $region80: #{tpu_custom_call.1} parent=47 // pred_fallthru
          _
      $region48: #{tpu_custom_call.1} parent=5 // pred_fallthru
        _
      %p7467 = scmp.le.s32.totalorder 2, %s23
      // Predicated region
      $region81: #{tpu_custom_call.1} parent=5 // pred_check
        %p7468 = pneg %p7467
      $region82: #{tpu_custom_call.1} parent=5 // pred_check_branch
        %7470 = sbr.rel (%p7468) target = $region84
      $region83: #{tpu_custom_call.1} parent=5 // pred_region
        %s7471 = ssub.s32 %s23, 2
        // Predicated region
        $region85: #{tpu_custom_call.1} parent=83 // pred_check
          %p7472 = pneg %p204
        $region86: #{tpu_custom_call.1} parent=83 // pred_check_branch
          %7474 = sbr.rel (%p7472) target = $region88
        $region87: #{tpu_custom_call.1} parent=83 // pred_region
          %s7475 = sand.u32 %s189, 1
          %s7476 = scalar_lea.sflag [#allocation6], %s7475
          %s7477 = sand.u32 %s189, 1
          %s7478 = smul.addr %s7477, 32
          %s7479 = scalar_lea.vmem [#allocation17], %s7478
          %7480 = dma.done %s7476, 512
        $region88: #{tpu_custom_call.1} parent=83 // pred_fallthru
          _
      $region84: #{tpu_custom_call.1} parent=5 // pred_fallthru
        _
    $region6: #{tpu_custom_call.1} parent=1 // loop_footer
      %s27 = sadd.s32 1, %s23
    $region7: #{tpu_custom_call.1} parent=1 // loop_footer_branch
      %22 = sbr.rel target = $region3
    $region8: #{tpu_custom_call.1} parent=1 // loop_exit
      _
    %7481 = vsyncpa [#allocation5], 1
    %s7482 = scalar_lea.sflag [#allocation5], 1
    %7483 = vsyncpa %s7482, 1
    %7484 = vsyncpa [#allocation6], 1
    %s7485 = scalar_lea.sflag [#allocation6], 1
    %7486 = vsyncpa %s7485, 1
    %7487 = vsyncpa [#allocation7], 1
    %s7488 = scalar_lea.sflag [#allocation7], 1
    %7489 = vsyncpa %s7488, 1
    %7490 = vsyncpa [#allocation8], 1
    %s7491 = scalar_lea.sflag [#allocation8], 1
    %7492 = vsyncpa %s7491, 1
    %7493 = vsyncpa [#allocation12], 1
    %7494 = vsyncpa [#allocation15], 1

</llo_original>
